<compile_context>
chip_gen: v6e
topology: v6e:2x2x1
jax: 0.10.0
libtpu: 0.0.40
codegen_flags: <defaults>
</compile_context>

<pallas_src>
import functools
import numpy as np
import jax
import jax.numpy as jnp
from jax.experimental import pallas as pl
from jax.experimental.pallas import tpu as pltpu

EOS_TOKEN_ID = 49407
SOT_TOKEN_ID = 49406


# --------------------------------------------------------------------------
# Pallas kernel
# --------------------------------------------------------------------------
def _ln(z, g, b, eps=1e-5):
    mu = jnp.mean(z, axis=-1, keepdims=True)
    var = jnp.mean((z - mu) ** 2, axis=-1, keepdims=True)
    return (z - mu) * jax.lax.rsqrt(var + eps) * g + b


def transformer_stack_kernel(eos_ref,                      # SMEM (Np,) int32
                             x_ref,                        # (Nb*S, D) f32
                             ln1g, ln1b, wqkv, bqkv, wo, bo,
                             ln2g, ln2b, wfc, bfc, wpr, bpr,
                             lnfg, lnfb, wproj,
                             feat_ref,                     # (Nb, Dout) f32
                             carry, attn_buf,              # VMEM scratch
                             *, num_heads, nb, seq):
    """All CLIP ResidualAttentionBlocks + EOS/ln_final/projection epilogue.

    NOTE: the carry pattern is only correct because the layer axis is the
    innermost grid axis and is "arbitrary" (sequential); the activation block
    for sequence-block n is carried across layer steps in `carry` (VMEM).
    """
    n = pl.program_id(0)
    l = pl.program_id(1)
    L = pl.num_programs(1)

    Nb, S, H = nb, seq, num_heads
    D = x_ref.shape[-1]
    dh = D // H
    scale = 1.0 / float(np.sqrt(dh))
    bf16 = jnp.bfloat16

    @pl.when(l == 0)
    def _():
        carry[...] = x_ref[...]

    x2 = carry[...]                                        # (Nb*S, D) f32

    # ---- multi-head self-attention (pre-LN), fused QKV ----
    h = _ln(x2, ln1g[...], ln1b[...])
    qkv = jnp.dot(h.astype(bf16), wqkv[...],
                  preferred_element_type=jnp.float32) + bqkv[...]
    q3 = (qkv[:, 0 * D:1 * D] * scale).reshape(Nb, S, D)   # scale folded once
    k3 = qkv[:, 1 * D:2 * D].reshape(Nb, S, D)
    v3 = qkv[:, 2 * D:3 * D].reshape(Nb, S, D)

    # Heads batched on the leading axis -> single score/softmax/value chain.
    qh = jnp.concatenate([q3[:, :, hd * dh:(hd + 1) * dh] for hd in range(H)],
                         axis=0).astype(bf16)              # (H*Nb, S, dh)
    kh = jnp.concatenate([k3[:, :, hd * dh:(hd + 1) * dh] for hd in range(H)],
                         axis=0).astype(bf16)
    vh = jnp.concatenate([v3[:, :, hd * dh:(hd + 1) * dh] for hd in range(H)],
                         axis=0).astype(bf16)

    # Causal additive mask, built in-kernel, applied ONCE to batched scores.
    row = jax.lax.broadcasted_iota(jnp.int32, (S, S), 0)
    col = jax.lax.broadcasted_iota(jnp.int32, (S, S), 1)
    causal = jnp.where(col > row, jnp.float32(-1e9), jnp.float32(0.0))

    s = jnp.einsum("bqd,bkd->bqk", qh, kh,
                   preferred_element_type=jnp.float32) + causal[None]
    m = jnp.max(s, axis=-1, keepdims=True)
    p = jnp.exp(s - m)
    p = p * pl.reciprocal(jnp.sum(p, axis=-1, keepdims=True), approx=True)
    o = jnp.einsum("bqk,bkd->bqd", p.astype(bf16), vh,
                   preferred_element_type=jnp.float32)     # (H*Nb, S, dh)

    # Scatter head outputs into lane slices of a VMEM scratch (no lane concat).
    for hd in range(H):                                    # static, slices only
        attn_buf[:, hd * dh:(hd + 1) * dh] = (
            o[hd * Nb:(hd + 1) * Nb].reshape(Nb * S, dh))

    attn = jnp.dot(attn_buf[...].astype(bf16), wo[...],
                   preferred_element_type=jnp.float32) + bo[...]
    x2 = x2 + attn

    # ---- MLP (pre-LN, QuickGELU as in CLIP) ----
    h2 = _ln(x2, ln2g[...], ln2b[...])
    z = jnp.dot(h2.astype(bf16), wfc[...],
                preferred_element_type=jnp.float32) + bfc[...]
    z = z * jax.nn.sigmoid(1.702 * z)
    z = jnp.dot(z.astype(bf16), wpr[...],
                preferred_element_type=jnp.float32) + bpr[...]
    x2 = x2 + z
    carry[...] = x2

    # ---- fused epilogue on the last layer: EOS gather + ln_final + proj ----
    @pl.when(l == L - 1)
    def _():
        rows = []
        for b in range(Nb):                                # static, Nb small
            e = eos_ref[n * Nb + b]
            rows.append(carry[pl.ds(b * S + e, 1), :])     # (1, D) gather
        sel = jnp.concatenate(rows, axis=0)                # (Nb, D)
        seln = _ln(sel, lnfg[...], lnfb[...])
        feat_ref[...] = jnp.dot(seln.astype(bf16), wproj[...],
                                preferred_element_type=jnp.float32)


# --------------------------------------------------------------------------
# Pallas wrappers
# --------------------------------------------------------------------------
def _vmem_limit_bytes():
    """~75% of physical VMEM (48 MiB on v7x, ~96 MiB on v5e/v6e), <=100 MiB."""
    cap = 64 * 1024 * 1024
    try:
        cap = int(getattr(pltpu.get_tpu_info(), "vmem_capacity_bytes", cap))
    except Exception:
        pass
    return int(min(cap * 3 // 4, 100 * 1024 * 1024))


def pack_layers(layers):
    """Stack per-layer weights with a leading layer axis; matmul weights bf16."""
    bf = jnp.bfloat16

    def stk(key, dtype=jnp.float32):
        return jnp.stack([l[key] for l in layers], axis=0).astype(dtype)

    return {
        "ln1g": stk("ln1g"), "ln1b": stk("ln1b"),
        "wqkv": jnp.stack([jnp.concatenate([l["wq"], l["wk"], l["wv"]], axis=1)
                           for l in layers], axis=0).astype(bf),
        "bqkv": jnp.stack([jnp.concatenate([l["bq"], l["bk"], l["bv"]], axis=1)
                           for l in layers], axis=0),
        "wo": stk("wo", bf), "bo": stk("bo"),
        "ln2g": stk("ln2g"), "ln2b": stk("ln2b"),
        "wfc": stk("wfc", bf), "bfc": stk("bfc"),
        "wpr": stk("wpr", bf), "bpr": stk("bpr"),
    }


def run_text_transformer(h, eos_idx, packed, lnf_g, lnf_b, w_proj, num_heads,
                         *, nb=8):
    """Transformer stack + EOS gather + ln_final + projection, one pallas_call.

    h: (N, S, D) f32, eos_idx: (N,) int32 -> (N, Dout) f32 features.
    """
    N, S0, D = h.shape
    L = packed["wqkv"].shape[0]
    Dout = w_proj.shape[1]

    # Pad context length to a multiple of 8: sublane-aligned reshapes; padded
    # key positions come after every real query, so the causal mask hides them.
    S = -(-S0 // 8) * 8
    if S != S0:
        h = jnp.pad(h, ((0, 0), (0, S - S0), (0, 0)))

    # Pad the sequence count to a multiple of the per-step batch nb.
    n_pad = (-N) % nb
    if n_pad:
        h = jnp.pad(h, ((0, n_pad), (0, 0), (0, 0)))
        eos_idx = jnp.pad(eos_idx, (0, n_pad))
    Np = h.shape[0]
    h2d = h.reshape(Np * S, D)              # lane-dense 2-D activation slab

    names = ("ln1g", "ln1b", "wqkv", "bqkv", "wo", "bo",
             "ln2g", "ln2b", "wfc", "bfc", "wpr", "bpr")
    weights = [packed[k] for k in names]
    w_specs = [
        pl.BlockSpec((pl.Squeezed(),) + tuple(w.shape[1:]),
                     lambda n, l, eos, nd=w.ndim: (l,) + (0,) * (nd - 1))
        for w in weights
    ]
    full = lambda a: pl.BlockSpec(a.shape, lambda n, l, eos: (0,) * a.ndim)
    x_spec = pl.BlockSpec((nb * S, D), lambda n, l, eos: (n, 0))
    out_spec = pl.BlockSpec((nb, Dout), lambda n, l, eos: (n, 0))

    w_proj_bf = w_proj.astype(jnp.bfloat16)
    kern = functools.partial(transformer_stack_kernel,
                             num_heads=num_heads, nb=nb, seq=S)
    feat = pl.pallas_call(
        kern,
        out_shape=jax.ShapeDtypeStruct((Np, Dout), jnp.float32),
        grid_spec=pltpu.PrefetchScalarGridSpec(
            num_scalar_prefetch=1,
            grid=(Np // nb, L),                         # layer axis innermost
            in_specs=[x_spec] + w_specs + [full(lnf_g), full(lnf_b),
                                           full(w_proj_bf)],
            out_specs=out_spec,
            scratch_shapes=[pltpu.VMEM((nb * S, D), jnp.float32),   # carry
                            pltpu.VMEM((nb * S, D), jnp.float32)]), # attn buf
        compiler_params=pltpu.CompilerParams(
            dimension_semantics=("parallel", "arbitrary"),
            vmem_limit_bytes=_vmem_limit_bytes()),
    )(eos_idx.astype(jnp.int32), h2d, *weights, lnf_g, lnf_b, w_proj_bf)
    return feat[:N]


# --------------------------------------------------------------------------
# Pure-JAX reference (mirrors the kernel's bf16 quantization for verification)
# --------------------------------------------------------------------------
def ref_block(x, layer, num_heads):
    def ln(z, g, b):
        mu = z.mean(-1, keepdims=True)
        var = ((z - mu) ** 2).mean(-1, keepdims=True)
        return (z - mu) * jax.lax.rsqrt(var + 1e-5) * g + b

    bf = jnp.bfloat16
    N, S, D = x.shape
    dh = D // num_heads
    scale = 1.0 / float(np.sqrt(dh))

    wqkv = jnp.concatenate([layer["wq"], layer["wk"], layer["wv"]], 1).astype(bf)
    bqkv = jnp.concatenate([layer["bq"], layer["bk"], layer["bv"]], 1)

    h = ln(x, layer["ln1g"], layer["ln1b"])
    qkv = jnp.einsum("nsd,de->nse", h.astype(bf), wqkv,
                     preferred_element_type=jnp.float32) + bqkv
    q = qkv[..., 0 * D:1 * D] * scale
    k = qkv[..., 1 * D:2 * D]
    v = qkv[..., 2 * D:3 * D]
    qh = q.reshape(N, S, num_heads, dh)
    kh = k.reshape(N, S, num_heads, dh)
    vh = v.reshape(N, S, num_heads, dh)

    mask = jnp.triu(jnp.full((S, S), -1e9, jnp.float32), k=1)
    scores = jnp.einsum("nqhd,nkhd->nhqk", qh.astype(bf), kh.astype(bf),
                        preferred_element_type=jnp.float32) + mask
    m = scores.max(-1, keepdims=True)
    p = jnp.exp(scores - m)
    p = p / p.sum(-1, keepdims=True)
    o = jnp.einsum("nhqk,nkhd->nqhd", p.astype(bf), vh.astype(bf),
                   preferred_element_type=jnp.float32).reshape(N, S, D)
    o = jnp.einsum("nsd,de->nse", o.astype(bf), layer["wo"].astype(bf),
                   preferred_element_type=jnp.float32) + layer["bo"]
    x = x + o

    h2 = ln(x, layer["ln2g"], layer["ln2b"])
    z = jnp.einsum("nsd,df->nsf", h2.astype(bf), layer["wfc"].astype(bf),
                   preferred_element_type=jnp.float32) + layer["bfc"]
    z = z * jax.nn.sigmoid(1.702 * z)
    z = jnp.einsum("nsf,fd->nsd", z.astype(bf), layer["wpr"].astype(bf),
                   preferred_element_type=jnp.float32) + layer["bpr"]
    return x + z


def ref_transformer(x, layers, num_heads):
    for layer in layers:
        x = ref_block(x, layer, num_heads)
    return x


def ref_ln_proj(x, g, b, w):
    mu = x.mean(-1, keepdims=True)
    var = ((x - mu) ** 2).mean(-1, keepdims=True)
    xn = (x - mu) * jax.lax.rsqrt(var + 1e-5) * g + b
    return jnp.dot(xn.astype(jnp.bfloat16), w.astype(jnp.bfloat16),
                   preferred_element_type=jnp.float32)


# --------------------------------------------------------------------------
# TextEncoder forward (glue mirrors the PyTorch forward exactly)
# --------------------------------------------------------------------------
def text_encoder_forward(text, visual_feature, prompt_bias_list, mode, params,
                         *, num_tokens, num_heads, use_pallas=True, nb=8):
    prompt_bias, prompt_bias_state = prompt_bias_list
    B = text.shape[0]
    V, Lv, D = visual_feature.shape
    pos = params["positional_embedding"]
    S = pos.shape[0]                       # context_length
    pos_y = 1                              # pos_y = [1] * text.shape[0]
    x = params["token_embedding"][text]    # token_embedding(text)  (B, Ltext, D)

    def build(i, pb_i, pbs_i):
        vf = visual_feature
        vf = vf.at[:, :num_tokens, :].add(pb_i[None, None, :])
        vf = vf.at[:, num_tokens:, :].add(pbs_i[None, None, :])
        head = jnp.broadcast_to(x[i, 0:pos_y, :][None], (V, pos_y, D))
        tail = jnp.broadcast_to(x[i, pos_y + 1:S - Lv + 1, :][None],
                                (V, S - Lv - pos_y, D))
        return jnp.concatenate([head, vf, tail], axis=1) + pos[None]

    seqs, eos_idx = [], []
    if mode == "train":
        for i in range(B):
            seqs.append(build(i, prompt_bias[i], prompt_bias_state))
            e = jnp.argmax(text[i] == EOS_TOKEN_ID).astype(jnp.int32) + Lv - 1
            eos_idx.append(jnp.full((V,), e, jnp.int32))
        out_cols = V
    else:
        P = prompt_bias.shape[0]
        for i in range(B):
            for j in range(P):
                seqs.append(build(i, prompt_bias[j], prompt_bias_state[j]))
            e = jnp.argmax(text[i] == EOS_TOKEN_ID).astype(jnp.int32) + Lv - 1
            eos_idx.append(jnp.full((P * V,), e, jnp.int32))
        out_cols = V * P

    h = jnp.concatenate(seqs, axis=0).astype(jnp.float32)    # (N, S, D)
    eos_idx = jnp.concatenate(eos_idx, axis=0)                # (N,)

    if use_pallas:
        packed = pack_layers(params["layers"])
        feat = run_text_transformer(
            h, eos_idx, packed, params["ln_final_g"], params["ln_final_b"],
            params["text_projection"], num_heads, nb=nb)      # (N, Dout)
    else:
        hh = ref_transformer(h, params["layers"], num_heads)
        sel = hh[jnp.arange(hh.shape[0]), eos_idx, :]
        feat = ref_ln_proj(sel, params["ln_final_g"], params["ln_final_b"],
                           params["text_projection"])
    return feat.reshape(B, out_cols, -1)


# --------------------------------------------------------------------------
# Deterministic parameter init (synthetic; shapes follow CLIP text tower)
# --------------------------------------------------------------------------
def init_params(key, *, vocab, D, S, Dff, n_layers):
    keys = jax.random.split(key, 4 + n_layers)
    p = {
        "token_embedding": jax.random.normal(keys[0], (vocab, D), jnp.float32) * 0.02,
        "positional_embedding": jax.random.normal(keys[1], (S, D), jnp.float32) * 0.01,
        "ln_final_g": jnp.ones((1, D), jnp.float32),
        "ln_final_b": jnp.zeros((1, D), jnp.float32),
        "text_projection": jax.random.normal(keys[2], (D, D), jnp.float32) * 0.05,
        "layers": [],
    }
    for l in range(n_layers):
        k = jax.random.split(keys[4 + l], 6)
        p["layers"].append({
            "ln1g": jnp.ones((1, D), jnp.float32),
            "ln1b": jnp.zeros((1, D), jnp.float32),
            "wq": jax.random.normal(k[0], (D, D), jnp.float32) * 0.05,
            "bq": jnp.zeros((1, D), jnp.float32),
            "wk": jax.random.normal(k[1], (D, D), jnp.float32) * 0.05,
            "bk": jnp.zeros((1, D), jnp.float32),
            "wv": jax.random.normal(k[2], (D, D), jnp.float32) * 0.05,
            "bv": jnp.zeros((1, D), jnp.float32),
            "wo": jax.random.normal(k[3], (D, D), jnp.float32) * 0.05,
            "bo": jnp.zeros((1, D), jnp.float32),
            "ln2g": jnp.ones((1, D), jnp.float32),
            "ln2b": jnp.zeros((1, D), jnp.float32),
            "wfc": jax.random.normal(k[4], (D, Dff), jnp.float32) * 0.05,
            "bfc": jnp.zeros((1, Dff), jnp.float32),
            "wpr": jax.random.normal(k[5], (Dff, D), jnp.float32) * 0.05,
            "bpr": jnp.zeros((1, D), jnp.float32),
        })
    return p


# --------------------------------------------------------------------------
if __name__ == "__main__":
    # Small shapes consistent with the module's forward.
    B, V, Lv, D, S = 2, 2, 4, 32, 16          # texts, visual feats, visual len, width, context_length
    num_heads, n_layers, Dff = 4, 2, 128
    num_tokens = 2                             # args.prompt_context_len
    vocab = 49408

    key = jax.random.PRNGKey(0)
    kp, k1, k2, k3, k4, k5, k6 = jax.random.split(key, 7)
    params = init_params(kp, vocab=vocab, D=D, S=S, Dff=Dff, n_layers=n_layers)

    # text: [SOT, 5 random tokens, EOS, padding]; EOS must satisfy eos+Lv-1 < S.
    body = jax.random.randint(k1, (B, 5), 1, 1000, dtype=jnp.int32)
    text = jnp.zeros((B, S), jnp.int32)
    text = text.at[:, 0].set(SOT_TOKEN_ID)
    text = text.at[:, 1:6].set(body)
    text = text.at[:, 6].set(EOS_TOKEN_ID)

    visual_feature = jax.random.normal(k2, (V, Lv, D), jnp.float32) * 0.1
    prompt_bias = jax.random.normal(k3, (B, D), jnp.float32) * 0.1       # train: one per text
    prompt_bias_state = jax.random.normal(k4, (D,), jnp.float32) * 0.1

    # --- train mode (Pallas) + pure-JAX reference check ---
    out_train = text_encoder_forward(
        text, visual_feature, [prompt_bias, prompt_bias_state], "train", params,
        num_tokens=num_tokens, num_heads=num_heads, use_pallas=True)
    jax.block_until_ready(out_train)

    out_ref = text_encoder_forward(
        text, visual_feature, [prompt_bias, prompt_bias_state], "train", params,
        num_tokens=num_tokens, num_heads=num_heads, use_pallas=False)
    jax.block_until_ready(out_ref)

    assert out_train.shape == (B, V, D), out_train.shape
    assert np.allclose(np.asarray(out_train), np.asarray(out_ref),
                       atol=2e-2, rtol=2e-2), "Pallas/JAX mismatch"

    # --- eval mode (Pallas): prompt_bias / prompt_bias_state are (P, D) ---
    P = 3
    pb_eval = jax.random.normal(k5, (P, D), jnp.float32) * 0.1
    pbs_eval = jax.random.normal(k6, (P, D), jnp.float32) * 0.1
    out_eval = text_encoder_forward(
        text, visual_feature, [pb_eval, pbs_eval], "eval", params,
        num_tokens=num_tokens, num_heads=num_heads, use_pallas=True)
    jax.block_until_ready(out_eval)
    assert out_eval.shape == (B, V * P, D), out_eval.shape

    print("KERNEL_OK")
</pallas_src>

<mosaic_0001>
module attributes {stable_mosaic.version = 11 : i64} {
  func.func @transformer_stack_kernel(%arg0: i32, %arg1: i32, %arg2: memref<8xi32, #tpu.memory_space<smem>>, %arg3: memref<128x32xf32, #tpu.memory_space<vmem>>, %arg4: memref<1x1x32xf32, #tpu.memory_space<vmem>>, %arg5: memref<1x1x32xf32, #tpu.memory_space<vmem>>, %arg6: memref<1x32x96xbf16, #tpu.memory_space<vmem>>, %arg7: memref<1x1x96xf32, #tpu.memory_space<vmem>>, %arg8: memref<1x32x32xbf16, #tpu.memory_space<vmem>>, %arg9: memref<1x1x32xf32, #tpu.memory_space<vmem>>, %arg10: memref<1x1x32xf32, #tpu.memory_space<vmem>>, %arg11: memref<1x1x32xf32, #tpu.memory_space<vmem>>, %arg12: memref<1x32x128xbf16, #tpu.memory_space<vmem>>, %arg13: memref<1x1x128xf32, #tpu.memory_space<vmem>>, %arg14: memref<1x128x32xbf16, #tpu.memory_space<vmem>>, %arg15: memref<1x1x32xf32, #tpu.memory_space<vmem>>, %arg16: memref<1x32xf32, #tpu.memory_space<vmem>>, %arg17: memref<1x32xf32, #tpu.memory_space<vmem>>, %arg18: memref<32x32xbf16, #tpu.memory_space<vmem>>, %arg19: memref<8x32xf32, #tpu.memory_space<vmem>>, %arg20: memref<128x32xf32, #tpu.memory_space<vmem>>, %arg21: memref<128x32xf32, #tpu.memory_space<vmem>>) attributes {dimension_semantics = [#tpu.dimension_semantics<parallel>, #tpu.dimension_semantics<arbitrary>], iteration_bounds = array<i64: 1, 2>, scalar_prefetch = 1 : i64, scratch_operands = 2 : i64, tpu.core_type = #tpu.core_type<tc>, window_params = [{transform_indices = @transform_0, window_bounds = array<i64: 128, 32>}, {transform_indices = @transform_1, window_bounds = array<i64: 1, 1, 32>}, {transform_indices = @transform_2, window_bounds = array<i64: 1, 1, 32>}, {transform_indices = @transform_3, window_bounds = array<i64: 1, 32, 96>}, {transform_indices = @transform_4, window_bounds = array<i64: 1, 1, 96>}, {transform_indices = @transform_5, window_bounds = array<i64: 1, 32, 32>}, {transform_indices = @transform_6, window_bounds = array<i64: 1, 1, 32>}, {transform_indices = @transform_7, window_bounds = array<i64: 1, 1, 32>}, {transform_indices = @transform_8, window_bounds = array<i64: 1, 1, 32>}, {transform_indices = @transform_9, window_bounds = array<i64: 1, 32, 128>}, {transform_indices = @transform_10, window_bounds = array<i64: 1, 1, 128>}, {transform_indices = @transform_11, window_bounds = array<i64: 1, 128, 32>}, {transform_indices = @transform_12, window_bounds = array<i64: 1, 1, 32>}, {pipeline_mode = #tpu.pipeline_mode<synchronous>, transform_indices = @transform_13, window_bounds = array<i64: 1, 32>}, {pipeline_mode = #tpu.pipeline_mode<synchronous>, transform_indices = @transform_14, window_bounds = array<i64: 1, 32>}, {pipeline_mode = #tpu.pipeline_mode<synchronous>, transform_indices = @transform_15, window_bounds = array<i64: 32, 32>}, {transform_indices = @transform_16, window_bounds = array<i64: 8, 32>}]} {
    %c0_i32 = arith.constant 0 : i32
    %0 = arith.cmpi eq, %arg1, %c0_i32 : i32
    %1 = arith.extui %0 : i1 to i32
    %c0_i32_0 = arith.constant 0 : i32
    %2 = arith.cmpi ne, %1, %c0_i32_0 : i32
    scf.if %2 {
      %c0_70 = arith.constant 0 : index
      %c0_71 = arith.constant 0 : index
      %163 = vector.load %arg3[%c0_70, %c0_71] : memref<128x32xf32, #tpu.memory_space<vmem>>, vector<128x32xf32>
      %c0_72 = arith.constant 0 : index
      %c0_73 = arith.constant 0 : index
      %164 = vector.load %arg20[%c0_72, %c0_73] : memref<128x32xf32, #tpu.memory_space<vmem>>, vector<128x32xf32>
      tpu.vector_store %arg20[%c0_72, %c0_73], %163 {strides = array<i32>} : memref<128x32xf32, #tpu.memory_space<vmem>>, vector<128x32xf32>,
    } else {
    }
    %c0 = arith.constant 0 : index
    %c0_1 = arith.constant 0 : index
    %3 = vector.load %arg20[%c0, %c0_1] : memref<128x32xf32, #tpu.memory_space<vmem>>, vector<128x32xf32>
    %c0_2 = arith.constant 0 : index
    %c0_3 = arith.constant 0 : index
    %c0_4 = arith.constant 0 : index
    %4 = vector.load %arg4[%c0_2, %c0_3, %c0_4] : memref<1x1x32xf32, #tpu.memory_space<vmem>>, vector<1x1x32xf32>
    %5 = vector.shape_cast %4 : vector<1x1x32xf32> to vector<1x32xf32>
    %c0_5 = arith.constant 0 : index
    %c0_6 = arith.constant 0 : index
    %c0_7 = arith.constant 0 : index
    %6 = vector.load %arg5[%c0_5, %c0_6, %c0_7] : memref<1x1x32xf32, #tpu.memory_space<vmem>>, vector<1x1x32xf32>
    %7 = vector.shape_cast %6 : vector<1x1x32xf32> to vector<1x32xf32>
    %cst = arith.constant dense<0.000000e+00> : vector<128xf32>
    %8 = vector.multi_reduction <add>, %3, %cst [1] : vector<128x32xf32> to vector<128xf32>
    %9 = vector.shape_cast %8 : vector<128xf32> to vector<128x1xf32>
    %cst_8 = arith.constant 3.200000e+01 : f32
    %10 = vector.broadcast %cst_8 : f32 to vector<128x1xf32>
    %11 = arith.divf %9, %10 : vector<128x1xf32>
    %12 = vector.broadcast %11 : vector<128x1xf32> to vector<128x32xf32>
    %13 = arith.subf %3, %12 : vector<128x32xf32>
    %14 = arith.mulf %13, %13 : vector<128x32xf32>
    %cst_9 = arith.constant dense<0.000000e+00> : vector<128xf32>
    %15 = vector.multi_reduction <add>, %14, %cst_9 [1] : vector<128x32xf32> to vector<128xf32>
    %16 = vector.shape_cast %15 : vector<128xf32> to vector<128x1xf32>
    %cst_10 = arith.constant 3.200000e+01 : f32
    %17 = vector.broadcast %cst_10 : f32 to vector<128x1xf32>
    %18 = arith.divf %16, %17 : vector<128x1xf32>
    %19 = vector.broadcast %11 : vector<128x1xf32> to vector<128x32xf32>
    %20 = arith.subf %3, %19 : vector<128x32xf32>
    %cst_11 = arith.constant 9.99999974E-6 : f32
    %21 = vector.broadcast %cst_11 : f32 to vector<128x1xf32>
    %22 = arith.addf %18, %21 : vector<128x1xf32>
    %23 = math.rsqrt %22 : vector<128x1xf32>
    %24 = vector.broadcast %23 : vector<128x1xf32> to vector<128x32xf32>
    %25 = arith.mulf %20, %24 : vector<128x32xf32>
    %26 = vector.broadcast %5 : vector<1x32xf32> to vector<128x32xf32>
    %27 = arith.mulf %25, %26 : vector<128x32xf32>
    %28 = vector.broadcast %7 : vector<1x32xf32> to vector<128x32xf32>
    %29 = arith.addf %27, %28 : vector<128x32xf32>
    %30 = arith.truncf %29 : vector<128x32xf32> to vector<128x32xbf16>
    %c0_12 = arith.constant 0 : index
    %c0_13 = arith.constant 0 : index
    %c0_14 = arith.constant 0 : index
    %31 = vector.load %arg6[%c0_12, %c0_13, %c0_14] : memref<1x32x96xbf16, #tpu.memory_space<vmem>>, vector<1x32x96xbf16>
    %32 = vector.shape_cast %31 : vector<1x32x96xbf16> to vector<32x96xbf16>
    %cst_15 = arith.constant dense<0.000000e+00> : vector<128x96xf32>
    %33 = tpu.matmul %30, %32, %cst_15 {dimension_numbers = #tpu.dot_dimension_numbers<[1], [0], [0], [1], [0, 0, 1, 1], [], []>} : vector<128x32xbf16>, vector<32x96xbf16>, vector<128x96xf32> -> vector<128x96xf32>
    %c0_16 = arith.constant 0 : index
    %c0_17 = arith.constant 0 : index
    %c0_18 = arith.constant 0 : index
    %34 = vector.load %arg7[%c0_16, %c0_17, %c0_18] : memref<1x1x96xf32, #tpu.memory_space<vmem>>, vector<1x1x96xf32>
    %35 = vector.shape_cast %34 : vector<1x1x96xf32> to vector<1x96xf32>
    %36 = vector.broadcast %35 : vector<1x96xf32> to vector<128x96xf32>
    %37 = arith.addf %33, %36 : vector<128x96xf32>
    %38 = vector.extract_strided_slice %37 {offsets = [0, 0], sizes = [128, 32], strides = [1, 1]} : vector<128x96xf32> to vector<128x32xf32>
    %cst_19 = arith.constant 0.353553385 : f32
    %39 = vector.broadcast %cst_19 : f32 to vector<128x32xf32>
    %40 = arith.mulf %38, %39 : vector<128x32xf32>
    %41 = vector.shape_cast %40 : vector<128x32xf32> to vector<8x16x32xf32>
    %42 = vector.extract_strided_slice %37 {offsets = [0, 32], sizes = [128, 32], strides = [1, 1]} : vector<128x96xf32> to vector<128x32xf32>
    %43 = vector.shape_cast %42 : vector<128x32xf32> to vector<8x16x32xf32>
    %44 = vector.extract_strided_slice %37 {offsets = [0, 64], sizes = [128, 32], strides = [1, 1]} : vector<128x96xf32> to vector<128x32xf32>
    %45 = vector.shape_cast %44 : vector<128x32xf32> to vector<8x16x32xf32>
    %46 = vector.extract_strided_slice %41 {offsets = [0, 0, 0], sizes = [8, 16, 8], strides = [1, 1, 1]} : vector<8x16x32xf32> to vector<8x16x8xf32>
    %47 = vector.extract_strided_slice %41 {offsets = [0, 0, 8], sizes = [8, 16, 8], strides = [1, 1, 1]} : vector<8x16x32xf32> to vector<8x16x8xf32>
    %48 = vector.extract_strided_slice %41 {offsets = [0, 0, 16], sizes = [8, 16, 8], strides = [1, 1, 1]} : vector<8x16x32xf32> to vector<8x16x8xf32>
    %49 = vector.extract_strided_slice %41 {offsets = [0, 0, 24], sizes = [8, 16, 8], strides = [1, 1, 1]} : vector<8x16x32xf32> to vector<8x16x8xf32>
    %50 = tpu.concatenate %46, %47, %48, %49 in 0 : vector<8x16x8xf32>, vector<8x16x8xf32>, vector<8x16x8xf32>, vector<8x16x8xf32> -> vector<32x16x8xf32>
    %51 = arith.truncf %50 : vector<32x16x8xf32> to vector<32x16x8xbf16>
    %52 = vector.extract_strided_slice %43 {offsets = [0, 0, 0], sizes = [8, 16, 8], strides = [1, 1, 1]} : vector<8x16x32xf32> to vector<8x16x8xf32>
    %53 = vector.extract_strided_slice %43 {offsets = [0, 0, 8], sizes = [8, 16, 8], strides = [1, 1, 1]} : vector<8x16x32xf32> to vector<8x16x8xf32>
    %54 = vector.extract_strided_slice %43 {offsets = [0, 0, 16], sizes = [8, 16, 8], strides = [1, 1, 1]} : vector<8x16x32xf32> to vector<8x16x8xf32>
    %55 = vector.extract_strided_slice %43 {offsets = [0, 0, 24], sizes = [8, 16, 8], strides = [1, 1, 1]} : vector<8x16x32xf32> to vector<8x16x8xf32>
    %56 = tpu.concatenate %52, %53, %54, %55 in 0 : vector<8x16x8xf32>, vector<8x16x8xf32>, vector<8x16x8xf32>, vector<8x16x8xf32> -> vector<32x16x8xf32>
    %57 = arith.truncf %56 : vector<32x16x8xf32> to vector<32x16x8xbf16>
    %58 = vector.extract_strided_slice %45 {offsets = [0, 0, 0], sizes = [8, 16, 8], strides = [1, 1, 1]} : vector<8x16x32xf32> to vector<8x16x8xf32>
    %59 = vector.extract_strided_slice %45 {offsets = [0, 0, 8], sizes = [8, 16, 8], strides = [1, 1, 1]} : vector<8x16x32xf32> to vector<8x16x8xf32>
    %60 = vector.extract_strided_slice %45 {offsets = [0, 0, 16], sizes = [8, 16, 8], strides = [1, 1, 1]} : vector<8x16x32xf32> to vector<8x16x8xf32>
    %61 = vector.extract_strided_slice %45 {offsets = [0, 0, 24], sizes = [8, 16, 8], strides = [1, 1, 1]} : vector<8x16x32xf32> to vector<8x16x8xf32>
    %62 = tpu.concatenate %58, %59, %60, %61 in 0 : vector<8x16x8xf32>, vector<8x16x8xf32>, vector<8x16x8xf32>, vector<8x16x8xf32> -> vector<32x16x8xf32>
    %63 = arith.truncf %62 : vector<32x16x8xf32> to vector<32x16x8xbf16>
    %64 = tpu.iota {dimensions = array<i32: 0>} : vector<16x16xi32>
    %65 = tpu.iota {dimensions = array<i32: 1>} : vector<16x16xi32>
    %66 = arith.cmpi sgt, %65, %64 : vector<16x16xi32>
    %cst_20 = arith.constant -1.000000e+09 : f32
    %cst_21 = arith.constant 0.000000e+00 : f32
    %67 = vector.broadcast %cst_20 : f32 to vector<16x16xf32>
    %68 = vector.broadcast %cst_21 : f32 to vector<16x16xf32>
    %69 = arith.select %66, %67, %68 : vector<16x16xi1>, vector<16x16xf32>
    "tpu.trace_start"() <{level = 10 : i32, message = "bqd,bkd->bqk"}> : () -> ()
    %cst_22 = arith.constant dense<0.000000e+00> : vector<32x16x16xf32>
    %70 = tpu.matmul %51, %57, %cst_22 {dimension_numbers = #tpu.dot_dimension_numbers<[2], [2], [1], [1], [0, 0, 0, 1, 1, 1], [0], [0]>} : vector<32x16x8xbf16>, vector<32x16x8xbf16>, vector<32x16x16xf32> -> vector<32x16x16xf32>
    "tpu.trace_stop"() : () -> ()
    %71 = vector.shape_cast %69 : vector<16x16xf32> to vector<1x16x16xf32>
    %72 = vector.broadcast %71 : vector<1x16x16xf32> to vector<32x16x16xf32>
    %73 = arith.addf %70, %72 : vector<32x16x16xf32>
    %cst_23 = arith.constant dense<0xFF800000> : vector<32x16xf32>
    %74 = vector.multi_reduction <maximumf>, %73, %cst_23 [2] : vector<32x16x16xf32> to vector<32x16xf32>
    %75 = vector.shape_cast %74 : vector<32x16xf32> to vector<32x16x1xf32>
    %76 = vector.broadcast %75 : vector<32x16x1xf32> to vector<32x16x16xf32>
    %77 = arith.subf %73, %76 : vector<32x16x16xf32>
    %78 = math.exp %77 : vector<32x16x16xf32>
    %cst_24 = arith.constant dense<0.000000e+00> : vector<32x16xf32>
    %79 = vector.multi_reduction <add>, %78, %cst_24 [2] : vector<32x16x16xf32> to vector<32x16xf32>
    %80 = vector.shape_cast %79 : vector<32x16xf32> to vector<32x16x1xf32>
    %81 = tpu.reciprocal %80 {approx = true} : vector<32x16x1xf32> -> vector<32x16x1xf32>
    %82 = vector.broadcast %81 : vector<32x16x1xf32> to vector<32x16x16xf32>
    %83 = arith.mulf %78, %82 : vector<32x16x16xf32>
    %84 = arith.truncf %83 : vector<32x16x16xf32> to vector<32x16x16xbf16>
    "tpu.trace_start"() <{level = 10 : i32, message = "bqk,bkd->bqd"}> : () -> ()
    %cst_25 = arith.constant dense<0.000000e+00> : vector<32x16x8xf32>
    %85 = tpu.matmul %84, %63, %cst_25 {dimension_numbers = #tpu.dot_dimension_numbers<[2], [1], [1], [2], [0, 0, 0, 1, 1, 2], [0], [0]>} : vector<32x16x16xbf16>, vector<32x16x8xbf16>, vector<32x16x8xf32> -> vector<32x16x8xf32>
    "tpu.trace_stop"() : () -> ()
    %86 = vector.extract_strided_slice %85 {offsets = [0, 0, 0], sizes = [8, 16, 8], strides = [1, 1, 1]} : vector<32x16x8xf32> to vector<8x16x8xf32>
    %87 = vector.shape_cast %86 : vector<8x16x8xf32> to vector<128x8xf32>
    %c0_26 = arith.constant 0 : index
    %c0_27 = arith.constant 0 : index
    %88 = vector.load %arg21[%c0_26, %c0_27] : memref<128x32xf32, #tpu.memory_space<vmem>>, vector<128x8xf32>
    tpu.vector_store %arg21[%c0_26, %c0_27], %87 {strides = array<i32>} : memref<128x32xf32, #tpu.memory_space<vmem>>, vector<128x8xf32>,
    %89 = vector.extract_strided_slice %85 {offsets = [8, 0, 0], sizes = [8, 16, 8], strides = [1, 1, 1]} : vector<32x16x8xf32> to vector<8x16x8xf32>
    %90 = vector.shape_cast %89 : vector<8x16x8xf32> to vector<128x8xf32>
    %c0_28 = arith.constant 0 : index
    %c8 = arith.constant 8 : index
    %91 = vector.load %arg21[%c0_28, %c8] : memref<128x32xf32, #tpu.memory_space<vmem>>, vector<128x8xf32>
    tpu.vector_store %arg21[%c0_28, %c8], %90 {strides = array<i32>} : memref<128x32xf32, #tpu.memory_space<vmem>>, vector<128x8xf32>,
    %92 = vector.extract_strided_slice %85 {offsets = [16, 0, 0], sizes = [8, 16, 8], strides = [1, 1, 1]} : vector<32x16x8xf32> to vector<8x16x8xf32>
    %93 = vector.shape_cast %92 : vector<8x16x8xf32> to vector<128x8xf32>
    %c0_29 = arith.constant 0 : index
    %c16 = arith.constant 16 : index
    %94 = vector.load %arg21[%c0_29, %c16] : memref<128x32xf32, #tpu.memory_space<vmem>>, vector<128x8xf32>
    tpu.vector_store %arg21[%c0_29, %c16], %93 {strides = array<i32>} : memref<128x32xf32, #tpu.memory_space<vmem>>, vector<128x8xf32>,
    %95 = vector.extract_strided_slice %85 {offsets = [24, 0, 0], sizes = [8, 16, 8], strides = [1, 1, 1]} : vector<32x16x8xf32> to vector<8x16x8xf32>
    %96 = vector.shape_cast %95 : vector<8x16x8xf32> to vector<128x8xf32>
    %c0_30 = arith.constant 0 : index
    %c24 = arith.constant 24 : index
    %97 = vector.load %arg21[%c0_30, %c24] : memref<128x32xf32, #tpu.memory_space<vmem>>, vector<128x8xf32>
    tpu.vector_store %arg21[%c0_30, %c24], %96 {strides = array<i32>} : memref<128x32xf32, #tpu.memory_space<vmem>>, vector<128x8xf32>,
    %c0_31 = arith.constant 0 : index
    %c0_32 = arith.constant 0 : index
    %98 = vector.load %arg21[%c0_31, %c0_32] : memref<128x32xf32, #tpu.memory_space<vmem>>, vector<128x32xf32>
    %99 = arith.truncf %98 : vector<128x32xf32> to vector<128x32xbf16>
    %c0_33 = arith.constant 0 : index
    %c0_34 = arith.constant 0 : index
    %c0_35 = arith.constant 0 : index
    %100 = vector.load %arg8[%c0_33, %c0_34, %c0_35] : memref<1x32x32xbf16, #tpu.memory_space<vmem>>, vector<1x32x32xbf16>
    %101 = vector.shape_cast %100 : vector<1x32x32xbf16> to vector<32x32xbf16>
    %cst_36 = arith.constant dense<0.000000e+00> : vector<128x32xf32>
    %102 = tpu.matmul %99, %101, %cst_36 {dimension_numbers = #tpu.dot_dimension_numbers<[1], [0], [0], [1], [0, 0, 1, 1], [], []>} : vector<128x32xbf16>, vector<32x32xbf16>, vector<128x32xf32> -> vector<128x32xf32>
    %c0_37 = arith.constant 0 : index
    %c0_38 = arith.constant 0 : index
    %c0_39 = arith.constant 0 : index
    %103 = vector.load %arg9[%c0_37, %c0_38, %c0_39] : memref<1x1x32xf32, #tpu.memory_space<vmem>>, vector<1x1x32xf32>
    %104 = vector.shape_cast %103 : vector<1x1x32xf32> to vector<1x32xf32>
    %105 = vector.broadcast %104 : vector<1x32xf32> to vector<128x32xf32>
    %106 = arith.addf %102, %105 : vector<128x32xf32>
    %107 = arith.addf %3, %106 : vector<128x32xf32>
    %c0_40 = arith.constant 0 : index
    %c0_41 = arith.constant 0 : index
    %c0_42 = arith.constant 0 : index
    %108 = vector.load %arg10[%c0_40, %c0_41, %c0_42] : memref<1x1x32xf32, #tpu.memory_space<vmem>>, vector<1x1x32xf32>
    %109 = vector.shape_cast %108 : vector<1x1x32xf32> to vector<1x32xf32>
    %c0_43 = arith.constant 0 : index
    %c0_44 = arith.constant 0 : index
    %c0_45 = arith.constant 0 : index
    %110 = vector.load %arg11[%c0_43, %c0_44, %c0_45] : memref<1x1x32xf32, #tpu.memory_space<vmem>>, vector<1x1x32xf32>
    %111 = vector.shape_cast %110 : vector<1x1x32xf32> to vector<1x32xf32>
    %cst_46 = arith.constant dense<0.000000e+00> : vector<128xf32>
    %112 = vector.multi_reduction <add>, %107, %cst_46 [1] : vector<128x32xf32> to vector<128xf32>
    %113 = vector.shape_cast %112 : vector<128xf32> to vector<128x1xf32>
    %cst_47 = arith.constant 3.200000e+01 : f32
    %114 = vector.broadcast %cst_47 : f32 to vector<128x1xf32>
    %115 = arith.divf %113, %114 : vector<128x1xf32>
    %116 = vector.broadcast %115 : vector<128x1xf32> to vector<128x32xf32>
    %117 = arith.subf %107, %116 : vector<128x32xf32>
    %118 = arith.mulf %117, %117 : vector<128x32xf32>
    %cst_48 = arith.constant dense<0.000000e+00> : vector<128xf32>
    %119 = vector.multi_reduction <add>, %118, %cst_48 [1] : vector<128x32xf32> to vector<128xf32>
    %120 = vector.shape_cast %119 : vector<128xf32> to vector<128x1xf32>
    %cst_49 = arith.constant 3.200000e+01 : f32
    %121 = vector.broadcast %cst_49 : f32 to vector<128x1xf32>
    %122 = arith.divf %120, %121 : vector<128x1xf32>
    %123 = vector.broadcast %115 : vector<128x1xf32> to vector<128x32xf32>
    %124 = arith.subf %107, %123 : vector<128x32xf32>
    %cst_50 = arith.constant 9.99999974E-6 : f32
    %125 = vector.broadcast %cst_50 : f32 to vector<128x1xf32>
    %126 = arith.addf %122, %125 : vector<128x1xf32>
    %127 = math.rsqrt %126 : vector<128x1xf32>
    %128 = vector.broadcast %127 : vector<128x1xf32> to vector<128x32xf32>
    %129 = arith.mulf %124, %128 : vector<128x32xf32>
    %130 = vector.broadcast %109 : vector<1x32xf32> to vector<128x32xf32>
    %131 = arith.mulf %129, %130 : vector<128x32xf32>
    %132 = vector.broadcast %111 : vector<1x32xf32> to vector<128x32xf32>
    %133 = arith.addf %131, %132 : vector<128x32xf32>
    %134 = arith.truncf %133 : vector<128x32xf32> to vector<128x32xbf16>
    %c0_51 = arith.constant 0 : index
    %c0_52 = arith.constant 0 : index
    %c0_53 = arith.constant 0 : index
    %135 = vector.load %arg12[%c0_51, %c0_52, %c0_53] : memref<1x32x128xbf16, #tpu.memory_space<vmem>>, vector<1x32x128xbf16>
    %136 = vector.shape_cast %135 : vector<1x32x128xbf16> to vector<32x128xbf16>
    %cst_54 = arith.constant dense<0.000000e+00> : vector<128x128xf32>
    %137 = tpu.matmul %134, %136, %cst_54 {dimension_numbers = #tpu.dot_dimension_numbers<[1], [0], [0], [1], [0, 0, 1, 1], [], []>} : vector<128x32xbf16>, vector<32x128xbf16>, vector<128x128xf32> -> vector<128x128xf32>
    %c0_55 = arith.constant 0 : index
    %c0_56 = arith.constant 0 : index
    %c0_57 = arith.constant 0 : index
    %138 = vector.load %arg13[%c0_55, %c0_56, %c0_57] : memref<1x1x128xf32, #tpu.memory_space<vmem>>, vector<1x1x128xf32>
    %139 = vector.shape_cast %138 : vector<1x1x128xf32> to vector<1x128xf32>
    %140 = vector.broadcast %139 : vector<1x128xf32> to vector<128x128xf32>
    %141 = arith.addf %137, %140 : vector<128x128xf32>
    %cst_58 = arith.constant 1.702000e+00 : f32
    %142 = vector.broadcast %cst_58 : f32 to vector<128x128xf32>
    %143 = arith.mulf %142, %141 : vector<128x128xf32>
    %144 = arith.negf %143 : vector<128x128xf32>
    %145 = math.exp %144 : vector<128x128xf32>
    %cst_59 = arith.constant 1.000000e+00 : f32
    %146 = vector.broadcast %cst_59 : f32 to vector<128x128xf32>
    %147 = arith.addf %146, %145 : vector<128x128xf32>
    %148 = arith.divf %146, %147 : vector<128x128xf32>
    %149 = arith.mulf %141, %148 : vector<128x128xf32>
    %150 = arith.truncf %149 : vector<128x128xf32> to vector<128x128xbf16>
    %c0_60 = arith.constant 0 : index
    %c0_61 = arith.constant 0 : index
    %c0_62 = arith.constant 0 : index
    %151 = vector.load %arg14[%c0_60, %c0_61, %c0_62] : memref<1x128x32xbf16, #tpu.memory_space<vmem>>, vector<1x128x32xbf16>
    %152 = vector.shape_cast %151 : vector<1x128x32xbf16> to vector<128x32xbf16>
    %cst_63 = arith.constant dense<0.000000e+00> : vector<128x32xf32>
    %153 = tpu.matmul %150, %152, %cst_63 {dimension_numbers = #tpu.dot_dimension_numbers<[1], [0], [0], [1], [0, 0, 1, 1], [], []>} : vector<128x128xbf16>, vector<128x32xbf16>, vector<128x32xf32> -> vector<128x32xf32>
    %c0_64 = arith.constant 0 : index
    %c0_65 = arith.constant 0 : index
    %c0_66 = arith.constant 0 : index
    %154 = vector.load %arg15[%c0_64, %c0_65, %c0_66] : memref<1x1x32xf32, #tpu.memory_space<vmem>>, vector<1x1x32xf32>
    %155 = vector.shape_cast %154 : vector<1x1x32xf32> to vector<1x32xf32>
    %156 = vector.broadcast %155 : vector<1x32xf32> to vector<128x32xf32>
    %157 = arith.addf %153, %156 : vector<128x32xf32>
    %158 = arith.addf %107, %157 : vector<128x32xf32>
    %c0_67 = arith.constant 0 : index
    %c0_68 = arith.constant 0 : index
    %159 = vector.load %arg20[%c0_67, %c0_68] : memref<128x32xf32, #tpu.memory_space<vmem>>, vector<128x32xf32>
    tpu.vector_store %arg20[%c0_67, %c0_68], %158 {strides = array<i32>} : memref<128x32xf32, #tpu.memory_space<vmem>>, vector<128x32xf32>,
    %c1_i32 = arith.constant 1 : i32
    %160 = arith.cmpi eq, %arg1, %c1_i32 : i32
    %161 = arith.extui %160 : i1 to i32
    %c0_i32_69 = arith.constant 0 : i32
    %162 = arith.cmpi ne, %161, %c0_i32_69 : i32
    scf.if %162 {
      %c8_i32 = arith.constant 8 : i32
      %163 = arith.muli %arg0, %c8_i32 : i32
      %c0_i32_70 = arith.constant 0 : i32
      %164 = arith.addi %163, %c0_i32_70 : i32
      %165 = arith.index_cast %164 : i32 to index
      %166 = memref.load %arg2[%165] : memref<8xi32, #tpu.memory_space<smem>>
      %c0_i32_71 = arith.constant 0 : i32
      %167 = arith.addi %c0_i32_71, %166 : i32
      %168 = arith.index_cast %167 : i32 to index
      %c0_72 = arith.constant 0 : index
      %169 = vector.load %arg20[%168, %c0_72] : memref<128x32xf32, #tpu.memory_space<vmem>>, vector<1x32xf32>
      %c8_i32_73 = arith.constant 8 : i32
      %170 = arith.muli %arg0, %c8_i32_73 : i32
      %c1_i32_74 = arith.constant 1 : i32
      %171 = arith.addi %170, %c1_i32_74 : i32
      %172 = arith.index_cast %171 : i32 to index
      %173 = memref.load %arg2[%172] : memref<8xi32, #tpu.memory_space<smem>>
      %c16_i32 = arith.constant 16 : i32
      %174 = arith.addi %c16_i32, %173 : i32
      %175 = arith.index_cast %174 : i32 to index
      %c0_75 = arith.constant 0 : index
      %176 = vector.load %arg20[%175, %c0_75] : memref<128x32xf32, #tpu.memory_space<vmem>>, vector<1x32xf32>
      %c8_i32_76 = arith.constant 8 : i32
      %177 = arith.muli %arg0, %c8_i32_76 : i32
      %c2_i32 = arith.constant 2 : i32
      %178 = arith.addi %177, %c2_i32 : i32
      %179 = arith.index_cast %178 : i32 to index
      %180 = memref.load %arg2[%179] : memref<8xi32, #tpu.memory_space<smem>>
      %c32_i32 = arith.constant 32 : i32
      %181 = arith.addi %c32_i32, %180 : i32
      %182 = arith.index_cast %181 : i32 to index
      %c0_77 = arith.constant 0 : index
      %183 = vector.load %arg20[%182, %c0_77] : memref<128x32xf32, #tpu.memory_space<vmem>>, vector<1x32xf32>
      %c8_i32_78 = arith.constant 8 : i32
      %184 = arith.muli %arg0, %c8_i32_78 : i32
      %c3_i32 = arith.constant 3 : i32
      %185 = arith.addi %184, %c3_i32 : i32
      %186 = arith.index_cast %185 : i32 to index
      %187 = memref.load %arg2[%186] : memref<8xi32, #tpu.memory_space<smem>>
      %c48_i32 = arith.constant 48 : i32
      %188 = arith.addi %c48_i32, %187 : i32
      %189 = arith.index_cast %188 : i32 to index
      %c0_79 = arith.constant 0 : index
      %190 = vector.load %arg20[%189, %c0_79] : memref<128x32xf32, #tpu.memory_space<vmem>>, vector<1x32xf32>
      %c8_i32_80 = arith.constant 8 : i32
      %191 = arith.muli %arg0, %c8_i32_80 : i32
      %c4_i32 = arith.constant 4 : i32
      %192 = arith.addi %191, %c4_i32 : i32
      %193 = arith.index_cast %192 : i32 to index
      %194 = memref.load %arg2[%193] : memref<8xi32, #tpu.memory_space<smem>>
      %c64_i32 = arith.constant 64 : i32
      %195 = arith.addi %c64_i32, %194 : i32
      %196 = arith.index_cast %195 : i32 to index
      %c0_81 = arith.constant 0 : index
      %197 = vector.load %arg20[%196, %c0_81] : memref<128x32xf32, #tpu.memory_space<vmem>>, vector<1x32xf32>
      %c8_i32_82 = arith.constant 8 : i32
      %198 = arith.muli %arg0, %c8_i32_82 : i32
      %c5_i32 = arith.constant 5 : i32
      %199 = arith.addi %198, %c5_i32 : i32
      %200 = arith.index_cast %199 : i32 to index
      %201 = memref.load %arg2[%200] : memref<8xi32, #tpu.memory_space<smem>>
      %c80_i32 = arith.constant 80 : i32
      %202 = arith.addi %c80_i32, %201 : i32
      %203 = arith.index_cast %202 : i32 to index
      %c0_83 = arith.constant 0 : index
      %204 = vector.load %arg20[%203, %c0_83] : memref<128x32xf32, #tpu.memory_space<vmem>>, vector<1x32xf32>
      %c8_i32_84 = arith.constant 8 : i32
      %205 = arith.muli %arg0, %c8_i32_84 : i32
      %c6_i32 = arith.constant 6 : i32
      %206 = arith.addi %205, %c6_i32 : i32
      %207 = arith.index_cast %206 : i32 to index
      %208 = memref.load %arg2[%207] : memref<8xi32, #tpu.memory_space<smem>>
      %c96_i32 = arith.constant 96 : i32
      %209 = arith.addi %c96_i32, %208 : i32
      %210 = arith.index_cast %209 : i32 to index
      %c0_85 = arith.constant 0 : index
      %211 = vector.load %arg20[%210, %c0_85] : memref<128x32xf32, #tpu.memory_space<vmem>>, vector<1x32xf32>
      %c8_i32_86 = arith.constant 8 : i32
      %212 = arith.muli %arg0, %c8_i32_86 : i32
      %c7_i32 = arith.constant 7 : i32
      %213 = arith.addi %212, %c7_i32 : i32
      %214 = arith.index_cast %213 : i32 to index
      %215 = memref.load %arg2[%214] : memref<8xi32, #tpu.memory_space<smem>>
      %c112_i32 = arith.constant 112 : i32
      %216 = arith.addi %c112_i32, %215 : i32
      %217 = arith.index_cast %216 : i32 to index
      %c0_87 = arith.constant 0 : index
      %218 = vector.load %arg20[%217, %c0_87] : memref<128x32xf32, #tpu.memory_space<vmem>>, vector<1x32xf32>
      %219 = tpu.concatenate %169, %176, %183, %190, %197, %204, %211, %218 in 0 : vector<1x32xf32>, vector<1x32xf32>, vector<1x32xf32>, vector<1x32xf32>, vector<1x32xf32>, vector<1x32xf32>, vector<1x32xf32>, vector<1x32xf32> -> vector<8x32xf32>
      %c0_88 = arith.constant 0 : index
      %c0_89 = arith.constant 0 : index
      %220 = vector.load %arg16[%c0_88, %c0_89] : memref<1x32xf32, #tpu.memory_space<vmem>>, vector<1x32xf32>
      %c0_90 = arith.constant 0 : index
      %c0_91 = arith.constant 0 : index
      %221 = vector.load %arg17[%c0_90, %c0_91] : memref<1x32xf32, #tpu.memory_space<vmem>>, vector<1x32xf32>
      %cst_92 = arith.constant dense<0.000000e+00> : vector<8xf32>
      %222 = vector.multi_reduction <add>, %219, %cst_92 [1] : vector<8x32xf32> to vector<8xf32>
      %223 = vector.shape_cast %222 : vector<8xf32> to vector<8x1xf32>
      %cst_93 = arith.constant 3.200000e+01 : f32
      %224 = vector.broadcast %cst_93 : f32 to vector<8x1xf32>
      %225 = arith.divf %223, %224 : vector<8x1xf32>
      %226 = vector.broadcast %225 : vector<8x1xf32> to vector<8x32xf32>
      %227 = arith.subf %219, %226 : vector<8x32xf32>
      %228 = arith.mulf %227, %227 : vector<8x32xf32>
      %cst_94 = arith.constant dense<0.000000e+00> : vector<8xf32>
      %229 = vector.multi_reduction <add>, %228, %cst_94 [1] : vector<8x32xf32> to vector<8xf32>
      %230 = vector.shape_cast %229 : vector<8xf32> to vector<8x1xf32>
      %cst_95 = arith.constant 3.200000e+01 : f32
      %231 = vector.broadcast %cst_95 : f32 to vector<8x1xf32>
      %232 = arith.divf %230, %231 : vector<8x1xf32>
      %233 = vector.broadcast %225 : vector<8x1xf32> to vector<8x32xf32>
      %234 = arith.subf %219, %233 : vector<8x32xf32>
      %cst_96 = arith.constant 9.99999974E-6 : f32
      %235 = vector.broadcast %cst_96 : f32 to vector<8x1xf32>
      %236 = arith.addf %232, %235 : vector<8x1xf32>
      %237 = math.rsqrt %236 : vector<8x1xf32>
      %238 = vector.broadcast %237 : vector<8x1xf32> to vector<8x32xf32>
      %239 = arith.mulf %234, %238 : vector<8x32xf32>
      %240 = vector.broadcast %220 : vector<1x32xf32> to vector<8x32xf32>
      %241 = arith.mulf %239, %240 : vector<8x32xf32>
      %242 = vector.broadcast %221 : vector<1x32xf32> to vector<8x32xf32>
      %243 = arith.addf %241, %242 : vector<8x32xf32>
      %244 = arith.truncf %243 : vector<8x32xf32> to vector<8x32xbf16>
      %c0_97 = arith.constant 0 : index
      %c0_98 = arith.constant 0 : index
      %245 = vector.load %arg18[%c0_97, %c0_98] : memref<32x32xbf16, #tpu.memory_space<vmem>>, vector<32x32xbf16>
      %cst_99 = arith.constant dense<0.000000e+00> : vector<8x32xf32>
      %246 = tpu.matmul %244, %245, %cst_99 {dimension_numbers = #tpu.dot_dimension_numbers<[1], [0], [0], [1], [0, 0, 1, 1], [], []>} : vector<8x32xbf16>, vector<32x32xbf16>, vector<8x32xf32> -> vector<8x32xf32>
      %c0_100 = arith.constant 0 : index
      %c0_101 = arith.constant 0 : index
      %247 = vector.load %arg19[%c0_100, %c0_101] : memref<8x32xf32, #tpu.memory_space<vmem>>, vector<8x32xf32>
      tpu.vector_store %arg19[%c0_100, %c0_101], %246 {strides = array<i32>} : memref<8x32xf32, #tpu.memory_space<vmem>>, vector<8x32xf32>,
    } else {
    }
    return
  }
  func.func @transform_0(%arg0: i32, %arg1: i32, %arg2: memref<8xi32, #tpu.memory_space<smem>>) -> (i32, i32) {
    %c0_i32 = arith.constant 0 : i32
    %c0_i32_0 = arith.constant 0 : i32
    return %arg0, %c0_i32 : i32, i32
  }
  func.func @transform_1(%arg0: i32, %arg1: i32, %arg2: memref<8xi32, #tpu.memory_space<smem>>) -> (i32, i32, i32) {
    %c0_i32 = arith.constant 0 : i32
    %c0_i32_0 = arith.constant 0 : i32
    %c0_i32_1 = arith.constant 0 : i32
    return %arg1, %c0_i32, %c0_i32_0 : i32, i32, i32
  }
  func.func @transform_2(%arg0: i32, %arg1: i32, %arg2: memref<8xi32, #tpu.memory_space<smem>>) -> (i32, i32, i32) {
    %c0_i32 = arith.constant 0 : i32
    %c0_i32_0 = arith.constant 0 : i32
    %c0_i32_1 = arith.constant 0 : i32
    return %arg1, %c0_i32, %c0_i32_0 : i32, i32, i32
  }
  func.func @transform_3(%arg0: i32, %arg1: i32, %arg2: memref<8xi32, #tpu.memory_space<smem>>) -> (i32, i32, i32) {
    %c0_i32 = arith.constant 0 : i32
    %c0_i32_0 = arith.constant 0 : i32
    %c0_i32_1 = arith.constant 0 : i32
    return %arg1, %c0_i32, %c0_i32_0 : i32, i32, i32
  }
  func.func @transform_4(%arg0: i32, %arg1: i32, %arg2: memref<8xi32, #tpu.memory_space<smem>>) -> (i32, i32, i32) {
    %c0_i32 = arith.constant 0 : i32
    %c0_i32_0 = arith.constant 0 : i32
    %c0_i32_1 = arith.constant 0 : i32
    return %arg1, %c0_i32, %c0_i32_0 : i32, i32, i32
  }
  func.func @transform_5(%arg0: i32, %arg1: i32, %arg2: memref<8xi32, #tpu.memory_space<smem>>) -> (i32, i32, i32) {
    %c0_i32 = arith.constant 0 : i32
    %c0_i32_0 = arith.constant 0 : i32
    %c0_i32_1 = arith.constant 0 : i32
    return %arg1, %c0_i32, %c0_i32_0 : i32, i32, i32
  }
  func.func @transform_6(%arg0: i32, %arg1: i32, %arg2: memref<8xi32, #tpu.memory_space<smem>>) -> (i32, i32, i32) {
    %c0_i32 = arith.constant 0 : i32
    %c0_i32_0 = arith.constant 0 : i32
    %c0_i32_1 = arith.constant 0 : i32
    return %arg1, %c0_i32, %c0_i32_0 : i32, i32, i32
  }
  func.func @transform_7(%arg0: i32, %arg1: i32, %arg2: memref<8xi32, #tpu.memory_space<smem>>) -> (i32, i32, i32) {
    %c0_i32 = arith.constant 0 : i32
    %c0_i32_0 = arith.constant 0 : i32
    %c0_i32_1 = arith.constant 0 : i32
    return %arg1, %c0_i32, %c0_i32_0 : i32, i32, i32
  }
  func.func @transform_8(%arg0: i32, %arg1: i32, %arg2: memref<8xi32, #tpu.memory_space<smem>>) -> (i32, i32, i32) {
    %c0_i32 = arith.constant 0 : i32
    %c0_i32_0 = arith.constant 0 : i32
    %c0_i32_1 = arith.constant 0 : i32
    return %arg1, %c0_i32, %c0_i32_0 : i32, i32, i32
  }
  func.func @transform_9(%arg0: i32, %arg1: i32, %arg2: memref<8xi32, #tpu.memory_space<smem>>) -> (i32, i32, i32) {
    %c0_i32 = arith.constant 0 : i32
    %c0_i32_0 = arith.constant 0 : i32
    %c0_i32_1 = arith.constant 0 : i32
    return %arg1, %c0_i32, %c0_i32_0 : i32, i32, i32
  }
  func.func @transform_10(%arg0: i32, %arg1: i32, %arg2: memref<8xi32, #tpu.memory_space<smem>>) -> (i32, i32, i32) {
    %c0_i32 = arith.constant 0 : i32
    %c0_i32_0 = arith.constant 0 : i32
    %c0_i32_1 = arith.constant 0 : i32
    return %arg1, %c0_i32, %c0_i32_0 : i32, i32, i32
  }
  func.func @transform_11(%arg0: i32, %arg1: i32, %arg2: memref<8xi32, #tpu.memory_space<smem>>) -> (i32, i32, i32) {
    %c0_i32 = arith.constant 0 : i32
    %c0_i32_0 = arith.constant 0 : i32
    %c0_i32_1 = arith.constant 0 : i32
    return %arg1, %c0_i32, %c0_i32_0 : i32, i32, i32
  }
  func.func @transform_12(%arg0: i32, %arg1: i32, %arg2: memref<8xi32, #tpu.memory_space<smem>>) -> (i32, i32, i32) {
    %c0_i32 = arith.constant 0 : i32
    %c0_i32_0 = arith.constant 0 : i32
    %c0_i32_1 = arith.constant 0 : i32
    return %arg1, %c0_i32, %c0_i32_0 : i32, i32, i32
  }
  func.func @transform_13(%arg0: i32, %arg1: i32, %arg2: memref<8xi32, #tpu.memory_space<smem>>) -> (i32, i32) {
    %c0_i32 = arith.constant 0 : i32
    %c0_i32_0 = arith.constant 0 : i32
    %c0_i32_1 = arith.constant 0 : i32
    return %c0_i32, %c0_i32_0 : i32, i32
  }
  func.func @transform_14(%arg0: i32, %arg1: i32, %arg2: memref<8xi32, #tpu.memory_space<smem>>) -> (i32, i32) {
    %c0_i32 = arith.constant 0 : i32
    %c0_i32_0 = arith.constant 0 : i32
    %c0_i32_1 = arith.constant 0 : i32
    return %c0_i32, %c0_i32_0 : i32, i32
  }
  func.func @transform_15(%arg0: i32, %arg1: i32, %arg2: memref<8xi32, #tpu.memory_space<smem>>) -> (i32, i32) {
    %c0_i32 = arith.constant 0 : i32
    %c0_i32_0 = arith.constant 0 : i32
    %c0_i32_1 = arith.constant 0 : i32
    return %c0_i32, %c0_i32_0 : i32, i32
  }
  func.func @transform_16(%arg0: i32, %arg1: i32, %arg2: memref<8xi32, #tpu.memory_space<smem>>) -> (i32, i32) {
    %c0_i32 = arith.constant 0 : i32
    %c0_i32_0 = arith.constant 0 : i32
    return %arg0, %c0_i32 : i32, i32
  }
}

</mosaic_0001>

<llo_original>
// kernel: tpu_custom_call.1
$region0: #{tpu_custom_call.1}
  #allocation0 [shape = 'u32[]', space=smem, size = 0x4, offset = 0x4, fixed_abs, tag = 'smem constant byte address 0x4 - core index']
  #allocation1 [shape = 'u32[144,128]{1,0:T(1,128)}', space=vmem, size = 0x12000, scoped, tag = 'internal scratch']
  #allocation2 [shape = 'f32[128,32]{1,0:T(8,128)}', space=vmem, size = 0x10000, scoped, tag = 'scratch operand']
  #allocation3 [shape = 'f32[128,32]{1,0:T(8,128)}', space=vmem, size = 0x10000, scoped, tag = 'scratch operand']
  #allocation4 [shape = 's32[1]{0}', space=sflag, size = 0x4, scoped, tag = 'scoped memory for tpu_custom_call.1']
  #allocation5 [shape = 'u8[512]{0}', space=smem, size = 0x200, scoped, tag = 'prefetched SMEM operand 0']
  %s0 = inlined_call_operand.vmem [shape: s32[8], index: 0, kind: input, shape index: {}]
  %s1 = inlined_call_operand.vmem [shape: f32[128,32], index: 1, kind: input, shape index: {}]
  %s2 = inlined_call_operand.vmem [shape: f32[2,1,32], index: 2, kind: input, shape index: {}]
  %s3 = inlined_call_operand.vmem [shape: f32[2,1,32], index: 3, kind: input, shape index: {}]
  %s4 = inlined_call_operand.vmem [shape: bf16[2,32,96], index: 4, kind: input, shape index: {}]
  %s5 = inlined_call_operand.vmem [shape: f32[2,1,96], index: 5, kind: input, shape index: {}]
  %s6 = inlined_call_operand.vmem [shape: bf16[2,32,32], index: 6, kind: input, shape index: {}]
  %s7 = inlined_call_operand.vmem [shape: f32[2,1,32], index: 7, kind: input, shape index: {}]
  %s8 = inlined_call_operand.vmem [shape: f32[2,1,32], index: 8, kind: input, shape index: {}]
  %s9 = inlined_call_operand.vmem [shape: f32[2,1,32], index: 9, kind: input, shape index: {}]
  %s10 = inlined_call_operand.vmem [shape: bf16[2,32,128], index: 10, kind: input, shape index: {}]
  %s11 = inlined_call_operand.vmem [shape: f32[2,1,128], index: 11, kind: input, shape index: {}]
  %s12 = inlined_call_operand.vmem [shape: bf16[2,128,32], index: 12, kind: input, shape index: {}]
  %s13 = inlined_call_operand.vmem [shape: f32[2,1,32], index: 13, kind: input, shape index: {}]
  %s14 = inlined_call_operand.vmem [shape: f32[1,32], index: 14, kind: input, shape index: {}]
  %s15 = inlined_call_operand.vmem [shape: f32[1,32], index: 15, kind: input, shape index: {}]
  %s16 = inlined_call_operand.vmem [shape: bf16[32,32], index: 16, kind: input, shape index: {}]
  %s17 = inlined_call_operand.hbm [shape: f32[8,32], index: 17, kind: output, shape index: {}]
  %s18 = sld [smem:[#allocation0]]
  $region105: #{tpu_custom_call.1} parent=0
    _
  %s20 = ssub.s32 1, %s18
  %s21 = scalar_select 0, %s20, %s18
  %s22 = sshll.u32 %s0, 4
  %s23 = int_to_ptr.vmem [resolvable:$true] %s22
  %25 = dma.vmem_to_smem %s23, 16, [#allocation5], [#allocation4]
  %26 = dma.done [#allocation4], 16
  %27 = sfence
  $region1: #{tpu_custom_call.1} parent=0
    #allocation6 [shape = 'u8[4096]{0}', space=vmem, size = 0x1000, scoped, tag = 'output window, operand 0, single buffered']
    #allocation7 [shape = 's32[2]{0}', space=sflag, size = 0x8, scoped, tag = 'scoped memory for tpu_custom_call.1']
    %28 = vsyncpa [#allocation7], 0
    loop: start=0, step=1, limit=4
    $region2: #{tpu_custom_call.1} parent=1 // loop_pre_header
      _
    $region3: #{tpu_custom_call.1} parent=1 // loop_header
      %s30 = sphi 0, %s34
      %p31 = scmp.ge.s32.totalorder %s30, 4
      %s37 = sphi 0, %s49
      %s38 = sphi 0, %s45
      %s39 = sphi 0, %s37
      %s40 = sphi 0, %s38
      %s41 = sphi 0, %s39
      %s42 = sphi 0, %s40
      %s52 = sphi 0, %s54
      %s55 = sphi 0, %s52
      %s56 = sphi 0, %s55
      %s72 = sphi 0, %s56
      %s78 = sphi 0, %s80
      %s81 = sphi 0, %s78
      %s82 = sphi 0, %s81
      %s98 = sphi 0, %s82
      %s104 = sphi 0, %s106
      %s107 = sphi 0, %s104
      %s108 = sphi 0, %s107
      %s124 = sphi 0, %s108
      %s130 = sphi 0, %s132
      %s133 = sphi 0, %s130
      %s134 = sphi 0, %s133
      %s150 = sphi 0, %s134
      %s156 = sphi 0, %s158
      %s159 = sphi 0, %s156
      %s160 = sphi 0, %s159
      %s176 = sphi 0, %s160
      %s182 = sphi 0, %s184
      %s185 = sphi 0, %s182
      %s186 = sphi 0, %s185
      %s202 = sphi 0, %s186
      %s208 = sphi 0, %s210
      %s211 = sphi 0, %s208
      %s212 = sphi 0, %s211
      %s228 = sphi 0, %s212
      %s234 = sphi 0, %s236
      %s237 = sphi 0, %s234
      %s238 = sphi 0, %s237
      %s254 = sphi 0, %s238
      %s260 = sphi 0, %s262
      %s263 = sphi 0, %s260
      %s264 = sphi 0, %s263
      %s280 = sphi 0, %s264
      %s286 = sphi 0, %s288
      %s289 = sphi 0, %s286
      %s290 = sphi 0, %s289
      %s306 = sphi 0, %s290
      %s312 = sphi 0, %s314
      %s315 = sphi 0, %s312
      %s316 = sphi 0, %s315
      %s332 = sphi 0, %s316
      %s338 = sphi 0, %s340
      %s341 = sphi 0, %s338
      %s342 = sphi 0, %s341
      %s358 = sphi 0, %s342
      %s364 = sphi 0, %s366
      %s367 = sphi 0, %s364
      %s368 = sphi 0, %s367
      %s384 = sphi 0, %s368
      %s388 = sphi 0, %s388
      %s390 = sphi 0, %s388
      %s391 = sphi 0, %s390
      %s405 = sphi 0, %s391
      %s409 = sphi 0, %s409
      %s411 = sphi 0, %s409
      %s412 = sphi 0, %s411
      %s426 = sphi 0, %s412
      %s430 = sphi 0, %s430
      %s432 = sphi 0, %s430
      %s433 = sphi 0, %s432
      %s447 = sphi 0, %s433
      %s453 = sphi 0, %s455
      %s456 = sphi 0, %s453
      %s457 = sphi 0, %s456
      %s473 = sphi 0, %s457
    $region4: #{tpu_custom_call.1} parent=1 // loop_header_branch
      %33 = sbr.rel (%p31) target = $region8
    $region5: #{tpu_custom_call.1} parent=1 // loop_body
      %s35 = ssub.s32 %s30, 1
      %s36 = ssub.s32 %s30, 2
      %s43 = sadd.s32 1, %s38
      %p44 = scmp.ge.s32.totalorder %s43, 2
      %s45 = scalar_select %p44, 0, %s43
      %s46 = sadd.s32 1, %s37
      %s47 = scalar_select %p44, %s46, %s37
      %p48 = scmp.ge.s32.totalorder %s47, 1
      %s49 = scalar_select %p48, 0, %s47
      %s50 = ssub.s32 %s37, %s49
      %p51 = scmp.eq.s32.totalorder %s50, 0
      %s53 = sadd.s32 %s52, 1
      %s54 = scalar_select %p51, %s52, %s53
      %p57 = pneg %p51
      %p58 = scmp.eq.s32.totalorder %s30, 1
      %p59 = por %p57, %p58
      %p60 = scmp.ne.s32.totalorder %s52, %s55
      %p61 = scmp.eq.s32.totalorder %s30, 0
      %p62 = por %p60, %p61
      %p63 = scmp.ne.s32.totalorder %s52, %s55
      %p64 = scmp.eq.s32.totalorder %s35, 1
      %p65 = por %p63, %p64
      %p66 = scmp.ne.s32.totalorder %s55, %s56
      %p67 = scmp.eq.s32.totalorder %s35, 0
      %p68 = por %p66, %p67
      %p69 = scmp.ne.s32.totalorder %s55, %s56
      %p70 = scmp.eq.s32.totalorder %s36, 1
      %p71 = por %p69, %p70
      %p73 = scmp.ne.s32.totalorder %s56, %s72
      %p74 = scmp.eq.s32.totalorder %s36, 0
      %p75 = por %p73, %p74
      %s76 = ssub.s32 %s38, %s45
      %p77 = scmp.eq.s32.totalorder %s76, 0
      %s79 = sadd.s32 %s78, 1
      %s80 = scalar_select %p77, %s78, %s79
      %p83 = pneg %p77
      %p84 = scmp.eq.s32.totalorder %s30, 1
      %p85 = por %p83, %p84
      %p86 = scmp.ne.s32.totalorder %s78, %s81
      %p87 = scmp.eq.s32.totalorder %s30, 0
      %p88 = por %p86, %p87
      %p89 = scmp.ne.s32.totalorder %s78, %s81
      %p90 = scmp.eq.s32.totalorder %s35, 1
      %p91 = por %p89, %p90
      %p92 = scmp.ne.s32.totalorder %s81, %s82
      %p93 = scmp.eq.s32.totalorder %s35, 0
      %p94 = por %p92, %p93
      %p95 = scmp.ne.s32.totalorder %s81, %s82
      %p96 = scmp.eq.s32.totalorder %s36, 1
      %p97 = por %p95, %p96
      %p99 = scmp.ne.s32.totalorder %s82, %s98
      %p100 = scmp.eq.s32.totalorder %s36, 0
      %p101 = por %p99, %p100
      %s102 = ssub.s32 %s38, %s45
      %p103 = scmp.eq.s32.totalorder %s102, 0
      %s105 = sadd.s32 %s104, 1
      %s106 = scalar_select %p103, %s104, %s105
      %p109 = pneg %p103
      %p110 = scmp.eq.s32.totalorder %s30, 1
      %p111 = por %p109, %p110
      %p112 = scmp.ne.s32.totalorder %s104, %s107
      %p113 = scmp.eq.s32.totalorder %s30, 0
      %p114 = por %p112, %p113
      %p115 = scmp.ne.s32.totalorder %s104, %s107
      %p116 = scmp.eq.s32.totalorder %s35, 1
      %p117 = por %p115, %p116
      %p118 = scmp.ne.s32.totalorder %s107, %s108
      %p119 = scmp.eq.s32.totalorder %s35, 0
      %p120 = por %p118, %p119
      %p121 = scmp.ne.s32.totalorder %s107, %s108
      %p122 = scmp.eq.s32.totalorder %s36, 1
      %p123 = por %p121, %p122
      %p125 = scmp.ne.s32.totalorder %s108, %s124
      %p126 = scmp.eq.s32.totalorder %s36, 0
      %p127 = por %p125, %p126
      %s128 = ssub.s32 %s38, %s45
      %p129 = scmp.eq.s32.totalorder %s128, 0
      %s131 = sadd.s32 %s130, 1
      %s132 = scalar_select %p129, %s130, %s131
      %p135 = pneg %p129
      %p136 = scmp.eq.s32.totalorder %s30, 1
      %p137 = por %p135, %p136
      %p138 = scmp.ne.s32.totalorder %s130, %s133
      %p139 = scmp.eq.s32.totalorder %s30, 0
      %p140 = por %p138, %p139
      %p141 = scmp.ne.s32.totalorder %s130, %s133
      %p142 = scmp.eq.s32.totalorder %s35, 1
      %p143 = por %p141, %p142
      %p144 = scmp.ne.s32.totalorder %s133, %s134
      %p145 = scmp.eq.s32.totalorder %s35, 0
      %p146 = por %p144, %p145
      %p147 = scmp.ne.s32.totalorder %s133, %s134
      %p148 = scmp.eq.s32.totalorder %s36, 1
      %p149 = por %p147, %p148
      %p151 = scmp.ne.s32.totalorder %s134, %s150
      %p152 = scmp.eq.s32.totalorder %s36, 0
      %p153 = por %p151, %p152
      %s154 = ssub.s32 %s38, %s45
      %p155 = scmp.eq.s32.totalorder %s154, 0
      %s157 = sadd.s32 %s156, 1
      %s158 = scalar_select %p155, %s156, %s157
      %p161 = pneg %p155
      %p162 = scmp.eq.s32.totalorder %s30, 1
      %p163 = por %p161, %p162
      %p164 = scmp.ne.s32.totalorder %s156, %s159
      %p165 = scmp.eq.s32.totalorder %s30, 0
      %p166 = por %p164, %p165
      %p167 = scmp.ne.s32.totalorder %s156, %s159
      %p168 = scmp.eq.s32.totalorder %s35, 1
      %p169 = por %p167, %p168
      %p170 = scmp.ne.s32.totalorder %s159, %s160
      %p171 = scmp.eq.s32.totalorder %s35, 0
      %p172 = por %p170, %p171
      %p173 = scmp.ne.s32.totalorder %s159, %s160
      %p174 = scmp.eq.s32.totalorder %s36, 1
      %p175 = por %p173, %p174
      %p177 = scmp.ne.s32.totalorder %s160, %s176
      %p178 = scmp.eq.s32.totalorder %s36, 0
      %p179 = por %p177, %p178
      %s180 = ssub.s32 %s38, %s45
      %p181 = scmp.eq.s32.totalorder %s180, 0
      %s183 = sadd.s32 %s182, 1
      %s184 = scalar_select %p181, %s182, %s183
      %p187 = pneg %p181
      %p188 = scmp.eq.s32.totalorder %s30, 1
      %p189 = por %p187, %p188
      %p190 = scmp.ne.s32.totalorder %s182, %s185
      %p191 = scmp.eq.s32.totalorder %s30, 0
      %p192 = por %p190, %p191
      %p193 = scmp.ne.s32.totalorder %s182, %s185
      %p194 = scmp.eq.s32.totalorder %s35, 1
      %p195 = por %p193, %p194
      %p196 = scmp.ne.s32.totalorder %s185, %s186
      %p197 = scmp.eq.s32.totalorder %s35, 0
      %p198 = por %p196, %p197
      %p199 = scmp.ne.s32.totalorder %s185, %s186
      %p200 = scmp.eq.s32.totalorder %s36, 1
      %p201 = por %p199, %p200
      %p203 = scmp.ne.s32.totalorder %s186, %s202
      %p204 = scmp.eq.s32.totalorder %s36, 0
      %p205 = por %p203, %p204
      %s206 = ssub.s32 %s38, %s45
      %p207 = scmp.eq.s32.totalorder %s206, 0
      %s209 = sadd.s32 %s208, 1
      %s210 = scalar_select %p207, %s208, %s209
      %p213 = pneg %p207
      %p214 = scmp.eq.s32.totalorder %s30, 1
      %p215 = por %p213, %p214
      %p216 = scmp.ne.s32.totalorder %s208, %s211
      %p217 = scmp.eq.s32.totalorder %s30, 0
      %p218 = por %p216, %p217
      %p219 = scmp.ne.s32.totalorder %s208, %s211
      %p220 = scmp.eq.s32.totalorder %s35, 1
      %p221 = por %p219, %p220
      %p222 = scmp.ne.s32.totalorder %s211, %s212
      %p223 = scmp.eq.s32.totalorder %s35, 0
      %p224 = por %p222, %p223
      %p225 = scmp.ne.s32.totalorder %s211, %s212
      %p226 = scmp.eq.s32.totalorder %s36, 1
      %p227 = por %p225, %p226
      %p229 = scmp.ne.s32.totalorder %s212, %s228
      %p230 = scmp.eq.s32.totalorder %s36, 0
      %p231 = por %p229, %p230
      %s232 = ssub.s32 %s38, %s45
      %p233 = scmp.eq.s32.totalorder %s232, 0
      %s235 = sadd.s32 %s234, 1
      %s236 = scalar_select %p233, %s234, %s235
      %p239 = pneg %p233
      %p240 = scmp.eq.s32.totalorder %s30, 1
      %p241 = por %p239, %p240
      %p242 = scmp.ne.s32.totalorder %s234, %s237
      %p243 = scmp.eq.s32.totalorder %s30, 0
      %p244 = por %p242, %p243
      %p245 = scmp.ne.s32.totalorder %s234, %s237
      %p246 = scmp.eq.s32.totalorder %s35, 1
      %p247 = por %p245, %p246
      %p248 = scmp.ne.s32.totalorder %s237, %s238
      %p249 = scmp.eq.s32.totalorder %s35, 0
      %p250 = por %p248, %p249
      %p251 = scmp.ne.s32.totalorder %s237, %s238
      %p252 = scmp.eq.s32.totalorder %s36, 1
      %p253 = por %p251, %p252
      %p255 = scmp.ne.s32.totalorder %s238, %s254
      %p256 = scmp.eq.s32.totalorder %s36, 0
      %p257 = por %p255, %p256
      %s258 = ssub.s32 %s38, %s45
      %p259 = scmp.eq.s32.totalorder %s258, 0
      %s261 = sadd.s32 %s260, 1
      %s262 = scalar_select %p259, %s260, %s261
      %p265 = pneg %p259
      %p266 = scmp.eq.s32.totalorder %s30, 1
      %p267 = por %p265, %p266
      %p268 = scmp.ne.s32.totalorder %s260, %s263
      %p269 = scmp.eq.s32.totalorder %s30, 0
      %p270 = por %p268, %p269
      %p271 = scmp.ne.s32.totalorder %s260, %s263
      %p272 = scmp.eq.s32.totalorder %s35, 1
      %p273 = por %p271, %p272
      %p274 = scmp.ne.s32.totalorder %s263, %s264
      %p275 = scmp.eq.s32.totalorder %s35, 0
      %p276 = por %p274, %p275
      %p277 = scmp.ne.s32.totalorder %s263, %s264
      %p278 = scmp.eq.s32.totalorder %s36, 1
      %p279 = por %p277, %p278
      %p281 = scmp.ne.s32.totalorder %s264, %s280
      %p282 = scmp.eq.s32.totalorder %s36, 0
      %p283 = por %p281, %p282
      %s284 = ssub.s32 %s38, %s45
      %p285 = scmp.eq.s32.totalorder %s284, 0
      %s287 = sadd.s32 %s286, 1
      %s288 = scalar_select %p285, %s286, %s287
      %p291 = pneg %p285
      %p292 = scmp.eq.s32.totalorder %s30, 1
      %p293 = por %p291, %p292
      %p294 = scmp.ne.s32.totalorder %s286, %s289
      %p295 = scmp.eq.s32.totalorder %s30, 0
      %p296 = por %p294, %p295
      %p297 = scmp.ne.s32.totalorder %s286, %s289
      %p298 = scmp.eq.s32.totalorder %s35, 1
      %p299 = por %p297, %p298
      %p300 = scmp.ne.s32.totalorder %s289, %s290
      %p301 = scmp.eq.s32.totalorder %s35, 0
      %p302 = por %p300, %p301
      %p303 = scmp.ne.s32.totalorder %s289, %s290
      %p304 = scmp.eq.s32.totalorder %s36, 1
      %p305 = por %p303, %p304
      %p307 = scmp.ne.s32.totalorder %s290, %s306
      %p308 = scmp.eq.s32.totalorder %s36, 0
      %p309 = por %p307, %p308
      %s310 = ssub.s32 %s38, %s45
      %p311 = scmp.eq.s32.totalorder %s310, 0
      %s313 = sadd.s32 %s312, 1
      %s314 = scalar_select %p311, %s312, %s313
      %p317 = pneg %p311
      %p318 = scmp.eq.s32.totalorder %s30, 1
      %p319 = por %p317, %p318
      %p320 = scmp.ne.s32.totalorder %s312, %s315
      %p321 = scmp.eq.s32.totalorder %s30, 0
      %p322 = por %p320, %p321
      %p323 = scmp.ne.s32.totalorder %s312, %s315
      %p324 = scmp.eq.s32.totalorder %s35, 1
      %p325 = por %p323, %p324
      %p326 = scmp.ne.s32.totalorder %s315, %s316
      %p327 = scmp.eq.s32.totalorder %s35, 0
      %p328 = por %p326, %p327
      %p329 = scmp.ne.s32.totalorder %s315, %s316
      %p330 = scmp.eq.s32.totalorder %s36, 1
      %p331 = por %p329, %p330
      %p333 = scmp.ne.s32.totalorder %s316, %s332
      %p334 = scmp.eq.s32.totalorder %s36, 0
      %p335 = por %p333, %p334
      %s336 = ssub.s32 %s38, %s45
      %p337 = scmp.eq.s32.totalorder %s336, 0
      %s339 = sadd.s32 %s338, 1
      %s340 = scalar_select %p337, %s338, %s339
      %p343 = pneg %p337
      %p344 = scmp.eq.s32.totalorder %s30, 1
      %p345 = por %p343, %p344
      %p346 = scmp.ne.s32.totalorder %s338, %s341
      %p347 = scmp.eq.s32.totalorder %s30, 0
      %p348 = por %p346, %p347
      %p349 = scmp.ne.s32.totalorder %s338, %s341
      %p350 = scmp.eq.s32.totalorder %s35, 1
      %p351 = por %p349, %p350
      %p352 = scmp.ne.s32.totalorder %s341, %s342
      %p353 = scmp.eq.s32.totalorder %s35, 0
      %p354 = por %p352, %p353
      %p355 = scmp.ne.s32.totalorder %s341, %s342
      %p356 = scmp.eq.s32.totalorder %s36, 1
      %p357 = por %p355, %p356
      %p359 = scmp.ne.s32.totalorder %s342, %s358
      %p360 = scmp.eq.s32.totalorder %s36, 0
      %p361 = por %p359, %p360
      %s362 = ssub.s32 %s38, %s45
      %p363 = scmp.eq.s32.totalorder %s362, 0
      %s365 = sadd.s32 %s364, 1
      %s366 = scalar_select %p363, %s364, %s365
      %p369 = pneg %p363
      %p370 = scmp.eq.s32.totalorder %s30, 1
      %p371 = por %p369, %p370
      %p372 = scmp.ne.s32.totalorder %s364, %s367
      %p373 = scmp.eq.s32.totalorder %s30, 0
      %p374 = por %p372, %p373
      %p375 = scmp.ne.s32.totalorder %s364, %s367
      %p376 = scmp.eq.s32.totalorder %s35, 1
      %p377 = por %p375, %p376
      %p378 = scmp.ne.s32.totalorder %s367, %s368
      %p379 = scmp.eq.s32.totalorder %s35, 0
      %p380 = por %p378, %p379
      %p381 = scmp.ne.s32.totalorder %s367, %s368
      %p382 = scmp.eq.s32.totalorder %s36, 1
      %p383 = por %p381, %p382
      %p385 = scmp.ne.s32.totalorder %s368, %s384
      %p386 = scmp.eq.s32.totalorder %s36, 0
      %p387 = por %p385, %p386
      %s389 = sadd.s32 %s388, 1
      %p392 = scmp.eq.s32.totalorder %s30, 1
      %p393 = scmp.ne.s32.totalorder %s388, %s390
      %p394 = scmp.eq.s32.totalorder %s30, 0
      %p395 = por %p393, %p394
      %p396 = scmp.ne.s32.totalorder %s388, %s390
      %p397 = scmp.eq.s32.totalorder %s35, 1
      %p398 = por %p396, %p397
      %p399 = scmp.ne.s32.totalorder %s390, %s391
      %p400 = scmp.eq.s32.totalorder %s35, 0
      %p401 = por %p399, %p400
      %p402 = scmp.ne.s32.totalorder %s390, %s391
      %p403 = scmp.eq.s32.totalorder %s36, 1
      %p404 = por %p402, %p403
      %p406 = scmp.ne.s32.totalorder %s391, %s405
      %p407 = scmp.eq.s32.totalorder %s36, 0
      %p408 = por %p406, %p407
      %s410 = sadd.s32 %s409, 1
      %p413 = scmp.eq.s32.totalorder %s30, 1
      %p414 = scmp.ne.s32.totalorder %s409, %s411
      %p415 = scmp.eq.s32.totalorder %s30, 0
      %p416 = por %p414, %p415
      %p417 = scmp.ne.s32.totalorder %s409, %s411
      %p418 = scmp.eq.s32.totalorder %s35, 1
      %p419 = por %p417, %p418
      %p420 = scmp.ne.s32.totalorder %s411, %s412
      %p421 = scmp.eq.s32.totalorder %s35, 0
      %p422 = por %p420, %p421
      %p423 = scmp.ne.s32.totalorder %s411, %s412
      %p424 = scmp.eq.s32.totalorder %s36, 1
      %p425 = por %p423, %p424
      %p427 = scmp.ne.s32.totalorder %s412, %s426
      %p428 = scmp.eq.s32.totalorder %s36, 0
      %p429 = por %p427, %p428
      %s431 = sadd.s32 %s430, 1
      %p434 = scmp.eq.s32.totalorder %s30, 1
      %p435 = scmp.ne.s32.totalorder %s430, %s432
      %p436 = scmp.eq.s32.totalorder %s30, 0
      %p437 = por %p435, %p436
      %p438 = scmp.ne.s32.totalorder %s430, %s432
      %p439 = scmp.eq.s32.totalorder %s35, 1
      %p440 = por %p438, %p439
      %p441 = scmp.ne.s32.totalorder %s432, %s433
      %p442 = scmp.eq.s32.totalorder %s35, 0
      %p443 = por %p441, %p442
      %p444 = scmp.ne.s32.totalorder %s432, %s433
      %p445 = scmp.eq.s32.totalorder %s36, 1
      %p446 = por %p444, %p445
      %p448 = scmp.ne.s32.totalorder %s433, %s447
      %p449 = scmp.eq.s32.totalorder %s36, 0
      %p450 = por %p448, %p449
      %s451 = ssub.s32 %s37, %s49
      %p452 = scmp.eq.s32.totalorder %s451, 0
      %s454 = sadd.s32 %s453, 1
      %s455 = scalar_select %p452, %s453, %s454
      %p458 = pneg %p452
      %p459 = scmp.eq.s32.totalorder %s30, 1
      %p460 = por %p458, %p459
      %p461 = scmp.ne.s32.totalorder %s453, %s456
      %p462 = scmp.eq.s32.totalorder %s30, 0
      %p463 = por %p461, %p462
      %p464 = scmp.ne.s32.totalorder %s453, %s456
      %p465 = scmp.eq.s32.totalorder %s35, 1
      %p466 = por %p464, %p465
      %p467 = scmp.ne.s32.totalorder %s456, %s457
      %p468 = scmp.eq.s32.totalorder %s35, 0
      %p469 = por %p467, %p468
      %p470 = scmp.ne.s32.totalorder %s456, %s457
      %p471 = scmp.eq.s32.totalorder %s36, 1
      %p472 = por %p470, %p471
      %p474 = scmp.ne.s32.totalorder %s457, %s473
      %p475 = scmp.eq.s32.totalorder %s36, 0
      %p476 = por %p474, %p475
      %p477 = scmp.le.s32.totalorder 1, %s30
      %p478 = scmp.lt.s32.totalorder %s30, 3
      %p479 = pnand %p477, %p478
      %p480 = pneg %p479
      // Predicated region
      $region9: #{tpu_custom_call.1} parent=5 // pred_check
        _
      $region10: #{tpu_custom_call.1} parent=5 // pred_check_branch
        %482 = sbr.rel (%p479) target = $region12
      $region11: #{tpu_custom_call.1} parent=5 // pred_region
        %s483 = ssub.s32 %s30, 1
        // Predicated region
        $region13: #{tpu_custom_call.1} parent=11 // pred_check
          %p484 = pneg %p68
        $region14: #{tpu_custom_call.1} parent=11 // pred_check_branch
          %486 = sbr.rel (%p484) target = $region16
        $region15: #{tpu_custom_call.1} parent=11 // pred_region
          %s487 = smul.u32 16, %s39
          %p488 = scmp.lt.s32.totalorder %s487, 15
          %s489 = scalar_select %p488, %s487, 15
          %s490 = smul.addr %s489, 8
          %s491 = scalar_lea.vmem %s1, %s490
          %s492 = smul.u32 16, %s39
        $region16: #{tpu_custom_call.1} parent=11 // pred_fallthru
          _
        // Predicated region
        $region17: #{tpu_custom_call.1} parent=11 // pred_check
          %p493 = pneg %p401
        $region18: #{tpu_custom_call.1} parent=11 // pred_check_branch
          %495 = sbr.rel (%p493) target = $region20
        $region19: #{tpu_custom_call.1} parent=11 // pred_region
          _
        $region20: #{tpu_custom_call.1} parent=11 // pred_fallthru
          _
        // Predicated region
        $region21: #{tpu_custom_call.1} parent=11 // pred_check
          %p496 = pneg %p422
        $region22: #{tpu_custom_call.1} parent=11 // pred_check_branch
          %498 = sbr.rel (%p496) target = $region24
        $region23: #{tpu_custom_call.1} parent=11 // pred_region
          _
        $region24: #{tpu_custom_call.1} parent=11 // pred_fallthru
          _
        // Predicated region
        $region25: #{tpu_custom_call.1} parent=11 // pred_check
          %p499 = pneg %p443
        $region26: #{tpu_custom_call.1} parent=11 // pred_check_branch
          %501 = sbr.rel (%p499) target = $region28
        $region27: #{tpu_custom_call.1} parent=11 // pred_region
          _
        $region28: #{tpu_custom_call.1} parent=11 // pred_fallthru
          _
      $region12: #{tpu_custom_call.1} parent=5 // pred_fallthru
        _
      %p502 = scmp.lt.s32.totalorder %s30, 2
      // Predicated region
      $region29: #{tpu_custom_call.1} parent=5 // pred_check
        %p503 = pneg %p502
      $region30: #{tpu_custom_call.1} parent=5 // pred_check_branch
        %505 = sbr.rel (%p503) target = $region32
      $region31: #{tpu_custom_call.1} parent=5 // pred_region
        // Predicated region
        $region33: #{tpu_custom_call.1} parent=31 // pred_check
          %p506 = pneg %p88
        $region34: #{tpu_custom_call.1} parent=31 // pred_check_branch
          %508 = sbr.rel (%p506) target = $region36
        $region35: #{tpu_custom_call.1} parent=31 // pred_region
          %p509 = scmp.lt.s32.totalorder %s38, 1
          %s510 = scalar_select %p509, %s38, 1
          %s511 = scalar_lea.vmem %s2, %s510
        $region36: #{tpu_custom_call.1} parent=31 // pred_fallthru
          _
        // Predicated region
        $region37: #{tpu_custom_call.1} parent=31 // pred_check
          %p512 = pneg %p114
        $region38: #{tpu_custom_call.1} parent=31 // pred_check_branch
          %514 = sbr.rel (%p512) target = $region40
        $region39: #{tpu_custom_call.1} parent=31 // pred_region
          %p515 = scmp.lt.s32.totalorder %s38, 1
          %s516 = scalar_select %p515, %s38, 1
          %s517 = scalar_lea.vmem %s3, %s516
        $region40: #{tpu_custom_call.1} parent=31 // pred_fallthru
          _
        // Predicated region
        $region41: #{tpu_custom_call.1} parent=31 // pred_check
          %p518 = pneg %p140
        $region42: #{tpu_custom_call.1} parent=31 // pred_check_branch
          %520 = sbr.rel (%p518) target = $region44
        $region43: #{tpu_custom_call.1} parent=31 // pred_region
          %p521 = scmp.lt.s32.totalorder %s38, 1
          %s522 = scalar_select %p521, %s38, 1
          %s523 = smul.addr %s522, 4
          %s524 = smul.addr %s523, 4
          %s525 = scalar_lea.vmem %s4, %s524
        $region44: #{tpu_custom_call.1} parent=31 // pred_fallthru
          _
        // Predicated region
        $region45: #{tpu_custom_call.1} parent=31 // pred_check
          %p526 = pneg %p166
        $region46: #{tpu_custom_call.1} parent=31 // pred_check_branch
          %528 = sbr.rel (%p526) target = $region48
        $region47: #{tpu_custom_call.1} parent=31 // pred_region
          %p529 = scmp.lt.s32.totalorder %s38, 1
          %s530 = scalar_select %p529, %s38, 1
          %s531 = scalar_lea.vmem %s5, %s530
        $region48: #{tpu_custom_call.1} parent=31 // pred_fallthru
          _
        // Predicated region
        $region49: #{tpu_custom_call.1} parent=31 // pred_check
          %p532 = pneg %p192
        $region50: #{tpu_custom_call.1} parent=31 // pred_check_branch
          %534 = sbr.rel (%p532) target = $region52
        $region51: #{tpu_custom_call.1} parent=31 // pred_region
          %p535 = scmp.lt.s32.totalorder %s38, 1
          %s536 = scalar_select %p535, %s38, 1
          %s537 = smul.addr %s536, 4
          %s538 = smul.addr %s537, 4
          %s539 = scalar_lea.vmem %s6, %s538
        $region52: #{tpu_custom_call.1} parent=31 // pred_fallthru
          _
        // Predicated region
        $region53: #{tpu_custom_call.1} parent=31 // pred_check
          %p540 = pneg %p218
        $region54: #{tpu_custom_call.1} parent=31 // pred_check_branch
          %542 = sbr.rel (%p540) target = $region56
        $region55: #{tpu_custom_call.1} parent=31 // pred_region
          %p543 = scmp.lt.s32.totalorder %s38, 1
          %s544 = scalar_select %p543, %s38, 1
          %s545 = scalar_lea.vmem %s7, %s544
        $region56: #{tpu_custom_call.1} parent=31 // pred_fallthru
          _
        // Predicated region
        $region57: #{tpu_custom_call.1} parent=31 // pred_check
          %p546 = pneg %p244
        $region58: #{tpu_custom_call.1} parent=31 // pred_check_branch
          %548 = sbr.rel (%p546) target = $region60
        $region59: #{tpu_custom_call.1} parent=31 // pred_region
          %p549 = scmp.lt.s32.totalorder %s38, 1
          %s550 = scalar_select %p549, %s38, 1
          %s551 = scalar_lea.vmem %s8, %s550
        $region60: #{tpu_custom_call.1} parent=31 // pred_fallthru
          _
        // Predicated region
        $region61: #{tpu_custom_call.1} parent=31 // pred_check
          %p552 = pneg %p270
        $region62: #{tpu_custom_call.1} parent=31 // pred_check_branch
          %554 = sbr.rel (%p552) target = $region64
        $region63: #{tpu_custom_call.1} parent=31 // pred_region
          %p555 = scmp.lt.s32.totalorder %s38, 1
          %s556 = scalar_select %p555, %s38, 1
          %s557 = scalar_lea.vmem %s9, %s556
        $region64: #{tpu_custom_call.1} parent=31 // pred_fallthru
          _
        // Predicated region
        $region65: #{tpu_custom_call.1} parent=31 // pred_check
          %p558 = pneg %p296
        $region66: #{tpu_custom_call.1} parent=31 // pred_check_branch
          %560 = sbr.rel (%p558) target = $region68
        $region67: #{tpu_custom_call.1} parent=31 // pred_region
          %p561 = scmp.lt.s32.totalorder %s38, 1
          %s562 = scalar_select %p561, %s38, 1
          %s563 = smul.addr %s562, 4
          %s564 = smul.addr %s563, 4
          %s565 = scalar_lea.vmem %s10, %s564
        $region68: #{tpu_custom_call.1} parent=31 // pred_fallthru
          _
        // Predicated region
        $region69: #{tpu_custom_call.1} parent=31 // pred_check
          %p566 = pneg %p322
        $region70: #{tpu_custom_call.1} parent=31 // pred_check_branch
          %568 = sbr.rel (%p566) target = $region72
        $region71: #{tpu_custom_call.1} parent=31 // pred_region
          %p569 = scmp.lt.s32.totalorder %s38, 1
          %s570 = scalar_select %p569, %s38, 1
          %s571 = scalar_lea.vmem %s11, %s570
        $region72: #{tpu_custom_call.1} parent=31 // pred_fallthru
          _
        // Predicated region
        $region73: #{tpu_custom_call.1} parent=31 // pred_check
          %p572 = pneg %p348
        $region74: #{tpu_custom_call.1} parent=31 // pred_check_branch
          %574 = sbr.rel (%p572) target = $region76
        $region75: #{tpu_custom_call.1} parent=31 // pred_region
          %p575 = scmp.lt.s32.totalorder %s38, 1
          %s576 = scalar_select %p575, %s38, 1
          %s577 = smul.addr %s576, 16
          %s578 = smul.addr %s577, 4
          %s579 = scalar_lea.vmem %s12, %s578
        $region76: #{tpu_custom_call.1} parent=31 // pred_fallthru
          _
        // Predicated region
        $region77: #{tpu_custom_call.1} parent=31 // pred_check
          %p580 = pneg %p374
        $region78: #{tpu_custom_call.1} parent=31 // pred_check_branch
          %582 = sbr.rel (%p580) target = $region80
        $region79: #{tpu_custom_call.1} parent=31 // pred_region
          %p583 = scmp.lt.s32.totalorder %s38, 1
          %s584 = scalar_select %p583, %s38, 1
          %s585 = scalar_lea.vmem %s13, %s584
        $region80: #{tpu_custom_call.1} parent=31 // pred_fallthru
          _
      $region32: #{tpu_custom_call.1} parent=5 // pred_fallthru
        _
      %p586 = scmp.le.s32.totalorder 1, %s30
      %p587 = scmp.lt.s32.totalorder %s30, 3
      %p588 = pnand %p586, %p587
      %p589 = pneg %p588
      // Predicated region
      $region81: #{tpu_custom_call.1} parent=5 // pred_check
        _
      $region82: #{tpu_custom_call.1} parent=5 // pred_check_branch
        %591 = sbr.rel (%p588) target = $region84
      $region83: #{tpu_custom_call.1} parent=5 // pred_region
        %s592 = ssub.s32 %s30, 1
        %s593 = smul.u32 16, %s39
        %p594 = scmp.lt.s32.totalorder %s593, 15
        %s595 = scalar_select %p594, %s593, 15
        %s596 = smul.addr %s595, 8
        %s597 = scalar_lea.vmem %s1, %s596
        %p598 = pneg %p68
        %p599 = pneg %p65
        %p600 = scmp.lt.s32.totalorder %s40, 1
        %s601 = scalar_select %p600, %s40, 1
        %s602 = scalar_lea.vmem %s2, %s601
        %p603 = pneg %p94
        %p604 = pneg %p91
        %p605 = scmp.lt.s32.totalorder %s40, 1
        %s606 = scalar_select %p605, %s40, 1
        %s607 = scalar_lea.vmem %s3, %s606
        %p608 = pneg %p120
        %p609 = pneg %p117
        %p610 = scmp.lt.s32.totalorder %s40, 1
        %s611 = scalar_select %p610, %s40, 1
        %s612 = smul.addr %s611, 4
        %s613 = smul.addr %s612, 4
        %s614 = scalar_lea.vmem %s4, %s613
        %p615 = pneg %p146
        %p616 = pneg %p143
        %p617 = scmp.lt.s32.totalorder %s40, 1
        %s618 = scalar_select %p617, %s40, 1
        %s619 = scalar_lea.vmem %s5, %s618
        %p620 = pneg %p172
        %p621 = pneg %p169
        %p622 = scmp.lt.s32.totalorder %s40, 1
        %s623 = scalar_select %p622, %s40, 1
        %s624 = smul.addr %s623, 4
        %s625 = smul.addr %s624, 4
        %s626 = scalar_lea.vmem %s6, %s625
        %p627 = pneg %p198
        %p628 = pneg %p195
        %p629 = scmp.lt.s32.totalorder %s40, 1
        %s630 = scalar_select %p629, %s40, 1
        %s631 = scalar_lea.vmem %s7, %s630
        %p632 = pneg %p224
        %p633 = pneg %p221
        %p634 = scmp.lt.s32.totalorder %s40, 1
        %s635 = scalar_select %p634, %s40, 1
        %s636 = scalar_lea.vmem %s8, %s635
        %p637 = pneg %p250
        %p638 = pneg %p247
        %p639 = scmp.lt.s32.totalorder %s40, 1
        %s640 = scalar_select %p639, %s40, 1
        %s641 = scalar_lea.vmem %s9, %s640
        %p642 = pneg %p276
        %p643 = pneg %p273
        %p644 = scmp.lt.s32.totalorder %s40, 1
        %s645 = scalar_select %p644, %s40, 1
        %s646 = smul.addr %s645, 4
        %s647 = smul.addr %s646, 4
        %s648 = scalar_lea.vmem %s10, %s647
        %p649 = pneg %p302
        %p650 = pneg %p299
        %p651 = scmp.lt.s32.totalorder %s40, 1
        %s652 = scalar_select %p651, %s40, 1
        %s653 = scalar_lea.vmem %s11, %s652
        %p654 = pneg %p328
        %p655 = pneg %p325
        %p656 = scmp.lt.s32.totalorder %s40, 1
        %s657 = scalar_select %p656, %s40, 1
        %s658 = smul.addr %s657, 16
        %s659 = smul.addr %s658, 4
        %s660 = scalar_lea.vmem %s12, %s659
        %p661 = pneg %p354
        %p662 = pneg %p351
        %p663 = scmp.lt.s32.totalorder %s40, 1
        %s664 = scalar_select %p663, %s40, 1
        %s665 = scalar_lea.vmem %s13, %s664
        %p666 = pneg %p380
        %p667 = pneg %p377
        %p668 = pneg %p401
        %p669 = pneg %p398
        %p670 = pneg %p422
        %p671 = pneg %p419
        %p672 = pneg %p443
        %p673 = pneg %p440
        %p674 = pneg %p469
        %p675 = pneg %p466
        %s676 = smul.u32 16, %s39
        %p677 = scmp.lt.s32.totalorder %s676, 15
        %s678 = scalar_select %p677, %s676, 15
        %s679 = smul.addr %s678, 8
        %s680 = scalar_lea.vmem %s1, %s679
        %s681 = smul.u32 16, %s39
        %p682 = scmp.lt.s32.totalorder %s40, 1
        %s683 = scalar_select %p682, %s40, 1
        %s684 = scalar_lea.vmem %s2, %s683
        %p685 = scmp.lt.s32.totalorder %s40, 1
        %s686 = scalar_select %p685, %s40, 1
        %s687 = scalar_lea.vmem %s3, %s686
        %p688 = scmp.lt.s32.totalorder %s40, 1
        %s689 = scalar_select %p688, %s40, 1
        %s690 = smul.addr %s689, 4
        %s691 = smul.addr %s690, 4
        %s692 = scalar_lea.vmem %s4, %s691
        %p693 = scmp.lt.s32.totalorder %s40, 1
        %s694 = scalar_select %p693, %s40, 1
        %s695 = scalar_lea.vmem %s5, %s694
        %p696 = scmp.lt.s32.totalorder %s40, 1
        %s697 = scalar_select %p696, %s40, 1
        %s698 = smul.addr %s697, 4
        %s699 = smul.addr %s698, 4
        %s700 = scalar_lea.vmem %s6, %s699
        %p701 = scmp.lt.s32.totalorder %s40, 1
        %s702 = scalar_select %p701, %s40, 1
        %s703 = scalar_lea.vmem %s7, %s702
        %p704 = scmp.lt.s32.totalorder %s40, 1
        %s705 = scalar_select %p704, %s40, 1
        %s706 = scalar_lea.vmem %s8, %s705
        %p707 = scmp.lt.s32.totalorder %s40, 1
        %s708 = scalar_select %p707, %s40, 1
        %s709 = scalar_lea.vmem %s9, %s708
        %p710 = scmp.lt.s32.totalorder %s40, 1
        %s711 = scalar_select %p710, %s40, 1
        %s712 = smul.addr %s711, 4
        %s713 = smul.addr %s712, 4
        %s714 = scalar_lea.vmem %s10, %s713
        %p715 = scmp.lt.s32.totalorder %s40, 1
        %s716 = scalar_select %p715, %s40, 1
        %s717 = scalar_lea.vmem %s11, %s716
        %p718 = scmp.lt.s32.totalorder %s40, 1
        %s719 = scalar_select %p718, %s40, 1
        %s720 = smul.addr %s719, 16
        %s721 = smul.addr %s720, 4
        %s722 = scalar_lea.vmem %s12, %s721
        %p723 = scmp.lt.s32.totalorder %s40, 1
        %s724 = scalar_select %p723, %s40, 1
        %s725 = scalar_lea.vmem %s13, %s724
        %p727 = scmp.eq.s32.totalorder %s40, 0
        // Predicated region
        $region85: #{tpu_custom_call.1} parent=83 // pred_check
          %p728 = pneg %p727
        $region86: #{tpu_custom_call.1} parent=83 // pred_check_branch
          %730 = sbr.rel (%p728) target = $region88
        $region87: #{tpu_custom_call.1} parent=83 // pred_region
          %v731 = vld [vmem:[%s680] sm:$0xff]
          %v732 = vld [vmem:[%s680 + $0x8] sm:$0xff]
          %v733 = vld [vmem:[%s680 + $0x10] sm:$0xff]
          %v734 = vld [vmem:[%s680 + $0x18] sm:$0xff]
          %v735 = vld [vmem:[%s680 + $0x20] sm:$0xff]
          %v736 = vld [vmem:[%s680 + $0x28] sm:$0xff]
          %v737 = vld [vmem:[%s680 + $0x30] sm:$0xff]
          %v738 = vld [vmem:[%s680 + $0x38] sm:$0xff]
          %v739 = vld [vmem:[%s680 + $0x40] sm:$0xff]
          %v740 = vld [vmem:[%s680 + $0x48] sm:$0xff]
          %v741 = vld [vmem:[%s680 + $0x50] sm:$0xff]
          %v742 = vld [vmem:[%s680 + $0x58] sm:$0xff]
          %v743 = vld [vmem:[%s680 + $0x60] sm:$0xff]
          %v744 = vld [vmem:[%s680 + $0x68] sm:$0xff]
          %v745 = vld [vmem:[%s680 + $0x70] sm:$0xff]
          %v746 = vld [vmem:[%s680 + $0x78] sm:$0xff]
          %vm747 = vcmask 261120
          %748 = vst.msk [vmem:[#allocation2] sm:$0xff] %vm747, %v731
          %749 = vst.msk [vmem:[#allocation2 + $0x8] sm:$0xff] %vm747, %v732
          %750 = vst.msk [vmem:[#allocation2 + $0x10] sm:$0xff] %vm747, %v733
          %751 = vst.msk [vmem:[#allocation2 + $0x18] sm:$0xff] %vm747, %v734
          %752 = vst.msk [vmem:[#allocation2 + $0x20] sm:$0xff] %vm747, %v735
          %753 = vst.msk [vmem:[#allocation2 + $0x28] sm:$0xff] %vm747, %v736
          %754 = vst.msk [vmem:[#allocation2 + $0x30] sm:$0xff] %vm747, %v737
          %755 = vst.msk [vmem:[#allocation2 + $0x38] sm:$0xff] %vm747, %v738
          %756 = vst.msk [vmem:[#allocation2 + $0x40] sm:$0xff] %vm747, %v739
          %757 = vst.msk [vmem:[#allocation2 + $0x48] sm:$0xff] %vm747, %v740
          %758 = vst.msk [vmem:[#allocation2 + $0x50] sm:$0xff] %vm747, %v741
          %759 = vst.msk [vmem:[#allocation2 + $0x58] sm:$0xff] %vm747, %v742
          %760 = vst.msk [vmem:[#allocation2 + $0x60] sm:$0xff] %vm747, %v743
          %761 = vst.msk [vmem:[#allocation2 + $0x68] sm:$0xff] %vm747, %v744
          %762 = vst.msk [vmem:[#allocation2 + $0x70] sm:$0xff] %vm747, %v745
          %763 = vst.msk [vmem:[#allocation2 + $0x78] sm:$0xff] %vm747, %v746
        $region88: #{tpu_custom_call.1} parent=83 // pred_fallthru
          _
        %v764 = vld [vmem:[#allocation2] sm:$0xff]
        %v765 = vld [vmem:[#allocation2 + $0x8] sm:$0xff]
        %v766 = vld [vmem:[#allocation2 + $0x10] sm:$0xff]
        %v767 = vld [vmem:[#allocation2 + $0x18] sm:$0xff]
        %v768 = vld [vmem:[#allocation2 + $0x20] sm:$0xff]
        %v769 = vld [vmem:[#allocation2 + $0x28] sm:$0xff]
        %v770 = vld [vmem:[#allocation2 + $0x30] sm:$0xff]
        %v771 = vld [vmem:[#allocation2 + $0x38] sm:$0xff]
        %v772 = vld [vmem:[#allocation2 + $0x40] sm:$0xff]
        %v773 = vld [vmem:[#allocation2 + $0x48] sm:$0xff]
        %v774 = vld [vmem:[#allocation2 + $0x50] sm:$0xff]
        %v775 = vld [vmem:[#allocation2 + $0x58] sm:$0xff]
        %v776 = vld [vmem:[#allocation2 + $0x60] sm:$0xff]
        %v777 = vld [vmem:[#allocation2 + $0x68] sm:$0xff]
        %v778 = vld [vmem:[#allocation2 + $0x70] sm:$0xff]
        %v779 = vld [vmem:[#allocation2 + $0x78] sm:$0xff]
        %v780 = vld [vmem:[%s684] sm:$0x1]
        %v781 = vld [vmem:[%s687] sm:$0x1]
        %vm782 = vcmask 261120
        %v783 = vsel %vm782, %v764, 0.0
        %784 = vadd.xlane.f32.xlu0 %v783
        %v785 = vpop.xlane.xlu0 %784
        %v786 = vsel %vm782, %v765, 0.0
        %787 = vadd.xlane.f32.xlu0 %v786
        %v788 = vpop.xlane.xlu0 %787
        %v789 = vsel %vm782, %v766, 0.0
        %790 = vadd.xlane.f32.xlu0 %v789
        %v791 = vpop.xlane.xlu0 %790
        %v792 = vsel %vm782, %v767, 0.0
        %793 = vadd.xlane.f32.xlu0 %v792
        %v794 = vpop.xlane.xlu0 %793
        %v795 = vsel %vm782, %v768, 0.0
        %796 = vadd.xlane.f32.xlu0 %v795
        %v797 = vpop.xlane.xlu0 %796
        %v798 = vsel %vm782, %v769, 0.0
        %799 = vadd.xlane.f32.xlu0 %v798
        %v800 = vpop.xlane.xlu0 %799
        %v801 = vsel %vm782, %v770, 0.0
        %802 = vadd.xlane.f32.xlu0 %v801
        %v803 = vpop.xlane.xlu0 %802
        %v804 = vsel %vm782, %v771, 0.0
        %805 = vadd.xlane.f32.xlu0 %v804
        %v806 = vpop.xlane.xlu0 %805
        %v807 = vsel %vm782, %v772, 0.0
        %808 = vadd.xlane.f32.xlu0 %v807
        %v809 = vpop.xlane.xlu0 %808
        %v810 = vsel %vm782, %v773, 0.0
        %811 = vadd.xlane.f32.xlu0 %v810
        %v812 = vpop.xlane.xlu0 %811
        %v813 = vsel %vm782, %v774, 0.0
        %814 = vadd.xlane.f32.xlu0 %v813
        %v815 = vpop.xlane.xlu0 %814
        %v816 = vsel %vm782, %v775, 0.0
        %817 = vadd.xlane.f32.xlu0 %v816
        %v818 = vpop.xlane.xlu0 %817
        %v819 = vsel %vm782, %v776, 0.0
        %820 = vadd.xlane.f32.xlu0 %v819
        %v821 = vpop.xlane.xlu0 %820
        %v822 = vsel %vm782, %v777, 0.0
        %823 = vadd.xlane.f32.xlu0 %v822
        %v824 = vpop.xlane.xlu0 %823
        %v825 = vsel %vm782, %v778, 0.0
        %826 = vadd.xlane.f32.xlu0 %v825
        %v827 = vpop.xlane.xlu0 %826
        %v828 = vsel %vm782, %v779, 0.0
        %829 = vadd.xlane.f32.xlu0 %v828
        %v830 = vpop.xlane.xlu0 %829
        %v831 = vrcp.pop 32.0
        %v832 = vmul.f32 %v785, %v831
        %v833 = vmul.f32 %v788, %v831
        %v834 = vmul.f32 %v791, %v831
        %v835 = vmul.f32 %v794, %v831
        %v836 = vmul.f32 %v797, %v831
        %v837 = vmul.f32 %v800, %v831
        %v838 = vmul.f32 %v803, %v831
        %v839 = vmul.f32 %v806, %v831
        %v840 = vmul.f32 %v809, %v831
        %v841 = vmul.f32 %v812, %v831
        %v842 = vmul.f32 %v815, %v831
        %v843 = vmul.f32 %v818, %v831
        %v844 = vmul.f32 %v821, %v831
        %v845 = vmul.f32 %v824, %v831
        %v846 = vmul.f32 %v827, %v831
        %v847 = vmul.f32 %v830, %v831
        %v848 = vsub.f32 %v764, %v832
        %v849 = vsub.f32 %v765, %v833
        %v850 = vsub.f32 %v766, %v834
        %v851 = vsub.f32 %v767, %v835
        %v852 = vsub.f32 %v768, %v836
        %v853 = vsub.f32 %v769, %v837
        %v854 = vsub.f32 %v770, %v838
        %v855 = vsub.f32 %v771, %v839
        %v856 = vsub.f32 %v772, %v840
        %v857 = vsub.f32 %v773, %v841
        %v858 = vsub.f32 %v774, %v842
        %v859 = vsub.f32 %v775, %v843
        %v860 = vsub.f32 %v776, %v844
        %v861 = vsub.f32 %v777, %v845
        %v862 = vsub.f32 %v778, %v846
        %v863 = vsub.f32 %v779, %v847
        %v864 = vmul.f32 %v848, %v848
        %v865 = vmul.f32 %v849, %v849
        %v866 = vmul.f32 %v850, %v850
        %v867 = vmul.f32 %v851, %v851
        %v868 = vmul.f32 %v852, %v852
        %v869 = vmul.f32 %v853, %v853
        %v870 = vmul.f32 %v854, %v854
        %v871 = vmul.f32 %v855, %v855
        %v872 = vmul.f32 %v856, %v856
        %v873 = vmul.f32 %v857, %v857
        %v874 = vmul.f32 %v858, %v858
        %v875 = vmul.f32 %v859, %v859
        %v876 = vmul.f32 %v860, %v860
        %v877 = vmul.f32 %v861, %v861
        %v878 = vmul.f32 %v862, %v862
        %v879 = vmul.f32 %v863, %v863
        %v880 = vsel %vm782, %v864, 0.0
        %881 = vadd.xlane.f32.xlu0 %v880
        %v882 = vpop.xlane.xlu0 %881
        %v883 = vsel %vm782, %v865, 0.0
        %884 = vadd.xlane.f32.xlu0 %v883
        %v885 = vpop.xlane.xlu0 %884
        %v886 = vsel %vm782, %v866, 0.0
        %887 = vadd.xlane.f32.xlu0 %v886
        %v888 = vpop.xlane.xlu0 %887
        %v889 = vsel %vm782, %v867, 0.0
        %890 = vadd.xlane.f32.xlu0 %v889
        %v891 = vpop.xlane.xlu0 %890
        %v892 = vsel %vm782, %v868, 0.0
        %893 = vadd.xlane.f32.xlu0 %v892
        %v894 = vpop.xlane.xlu0 %893
        %v895 = vsel %vm782, %v869, 0.0
        %896 = vadd.xlane.f32.xlu0 %v895
        %v897 = vpop.xlane.xlu0 %896
        %v898 = vsel %vm782, %v870, 0.0
        %899 = vadd.xlane.f32.xlu0 %v898
        %v900 = vpop.xlane.xlu0 %899
        %v901 = vsel %vm782, %v871, 0.0
        %902 = vadd.xlane.f32.xlu0 %v901
        %v903 = vpop.xlane.xlu0 %902
        %v904 = vsel %vm782, %v872, 0.0
        %905 = vadd.xlane.f32.xlu0 %v904
        %v906 = vpop.xlane.xlu0 %905
        %v907 = vsel %vm782, %v873, 0.0
        %908 = vadd.xlane.f32.xlu0 %v907
        %v909 = vpop.xlane.xlu0 %908
        %v910 = vsel %vm782, %v874, 0.0
        %911 = vadd.xlane.f32.xlu0 %v910
        %v912 = vpop.xlane.xlu0 %911
        %v913 = vsel %vm782, %v875, 0.0
        %914 = vadd.xlane.f32.xlu0 %v913
        %v915 = vpop.xlane.xlu0 %914
        %v916 = vsel %vm782, %v876, 0.0
        %917 = vadd.xlane.f32.xlu0 %v916
        %v918 = vpop.xlane.xlu0 %917
        %v919 = vsel %vm782, %v877, 0.0
        %920 = vadd.xlane.f32.xlu0 %v919
        %v921 = vpop.xlane.xlu0 %920
        %v922 = vsel %vm782, %v878, 0.0
        %923 = vadd.xlane.f32.xlu0 %v922
        %v924 = vpop.xlane.xlu0 %923
        %v925 = vsel %vm782, %v879, 0.0
        %926 = vadd.xlane.f32.xlu0 %v925
        %v927 = vpop.xlane.xlu0 %926
        %v928 = vmul.f32 %v882, %v831
        %v929 = vmul.f32 %v885, %v831
        %v930 = vmul.f32 %v888, %v831
        %v931 = vmul.f32 %v891, %v831
        %v932 = vmul.f32 %v894, %v831
        %v933 = vmul.f32 %v897, %v831
        %v934 = vmul.f32 %v900, %v831
        %v935 = vmul.f32 %v903, %v831
        %v936 = vmul.f32 %v906, %v831
        %v937 = vmul.f32 %v909, %v831
        %v938 = vmul.f32 %v912, %v831
        %v939 = vmul.f32 %v915, %v831
        %v940 = vmul.f32 %v918, %v831
        %v941 = vmul.f32 %v921, %v831
        %v942 = vmul.f32 %v924, %v831
        %v943 = vmul.f32 %v927, %v831
        %v944 = vadd.f32 %v928, 1e-05
        %v945 = vadd.f32 %v929, 1e-05
        %v946 = vadd.f32 %v930, 1e-05
        %v947 = vadd.f32 %v931, 1e-05
        %v948 = vadd.f32 %v932, 1e-05
        %v949 = vadd.f32 %v933, 1e-05
        %v950 = vadd.f32 %v934, 1e-05
        %v951 = vadd.f32 %v935, 1e-05
        %v952 = vadd.f32 %v936, 1e-05
        %v953 = vadd.f32 %v937, 1e-05
        %v954 = vadd.f32 %v938, 1e-05
        %v955 = vadd.f32 %v939, 1e-05
        %v956 = vadd.f32 %v940, 1e-05
        %v957 = vadd.f32 %v941, 1e-05
        %v958 = vadd.f32 %v942, 1e-05
        %v959 = vadd.f32 %v943, 1e-05
        %v960 = vrsqrt.pop %v944
        %v961 = vrsqrt.pop %v945
        %v962 = vrsqrt.pop %v946
        %v963 = vrsqrt.pop %v947
        %v964 = vrsqrt.pop %v948
        %v965 = vrsqrt.pop %v949
        %v966 = vrsqrt.pop %v950
        %v967 = vrsqrt.pop %v951
        %v968 = vrsqrt.pop %v952
        %v969 = vrsqrt.pop %v953
        %v970 = vrsqrt.pop %v954
        %v971 = vrsqrt.pop %v955
        %v972 = vrsqrt.pop %v956
        %v973 = vrsqrt.pop %v957
        %v974 = vrsqrt.pop %v958
        %v975 = vrsqrt.pop %v959
        %v976 = vmul.f32 %v848, %v960
        %v977 = vmul.f32 %v849, %v961
        %v978 = vmul.f32 %v850, %v962
        %v979 = vmul.f32 %v851, %v963
        %v980 = vmul.f32 %v852, %v964
        %v981 = vmul.f32 %v853, %v965
        %v982 = vmul.f32 %v854, %v966
        %v983 = vmul.f32 %v855, %v967
        %v984 = vmul.f32 %v856, %v968
        %v985 = vmul.f32 %v857, %v969
        %v986 = vmul.f32 %v858, %v970
        %v987 = vmul.f32 %v859, %v971
        %v988 = vmul.f32 %v860, %v972
        %v989 = vmul.f32 %v861, %v973
        %v990 = vmul.f32 %v862, %v974
        %v991 = vmul.f32 %v863, %v975
        %v993 = vlaneseq
        %v994 = vshrl.u32 %v993, 7
        %v995 = vsub.s32 0, %v994
        %v996 = vrot.slane %v780, %v995
        %v998 = vmul.f32 %v976, %v996
        %v999 = vmul.f32 %v977, %v996
        %v1000 = vmul.f32 %v978, %v996
        %v1001 = vmul.f32 %v979, %v996
        %v1002 = vmul.f32 %v980, %v996
        %v1003 = vmul.f32 %v981, %v996
        %v1004 = vmul.f32 %v982, %v996
        %v1005 = vmul.f32 %v983, %v996
        %v1006 = vmul.f32 %v984, %v996
        %v1007 = vmul.f32 %v985, %v996
        %v1008 = vmul.f32 %v986, %v996
        %v1009 = vmul.f32 %v987, %v996
        %v1010 = vmul.f32 %v988, %v996
        %v1011 = vmul.f32 %v989, %v996
        %v1012 = vmul.f32 %v990, %v996
        %v1013 = vmul.f32 %v991, %v996
        %v1015 = vlaneseq
        %v1016 = vshrl.u32 %v1015, 7
        %v1017 = vsub.s32 0, %v1016
        %v1018 = vrot.slane %v781, %v1017
        %v1020 = vadd.f32 %v998, %v1018
        %v1021 = vadd.f32 %v999, %v1018
        %v1022 = vadd.f32 %v1000, %v1018
        %v1023 = vadd.f32 %v1001, %v1018
        %v1024 = vadd.f32 %v1002, %v1018
        %v1025 = vadd.f32 %v1003, %v1018
        %v1026 = vadd.f32 %v1004, %v1018
        %v1027 = vadd.f32 %v1005, %v1018
        %v1028 = vadd.f32 %v1006, %v1018
        %v1029 = vadd.f32 %v1007, %v1018
        %v1030 = vadd.f32 %v1008, %v1018
        %v1031 = vadd.f32 %v1009, %v1018
        %v1032 = vadd.f32 %v1010, %v1018
        %v1033 = vadd.f32 %v1011, %v1018
        %v1034 = vadd.f32 %v1012, %v1018
        %v1035 = vadd.f32 %v1013, %v1018
        %v1036 = vpack.c.bf16 %v1021, %v1020
        %v1037 = vpack.c.bf16 %v1023, %v1022
        %v1038 = vpack.c.bf16 %v1025, %v1024
        %v1039 = vpack.c.bf16 %v1027, %v1026
        %v1040 = vpack.c.bf16 %v1029, %v1028
        %v1041 = vpack.c.bf16 %v1031, %v1030
        %v1042 = vpack.c.bf16 %v1033, %v1032
        %v1043 = vpack.c.bf16 %v1035, %v1034
        %v1044 = vld [vmem:[%s692] sm:$0xf]
        %v1045 = vld [vmem:[%s692 + $0x4] sm:$0xf]
        %v1046 = vld [vmem:[%s692 + $0x8] sm:$0xf]
        %v1047 = vld [vmem:[%s692 + $0xc] sm:$0xf]
        %v1048 = vld [vmem:[%s695] sm:$0x1]
        %v1050 = vlaneseq
        %v1051 = vshrl.u32 %v1050, 7
        %v1052 = vsub.s32 0, %v1051
        %v1053 = vrot.slane %v1048, %v1052
        %v1059 = vunpack.c.l.b16 %v1044
        %v1060 = vunpack.c.l.b16 %v1045
        %v1061 = vunpack.c.l.b16 %v1046
        %v1062 = vunpack.c.l.b16 %v1047
        %v1063 = vpack.c.b16 %v1060, %v1059
        %v1064 = vpack.c.b16 %v1062, %v1061
        %v1068 = vsel %vm782, %v1036, 0
        %v1071 = vsel %vm782, %v1037, 0
        %v1074 = vsel %vm782, %v1038, 0
        %v1077 = vsel %vm782, %v1039, 0
        %v1080 = vsel %vm782, %v1040, 0
        %v1083 = vsel %vm782, %v1041, 0
        %v1086 = vsel %vm782, %v1042, 0
        %v1089 = vsel %vm782, %v1043, 0
        %1091 = vmatprep.subr.bf16.mxu0 0
        %1092 = vmatpush1.bf16.msra.mxu0 0
        %1093 = vmatprep.subr.bf16.mxu0 0
        %1094 = vmatpush1.bf16.msra.mxu0 0
        %1095 = vmatprep.subr.bf16.mxu0 0
        %1096 = vmatpush1.bf16.msra.mxu0 0
        %1097 = vmatprep.subr.bf16.mxu0 0
        %1098 = vmatpush1.bf16.msra.mxu0 0
        %1099 = vmatprep.subr.bf16.mxu0 0
        %1100 = vmatpush1.bf16.msra.mxu0 0
        %1101 = vmatprep.subr.bf16.mxu0 0
        %1102 = vmatpush1.bf16.msra.mxu0 0
        %1103 = vmatprep.subr.bf16.mxu0 0
        %1104 = vmatpush1.bf16.msra.mxu0 %v1064
        %1105 = vmatprep.subr.bf16.mxu0 0
        %1106 = vmatpush1.bf16.msra.mxu0 %v1063
        %1107 = vmatprep.subr.bf16.mxu0 0
        %1108 = vmatpush2.bf16.msra.mxu0 0
        %1109 = vmatprep.subr.bf16.mxu0 0
        %1110 = vmatpush2.bf16.msra.mxu0 0
        %1111 = vmatprep.subr.bf16.mxu0 0
        %1112 = vmatpush2.bf16.msra.mxu0 0
        %1113 = vmatprep.subr.bf16.mxu0 0
        %1114 = vmatpush2.bf16.msra.mxu0 0
        %1115 = vmatprep.subr.bf16.mxu0 0
        %1116 = vmatpush2.bf16.msra.mxu0 0
        %1117 = vmatprep.subr.bf16.mxu0 0
        %1118 = vmatpush2.bf16.msra.mxu0 0
        %1119 = vmatprep.subr.bf16.mxu0 0
        %1120 = vmatpush2.bf16.msra.mxu0 0
        %1121 = vmatprep.subr.bf16.mxu0 0
        %1122 = vmatpush2.bf16.msra.mxu0 0
        %1123 = vmatprep.mubr.bf16.mxu0 0
        %1124 = vmatmul.mubr.bf16.gmra.mxu0 %v1068
        %v1125 = vpop.f32.mrf.mxu0
        %v1126 = vadd.f32 %v1053, %v1125
        %v1127 = vpop.f32.mrf.mxu0
        %v1128 = vpop.f32.mrf.mxu0
        %v1129 = vadd.f32 %v1053, %v1128
        %v1130 = vpop.f32.mrf.mxu0
        %1131 = vmatprep.mubr.bf16.mxu0 0
        %1132 = vmatmul.mubr.bf16.gmra.mxu0 %v1071
        %v1133 = vpop.f32.mrf.mxu0
        %v1134 = vadd.f32 %v1053, %v1133
        %v1135 = vpop.f32.mrf.mxu0
        %v1136 = vpop.f32.mrf.mxu0
        %v1137 = vadd.f32 %v1053, %v1136
        %v1138 = vpop.f32.mrf.mxu0
        %1139 = vmatprep.mubr.bf16.mxu0 0
        %1140 = vmatmul.mubr.bf16.gmra.mxu0 %v1074
        %v1141 = vpop.f32.mrf.mxu0
        %v1142 = vadd.f32 %v1053, %v1141
        %v1143 = vpop.f32.mrf.mxu0
        %v1144 = vpop.f32.mrf.mxu0
        %v1145 = vadd.f32 %v1053, %v1144
        %v1146 = vpop.f32.mrf.mxu0
        %1147 = vmatprep.mubr.bf16.mxu0 0
        %1148 = vmatmul.mubr.bf16.gmra.mxu0 %v1077
        %v1149 = vpop.f32.mrf.mxu0
        %v1150 = vadd.f32 %v1053, %v1149
        %v1151 = vpop.f32.mrf.mxu0
        %v1152 = vpop.f32.mrf.mxu0
        %v1153 = vadd.f32 %v1053, %v1152
        %v1154 = vpop.f32.mrf.mxu0
        %1155 = vmatprep.mubr.bf16.mxu0 0
        %1156 = vmatmul.mubr.bf16.gmra.mxu0 %v1080
        %v1157 = vpop.f32.mrf.mxu0
        %v1158 = vadd.f32 %v1053, %v1157
        %v1159 = vpop.f32.mrf.mxu0
        %v1160 = vpop.f32.mrf.mxu0
        %v1161 = vadd.f32 %v1053, %v1160
        %v1162 = vpop.f32.mrf.mxu0
        %1163 = vmatprep.mubr.bf16.mxu0 0
        %1164 = vmatmul.mubr.bf16.gmra.mxu0 %v1083
        %v1165 = vpop.f32.mrf.mxu0
        %v1166 = vadd.f32 %v1053, %v1165
        %v1167 = vpop.f32.mrf.mxu0
        %v1168 = vpop.f32.mrf.mxu0
        %v1169 = vadd.f32 %v1053, %v1168
        %v1170 = vpop.f32.mrf.mxu0
        %1171 = vmatprep.mubr.bf16.mxu0 0
        %1172 = vmatmul.mubr.bf16.gmra.mxu0 %v1086
        %v1173 = vpop.f32.mrf.mxu0
        %v1174 = vadd.f32 %v1053, %v1173
        %v1175 = vpop.f32.mrf.mxu0
        %v1176 = vpop.f32.mrf.mxu0
        %v1177 = vadd.f32 %v1053, %v1176
        %v1178 = vpop.f32.mrf.mxu0
        %1179 = vmatprep.mubr.bf16.mxu0 0
        %1180 = vmatmul.mubr.bf16.gmra.mxu0 %v1089
        %v1181 = vpop.f32.mrf.mxu0
        %v1182 = vadd.f32 %v1053, %v1181
        %v1183 = vpop.f32.mrf.mxu0
        %v1184 = vpop.f32.mrf.mxu0
        %v1185 = vadd.f32 %v1053, %v1184
        %v1186 = vpop.f32.mrf.mxu0
        %1187 = vdwg.mxu0
        %v1188 = vmul.f32 %v1126, 0.35355338
        %v1189 = vmul.f32 %v1129, 0.35355338
        %v1190 = vmul.f32 %v1134, 0.35355338
        %v1191 = vmul.f32 %v1137, 0.35355338
        %v1192 = vmul.f32 %v1142, 0.35355338
        %v1193 = vmul.f32 %v1145, 0.35355338
        %v1194 = vmul.f32 %v1150, 0.35355338
        %v1195 = vmul.f32 %v1153, 0.35355338
        %v1196 = vmul.f32 %v1158, 0.35355338
        %v1197 = vmul.f32 %v1161, 0.35355338
        %v1198 = vmul.f32 %v1166, 0.35355338
        %v1199 = vmul.f32 %v1169, 0.35355338
        %v1200 = vmul.f32 %v1174, 0.35355338
        %v1201 = vmul.f32 %v1177, 0.35355338
        %v1202 = vmul.f32 %v1182, 0.35355338
        %v1203 = vmul.f32 %v1185, 0.35355338
        %1220 = vrot.lane.b32.xlu0 %v1188, 120
        %v1221 = vpop.permute.xlu0 %1220
        %1222 = vrot.lane.b32.xlu0 %v1189, 120
        %v1223 = vpop.permute.xlu0 %1222
        %1224 = vrot.lane.b32.xlu0 %v1190, 120
        %v1225 = vpop.permute.xlu0 %1224
        %1226 = vrot.lane.b32.xlu0 %v1191, 120
        %v1227 = vpop.permute.xlu0 %1226
        %1228 = vrot.lane.b32.xlu0 %v1192, 120
        %v1229 = vpop.permute.xlu0 %1228
        %1230 = vrot.lane.b32.xlu0 %v1193, 120
        %v1231 = vpop.permute.xlu0 %1230
        %1232 = vrot.lane.b32.xlu0 %v1194, 120
        %v1233 = vpop.permute.xlu0 %1232
        %1234 = vrot.lane.b32.xlu0 %v1195, 120
        %v1235 = vpop.permute.xlu0 %1234
        %1236 = vrot.lane.b32.xlu0 %v1196, 120
        %v1237 = vpop.permute.xlu0 %1236
        %1238 = vrot.lane.b32.xlu0 %v1197, 120
        %v1239 = vpop.permute.xlu0 %1238
        %1240 = vrot.lane.b32.xlu0 %v1198, 120
        %v1241 = vpop.permute.xlu0 %1240
        %1242 = vrot.lane.b32.xlu0 %v1199, 120
        %v1243 = vpop.permute.xlu0 %1242
        %1244 = vrot.lane.b32.xlu0 %v1200, 120
        %v1245 = vpop.permute.xlu0 %1244
        %1246 = vrot.lane.b32.xlu0 %v1201, 120
        %v1247 = vpop.permute.xlu0 %1246
        %1248 = vrot.lane.b32.xlu0 %v1202, 120
        %v1249 = vpop.permute.xlu0 %1248
        %1250 = vrot.lane.b32.xlu0 %v1203, 120
        %v1251 = vpop.permute.xlu0 %1250
        %1268 = vrot.lane.b32.xlu0 %v1188, 112
        %v1269 = vpop.permute.xlu0 %1268
        %1270 = vrot.lane.b32.xlu0 %v1189, 112
        %v1271 = vpop.permute.xlu0 %1270
        %1272 = vrot.lane.b32.xlu0 %v1190, 112
        %v1273 = vpop.permute.xlu0 %1272
        %1274 = vrot.lane.b32.xlu0 %v1191, 112
        %v1275 = vpop.permute.xlu0 %1274
        %1276 = vrot.lane.b32.xlu0 %v1192, 112
        %v1277 = vpop.permute.xlu0 %1276
        %1278 = vrot.lane.b32.xlu0 %v1193, 112
        %v1279 = vpop.permute.xlu0 %1278
        %1280 = vrot.lane.b32.xlu0 %v1194, 112
        %v1281 = vpop.permute.xlu0 %1280
        %1282 = vrot.lane.b32.xlu0 %v1195, 112
        %v1283 = vpop.permute.xlu0 %1282
        %1284 = vrot.lane.b32.xlu0 %v1196, 112
        %v1285 = vpop.permute.xlu0 %1284
        %1286 = vrot.lane.b32.xlu0 %v1197, 112
        %v1287 = vpop.permute.xlu0 %1286
        %1288 = vrot.lane.b32.xlu0 %v1198, 112
        %v1289 = vpop.permute.xlu0 %1288
        %1290 = vrot.lane.b32.xlu0 %v1199, 112
        %v1291 = vpop.permute.xlu0 %1290
        %1292 = vrot.lane.b32.xlu0 %v1200, 112
        %v1293 = vpop.permute.xlu0 %1292
        %1294 = vrot.lane.b32.xlu0 %v1201, 112
        %v1295 = vpop.permute.xlu0 %1294
        %1296 = vrot.lane.b32.xlu0 %v1202, 112
        %v1297 = vpop.permute.xlu0 %1296
        %1298 = vrot.lane.b32.xlu0 %v1203, 112
        %v1299 = vpop.permute.xlu0 %1298
        %1316 = vrot.lane.b32.xlu0 %v1188, 104
        %v1317 = vpop.permute.xlu0 %1316
        %1318 = vrot.lane.b32.xlu0 %v1189, 104
        %v1319 = vpop.permute.xlu0 %1318
        %1320 = vrot.lane.b32.xlu0 %v1190, 104
        %v1321 = vpop.permute.xlu0 %1320
        %1322 = vrot.lane.b32.xlu0 %v1191, 104
        %v1323 = vpop.permute.xlu0 %1322
        %1324 = vrot.lane.b32.xlu0 %v1192, 104
        %v1325 = vpop.permute.xlu0 %1324
        %1326 = vrot.lane.b32.xlu0 %v1193, 104
        %v1327 = vpop.permute.xlu0 %1326
        %1328 = vrot.lane.b32.xlu0 %v1194, 104
        %v1329 = vpop.permute.xlu0 %1328
        %1330 = vrot.lane.b32.xlu0 %v1195, 104
        %v1331 = vpop.permute.xlu0 %1330
        %1332 = vrot.lane.b32.xlu0 %v1196, 104
        %v1333 = vpop.permute.xlu0 %1332
        %1334 = vrot.lane.b32.xlu0 %v1197, 104
        %v1335 = vpop.permute.xlu0 %1334
        %1336 = vrot.lane.b32.xlu0 %v1198, 104
        %v1337 = vpop.permute.xlu0 %1336
        %1338 = vrot.lane.b32.xlu0 %v1199, 104
        %v1339 = vpop.permute.xlu0 %1338
        %1340 = vrot.lane.b32.xlu0 %v1200, 104
        %v1341 = vpop.permute.xlu0 %1340
        %1342 = vrot.lane.b32.xlu0 %v1201, 104
        %v1343 = vpop.permute.xlu0 %1342
        %1344 = vrot.lane.b32.xlu0 %v1202, 104
        %v1345 = vpop.permute.xlu0 %1344
        %1346 = vrot.lane.b32.xlu0 %v1203, 104
        %v1347 = vpop.permute.xlu0 %1346
        %v1364 = vpack.c.bf16 %v1189, %v1188
        %v1365 = vpack.c.bf16 %v1191, %v1190
        %v1366 = vpack.c.bf16 %v1193, %v1192
        %v1367 = vpack.c.bf16 %v1195, %v1194
        %v1368 = vpack.c.bf16 %v1197, %v1196
        %v1369 = vpack.c.bf16 %v1199, %v1198
        %v1370 = vpack.c.bf16 %v1201, %v1200
        %v1371 = vpack.c.bf16 %v1203, %v1202
        %v1372 = vpack.c.bf16 %v1223, %v1221
        %v1373 = vpack.c.bf16 %v1227, %v1225
        %v1374 = vpack.c.bf16 %v1231, %v1229
        %v1375 = vpack.c.bf16 %v1235, %v1233
        %v1376 = vpack.c.bf16 %v1239, %v1237
        %v1377 = vpack.c.bf16 %v1243, %v1241
        %v1378 = vpack.c.bf16 %v1247, %v1245
        %v1379 = vpack.c.bf16 %v1251, %v1249
        %v1380 = vpack.c.bf16 %v1271, %v1269
        %v1381 = vpack.c.bf16 %v1275, %v1273
        %v1382 = vpack.c.bf16 %v1279, %v1277
        %v1383 = vpack.c.bf16 %v1283, %v1281
        %v1384 = vpack.c.bf16 %v1287, %v1285
        %v1385 = vpack.c.bf16 %v1291, %v1289
        %v1386 = vpack.c.bf16 %v1295, %v1293
        %v1387 = vpack.c.bf16 %v1299, %v1297
        %v1388 = vpack.c.bf16 %v1319, %v1317
        %v1389 = vpack.c.bf16 %v1323, %v1321
        %v1390 = vpack.c.bf16 %v1327, %v1325
        %v1391 = vpack.c.bf16 %v1331, %v1329
        %v1392 = vpack.c.bf16 %v1335, %v1333
        %v1393 = vpack.c.bf16 %v1339, %v1337
        %v1394 = vpack.c.bf16 %v1343, %v1341
        %v1395 = vpack.c.bf16 %v1347, %v1345
        %1412 = vrot.lane.b32.xlu0 %v1126, 120
        %v1413 = vpop.permute.xlu0 %1412
        %1414 = vrot.lane.b32.xlu0 %v1129, 120
        %v1415 = vpop.permute.xlu0 %1414
        %1416 = vrot.lane.b32.xlu0 %v1134, 120
        %v1417 = vpop.permute.xlu0 %1416
        %1418 = vrot.lane.b32.xlu0 %v1137, 120
        %v1419 = vpop.permute.xlu0 %1418
        %1420 = vrot.lane.b32.xlu0 %v1142, 120
        %v1421 = vpop.permute.xlu0 %1420
        %1422 = vrot.lane.b32.xlu0 %v1145, 120
        %v1423 = vpop.permute.xlu0 %1422
        %1424 = vrot.lane.b32.xlu0 %v1150, 120
        %v1425 = vpop.permute.xlu0 %1424
        %1426 = vrot.lane.b32.xlu0 %v1153, 120
        %v1427 = vpop.permute.xlu0 %1426
        %1428 = vrot.lane.b32.xlu0 %v1158, 120
        %v1429 = vpop.permute.xlu0 %1428
        %1430 = vrot.lane.b32.xlu0 %v1161, 120
        %v1431 = vpop.permute.xlu0 %1430
        %1432 = vrot.lane.b32.xlu0 %v1166, 120
        %v1433 = vpop.permute.xlu0 %1432
        %1434 = vrot.lane.b32.xlu0 %v1169, 120
        %v1435 = vpop.permute.xlu0 %1434
        %1436 = vrot.lane.b32.xlu0 %v1174, 120
        %v1437 = vpop.permute.xlu0 %1436
        %1438 = vrot.lane.b32.xlu0 %v1177, 120
        %v1439 = vpop.permute.xlu0 %1438
        %1440 = vrot.lane.b32.xlu0 %v1182, 120
        %v1441 = vpop.permute.xlu0 %1440
        %1442 = vrot.lane.b32.xlu0 %v1185, 120
        %v1443 = vpop.permute.xlu0 %1442
        %1460 = vrot.lane.b32.xlu0 %v1126, 112
        %v1461 = vpop.permute.xlu0 %1460
        %1462 = vrot.lane.b32.xlu0 %v1129, 112
        %v1463 = vpop.permute.xlu0 %1462
        %1464 = vrot.lane.b32.xlu0 %v1134, 112
        %v1465 = vpop.permute.xlu0 %1464
        %1466 = vrot.lane.b32.xlu0 %v1137, 112
        %v1467 = vpop.permute.xlu0 %1466
        %1468 = vrot.lane.b32.xlu0 %v1142, 112
        %v1469 = vpop.permute.xlu0 %1468
        %1470 = vrot.lane.b32.xlu0 %v1145, 112
        %v1471 = vpop.permute.xlu0 %1470
        %1472 = vrot.lane.b32.xlu0 %v1150, 112
        %v1473 = vpop.permute.xlu0 %1472
        %1474 = vrot.lane.b32.xlu0 %v1153, 112
        %v1475 = vpop.permute.xlu0 %1474
        %1476 = vrot.lane.b32.xlu0 %v1158, 112
        %v1477 = vpop.permute.xlu0 %1476
        %1478 = vrot.lane.b32.xlu0 %v1161, 112
        %v1479 = vpop.permute.xlu0 %1478
        %1480 = vrot.lane.b32.xlu0 %v1166, 112
        %v1481 = vpop.permute.xlu0 %1480
        %1482 = vrot.lane.b32.xlu0 %v1169, 112
        %v1483 = vpop.permute.xlu0 %1482
        %1484 = vrot.lane.b32.xlu0 %v1174, 112
        %v1485 = vpop.permute.xlu0 %1484
        %1486 = vrot.lane.b32.xlu0 %v1177, 112
        %v1487 = vpop.permute.xlu0 %1486
        %1488 = vrot.lane.b32.xlu0 %v1182, 112
        %v1489 = vpop.permute.xlu0 %1488
        %1490 = vrot.lane.b32.xlu0 %v1185, 112
        %v1491 = vpop.permute.xlu0 %1490
        %1508 = vrot.lane.b32.xlu0 %v1126, 104
        %v1509 = vpop.permute.xlu0 %1508
        %1510 = vrot.lane.b32.xlu0 %v1129, 104
        %v1511 = vpop.permute.xlu0 %1510
        %1512 = vrot.lane.b32.xlu0 %v1134, 104
        %v1513 = vpop.permute.xlu0 %1512
        %1514 = vrot.lane.b32.xlu0 %v1137, 104
        %v1515 = vpop.permute.xlu0 %1514
        %1516 = vrot.lane.b32.xlu0 %v1142, 104
        %v1517 = vpop.permute.xlu0 %1516
        %1518 = vrot.lane.b32.xlu0 %v1145, 104
        %v1519 = vpop.permute.xlu0 %1518
        %1520 = vrot.lane.b32.xlu0 %v1150, 104
        %v1521 = vpop.permute.xlu0 %1520
        %1522 = vrot.lane.b32.xlu0 %v1153, 104
        %v1523 = vpop.permute.xlu0 %1522
        %1524 = vrot.lane.b32.xlu0 %v1158, 104
        %v1525 = vpop.permute.xlu0 %1524
        %1526 = vrot.lane.b32.xlu0 %v1161, 104
        %v1527 = vpop.permute.xlu0 %1526
        %1528 = vrot.lane.b32.xlu0 %v1166, 104
        %v1529 = vpop.permute.xlu0 %1528
        %1530 = vrot.lane.b32.xlu0 %v1169, 104
        %v1531 = vpop.permute.xlu0 %1530
        %1532 = vrot.lane.b32.xlu0 %v1174, 104
        %v1533 = vpop.permute.xlu0 %1532
        %1534 = vrot.lane.b32.xlu0 %v1177, 104
        %v1535 = vpop.permute.xlu0 %1534
        %1536 = vrot.lane.b32.xlu0 %v1182, 104
        %v1537 = vpop.permute.xlu0 %1536
        %1538 = vrot.lane.b32.xlu0 %v1185, 104
        %v1539 = vpop.permute.xlu0 %1538
        %v1556 = vpack.c.bf16 %v1129, %v1126
        %v1557 = vpack.c.bf16 %v1137, %v1134
        %v1558 = vpack.c.bf16 %v1145, %v1142
        %v1559 = vpack.c.bf16 %v1153, %v1150
        %v1560 = vpack.c.bf16 %v1161, %v1158
        %v1561 = vpack.c.bf16 %v1169, %v1166
        %v1562 = vpack.c.bf16 %v1177, %v1174
        %v1563 = vpack.c.bf16 %v1185, %v1182
        %v1564 = vpack.c.bf16 %v1415, %v1413
        %v1565 = vpack.c.bf16 %v1419, %v1417
        %v1566 = vpack.c.bf16 %v1423, %v1421
        %v1567 = vpack.c.bf16 %v1427, %v1425
        %v1568 = vpack.c.bf16 %v1431, %v1429
        %v1569 = vpack.c.bf16 %v1435, %v1433
        %v1570 = vpack.c.bf16 %v1439, %v1437
        %v1571 = vpack.c.bf16 %v1443, %v1441
        %v1572 = vpack.c.bf16 %v1463, %v1461
        %v1573 = vpack.c.bf16 %v1467, %v1465
        %v1574 = vpack.c.bf16 %v1471, %v1469
        %v1575 = vpack.c.bf16 %v1475, %v1473
        %v1576 = vpack.c.bf16 %v1479, %v1477
        %v1577 = vpack.c.bf16 %v1483, %v1481
        %v1578 = vpack.c.bf16 %v1487, %v1485
        %v1579 = vpack.c.bf16 %v1491, %v1489
        %v1580 = vpack.c.bf16 %v1511, %v1509
        %v1581 = vpack.c.bf16 %v1515, %v1513
        %v1582 = vpack.c.bf16 %v1519, %v1517
        %v1583 = vpack.c.bf16 %v1523, %v1521
        %v1584 = vpack.c.bf16 %v1527, %v1525
        %v1585 = vpack.c.bf16 %v1531, %v1529
        %v1586 = vpack.c.bf16 %v1535, %v1533
        %v1587 = vpack.c.bf16 %v1539, %v1537
        %v1588 = vlaneseq
        %v1589 = vshrl.u32 %v1588, 7
        %v1590 = vadd.s32 %v1589, 8
        %v1591 = vlaneseq
        %v1592 = vand.u32 %v1591, 127
        %vm1593 = vcmp.gt.s32.totalorder %v1592, %v1589
        %vm1594 = vcmp.gt.s32.totalorder %v1592, %v1590
        %v1595 = vsel %vm1593, -1e+09, 0.0
        %v1596 = vsel %vm1594, -1e+09, 0.0
        %1598 = vrot.lane.b32.xlu0 %v1556, 96
        %v1599 = vpop.permute.xlu0 %1598
        %vm1600 = vcmask 64512
        %v1602 = vsel %vm1600, %v1364, 0
        %v1605 = vsel %vm1600, %v1599, 0
        %1607 = vmatprep.subr.bf16.mxu0 0
        %1608 = vmatpush1.bf16.xpose.msra.mxu0 0
        %1609 = vmatprep.subr.bf16.mxu0 0
        %1610 = vmatpush1.bf16.xpose.msra.mxu0 0
        %1611 = vmatprep.subr.bf16.mxu0 0
        %1612 = vmatpush1.bf16.xpose.msra.mxu0 0
        %1613 = vmatprep.subr.bf16.mxu0 0
        %1614 = vmatpush1.bf16.xpose.msra.mxu0 0
        %1615 = vmatprep.subr.bf16.mxu0 0
        %1616 = vmatpush1.bf16.xpose.msra.mxu0 0
        %1617 = vmatprep.subr.bf16.mxu0 0
        %1618 = vmatpush1.bf16.xpose.msra.mxu0 0
        %1619 = vmatprep.subr.bf16.mxu0 0
        %1620 = vmatpush1.bf16.xpose.msra.mxu0 0
        %1621 = vmatprep.subr.bf16.mxu0 0
        %1622 = vmatpush1.bf16.xpose.msra.mxu0 %v1605
        %1623 = vmatprep.subr.bf16.mxu0 0
        %1624 = vmatpush2.bf16.xpose.msra.mxu0 0
        %1625 = vmatprep.subr.bf16.mxu0 0
        %1626 = vmatpush2.bf16.xpose.msra.mxu0 0
        %1627 = vmatprep.subr.bf16.mxu0 0
        %1628 = vmatpush2.bf16.xpose.msra.mxu0 0
        %1629 = vmatprep.subr.bf16.mxu0 0
        %1630 = vmatpush2.bf16.xpose.msra.mxu0 0
        %1631 = vmatprep.subr.bf16.mxu0 0
        %1632 = vmatpush2.bf16.xpose.msra.mxu0 0
        %1633 = vmatprep.subr.bf16.mxu0 0
        %1634 = vmatpush2.bf16.xpose.msra.mxu0 0
        %1635 = vmatprep.subr.bf16.mxu0 0
        %1636 = vmatpush2.bf16.xpose.msra.mxu0 0
        %1637 = vmatprep.subr.bf16.mxu0 0
        %1638 = vmatpush2.bf16.xpose.msra.mxu0 0
        %1639 = vmatprep.mubr.bf16.mxu0 0
        %1640 = vmatmul.mubr.bf16.gmra.mxu0 %v1602
        %v1641 = vpop.f32.mrf.mxu0
        %v1642 = vadd.f32 %v1595, %v1641
        %v1643 = vpop.f32.mrf.mxu0
        %v1644 = vpop.f32.mrf.mxu0
        %v1645 = vadd.f32 %v1596, %v1644
        %v1646 = vpop.f32.mrf.mxu0
        %1647 = vdwg.mxu0
        %1649 = vrot.lane.b32.xlu0 %v1557, 96
        %v1650 = vpop.permute.xlu0 %1649
        %v1652 = vsel %vm1600, %v1365, 0
        %v1655 = vsel %vm1600, %v1650, 0
        %1657 = vmatprep.subr.bf16.mxu0 0
        %1658 = vmatpush1.bf16.xpose.msra.mxu0 0
        %1659 = vmatprep.subr.bf16.mxu0 0
        %1660 = vmatpush1.bf16.xpose.msra.mxu0 0
        %1661 = vmatprep.subr.bf16.mxu0 0
        %1662 = vmatpush1.bf16.xpose.msra.mxu0 0
        %1663 = vmatprep.subr.bf16.mxu0 0
        %1664 = vmatpush1.bf16.xpose.msra.mxu0 0
        %1665 = vmatprep.subr.bf16.mxu0 0
        %1666 = vmatpush1.bf16.xpose.msra.mxu0 0
        %1667 = vmatprep.subr.bf16.mxu0 0
        %1668 = vmatpush1.bf16.xpose.msra.mxu0 0
        %1669 = vmatprep.subr.bf16.mxu0 0
        %1670 = vmatpush1.bf16.xpose.msra.mxu0 0
        %1671 = vmatprep.subr.bf16.mxu0 0
        %1672 = vmatpush1.bf16.xpose.msra.mxu0 %v1655
        %1673 = vmatprep.subr.bf16.mxu0 0
        %1674 = vmatpush2.bf16.xpose.msra.mxu0 0
        %1675 = vmatprep.subr.bf16.mxu0 0
        %1676 = vmatpush2.bf16.xpose.msra.mxu0 0
        %1677 = vmatprep.subr.bf16.mxu0 0
        %1678 = vmatpush2.bf16.xpose.msra.mxu0 0
        %1679 = vmatprep.subr.bf16.mxu0 0
        %1680 = vmatpush2.bf16.xpose.msra.mxu0 0
        %1681 = vmatprep.subr.bf16.mxu0 0
        %1682 = vmatpush2.bf16.xpose.msra.mxu0 0
        %1683 = vmatprep.subr.bf16.mxu0 0
        %1684 = vmatpush2.bf16.xpose.msra.mxu0 0
        %1685 = vmatprep.subr.bf16.mxu0 0
        %1686 = vmatpush2.bf16.xpose.msra.mxu0 0
        %1687 = vmatprep.subr.bf16.mxu0 0
        %1688 = vmatpush2.bf16.xpose.msra.mxu0 0
        %1689 = vmatprep.mubr.bf16.mxu0 0
        %1690 = vmatmul.mubr.bf16.gmra.mxu0 %v1652
        %v1691 = vpop.f32.mrf.mxu0
        %v1692 = vadd.f32 %v1595, %v1691
        %v1693 = vpop.f32.mrf.mxu0
        %v1694 = vpop.f32.mrf.mxu0
        %v1695 = vadd.f32 %v1596, %v1694
        %v1696 = vpop.f32.mrf.mxu0
        %1697 = vdwg.mxu0
        %1699 = vrot.lane.b32.xlu0 %v1558, 96
        %v1700 = vpop.permute.xlu0 %1699
        %v1702 = vsel %vm1600, %v1366, 0
        %v1705 = vsel %vm1600, %v1700, 0
        %1707 = vmatprep.subr.bf16.mxu0 0
        %1708 = vmatpush1.bf16.xpose.msra.mxu0 0
        %1709 = vmatprep.subr.bf16.mxu0 0
        %1710 = vmatpush1.bf16.xpose.msra.mxu0 0
        %1711 = vmatprep.subr.bf16.mxu0 0
        %1712 = vmatpush1.bf16.xpose.msra.mxu0 0
        %1713 = vmatprep.subr.bf16.mxu0 0
        %1714 = vmatpush1.bf16.xpose.msra.mxu0 0
        %1715 = vmatprep.subr.bf16.mxu0 0
        %1716 = vmatpush1.bf16.xpose.msra.mxu0 0
        %1717 = vmatprep.subr.bf16.mxu0 0
        %1718 = vmatpush1.bf16.xpose.msra.mxu0 0
        %1719 = vmatprep.subr.bf16.mxu0 0
        %1720 = vmatpush1.bf16.xpose.msra.mxu0 0
        %1721 = vmatprep.subr.bf16.mxu0 0
        %1722 = vmatpush1.bf16.xpose.msra.mxu0 %v1705
        %1723 = vmatprep.subr.bf16.mxu0 0
        %1724 = vmatpush2.bf16.xpose.msra.mxu0 0
        %1725 = vmatprep.subr.bf16.mxu0 0
        %1726 = vmatpush2.bf16.xpose.msra.mxu0 0
        %1727 = vmatprep.subr.bf16.mxu0 0
        %1728 = vmatpush2.bf16.xpose.msra.mxu0 0
        %1729 = vmatprep.subr.bf16.mxu0 0
        %1730 = vmatpush2.bf16.xpose.msra.mxu0 0
        %1731 = vmatprep.subr.bf16.mxu0 0
        %1732 = vmatpush2.bf16.xpose.msra.mxu0 0
        %1733 = vmatprep.subr.bf16.mxu0 0
        %1734 = vmatpush2.bf16.xpose.msra.mxu0 0
        %1735 = vmatprep.subr.bf16.mxu0 0
        %1736 = vmatpush2.bf16.xpose.msra.mxu0 0
        %1737 = vmatprep.subr.bf16.mxu0 0
        %1738 = vmatpush2.bf16.xpose.msra.mxu0 0
        %1739 = vmatprep.mubr.bf16.mxu0 0
        %1740 = vmatmul.mubr.bf16.gmra.mxu0 %v1702
        %v1741 = vpop.f32.mrf.mxu0
        %v1742 = vadd.f32 %v1595, %v1741
        %v1743 = vpop.f32.mrf.mxu0
        %v1744 = vpop.f32.mrf.mxu0
        %v1745 = vadd.f32 %v1596, %v1744
        %v1746 = vpop.f32.mrf.mxu0
        %1747 = vdwg.mxu0
        %1749 = vrot.lane.b32.xlu0 %v1559, 96
        %v1750 = vpop.permute.xlu0 %1749
        %v1752 = vsel %vm1600, %v1367, 0
        %v1755 = vsel %vm1600, %v1750, 0
        %1757 = vmatprep.subr.bf16.mxu0 0
        %1758 = vmatpush1.bf16.xpose.msra.mxu0 0
        %1759 = vmatprep.subr.bf16.mxu0 0
        %1760 = vmatpush1.bf16.xpose.msra.mxu0 0
        %1761 = vmatprep.subr.bf16.mxu0 0
        %1762 = vmatpush1.bf16.xpose.msra.mxu0 0
        %1763 = vmatprep.subr.bf16.mxu0 0
        %1764 = vmatpush1.bf16.xpose.msra.mxu0 0
        %1765 = vmatprep.subr.bf16.mxu0 0
        %1766 = vmatpush1.bf16.xpose.msra.mxu0 0
        %1767 = vmatprep.subr.bf16.mxu0 0
        %1768 = vmatpush1.bf16.xpose.msra.mxu0 0
        %1769 = vmatprep.subr.bf16.mxu0 0
        %1770 = vmatpush1.bf16.xpose.msra.mxu0 0
        %1771 = vmatprep.subr.bf16.mxu0 0
        %1772 = vmatpush1.bf16.xpose.msra.mxu0 %v1755
        %1773 = vmatprep.subr.bf16.mxu0 0
        %1774 = vmatpush2.bf16.xpose.msra.mxu0 0
        %1775 = vmatprep.subr.bf16.mxu0 0
        %1776 = vmatpush2.bf16.xpose.msra.mxu0 0
        %1777 = vmatprep.subr.bf16.mxu0 0
        %1778 = vmatpush2.bf16.xpose.msra.mxu0 0
        %1779 = vmatprep.subr.bf16.mxu0 0
        %1780 = vmatpush2.bf16.xpose.msra.mxu0 0
        %1781 = vmatprep.subr.bf16.mxu0 0
        %1782 = vmatpush2.bf16.xpose.msra.mxu0 0
        %1783 = vmatprep.subr.bf16.mxu0 0
        %1784 = vmatpush2.bf16.xpose.msra.mxu0 0
        %1785 = vmatprep.subr.bf16.mxu0 0
        %1786 = vmatpush2.bf16.xpose.msra.mxu0 0
        %1787 = vmatprep.subr.bf16.mxu0 0
        %1788 = vmatpush2.bf16.xpose.msra.mxu0 0
        %1789 = vmatprep.mubr.bf16.mxu0 0
        %1790 = vmatmul.mubr.bf16.gmra.mxu0 %v1752
        %v1791 = vpop.f32.mrf.mxu0
        %v1792 = vadd.f32 %v1595, %v1791
        %v1793 = vpop.f32.mrf.mxu0
        %v1794 = vpop.f32.mrf.mxu0
        %v1795 = vadd.f32 %v1596, %v1794
        %v1796 = vpop.f32.mrf.mxu0
        %1797 = vdwg.mxu0
        %1799 = vrot.lane.b32.xlu0 %v1560, 96
        %v1800 = vpop.permute.xlu0 %1799
        %v1802 = vsel %vm1600, %v1368, 0
        %v1805 = vsel %vm1600, %v1800, 0
        %1807 = vmatprep.subr.bf16.mxu0 0
        %1808 = vmatpush1.bf16.xpose.msra.mxu0 0
        %1809 = vmatprep.subr.bf16.mxu0 0
        %1810 = vmatpush1.bf16.xpose.msra.mxu0 0
        %1811 = vmatprep.subr.bf16.mxu0 0
        %1812 = vmatpush1.bf16.xpose.msra.mxu0 0
        %1813 = vmatprep.subr.bf16.mxu0 0
        %1814 = vmatpush1.bf16.xpose.msra.mxu0 0
        %1815 = vmatprep.subr.bf16.mxu0 0
        %1816 = vmatpush1.bf16.xpose.msra.mxu0 0
        %1817 = vmatprep.subr.bf16.mxu0 0
        %1818 = vmatpush1.bf16.xpose.msra.mxu0 0
        %1819 = vmatprep.subr.bf16.mxu0 0
        %1820 = vmatpush1.bf16.xpose.msra.mxu0 0
        %1821 = vmatprep.subr.bf16.mxu0 0
        %1822 = vmatpush1.bf16.xpose.msra.mxu0 %v1805
        %1823 = vmatprep.subr.bf16.mxu0 0
        %1824 = vmatpush2.bf16.xpose.msra.mxu0 0
        %1825 = vmatprep.subr.bf16.mxu0 0
        %1826 = vmatpush2.bf16.xpose.msra.mxu0 0
        %1827 = vmatprep.subr.bf16.mxu0 0
        %1828 = vmatpush2.bf16.xpose.msra.mxu0 0
        %1829 = vmatprep.subr.bf16.mxu0 0
        %1830 = vmatpush2.bf16.xpose.msra.mxu0 0
        %1831 = vmatprep.subr.bf16.mxu0 0
        %1832 = vmatpush2.bf16.xpose.msra.mxu0 0
        %1833 = vmatprep.subr.bf16.mxu0 0
        %1834 = vmatpush2.bf16.xpose.msra.mxu0 0
        %1835 = vmatprep.subr.bf16.mxu0 0
        %1836 = vmatpush2.bf16.xpose.msra.mxu0 0
        %1837 = vmatprep.subr.bf16.mxu0 0
        %1838 = vmatpush2.bf16.xpose.msra.mxu0 0
        %1839 = vmatprep.mubr.bf16.mxu0 0
        %1840 = vmatmul.mubr.bf16.gmra.mxu0 %v1802
        %v1841 = vpop.f32.mrf.mxu0
        %v1842 = vadd.f32 %v1595, %v1841
        %v1843 = vpop.f32.mrf.mxu0
        %v1844 = vpop.f32.mrf.mxu0
        %v1845 = vadd.f32 %v1596, %v1844
        %v1846 = vpop.f32.mrf.mxu0
        %1847 = vdwg.mxu0
        %1849 = vrot.lane.b32.xlu0 %v1561, 96
        %v1850 = vpop.permute.xlu0 %1849
        %v1852 = vsel %vm1600, %v1369, 0
        %v1855 = vsel %vm1600, %v1850, 0
        %1857 = vmatprep.subr.bf16.mxu0 0
        %1858 = vmatpush1.bf16.xpose.msra.mxu0 0
        %1859 = vmatprep.subr.bf16.mxu0 0
        %1860 = vmatpush1.bf16.xpose.msra.mxu0 0
        %1861 = vmatprep.subr.bf16.mxu0 0
        %1862 = vmatpush1.bf16.xpose.msra.mxu0 0
        %1863 = vmatprep.subr.bf16.mxu0 0
        %1864 = vmatpush1.bf16.xpose.msra.mxu0 0
        %1865 = vmatprep.subr.bf16.mxu0 0
        %1866 = vmatpush1.bf16.xpose.msra.mxu0 0
        %1867 = vmatprep.subr.bf16.mxu0 0
        %1868 = vmatpush1.bf16.xpose.msra.mxu0 0
        %1869 = vmatprep.subr.bf16.mxu0 0
        %1870 = vmatpush1.bf16.xpose.msra.mxu0 0
        %1871 = vmatprep.subr.bf16.mxu0 0
        %1872 = vmatpush1.bf16.xpose.msra.mxu0 %v1855
        %1873 = vmatprep.subr.bf16.mxu0 0
        %1874 = vmatpush2.bf16.xpose.msra.mxu0 0
        %1875 = vmatprep.subr.bf16.mxu0 0
        %1876 = vmatpush2.bf16.xpose.msra.mxu0 0
        %1877 = vmatprep.subr.bf16.mxu0 0
        %1878 = vmatpush2.bf16.xpose.msra.mxu0 0
        %1879 = vmatprep.subr.bf16.mxu0 0
        %1880 = vmatpush2.bf16.xpose.msra.mxu0 0
        %1881 = vmatprep.subr.bf16.mxu0 0
        %1882 = vmatpush2.bf16.xpose.msra.mxu0 0
        %1883 = vmatprep.subr.bf16.mxu0 0
        %1884 = vmatpush2.bf16.xpose.msra.mxu0 0
        %1885 = vmatprep.subr.bf16.mxu0 0
        %1886 = vmatpush2.bf16.xpose.msra.mxu0 0
        %1887 = vmatprep.subr.bf16.mxu0 0
        %1888 = vmatpush2.bf16.xpose.msra.mxu0 0
        %1889 = vmatprep.mubr.bf16.mxu0 0
        %1890 = vmatmul.mubr.bf16.gmra.mxu0 %v1852
        %v1891 = vpop.f32.mrf.mxu0
        %v1892 = vadd.f32 %v1595, %v1891
        %v1893 = vpop.f32.mrf.mxu0
        %v1894 = vpop.f32.mrf.mxu0
        %v1895 = vadd.f32 %v1596, %v1894
        %v1896 = vpop.f32.mrf.mxu0
        %1897 = vdwg.mxu0
        %1899 = vrot.lane.b32.xlu0 %v1562, 96
        %v1900 = vpop.permute.xlu0 %1899
        %v1902 = vsel %vm1600, %v1370, 0
        %v1905 = vsel %vm1600, %v1900, 0
        %1907 = vmatprep.subr.bf16.mxu0 0
        %1908 = vmatpush1.bf16.xpose.msra.mxu0 0
        %1909 = vmatprep.subr.bf16.mxu0 0
        %1910 = vmatpush1.bf16.xpose.msra.mxu0 0
        %1911 = vmatprep.subr.bf16.mxu0 0
        %1912 = vmatpush1.bf16.xpose.msra.mxu0 0
        %1913 = vmatprep.subr.bf16.mxu0 0
        %1914 = vmatpush1.bf16.xpose.msra.mxu0 0
        %1915 = vmatprep.subr.bf16.mxu0 0
        %1916 = vmatpush1.bf16.xpose.msra.mxu0 0
        %1917 = vmatprep.subr.bf16.mxu0 0
        %1918 = vmatpush1.bf16.xpose.msra.mxu0 0
        %1919 = vmatprep.subr.bf16.mxu0 0
        %1920 = vmatpush1.bf16.xpose.msra.mxu0 0
        %1921 = vmatprep.subr.bf16.mxu0 0
        %1922 = vmatpush1.bf16.xpose.msra.mxu0 %v1905
        %1923 = vmatprep.subr.bf16.mxu0 0
        %1924 = vmatpush2.bf16.xpose.msra.mxu0 0
        %1925 = vmatprep.subr.bf16.mxu0 0
        %1926 = vmatpush2.bf16.xpose.msra.mxu0 0
        %1927 = vmatprep.subr.bf16.mxu0 0
        %1928 = vmatpush2.bf16.xpose.msra.mxu0 0
        %1929 = vmatprep.subr.bf16.mxu0 0
        %1930 = vmatpush2.bf16.xpose.msra.mxu0 0
        %1931 = vmatprep.subr.bf16.mxu0 0
        %1932 = vmatpush2.bf16.xpose.msra.mxu0 0
        %1933 = vmatprep.subr.bf16.mxu0 0
        %1934 = vmatpush2.bf16.xpose.msra.mxu0 0
        %1935 = vmatprep.subr.bf16.mxu0 0
        %1936 = vmatpush2.bf16.xpose.msra.mxu0 0
        %1937 = vmatprep.subr.bf16.mxu0 0
        %1938 = vmatpush2.bf16.xpose.msra.mxu0 0
        %1939 = vmatprep.mubr.bf16.mxu0 0
        %1940 = vmatmul.mubr.bf16.gmra.mxu0 %v1902
        %v1941 = vpop.f32.mrf.mxu0
        %v1942 = vadd.f32 %v1595, %v1941
        %v1943 = vpop.f32.mrf.mxu0
        %v1944 = vpop.f32.mrf.mxu0
        %v1945 = vadd.f32 %v1596, %v1944
        %v1946 = vpop.f32.mrf.mxu0
        %1947 = vdwg.mxu0
        %1949 = vrot.lane.b32.xlu0 %v1563, 96
        %v1950 = vpop.permute.xlu0 %1949
        %v1952 = vsel %vm1600, %v1371, 0
        %v1955 = vsel %vm1600, %v1950, 0
        %1957 = vmatprep.subr.bf16.mxu0 0
        %1958 = vmatpush1.bf16.xpose.msra.mxu0 0
        %1959 = vmatprep.subr.bf16.mxu0 0
        %1960 = vmatpush1.bf16.xpose.msra.mxu0 0
        %1961 = vmatprep.subr.bf16.mxu0 0
        %1962 = vmatpush1.bf16.xpose.msra.mxu0 0
        %1963 = vmatprep.subr.bf16.mxu0 0
        %1964 = vmatpush1.bf16.xpose.msra.mxu0 0
        %1965 = vmatprep.subr.bf16.mxu0 0
        %1966 = vmatpush1.bf16.xpose.msra.mxu0 0
        %1967 = vmatprep.subr.bf16.mxu0 0
        %1968 = vmatpush1.bf16.xpose.msra.mxu0 0
        %1969 = vmatprep.subr.bf16.mxu0 0
        %1970 = vmatpush1.bf16.xpose.msra.mxu0 0
        %1971 = vmatprep.subr.bf16.mxu0 0
        %1972 = vmatpush1.bf16.xpose.msra.mxu0 %v1955
        %1973 = vmatprep.subr.bf16.mxu0 0
        %1974 = vmatpush2.bf16.xpose.msra.mxu0 0
        %1975 = vmatprep.subr.bf16.mxu0 0
        %1976 = vmatpush2.bf16.xpose.msra.mxu0 0
        %1977 = vmatprep.subr.bf16.mxu0 0
        %1978 = vmatpush2.bf16.xpose.msra.mxu0 0
        %1979 = vmatprep.subr.bf16.mxu0 0
        %1980 = vmatpush2.bf16.xpose.msra.mxu0 0
        %1981 = vmatprep.subr.bf16.mxu0 0
        %1982 = vmatpush2.bf16.xpose.msra.mxu0 0
        %1983 = vmatprep.subr.bf16.mxu0 0
        %1984 = vmatpush2.bf16.xpose.msra.mxu0 0
        %1985 = vmatprep.subr.bf16.mxu0 0
        %1986 = vmatpush2.bf16.xpose.msra.mxu0 0
        %1987 = vmatprep.subr.bf16.mxu0 0
        %1988 = vmatpush2.bf16.xpose.msra.mxu0 0
        %1989 = vmatprep.mubr.bf16.mxu0 0
        %1990 = vmatmul.mubr.bf16.gmra.mxu0 %v1952
        %v1991 = vpop.f32.mrf.mxu0
        %v1992 = vadd.f32 %v1595, %v1991
        %v1993 = vpop.f32.mrf.mxu0
        %v1994 = vpop.f32.mrf.mxu0
        %v1995 = vadd.f32 %v1596, %v1994
        %v1996 = vpop.f32.mrf.mxu0
        %1997 = vdwg.mxu0
        %1999 = vrot.lane.b32.xlu0 %v1564, 96
        %v2000 = vpop.permute.xlu0 %1999
        %v2002 = vsel %vm1600, %v1372, 0
        %v2005 = vsel %vm1600, %v2000, 0
        %2007 = vmatprep.subr.bf16.mxu0 0
        %2008 = vmatpush1.bf16.xpose.msra.mxu0 0
        %2009 = vmatprep.subr.bf16.mxu0 0
        %2010 = vmatpush1.bf16.xpose.msra.mxu0 0
        %2011 = vmatprep.subr.bf16.mxu0 0
        %2012 = vmatpush1.bf16.xpose.msra.mxu0 0
        %2013 = vmatprep.subr.bf16.mxu0 0
        %2014 = vmatpush1.bf16.xpose.msra.mxu0 0
        %2015 = vmatprep.subr.bf16.mxu0 0
        %2016 = vmatpush1.bf16.xpose.msra.mxu0 0
        %2017 = vmatprep.subr.bf16.mxu0 0
        %2018 = vmatpush1.bf16.xpose.msra.mxu0 0
        %2019 = vmatprep.subr.bf16.mxu0 0
        %2020 = vmatpush1.bf16.xpose.msra.mxu0 0
        %2021 = vmatprep.subr.bf16.mxu0 0
        %2022 = vmatpush1.bf16.xpose.msra.mxu0 %v2005
        %2023 = vmatprep.subr.bf16.mxu0 0
        %2024 = vmatpush2.bf16.xpose.msra.mxu0 0
        %2025 = vmatprep.subr.bf16.mxu0 0
        %2026 = vmatpush2.bf16.xpose.msra.mxu0 0
        %2027 = vmatprep.subr.bf16.mxu0 0
        %2028 = vmatpush2.bf16.xpose.msra.mxu0 0
        %2029 = vmatprep.subr.bf16.mxu0 0
        %2030 = vmatpush2.bf16.xpose.msra.mxu0 0
        %2031 = vmatprep.subr.bf16.mxu0 0
        %2032 = vmatpush2.bf16.xpose.msra.mxu0 0
        %2033 = vmatprep.subr.bf16.mxu0 0
        %2034 = vmatpush2.bf16.xpose.msra.mxu0 0
        %2035 = vmatprep.subr.bf16.mxu0 0
        %2036 = vmatpush2.bf16.xpose.msra.mxu0 0
        %2037 = vmatprep.subr.bf16.mxu0 0
        %2038 = vmatpush2.bf16.xpose.msra.mxu0 0
        %2039 = vmatprep.mubr.bf16.mxu0 0
        %2040 = vmatmul.mubr.bf16.gmra.mxu0 %v2002
        %v2041 = vpop.f32.mrf.mxu0
        %v2042 = vadd.f32 %v1595, %v2041
        %v2043 = vpop.f32.mrf.mxu0
        %v2044 = vpop.f32.mrf.mxu0
        %v2045 = vadd.f32 %v1596, %v2044
        %v2046 = vpop.f32.mrf.mxu0
        %2047 = vdwg.mxu0
        %2049 = vrot.lane.b32.xlu0 %v1565, 96
        %v2050 = vpop.permute.xlu0 %2049
        %v2052 = vsel %vm1600, %v1373, 0
        %v2055 = vsel %vm1600, %v2050, 0
        %2057 = vmatprep.subr.bf16.mxu0 0
        %2058 = vmatpush1.bf16.xpose.msra.mxu0 0
        %2059 = vmatprep.subr.bf16.mxu0 0
        %2060 = vmatpush1.bf16.xpose.msra.mxu0 0
        %2061 = vmatprep.subr.bf16.mxu0 0
        %2062 = vmatpush1.bf16.xpose.msra.mxu0 0
        %2063 = vmatprep.subr.bf16.mxu0 0
        %2064 = vmatpush1.bf16.xpose.msra.mxu0 0
        %2065 = vmatprep.subr.bf16.mxu0 0
        %2066 = vmatpush1.bf16.xpose.msra.mxu0 0
        %2067 = vmatprep.subr.bf16.mxu0 0
        %2068 = vmatpush1.bf16.xpose.msra.mxu0 0
        %2069 = vmatprep.subr.bf16.mxu0 0
        %2070 = vmatpush1.bf16.xpose.msra.mxu0 0
        %2071 = vmatprep.subr.bf16.mxu0 0
        %2072 = vmatpush1.bf16.xpose.msra.mxu0 %v2055
        %2073 = vmatprep.subr.bf16.mxu0 0
        %2074 = vmatpush2.bf16.xpose.msra.mxu0 0
        %2075 = vmatprep.subr.bf16.mxu0 0
        %2076 = vmatpush2.bf16.xpose.msra.mxu0 0
        %2077 = vmatprep.subr.bf16.mxu0 0
        %2078 = vmatpush2.bf16.xpose.msra.mxu0 0
        %2079 = vmatprep.subr.bf16.mxu0 0
        %2080 = vmatpush2.bf16.xpose.msra.mxu0 0
        %2081 = vmatprep.subr.bf16.mxu0 0
        %2082 = vmatpush2.bf16.xpose.msra.mxu0 0
        %2083 = vmatprep.subr.bf16.mxu0 0
        %2084 = vmatpush2.bf16.xpose.msra.mxu0 0
        %2085 = vmatprep.subr.bf16.mxu0 0
        %2086 = vmatpush2.bf16.xpose.msra.mxu0 0
        %2087 = vmatprep.subr.bf16.mxu0 0
        %2088 = vmatpush2.bf16.xpose.msra.mxu0 0
        %2089 = vmatprep.mubr.bf16.mxu0 0
        %2090 = vmatmul.mubr.bf16.gmra.mxu0 %v2052
        %v2091 = vpop.f32.mrf.mxu0
        %v2092 = vadd.f32 %v1595, %v2091
        %v2093 = vpop.f32.mrf.mxu0
        %v2094 = vpop.f32.mrf.mxu0
        %v2095 = vadd.f32 %v1596, %v2094
        %v2096 = vpop.f32.mrf.mxu0
        %2097 = vdwg.mxu0
        %2099 = vrot.lane.b32.xlu0 %v1566, 96
        %v2100 = vpop.permute.xlu0 %2099
        %v2102 = vsel %vm1600, %v1374, 0
        %v2105 = vsel %vm1600, %v2100, 0
        %2107 = vmatprep.subr.bf16.mxu0 0
        %2108 = vmatpush1.bf16.xpose.msra.mxu0 0
        %2109 = vmatprep.subr.bf16.mxu0 0
        %2110 = vmatpush1.bf16.xpose.msra.mxu0 0
        %2111 = vmatprep.subr.bf16.mxu0 0
        %2112 = vmatpush1.bf16.xpose.msra.mxu0 0
        %2113 = vmatprep.subr.bf16.mxu0 0
        %2114 = vmatpush1.bf16.xpose.msra.mxu0 0
        %2115 = vmatprep.subr.bf16.mxu0 0
        %2116 = vmatpush1.bf16.xpose.msra.mxu0 0
        %2117 = vmatprep.subr.bf16.mxu0 0
        %2118 = vmatpush1.bf16.xpose.msra.mxu0 0
        %2119 = vmatprep.subr.bf16.mxu0 0
        %2120 = vmatpush1.bf16.xpose.msra.mxu0 0
        %2121 = vmatprep.subr.bf16.mxu0 0
        %2122 = vmatpush1.bf16.xpose.msra.mxu0 %v2105
        %2123 = vmatprep.subr.bf16.mxu0 0
        %2124 = vmatpush2.bf16.xpose.msra.mxu0 0
        %2125 = vmatprep.subr.bf16.mxu0 0
        %2126 = vmatpush2.bf16.xpose.msra.mxu0 0
        %2127 = vmatprep.subr.bf16.mxu0 0
        %2128 = vmatpush2.bf16.xpose.msra.mxu0 0
        %2129 = vmatprep.subr.bf16.mxu0 0
        %2130 = vmatpush2.bf16.xpose.msra.mxu0 0
        %2131 = vmatprep.subr.bf16.mxu0 0
        %2132 = vmatpush2.bf16.xpose.msra.mxu0 0
        %2133 = vmatprep.subr.bf16.mxu0 0
        %2134 = vmatpush2.bf16.xpose.msra.mxu0 0
        %2135 = vmatprep.subr.bf16.mxu0 0
        %2136 = vmatpush2.bf16.xpose.msra.mxu0 0
        %2137 = vmatprep.subr.bf16.mxu0 0
        %2138 = vmatpush2.bf16.xpose.msra.mxu0 0
        %2139 = vmatprep.mubr.bf16.mxu0 0
        %2140 = vmatmul.mubr.bf16.gmra.mxu0 %v2102
        %v2141 = vpop.f32.mrf.mxu0
        %v2142 = vadd.f32 %v1595, %v2141
        %v2143 = vpop.f32.mrf.mxu0
        %v2144 = vpop.f32.mrf.mxu0
        %v2145 = vadd.f32 %v1596, %v2144
        %v2146 = vpop.f32.mrf.mxu0
        %2147 = vdwg.mxu0
        %2149 = vrot.lane.b32.xlu0 %v1567, 96
        %v2150 = vpop.permute.xlu0 %2149
        %v2152 = vsel %vm1600, %v1375, 0
        %v2155 = vsel %vm1600, %v2150, 0
        %2157 = vmatprep.subr.bf16.mxu0 0
        %2158 = vmatpush1.bf16.xpose.msra.mxu0 0
        %2159 = vmatprep.subr.bf16.mxu0 0
        %2160 = vmatpush1.bf16.xpose.msra.mxu0 0
        %2161 = vmatprep.subr.bf16.mxu0 0
        %2162 = vmatpush1.bf16.xpose.msra.mxu0 0
        %2163 = vmatprep.subr.bf16.mxu0 0
        %2164 = vmatpush1.bf16.xpose.msra.mxu0 0
        %2165 = vmatprep.subr.bf16.mxu0 0
        %2166 = vmatpush1.bf16.xpose.msra.mxu0 0
        %2167 = vmatprep.subr.bf16.mxu0 0
        %2168 = vmatpush1.bf16.xpose.msra.mxu0 0
        %2169 = vmatprep.subr.bf16.mxu0 0
        %2170 = vmatpush1.bf16.xpose.msra.mxu0 0
        %2171 = vmatprep.subr.bf16.mxu0 0
        %2172 = vmatpush1.bf16.xpose.msra.mxu0 %v2155
        %2173 = vmatprep.subr.bf16.mxu0 0
        %2174 = vmatpush2.bf16.xpose.msra.mxu0 0
        %2175 = vmatprep.subr.bf16.mxu0 0
        %2176 = vmatpush2.bf16.xpose.msra.mxu0 0
        %2177 = vmatprep.subr.bf16.mxu0 0
        %2178 = vmatpush2.bf16.xpose.msra.mxu0 0
        %2179 = vmatprep.subr.bf16.mxu0 0
        %2180 = vmatpush2.bf16.xpose.msra.mxu0 0
        %2181 = vmatprep.subr.bf16.mxu0 0
        %2182 = vmatpush2.bf16.xpose.msra.mxu0 0
        %2183 = vmatprep.subr.bf16.mxu0 0
        %2184 = vmatpush2.bf16.xpose.msra.mxu0 0
        %2185 = vmatprep.subr.bf16.mxu0 0
        %2186 = vmatpush2.bf16.xpose.msra.mxu0 0
        %2187 = vmatprep.subr.bf16.mxu0 0
        %2188 = vmatpush2.bf16.xpose.msra.mxu0 0
        %2189 = vmatprep.mubr.bf16.mxu0 0
        %2190 = vmatmul.mubr.bf16.gmra.mxu0 %v2152
        %v2191 = vpop.f32.mrf.mxu0
        %v2192 = vadd.f32 %v1595, %v2191
        %v2193 = vpop.f32.mrf.mxu0
        %v2194 = vpop.f32.mrf.mxu0
        %v2195 = vadd.f32 %v1596, %v2194
        %v2196 = vpop.f32.mrf.mxu0
        %2197 = vdwg.mxu0
        %2199 = vrot.lane.b32.xlu0 %v1568, 96
        %v2200 = vpop.permute.xlu0 %2199
        %v2202 = vsel %vm1600, %v1376, 0
        %v2205 = vsel %vm1600, %v2200, 0
        %2207 = vmatprep.subr.bf16.mxu0 0
        %2208 = vmatpush1.bf16.xpose.msra.mxu0 0
        %2209 = vmatprep.subr.bf16.mxu0 0
        %2210 = vmatpush1.bf16.xpose.msra.mxu0 0
        %2211 = vmatprep.subr.bf16.mxu0 0
        %2212 = vmatpush1.bf16.xpose.msra.mxu0 0
        %2213 = vmatprep.subr.bf16.mxu0 0
        %2214 = vmatpush1.bf16.xpose.msra.mxu0 0
        %2215 = vmatprep.subr.bf16.mxu0 0
        %2216 = vmatpush1.bf16.xpose.msra.mxu0 0
        %2217 = vmatprep.subr.bf16.mxu0 0
        %2218 = vmatpush1.bf16.xpose.msra.mxu0 0
        %2219 = vmatprep.subr.bf16.mxu0 0
        %2220 = vmatpush1.bf16.xpose.msra.mxu0 0
        %2221 = vmatprep.subr.bf16.mxu0 0
        %2222 = vmatpush1.bf16.xpose.msra.mxu0 %v2205
        %2223 = vmatprep.subr.bf16.mxu0 0
        %2224 = vmatpush2.bf16.xpose.msra.mxu0 0
        %2225 = vmatprep.subr.bf16.mxu0 0
        %2226 = vmatpush2.bf16.xpose.msra.mxu0 0
        %2227 = vmatprep.subr.bf16.mxu0 0
        %2228 = vmatpush2.bf16.xpose.msra.mxu0 0
        %2229 = vmatprep.subr.bf16.mxu0 0
        %2230 = vmatpush2.bf16.xpose.msra.mxu0 0
        %2231 = vmatprep.subr.bf16.mxu0 0
        %2232 = vmatpush2.bf16.xpose.msra.mxu0 0
        %2233 = vmatprep.subr.bf16.mxu0 0
        %2234 = vmatpush2.bf16.xpose.msra.mxu0 0
        %2235 = vmatprep.subr.bf16.mxu0 0
        %2236 = vmatpush2.bf16.xpose.msra.mxu0 0
        %2237 = vmatprep.subr.bf16.mxu0 0
        %2238 = vmatpush2.bf16.xpose.msra.mxu0 0
        %2239 = vmatprep.mubr.bf16.mxu0 0
        %2240 = vmatmul.mubr.bf16.gmra.mxu0 %v2202
        %v2241 = vpop.f32.mrf.mxu0
        %v2242 = vadd.f32 %v1595, %v2241
        %v2243 = vpop.f32.mrf.mxu0
        %v2244 = vpop.f32.mrf.mxu0
        %v2245 = vadd.f32 %v1596, %v2244
        %v2246 = vpop.f32.mrf.mxu0
        %2247 = vdwg.mxu0
        %2249 = vrot.lane.b32.xlu0 %v1569, 96
        %v2250 = vpop.permute.xlu0 %2249
        %v2252 = vsel %vm1600, %v1377, 0
        %v2255 = vsel %vm1600, %v2250, 0
        %2257 = vmatprep.subr.bf16.mxu0 0
        %2258 = vmatpush1.bf16.xpose.msra.mxu0 0
        %2259 = vmatprep.subr.bf16.mxu0 0
        %2260 = vmatpush1.bf16.xpose.msra.mxu0 0
        %2261 = vmatprep.subr.bf16.mxu0 0
        %2262 = vmatpush1.bf16.xpose.msra.mxu0 0
        %2263 = vmatprep.subr.bf16.mxu0 0
        %2264 = vmatpush1.bf16.xpose.msra.mxu0 0
        %2265 = vmatprep.subr.bf16.mxu0 0
        %2266 = vmatpush1.bf16.xpose.msra.mxu0 0
        %2267 = vmatprep.subr.bf16.mxu0 0
        %2268 = vmatpush1.bf16.xpose.msra.mxu0 0
        %2269 = vmatprep.subr.bf16.mxu0 0
        %2270 = vmatpush1.bf16.xpose.msra.mxu0 0
        %2271 = vmatprep.subr.bf16.mxu0 0
        %2272 = vmatpush1.bf16.xpose.msra.mxu0 %v2255
        %2273 = vmatprep.subr.bf16.mxu0 0
        %2274 = vmatpush2.bf16.xpose.msra.mxu0 0
        %2275 = vmatprep.subr.bf16.mxu0 0
        %2276 = vmatpush2.bf16.xpose.msra.mxu0 0
        %2277 = vmatprep.subr.bf16.mxu0 0
        %2278 = vmatpush2.bf16.xpose.msra.mxu0 0
        %2279 = vmatprep.subr.bf16.mxu0 0
        %2280 = vmatpush2.bf16.xpose.msra.mxu0 0
        %2281 = vmatprep.subr.bf16.mxu0 0
        %2282 = vmatpush2.bf16.xpose.msra.mxu0 0
        %2283 = vmatprep.subr.bf16.mxu0 0
        %2284 = vmatpush2.bf16.xpose.msra.mxu0 0
        %2285 = vmatprep.subr.bf16.mxu0 0
        %2286 = vmatpush2.bf16.xpose.msra.mxu0 0
        %2287 = vmatprep.subr.bf16.mxu0 0
        %2288 = vmatpush2.bf16.xpose.msra.mxu0 0
        %2289 = vmatprep.mubr.bf16.mxu0 0
        %2290 = vmatmul.mubr.bf16.gmra.mxu0 %v2252
        %v2291 = vpop.f32.mrf.mxu0
        %v2292 = vadd.f32 %v1595, %v2291
        %v2293 = vpop.f32.mrf.mxu0
        %v2294 = vpop.f32.mrf.mxu0
        %v2295 = vadd.f32 %v1596, %v2294
        %v2296 = vpop.f32.mrf.mxu0
        %2297 = vdwg.mxu0
        %2299 = vrot.lane.b32.xlu0 %v1570, 96
        %v2300 = vpop.permute.xlu0 %2299
        %v2302 = vsel %vm1600, %v1378, 0
        %v2305 = vsel %vm1600, %v2300, 0
        %2307 = vmatprep.subr.bf16.mxu0 0
        %2308 = vmatpush1.bf16.xpose.msra.mxu0 0
        %2309 = vmatprep.subr.bf16.mxu0 0
        %2310 = vmatpush1.bf16.xpose.msra.mxu0 0
        %2311 = vmatprep.subr.bf16.mxu0 0
        %2312 = vmatpush1.bf16.xpose.msra.mxu0 0
        %2313 = vmatprep.subr.bf16.mxu0 0
        %2314 = vmatpush1.bf16.xpose.msra.mxu0 0
        %2315 = vmatprep.subr.bf16.mxu0 0
        %2316 = vmatpush1.bf16.xpose.msra.mxu0 0
        %2317 = vmatprep.subr.bf16.mxu0 0
        %2318 = vmatpush1.bf16.xpose.msra.mxu0 0
        %2319 = vmatprep.subr.bf16.mxu0 0
        %2320 = vmatpush1.bf16.xpose.msra.mxu0 0
        %2321 = vmatprep.subr.bf16.mxu0 0
        %2322 = vmatpush1.bf16.xpose.msra.mxu0 %v2305
        %2323 = vmatprep.subr.bf16.mxu0 0
        %2324 = vmatpush2.bf16.xpose.msra.mxu0 0
        %2325 = vmatprep.subr.bf16.mxu0 0
        %2326 = vmatpush2.bf16.xpose.msra.mxu0 0
        %2327 = vmatprep.subr.bf16.mxu0 0
        %2328 = vmatpush2.bf16.xpose.msra.mxu0 0
        %2329 = vmatprep.subr.bf16.mxu0 0
        %2330 = vmatpush2.bf16.xpose.msra.mxu0 0
        %2331 = vmatprep.subr.bf16.mxu0 0
        %2332 = vmatpush2.bf16.xpose.msra.mxu0 0
        %2333 = vmatprep.subr.bf16.mxu0 0
        %2334 = vmatpush2.bf16.xpose.msra.mxu0 0
        %2335 = vmatprep.subr.bf16.mxu0 0
        %2336 = vmatpush2.bf16.xpose.msra.mxu0 0
        %2337 = vmatprep.subr.bf16.mxu0 0
        %2338 = vmatpush2.bf16.xpose.msra.mxu0 0
        %2339 = vmatprep.mubr.bf16.mxu0 0
        %2340 = vmatmul.mubr.bf16.gmra.mxu0 %v2302
        %v2341 = vpop.f32.mrf.mxu0
        %v2342 = vadd.f32 %v1595, %v2341
        %v2343 = vpop.f32.mrf.mxu0
        %v2344 = vpop.f32.mrf.mxu0
        %v2345 = vadd.f32 %v1596, %v2344
        %v2346 = vpop.f32.mrf.mxu0
        %2347 = vdwg.mxu0
        %2349 = vrot.lane.b32.xlu0 %v1571, 96
        %v2350 = vpop.permute.xlu0 %2349
        %v2352 = vsel %vm1600, %v1379, 0
        %v2355 = vsel %vm1600, %v2350, 0
        %2357 = vmatprep.subr.bf16.mxu0 0
        %2358 = vmatpush1.bf16.xpose.msra.mxu0 0
        %2359 = vmatprep.subr.bf16.mxu0 0
        %2360 = vmatpush1.bf16.xpose.msra.mxu0 0
        %2361 = vmatprep.subr.bf16.mxu0 0
        %2362 = vmatpush1.bf16.xpose.msra.mxu0 0
        %2363 = vmatprep.subr.bf16.mxu0 0
        %2364 = vmatpush1.bf16.xpose.msra.mxu0 0
        %2365 = vmatprep.subr.bf16.mxu0 0
        %2366 = vmatpush1.bf16.xpose.msra.mxu0 0
        %2367 = vmatprep.subr.bf16.mxu0 0
        %2368 = vmatpush1.bf16.xpose.msra.mxu0 0
        %2369 = vmatprep.subr.bf16.mxu0 0
        %2370 = vmatpush1.bf16.xpose.msra.mxu0 0
        %2371 = vmatprep.subr.bf16.mxu0 0
        %2372 = vmatpush1.bf16.xpose.msra.mxu0 %v2355
        %2373 = vmatprep.subr.bf16.mxu0 0
        %2374 = vmatpush2.bf16.xpose.msra.mxu0 0
        %2375 = vmatprep.subr.bf16.mxu0 0
        %2376 = vmatpush2.bf16.xpose.msra.mxu0 0
        %2377 = vmatprep.subr.bf16.mxu0 0
        %2378 = vmatpush2.bf16.xpose.msra.mxu0 0
        %2379 = vmatprep.subr.bf16.mxu0 0
        %2380 = vmatpush2.bf16.xpose.msra.mxu0 0
        %2381 = vmatprep.subr.bf16.mxu0 0
        %2382 = vmatpush2.bf16.xpose.msra.mxu0 0
        %2383 = vmatprep.subr.bf16.mxu0 0
        %2384 = vmatpush2.bf16.xpose.msra.mxu0 0
        %2385 = vmatprep.subr.bf16.mxu0 0
        %2386 = vmatpush2.bf16.xpose.msra.mxu0 0
        %2387 = vmatprep.subr.bf16.mxu0 0
        %2388 = vmatpush2.bf16.xpose.msra.mxu0 0
        %2389 = vmatprep.mubr.bf16.mxu0 0
        %2390 = vmatmul.mubr.bf16.gmra.mxu0 %v2352
        %v2391 = vpop.f32.mrf.mxu0
        %v2392 = vadd.f32 %v1595, %v2391
        %v2393 = vpop.f32.mrf.mxu0
        %v2394 = vpop.f32.mrf.mxu0
        %v2395 = vadd.f32 %v1596, %v2394
        %v2396 = vpop.f32.mrf.mxu0
        %2397 = vdwg.mxu0
        %2399 = vrot.lane.b32.xlu0 %v1572, 96
        %v2400 = vpop.permute.xlu0 %2399
        %v2402 = vsel %vm1600, %v1380, 0
        %v2405 = vsel %vm1600, %v2400, 0
        %2407 = vmatprep.subr.bf16.mxu0 0
        %2408 = vmatpush1.bf16.xpose.msra.mxu0 0
        %2409 = vmatprep.subr.bf16.mxu0 0
        %2410 = vmatpush1.bf16.xpose.msra.mxu0 0
        %2411 = vmatprep.subr.bf16.mxu0 0
        %2412 = vmatpush1.bf16.xpose.msra.mxu0 0
        %2413 = vmatprep.subr.bf16.mxu0 0
        %2414 = vmatpush1.bf16.xpose.msra.mxu0 0
        %2415 = vmatprep.subr.bf16.mxu0 0
        %2416 = vmatpush1.bf16.xpose.msra.mxu0 0
        %2417 = vmatprep.subr.bf16.mxu0 0
        %2418 = vmatpush1.bf16.xpose.msra.mxu0 0
        %2419 = vmatprep.subr.bf16.mxu0 0
        %2420 = vmatpush1.bf16.xpose.msra.mxu0 0
        %2421 = vmatprep.subr.bf16.mxu0 0
        %2422 = vmatpush1.bf16.xpose.msra.mxu0 %v2405
        %2423 = vmatprep.subr.bf16.mxu0 0
        %2424 = vmatpush2.bf16.xpose.msra.mxu0 0
        %2425 = vmatprep.subr.bf16.mxu0 0
        %2426 = vmatpush2.bf16.xpose.msra.mxu0 0
        %2427 = vmatprep.subr.bf16.mxu0 0
        %2428 = vmatpush2.bf16.xpose.msra.mxu0 0
        %2429 = vmatprep.subr.bf16.mxu0 0
        %2430 = vmatpush2.bf16.xpose.msra.mxu0 0
        %2431 = vmatprep.subr.bf16.mxu0 0
        %2432 = vmatpush2.bf16.xpose.msra.mxu0 0
        %2433 = vmatprep.subr.bf16.mxu0 0
        %2434 = vmatpush2.bf16.xpose.msra.mxu0 0
        %2435 = vmatprep.subr.bf16.mxu0 0
        %2436 = vmatpush2.bf16.xpose.msra.mxu0 0
        %2437 = vmatprep.subr.bf16.mxu0 0
        %2438 = vmatpush2.bf16.xpose.msra.mxu0 0
        %2439 = vmatprep.mubr.bf16.mxu0 0
        %2440 = vmatmul.mubr.bf16.gmra.mxu0 %v2402
        %v2441 = vpop.f32.mrf.mxu0
        %v2442 = vadd.f32 %v1595, %v2441
        %v2443 = vpop.f32.mrf.mxu0
        %v2444 = vpop.f32.mrf.mxu0
        %v2445 = vadd.f32 %v1596, %v2444
        %v2446 = vpop.f32.mrf.mxu0
        %2447 = vdwg.mxu0
        %2449 = vrot.lane.b32.xlu0 %v1573, 96
        %v2450 = vpop.permute.xlu0 %2449
        %v2452 = vsel %vm1600, %v1381, 0
        %v2455 = vsel %vm1600, %v2450, 0
        %2457 = vmatprep.subr.bf16.mxu0 0
        %2458 = vmatpush1.bf16.xpose.msra.mxu0 0
        %2459 = vmatprep.subr.bf16.mxu0 0
        %2460 = vmatpush1.bf16.xpose.msra.mxu0 0
        %2461 = vmatprep.subr.bf16.mxu0 0
        %2462 = vmatpush1.bf16.xpose.msra.mxu0 0
        %2463 = vmatprep.subr.bf16.mxu0 0
        %2464 = vmatpush1.bf16.xpose.msra.mxu0 0
        %2465 = vmatprep.subr.bf16.mxu0 0
        %2466 = vmatpush1.bf16.xpose.msra.mxu0 0
        %2467 = vmatprep.subr.bf16.mxu0 0
        %2468 = vmatpush1.bf16.xpose.msra.mxu0 0
        %2469 = vmatprep.subr.bf16.mxu0 0
        %2470 = vmatpush1.bf16.xpose.msra.mxu0 0
        %2471 = vmatprep.subr.bf16.mxu0 0
        %2472 = vmatpush1.bf16.xpose.msra.mxu0 %v2455
        %2473 = vmatprep.subr.bf16.mxu0 0
        %2474 = vmatpush2.bf16.xpose.msra.mxu0 0
        %2475 = vmatprep.subr.bf16.mxu0 0
        %2476 = vmatpush2.bf16.xpose.msra.mxu0 0
        %2477 = vmatprep.subr.bf16.mxu0 0
        %2478 = vmatpush2.bf16.xpose.msra.mxu0 0
        %2479 = vmatprep.subr.bf16.mxu0 0
        %2480 = vmatpush2.bf16.xpose.msra.mxu0 0
        %2481 = vmatprep.subr.bf16.mxu0 0
        %2482 = vmatpush2.bf16.xpose.msra.mxu0 0
        %2483 = vmatprep.subr.bf16.mxu0 0
        %2484 = vmatpush2.bf16.xpose.msra.mxu0 0
        %2485 = vmatprep.subr.bf16.mxu0 0
        %2486 = vmatpush2.bf16.xpose.msra.mxu0 0
        %2487 = vmatprep.subr.bf16.mxu0 0
        %2488 = vmatpush2.bf16.xpose.msra.mxu0 0
        %2489 = vmatprep.mubr.bf16.mxu0 0
        %2490 = vmatmul.mubr.bf16.gmra.mxu0 %v2452
        %v2491 = vpop.f32.mrf.mxu0
        %v2492 = vadd.f32 %v1595, %v2491
        %v2493 = vpop.f32.mrf.mxu0
        %v2494 = vpop.f32.mrf.mxu0
        %v2495 = vadd.f32 %v1596, %v2494
        %v2496 = vpop.f32.mrf.mxu0
        %2497 = vdwg.mxu0
        %2499 = vrot.lane.b32.xlu0 %v1574, 96
        %v2500 = vpop.permute.xlu0 %2499
        %v2502 = vsel %vm1600, %v1382, 0
        %v2505 = vsel %vm1600, %v2500, 0
        %2507 = vmatprep.subr.bf16.mxu0 0
        %2508 = vmatpush1.bf16.xpose.msra.mxu0 0
        %2509 = vmatprep.subr.bf16.mxu0 0
        %2510 = vmatpush1.bf16.xpose.msra.mxu0 0
        %2511 = vmatprep.subr.bf16.mxu0 0
        %2512 = vmatpush1.bf16.xpose.msra.mxu0 0
        %2513 = vmatprep.subr.bf16.mxu0 0
        %2514 = vmatpush1.bf16.xpose.msra.mxu0 0
        %2515 = vmatprep.subr.bf16.mxu0 0
        %2516 = vmatpush1.bf16.xpose.msra.mxu0 0
        %2517 = vmatprep.subr.bf16.mxu0 0
        %2518 = vmatpush1.bf16.xpose.msra.mxu0 0
        %2519 = vmatprep.subr.bf16.mxu0 0
        %2520 = vmatpush1.bf16.xpose.msra.mxu0 0
        %2521 = vmatprep.subr.bf16.mxu0 0
        %2522 = vmatpush1.bf16.xpose.msra.mxu0 %v2505
        %2523 = vmatprep.subr.bf16.mxu0 0
        %2524 = vmatpush2.bf16.xpose.msra.mxu0 0
        %2525 = vmatprep.subr.bf16.mxu0 0
        %2526 = vmatpush2.bf16.xpose.msra.mxu0 0
        %2527 = vmatprep.subr.bf16.mxu0 0
        %2528 = vmatpush2.bf16.xpose.msra.mxu0 0
        %2529 = vmatprep.subr.bf16.mxu0 0
        %2530 = vmatpush2.bf16.xpose.msra.mxu0 0
        %2531 = vmatprep.subr.bf16.mxu0 0
        %2532 = vmatpush2.bf16.xpose.msra.mxu0 0
        %2533 = vmatprep.subr.bf16.mxu0 0
        %2534 = vmatpush2.bf16.xpose.msra.mxu0 0
        %2535 = vmatprep.subr.bf16.mxu0 0
        %2536 = vmatpush2.bf16.xpose.msra.mxu0 0
        %2537 = vmatprep.subr.bf16.mxu0 0
        %2538 = vmatpush2.bf16.xpose.msra.mxu0 0
        %2539 = vmatprep.mubr.bf16.mxu0 0
        %2540 = vmatmul.mubr.bf16.gmra.mxu0 %v2502
        %v2541 = vpop.f32.mrf.mxu0
        %v2542 = vadd.f32 %v1595, %v2541
        %v2543 = vpop.f32.mrf.mxu0
        %v2544 = vpop.f32.mrf.mxu0
        %v2545 = vadd.f32 %v1596, %v2544
        %v2546 = vpop.f32.mrf.mxu0
        %2547 = vdwg.mxu0
        %2549 = vrot.lane.b32.xlu0 %v1575, 96
        %v2550 = vpop.permute.xlu0 %2549
        %v2552 = vsel %vm1600, %v1383, 0
        %v2555 = vsel %vm1600, %v2550, 0
        %2557 = vmatprep.subr.bf16.mxu0 0
        %2558 = vmatpush1.bf16.xpose.msra.mxu0 0
        %2559 = vmatprep.subr.bf16.mxu0 0
        %2560 = vmatpush1.bf16.xpose.msra.mxu0 0
        %2561 = vmatprep.subr.bf16.mxu0 0
        %2562 = vmatpush1.bf16.xpose.msra.mxu0 0
        %2563 = vmatprep.subr.bf16.mxu0 0
        %2564 = vmatpush1.bf16.xpose.msra.mxu0 0
        %2565 = vmatprep.subr.bf16.mxu0 0
        %2566 = vmatpush1.bf16.xpose.msra.mxu0 0
        %2567 = vmatprep.subr.bf16.mxu0 0
        %2568 = vmatpush1.bf16.xpose.msra.mxu0 0
        %2569 = vmatprep.subr.bf16.mxu0 0
        %2570 = vmatpush1.bf16.xpose.msra.mxu0 0
        %2571 = vmatprep.subr.bf16.mxu0 0
        %2572 = vmatpush1.bf16.xpose.msra.mxu0 %v2555
        %2573 = vmatprep.subr.bf16.mxu0 0
        %2574 = vmatpush2.bf16.xpose.msra.mxu0 0
        %2575 = vmatprep.subr.bf16.mxu0 0
        %2576 = vmatpush2.bf16.xpose.msra.mxu0 0
        %2577 = vmatprep.subr.bf16.mxu0 0
        %2578 = vmatpush2.bf16.xpose.msra.mxu0 0
        %2579 = vmatprep.subr.bf16.mxu0 0
        %2580 = vmatpush2.bf16.xpose.msra.mxu0 0
        %2581 = vmatprep.subr.bf16.mxu0 0
        %2582 = vmatpush2.bf16.xpose.msra.mxu0 0
        %2583 = vmatprep.subr.bf16.mxu0 0
        %2584 = vmatpush2.bf16.xpose.msra.mxu0 0
        %2585 = vmatprep.subr.bf16.mxu0 0
        %2586 = vmatpush2.bf16.xpose.msra.mxu0 0
        %2587 = vmatprep.subr.bf16.mxu0 0
        %2588 = vmatpush2.bf16.xpose.msra.mxu0 0
        %2589 = vmatprep.mubr.bf16.mxu0 0
        %2590 = vmatmul.mubr.bf16.gmra.mxu0 %v2552
        %v2591 = vpop.f32.mrf.mxu0
        %v2592 = vadd.f32 %v1595, %v2591
        %v2593 = vpop.f32.mrf.mxu0
        %v2594 = vpop.f32.mrf.mxu0
        %v2595 = vadd.f32 %v1596, %v2594
        %v2596 = vpop.f32.mrf.mxu0
        %2597 = vdwg.mxu0
        %2599 = vrot.lane.b32.xlu0 %v1576, 96
        %v2600 = vpop.permute.xlu0 %2599
        %v2602 = vsel %vm1600, %v1384, 0
        %v2605 = vsel %vm1600, %v2600, 0
        %2607 = vmatprep.subr.bf16.mxu0 0
        %2608 = vmatpush1.bf16.xpose.msra.mxu0 0
        %2609 = vmatprep.subr.bf16.mxu0 0
        %2610 = vmatpush1.bf16.xpose.msra.mxu0 0
        %2611 = vmatprep.subr.bf16.mxu0 0
        %2612 = vmatpush1.bf16.xpose.msra.mxu0 0
        %2613 = vmatprep.subr.bf16.mxu0 0
        %2614 = vmatpush1.bf16.xpose.msra.mxu0 0
        %2615 = vmatprep.subr.bf16.mxu0 0
        %2616 = vmatpush1.bf16.xpose.msra.mxu0 0
        %2617 = vmatprep.subr.bf16.mxu0 0
        %2618 = vmatpush1.bf16.xpose.msra.mxu0 0
        %2619 = vmatprep.subr.bf16.mxu0 0
        %2620 = vmatpush1.bf16.xpose.msra.mxu0 0
        %2621 = vmatprep.subr.bf16.mxu0 0
        %2622 = vmatpush1.bf16.xpose.msra.mxu0 %v2605
        %2623 = vmatprep.subr.bf16.mxu0 0
        %2624 = vmatpush2.bf16.xpose.msra.mxu0 0
        %2625 = vmatprep.subr.bf16.mxu0 0
        %2626 = vmatpush2.bf16.xpose.msra.mxu0 0
        %2627 = vmatprep.subr.bf16.mxu0 0
        %2628 = vmatpush2.bf16.xpose.msra.mxu0 0
        %2629 = vmatprep.subr.bf16.mxu0 0
        %2630 = vmatpush2.bf16.xpose.msra.mxu0 0
        %2631 = vmatprep.subr.bf16.mxu0 0
        %2632 = vmatpush2.bf16.xpose.msra.mxu0 0
        %2633 = vmatprep.subr.bf16.mxu0 0
        %2634 = vmatpush2.bf16.xpose.msra.mxu0 0
        %2635 = vmatprep.subr.bf16.mxu0 0
        %2636 = vmatpush2.bf16.xpose.msra.mxu0 0
        %2637 = vmatprep.subr.bf16.mxu0 0
        %2638 = vmatpush2.bf16.xpose.msra.mxu0 0
        %2639 = vmatprep.mubr.bf16.mxu0 0
        %2640 = vmatmul.mubr.bf16.gmra.mxu0 %v2602
        %v2641 = vpop.f32.mrf.mxu0
        %v2642 = vadd.f32 %v1595, %v2641
        %v2643 = vpop.f32.mrf.mxu0
        %v2644 = vpop.f32.mrf.mxu0
        %v2645 = vadd.f32 %v1596, %v2644
        %v2646 = vpop.f32.mrf.mxu0
        %2647 = vdwg.mxu0
        %2649 = vrot.lane.b32.xlu0 %v1577, 96
        %v2650 = vpop.permute.xlu0 %2649
        %v2652 = vsel %vm1600, %v1385, 0
        %v2655 = vsel %vm1600, %v2650, 0
        %2657 = vmatprep.subr.bf16.mxu0 0
        %2658 = vmatpush1.bf16.xpose.msra.mxu0 0
        %2659 = vmatprep.subr.bf16.mxu0 0
        %2660 = vmatpush1.bf16.xpose.msra.mxu0 0
        %2661 = vmatprep.subr.bf16.mxu0 0
        %2662 = vmatpush1.bf16.xpose.msra.mxu0 0
        %2663 = vmatprep.subr.bf16.mxu0 0
        %2664 = vmatpush1.bf16.xpose.msra.mxu0 0
        %2665 = vmatprep.subr.bf16.mxu0 0
        %2666 = vmatpush1.bf16.xpose.msra.mxu0 0
        %2667 = vmatprep.subr.bf16.mxu0 0
        %2668 = vmatpush1.bf16.xpose.msra.mxu0 0
        %2669 = vmatprep.subr.bf16.mxu0 0
        %2670 = vmatpush1.bf16.xpose.msra.mxu0 0
        %2671 = vmatprep.subr.bf16.mxu0 0
        %2672 = vmatpush1.bf16.xpose.msra.mxu0 %v2655
        %2673 = vmatprep.subr.bf16.mxu0 0
        %2674 = vmatpush2.bf16.xpose.msra.mxu0 0
        %2675 = vmatprep.subr.bf16.mxu0 0
        %2676 = vmatpush2.bf16.xpose.msra.mxu0 0
        %2677 = vmatprep.subr.bf16.mxu0 0
        %2678 = vmatpush2.bf16.xpose.msra.mxu0 0
        %2679 = vmatprep.subr.bf16.mxu0 0
        %2680 = vmatpush2.bf16.xpose.msra.mxu0 0
        %2681 = vmatprep.subr.bf16.mxu0 0
        %2682 = vmatpush2.bf16.xpose.msra.mxu0 0
        %2683 = vmatprep.subr.bf16.mxu0 0
        %2684 = vmatpush2.bf16.xpose.msra.mxu0 0
        %2685 = vmatprep.subr.bf16.mxu0 0
        %2686 = vmatpush2.bf16.xpose.msra.mxu0 0
        %2687 = vmatprep.subr.bf16.mxu0 0
        %2688 = vmatpush2.bf16.xpose.msra.mxu0 0
        %2689 = vmatprep.mubr.bf16.mxu0 0
        %2690 = vmatmul.mubr.bf16.gmra.mxu0 %v2652
        %v2691 = vpop.f32.mrf.mxu0
        %v2692 = vadd.f32 %v1595, %v2691
        %v2693 = vpop.f32.mrf.mxu0
        %v2694 = vpop.f32.mrf.mxu0
        %v2695 = vadd.f32 %v1596, %v2694
        %v2696 = vpop.f32.mrf.mxu0
        %2697 = vdwg.mxu0
        %2699 = vrot.lane.b32.xlu0 %v1578, 96
        %v2700 = vpop.permute.xlu0 %2699
        %v2702 = vsel %vm1600, %v1386, 0
        %v2705 = vsel %vm1600, %v2700, 0
        %2707 = vmatprep.subr.bf16.mxu0 0
        %2708 = vmatpush1.bf16.xpose.msra.mxu0 0
        %2709 = vmatprep.subr.bf16.mxu0 0
        %2710 = vmatpush1.bf16.xpose.msra.mxu0 0
        %2711 = vmatprep.subr.bf16.mxu0 0
        %2712 = vmatpush1.bf16.xpose.msra.mxu0 0
        %2713 = vmatprep.subr.bf16.mxu0 0
        %2714 = vmatpush1.bf16.xpose.msra.mxu0 0
        %2715 = vmatprep.subr.bf16.mxu0 0
        %2716 = vmatpush1.bf16.xpose.msra.mxu0 0
        %2717 = vmatprep.subr.bf16.mxu0 0
        %2718 = vmatpush1.bf16.xpose.msra.mxu0 0
        %2719 = vmatprep.subr.bf16.mxu0 0
        %2720 = vmatpush1.bf16.xpose.msra.mxu0 0
        %2721 = vmatprep.subr.bf16.mxu0 0
        %2722 = vmatpush1.bf16.xpose.msra.mxu0 %v2705
        %2723 = vmatprep.subr.bf16.mxu0 0
        %2724 = vmatpush2.bf16.xpose.msra.mxu0 0
        %2725 = vmatprep.subr.bf16.mxu0 0
        %2726 = vmatpush2.bf16.xpose.msra.mxu0 0
        %2727 = vmatprep.subr.bf16.mxu0 0
        %2728 = vmatpush2.bf16.xpose.msra.mxu0 0
        %2729 = vmatprep.subr.bf16.mxu0 0
        %2730 = vmatpush2.bf16.xpose.msra.mxu0 0
        %2731 = vmatprep.subr.bf16.mxu0 0
        %2732 = vmatpush2.bf16.xpose.msra.mxu0 0
        %2733 = vmatprep.subr.bf16.mxu0 0
        %2734 = vmatpush2.bf16.xpose.msra.mxu0 0
        %2735 = vmatprep.subr.bf16.mxu0 0
        %2736 = vmatpush2.bf16.xpose.msra.mxu0 0
        %2737 = vmatprep.subr.bf16.mxu0 0
        %2738 = vmatpush2.bf16.xpose.msra.mxu0 0
        %2739 = vmatprep.mubr.bf16.mxu0 0
        %2740 = vmatmul.mubr.bf16.gmra.mxu0 %v2702
        %v2741 = vpop.f32.mrf.mxu0
        %v2742 = vadd.f32 %v1595, %v2741
        %v2743 = vpop.f32.mrf.mxu0
        %v2744 = vpop.f32.mrf.mxu0
        %v2745 = vadd.f32 %v1596, %v2744
        %v2746 = vpop.f32.mrf.mxu0
        %2747 = vdwg.mxu0
        %2749 = vrot.lane.b32.xlu0 %v1579, 96
        %v2750 = vpop.permute.xlu0 %2749
        %v2752 = vsel %vm1600, %v1387, 0
        %v2755 = vsel %vm1600, %v2750, 0
        %2757 = vmatprep.subr.bf16.mxu0 0
        %2758 = vmatpush1.bf16.xpose.msra.mxu0 0
        %2759 = vmatprep.subr.bf16.mxu0 0
        %2760 = vmatpush1.bf16.xpose.msra.mxu0 0
        %2761 = vmatprep.subr.bf16.mxu0 0
        %2762 = vmatpush1.bf16.xpose.msra.mxu0 0
        %2763 = vmatprep.subr.bf16.mxu0 0
        %2764 = vmatpush1.bf16.xpose.msra.mxu0 0
        %2765 = vmatprep.subr.bf16.mxu0 0
        %2766 = vmatpush1.bf16.xpose.msra.mxu0 0
        %2767 = vmatprep.subr.bf16.mxu0 0
        %2768 = vmatpush1.bf16.xpose.msra.mxu0 0
        %2769 = vmatprep.subr.bf16.mxu0 0
        %2770 = vmatpush1.bf16.xpose.msra.mxu0 0
        %2771 = vmatprep.subr.bf16.mxu0 0
        %2772 = vmatpush1.bf16.xpose.msra.mxu0 %v2755
        %2773 = vmatprep.subr.bf16.mxu0 0
        %2774 = vmatpush2.bf16.xpose.msra.mxu0 0
        %2775 = vmatprep.subr.bf16.mxu0 0
        %2776 = vmatpush2.bf16.xpose.msra.mxu0 0
        %2777 = vmatprep.subr.bf16.mxu0 0
        %2778 = vmatpush2.bf16.xpose.msra.mxu0 0
        %2779 = vmatprep.subr.bf16.mxu0 0
        %2780 = vmatpush2.bf16.xpose.msra.mxu0 0
        %2781 = vmatprep.subr.bf16.mxu0 0
        %2782 = vmatpush2.bf16.xpose.msra.mxu0 0
        %2783 = vmatprep.subr.bf16.mxu0 0
        %2784 = vmatpush2.bf16.xpose.msra.mxu0 0
        %2785 = vmatprep.subr.bf16.mxu0 0
        %2786 = vmatpush2.bf16.xpose.msra.mxu0 0
        %2787 = vmatprep.subr.bf16.mxu0 0
        %2788 = vmatpush2.bf16.xpose.msra.mxu0 0
        %2789 = vmatprep.mubr.bf16.mxu0 0
        %2790 = vmatmul.mubr.bf16.gmra.mxu0 %v2752
        %v2791 = vpop.f32.mrf.mxu0
        %v2792 = vadd.f32 %v1595, %v2791
        %v2793 = vpop.f32.mrf.mxu0
        %v2794 = vpop.f32.mrf.mxu0
        %v2795 = vadd.f32 %v1596, %v2794
        %v2796 = vpop.f32.mrf.mxu0
        %2797 = vdwg.mxu0
        %2799 = vrot.lane.b32.xlu0 %v1580, 96
        %v2800 = vpop.permute.xlu0 %2799
        %v2802 = vsel %vm1600, %v1388, 0
        %v2805 = vsel %vm1600, %v2800, 0
        %2807 = vmatprep.subr.bf16.mxu0 0
        %2808 = vmatpush1.bf16.xpose.msra.mxu0 0
        %2809 = vmatprep.subr.bf16.mxu0 0
        %2810 = vmatpush1.bf16.xpose.msra.mxu0 0
        %2811 = vmatprep.subr.bf16.mxu0 0
        %2812 = vmatpush1.bf16.xpose.msra.mxu0 0
        %2813 = vmatprep.subr.bf16.mxu0 0
        %2814 = vmatpush1.bf16.xpose.msra.mxu0 0
        %2815 = vmatprep.subr.bf16.mxu0 0
        %2816 = vmatpush1.bf16.xpose.msra.mxu0 0
        %2817 = vmatprep.subr.bf16.mxu0 0
        %2818 = vmatpush1.bf16.xpose.msra.mxu0 0
        %2819 = vmatprep.subr.bf16.mxu0 0
        %2820 = vmatpush1.bf16.xpose.msra.mxu0 0
        %2821 = vmatprep.subr.bf16.mxu0 0
        %2822 = vmatpush1.bf16.xpose.msra.mxu0 %v2805
        %2823 = vmatprep.subr.bf16.mxu0 0
        %2824 = vmatpush2.bf16.xpose.msra.mxu0 0
        %2825 = vmatprep.subr.bf16.mxu0 0
        %2826 = vmatpush2.bf16.xpose.msra.mxu0 0
        %2827 = vmatprep.subr.bf16.mxu0 0
        %2828 = vmatpush2.bf16.xpose.msra.mxu0 0
        %2829 = vmatprep.subr.bf16.mxu0 0
        %2830 = vmatpush2.bf16.xpose.msra.mxu0 0
        %2831 = vmatprep.subr.bf16.mxu0 0
        %2832 = vmatpush2.bf16.xpose.msra.mxu0 0
        %2833 = vmatprep.subr.bf16.mxu0 0
        %2834 = vmatpush2.bf16.xpose.msra.mxu0 0
        %2835 = vmatprep.subr.bf16.mxu0 0
        %2836 = vmatpush2.bf16.xpose.msra.mxu0 0
        %2837 = vmatprep.subr.bf16.mxu0 0
        %2838 = vmatpush2.bf16.xpose.msra.mxu0 0
        %2839 = vmatprep.mubr.bf16.mxu0 0
        %2840 = vmatmul.mubr.bf16.gmra.mxu0 %v2802
        %v2841 = vpop.f32.mrf.mxu0
        %v2842 = vadd.f32 %v1595, %v2841
        %v2843 = vpop.f32.mrf.mxu0
        %v2844 = vpop.f32.mrf.mxu0
        %v2845 = vadd.f32 %v1596, %v2844
        %v2846 = vpop.f32.mrf.mxu0
        %2847 = vdwg.mxu0
        %2849 = vrot.lane.b32.xlu0 %v1581, 96
        %v2850 = vpop.permute.xlu0 %2849
        %v2852 = vsel %vm1600, %v1389, 0
        %v2855 = vsel %vm1600, %v2850, 0
        %2857 = vmatprep.subr.bf16.mxu0 0
        %2858 = vmatpush1.bf16.xpose.msra.mxu0 0
        %2859 = vmatprep.subr.bf16.mxu0 0
        %2860 = vmatpush1.bf16.xpose.msra.mxu0 0
        %2861 = vmatprep.subr.bf16.mxu0 0
        %2862 = vmatpush1.bf16.xpose.msra.mxu0 0
        %2863 = vmatprep.subr.bf16.mxu0 0
        %2864 = vmatpush1.bf16.xpose.msra.mxu0 0
        %2865 = vmatprep.subr.bf16.mxu0 0
        %2866 = vmatpush1.bf16.xpose.msra.mxu0 0
        %2867 = vmatprep.subr.bf16.mxu0 0
        %2868 = vmatpush1.bf16.xpose.msra.mxu0 0
        %2869 = vmatprep.subr.bf16.mxu0 0
        %2870 = vmatpush1.bf16.xpose.msra.mxu0 0
        %2871 = vmatprep.subr.bf16.mxu0 0
        %2872 = vmatpush1.bf16.xpose.msra.mxu0 %v2855
        %2873 = vmatprep.subr.bf16.mxu0 0
        %2874 = vmatpush2.bf16.xpose.msra.mxu0 0
        %2875 = vmatprep.subr.bf16.mxu0 0
        %2876 = vmatpush2.bf16.xpose.msra.mxu0 0
        %2877 = vmatprep.subr.bf16.mxu0 0
        %2878 = vmatpush2.bf16.xpose.msra.mxu0 0
        %2879 = vmatprep.subr.bf16.mxu0 0
        %2880 = vmatpush2.bf16.xpose.msra.mxu0 0
        %2881 = vmatprep.subr.bf16.mxu0 0
        %2882 = vmatpush2.bf16.xpose.msra.mxu0 0
        %2883 = vmatprep.subr.bf16.mxu0 0
        %2884 = vmatpush2.bf16.xpose.msra.mxu0 0
        %2885 = vmatprep.subr.bf16.mxu0 0
        %2886 = vmatpush2.bf16.xpose.msra.mxu0 0
        %2887 = vmatprep.subr.bf16.mxu0 0
        %2888 = vmatpush2.bf16.xpose.msra.mxu0 0
        %2889 = vmatprep.mubr.bf16.mxu0 0
        %2890 = vmatmul.mubr.bf16.gmra.mxu0 %v2852
        %v2891 = vpop.f32.mrf.mxu0
        %v2892 = vadd.f32 %v1595, %v2891
        %v2893 = vpop.f32.mrf.mxu0
        %v2894 = vpop.f32.mrf.mxu0
        %v2895 = vadd.f32 %v1596, %v2894
        %v2896 = vpop.f32.mrf.mxu0
        %2897 = vdwg.mxu0
        %2899 = vrot.lane.b32.xlu0 %v1582, 96
        %v2900 = vpop.permute.xlu0 %2899
        %v2902 = vsel %vm1600, %v1390, 0
        %v2905 = vsel %vm1600, %v2900, 0
        %2907 = vmatprep.subr.bf16.mxu0 0
        %2908 = vmatpush1.bf16.xpose.msra.mxu0 0
        %2909 = vmatprep.subr.bf16.mxu0 0
        %2910 = vmatpush1.bf16.xpose.msra.mxu0 0
        %2911 = vmatprep.subr.bf16.mxu0 0
        %2912 = vmatpush1.bf16.xpose.msra.mxu0 0
        %2913 = vmatprep.subr.bf16.mxu0 0
        %2914 = vmatpush1.bf16.xpose.msra.mxu0 0
        %2915 = vmatprep.subr.bf16.mxu0 0
        %2916 = vmatpush1.bf16.xpose.msra.mxu0 0
        %2917 = vmatprep.subr.bf16.mxu0 0
        %2918 = vmatpush1.bf16.xpose.msra.mxu0 0
        %2919 = vmatprep.subr.bf16.mxu0 0
        %2920 = vmatpush1.bf16.xpose.msra.mxu0 0
        %2921 = vmatprep.subr.bf16.mxu0 0
        %2922 = vmatpush1.bf16.xpose.msra.mxu0 %v2905
        %2923 = vmatprep.subr.bf16.mxu0 0
        %2924 = vmatpush2.bf16.xpose.msra.mxu0 0
        %2925 = vmatprep.subr.bf16.mxu0 0
        %2926 = vmatpush2.bf16.xpose.msra.mxu0 0
        %2927 = vmatprep.subr.bf16.mxu0 0
        %2928 = vmatpush2.bf16.xpose.msra.mxu0 0
        %2929 = vmatprep.subr.bf16.mxu0 0
        %2930 = vmatpush2.bf16.xpose.msra.mxu0 0
        %2931 = vmatprep.subr.bf16.mxu0 0
        %2932 = vmatpush2.bf16.xpose.msra.mxu0 0
        %2933 = vmatprep.subr.bf16.mxu0 0
        %2934 = vmatpush2.bf16.xpose.msra.mxu0 0
        %2935 = vmatprep.subr.bf16.mxu0 0
        %2936 = vmatpush2.bf16.xpose.msra.mxu0 0
        %2937 = vmatprep.subr.bf16.mxu0 0
        %2938 = vmatpush2.bf16.xpose.msra.mxu0 0
        %2939 = vmatprep.mubr.bf16.mxu0 0
        %2940 = vmatmul.mubr.bf16.gmra.mxu0 %v2902
        %v2941 = vpop.f32.mrf.mxu0
        %v2942 = vadd.f32 %v1595, %v2941
        %v2943 = vpop.f32.mrf.mxu0
        %v2944 = vpop.f32.mrf.mxu0
        %v2945 = vadd.f32 %v1596, %v2944
        %v2946 = vpop.f32.mrf.mxu0
        %2947 = vdwg.mxu0
        %2949 = vrot.lane.b32.xlu0 %v1583, 96
        %v2950 = vpop.permute.xlu0 %2949
        %v2952 = vsel %vm1600, %v1391, 0
        %v2955 = vsel %vm1600, %v2950, 0
        %2957 = vmatprep.subr.bf16.mxu0 0
        %2958 = vmatpush1.bf16.xpose.msra.mxu0 0
        %2959 = vmatprep.subr.bf16.mxu0 0
        %2960 = vmatpush1.bf16.xpose.msra.mxu0 0
        %2961 = vmatprep.subr.bf16.mxu0 0
        %2962 = vmatpush1.bf16.xpose.msra.mxu0 0
        %2963 = vmatprep.subr.bf16.mxu0 0
        %2964 = vmatpush1.bf16.xpose.msra.mxu0 0
        %2965 = vmatprep.subr.bf16.mxu0 0
        %2966 = vmatpush1.bf16.xpose.msra.mxu0 0
        %2967 = vmatprep.subr.bf16.mxu0 0
        %2968 = vmatpush1.bf16.xpose.msra.mxu0 0
        %2969 = vmatprep.subr.bf16.mxu0 0
        %2970 = vmatpush1.bf16.xpose.msra.mxu0 0
        %2971 = vmatprep.subr.bf16.mxu0 0
        %2972 = vmatpush1.bf16.xpose.msra.mxu0 %v2955
        %2973 = vmatprep.subr.bf16.mxu0 0
        %2974 = vmatpush2.bf16.xpose.msra.mxu0 0
        %2975 = vmatprep.subr.bf16.mxu0 0
        %2976 = vmatpush2.bf16.xpose.msra.mxu0 0
        %2977 = vmatprep.subr.bf16.mxu0 0
        %2978 = vmatpush2.bf16.xpose.msra.mxu0 0
        %2979 = vmatprep.subr.bf16.mxu0 0
        %2980 = vmatpush2.bf16.xpose.msra.mxu0 0
        %2981 = vmatprep.subr.bf16.mxu0 0
        %2982 = vmatpush2.bf16.xpose.msra.mxu0 0
        %2983 = vmatprep.subr.bf16.mxu0 0
        %2984 = vmatpush2.bf16.xpose.msra.mxu0 0
        %2985 = vmatprep.subr.bf16.mxu0 0
        %2986 = vmatpush2.bf16.xpose.msra.mxu0 0
        %2987 = vmatprep.subr.bf16.mxu0 0
        %2988 = vmatpush2.bf16.xpose.msra.mxu0 0
        %2989 = vmatprep.mubr.bf16.mxu0 0
        %2990 = vmatmul.mubr.bf16.gmra.mxu0 %v2952
        %v2991 = vpop.f32.mrf.mxu0
        %v2992 = vadd.f32 %v1595, %v2991
        %v2993 = vpop.f32.mrf.mxu0
        %v2994 = vpop.f32.mrf.mxu0
        %v2995 = vadd.f32 %v1596, %v2994
        %v2996 = vpop.f32.mrf.mxu0
        %2997 = vdwg.mxu0
        %2999 = vrot.lane.b32.xlu0 %v1584, 96
        %v3000 = vpop.permute.xlu0 %2999
        %v3002 = vsel %vm1600, %v1392, 0
        %v3005 = vsel %vm1600, %v3000, 0
        %3007 = vmatprep.subr.bf16.mxu0 0
        %3008 = vmatpush1.bf16.xpose.msra.mxu0 0
        %3009 = vmatprep.subr.bf16.mxu0 0
        %3010 = vmatpush1.bf16.xpose.msra.mxu0 0
        %3011 = vmatprep.subr.bf16.mxu0 0
        %3012 = vmatpush1.bf16.xpose.msra.mxu0 0
        %3013 = vmatprep.subr.bf16.mxu0 0
        %3014 = vmatpush1.bf16.xpose.msra.mxu0 0
        %3015 = vmatprep.subr.bf16.mxu0 0
        %3016 = vmatpush1.bf16.xpose.msra.mxu0 0
        %3017 = vmatprep.subr.bf16.mxu0 0
        %3018 = vmatpush1.bf16.xpose.msra.mxu0 0
        %3019 = vmatprep.subr.bf16.mxu0 0
        %3020 = vmatpush1.bf16.xpose.msra.mxu0 0
        %3021 = vmatprep.subr.bf16.mxu0 0
        %3022 = vmatpush1.bf16.xpose.msra.mxu0 %v3005
        %3023 = vmatprep.subr.bf16.mxu0 0
        %3024 = vmatpush2.bf16.xpose.msra.mxu0 0
        %3025 = vmatprep.subr.bf16.mxu0 0
        %3026 = vmatpush2.bf16.xpose.msra.mxu0 0
        %3027 = vmatprep.subr.bf16.mxu0 0
        %3028 = vmatpush2.bf16.xpose.msra.mxu0 0
        %3029 = vmatprep.subr.bf16.mxu0 0
        %3030 = vmatpush2.bf16.xpose.msra.mxu0 0
        %3031 = vmatprep.subr.bf16.mxu0 0
        %3032 = vmatpush2.bf16.xpose.msra.mxu0 0
        %3033 = vmatprep.subr.bf16.mxu0 0
        %3034 = vmatpush2.bf16.xpose.msra.mxu0 0
        %3035 = vmatprep.subr.bf16.mxu0 0
        %3036 = vmatpush2.bf16.xpose.msra.mxu0 0
        %3037 = vmatprep.subr.bf16.mxu0 0
        %3038 = vmatpush2.bf16.xpose.msra.mxu0 0
        %3039 = vmatprep.mubr.bf16.mxu0 0
        %3040 = vmatmul.mubr.bf16.gmra.mxu0 %v3002
        %v3041 = vpop.f32.mrf.mxu0
        %v3042 = vadd.f32 %v1595, %v3041
        %v3043 = vpop.f32.mrf.mxu0
        %v3044 = vpop.f32.mrf.mxu0
        %v3045 = vadd.f32 %v1596, %v3044
        %v3046 = vpop.f32.mrf.mxu0
        %3047 = vdwg.mxu0
        %3049 = vrot.lane.b32.xlu0 %v1585, 96
        %v3050 = vpop.permute.xlu0 %3049
        %v3052 = vsel %vm1600, %v1393, 0
        %v3055 = vsel %vm1600, %v3050, 0
        %3057 = vmatprep.subr.bf16.mxu0 0
        %3058 = vmatpush1.bf16.xpose.msra.mxu0 0
        %3059 = vmatprep.subr.bf16.mxu0 0
        %3060 = vmatpush1.bf16.xpose.msra.mxu0 0
        %3061 = vmatprep.subr.bf16.mxu0 0
        %3062 = vmatpush1.bf16.xpose.msra.mxu0 0
        %3063 = vmatprep.subr.bf16.mxu0 0
        %3064 = vmatpush1.bf16.xpose.msra.mxu0 0
        %3065 = vmatprep.subr.bf16.mxu0 0
        %3066 = vmatpush1.bf16.xpose.msra.mxu0 0
        %3067 = vmatprep.subr.bf16.mxu0 0
        %3068 = vmatpush1.bf16.xpose.msra.mxu0 0
        %3069 = vmatprep.subr.bf16.mxu0 0
        %3070 = vmatpush1.bf16.xpose.msra.mxu0 0
        %3071 = vmatprep.subr.bf16.mxu0 0
        %3072 = vmatpush1.bf16.xpose.msra.mxu0 %v3055
        %3073 = vmatprep.subr.bf16.mxu0 0
        %3074 = vmatpush2.bf16.xpose.msra.mxu0 0
        %3075 = vmatprep.subr.bf16.mxu0 0
        %3076 = vmatpush2.bf16.xpose.msra.mxu0 0
        %3077 = vmatprep.subr.bf16.mxu0 0
        %3078 = vmatpush2.bf16.xpose.msra.mxu0 0
        %3079 = vmatprep.subr.bf16.mxu0 0
        %3080 = vmatpush2.bf16.xpose.msra.mxu0 0
        %3081 = vmatprep.subr.bf16.mxu0 0
        %3082 = vmatpush2.bf16.xpose.msra.mxu0 0
        %3083 = vmatprep.subr.bf16.mxu0 0
        %3084 = vmatpush2.bf16.xpose.msra.mxu0 0
        %3085 = vmatprep.subr.bf16.mxu0 0
        %3086 = vmatpush2.bf16.xpose.msra.mxu0 0
        %3087 = vmatprep.subr.bf16.mxu0 0
        %3088 = vmatpush2.bf16.xpose.msra.mxu0 0
        %3089 = vmatprep.mubr.bf16.mxu0 0
        %3090 = vmatmul.mubr.bf16.gmra.mxu0 %v3052
        %v3091 = vpop.f32.mrf.mxu0
        %v3092 = vadd.f32 %v1595, %v3091
        %v3093 = vpop.f32.mrf.mxu0
        %v3094 = vpop.f32.mrf.mxu0
        %v3095 = vadd.f32 %v1596, %v3094
        %v3096 = vpop.f32.mrf.mxu0
        %3097 = vdwg.mxu0
        %3099 = vrot.lane.b32.xlu0 %v1586, 96
        %v3100 = vpop.permute.xlu0 %3099
        %v3102 = vsel %vm1600, %v1394, 0
        %v3105 = vsel %vm1600, %v3100, 0
        %3107 = vmatprep.subr.bf16.mxu0 0
        %3108 = vmatpush1.bf16.xpose.msra.mxu0 0
        %3109 = vmatprep.subr.bf16.mxu0 0
        %3110 = vmatpush1.bf16.xpose.msra.mxu0 0
        %3111 = vmatprep.subr.bf16.mxu0 0
        %3112 = vmatpush1.bf16.xpose.msra.mxu0 0
        %3113 = vmatprep.subr.bf16.mxu0 0
        %3114 = vmatpush1.bf16.xpose.msra.mxu0 0
        %3115 = vmatprep.subr.bf16.mxu0 0
        %3116 = vmatpush1.bf16.xpose.msra.mxu0 0
        %3117 = vmatprep.subr.bf16.mxu0 0
        %3118 = vmatpush1.bf16.xpose.msra.mxu0 0
        %3119 = vmatprep.subr.bf16.mxu0 0
        %3120 = vmatpush1.bf16.xpose.msra.mxu0 0
        %3121 = vmatprep.subr.bf16.mxu0 0
        %3122 = vmatpush1.bf16.xpose.msra.mxu0 %v3105
        %3123 = vmatprep.subr.bf16.mxu0 0
        %3124 = vmatpush2.bf16.xpose.msra.mxu0 0
        %3125 = vmatprep.subr.bf16.mxu0 0
        %3126 = vmatpush2.bf16.xpose.msra.mxu0 0
        %3127 = vmatprep.subr.bf16.mxu0 0
        %3128 = vmatpush2.bf16.xpose.msra.mxu0 0
        %3129 = vmatprep.subr.bf16.mxu0 0
        %3130 = vmatpush2.bf16.xpose.msra.mxu0 0
        %3131 = vmatprep.subr.bf16.mxu0 0
        %3132 = vmatpush2.bf16.xpose.msra.mxu0 0
        %3133 = vmatprep.subr.bf16.mxu0 0
        %3134 = vmatpush2.bf16.xpose.msra.mxu0 0
        %3135 = vmatprep.subr.bf16.mxu0 0
        %3136 = vmatpush2.bf16.xpose.msra.mxu0 0
        %3137 = vmatprep.subr.bf16.mxu0 0
        %3138 = vmatpush2.bf16.xpose.msra.mxu0 0
        %3139 = vmatprep.mubr.bf16.mxu0 0
        %3140 = vmatmul.mubr.bf16.gmra.mxu0 %v3102
        %v3141 = vpop.f32.mrf.mxu0
        %v3142 = vadd.f32 %v1595, %v3141
        %v3143 = vpop.f32.mrf.mxu0
        %v3144 = vpop.f32.mrf.mxu0
        %v3145 = vadd.f32 %v1596, %v3144
        %v3146 = vpop.f32.mrf.mxu0
        %3147 = vdwg.mxu0
        %3149 = vrot.lane.b32.xlu0 %v1587, 96
        %v3150 = vpop.permute.xlu0 %3149
        %v3152 = vsel %vm1600, %v1395, 0
        %v3155 = vsel %vm1600, %v3150, 0
        %3157 = vmatprep.subr.bf16.mxu0 0
        %3158 = vmatpush1.bf16.xpose.msra.mxu0 0
        %3159 = vmatprep.subr.bf16.mxu0 0
        %3160 = vmatpush1.bf16.xpose.msra.mxu0 0
        %3161 = vmatprep.subr.bf16.mxu0 0
        %3162 = vmatpush1.bf16.xpose.msra.mxu0 0
        %3163 = vmatprep.subr.bf16.mxu0 0
        %3164 = vmatpush1.bf16.xpose.msra.mxu0 0
        %3165 = vmatprep.subr.bf16.mxu0 0
        %3166 = vmatpush1.bf16.xpose.msra.mxu0 0
        %3167 = vmatprep.subr.bf16.mxu0 0
        %3168 = vmatpush1.bf16.xpose.msra.mxu0 0
        %3169 = vmatprep.subr.bf16.mxu0 0
        %3170 = vmatpush1.bf16.xpose.msra.mxu0 0
        %3171 = vmatprep.subr.bf16.mxu0 0
        %3172 = vmatpush1.bf16.xpose.msra.mxu0 %v3155
        %3173 = vmatprep.subr.bf16.mxu0 0
        %3174 = vmatpush2.bf16.xpose.msra.mxu0 0
        %3175 = vmatprep.subr.bf16.mxu0 0
        %3176 = vmatpush2.bf16.xpose.msra.mxu0 0
        %3177 = vmatprep.subr.bf16.mxu0 0
        %3178 = vmatpush2.bf16.xpose.msra.mxu0 0
        %3179 = vmatprep.subr.bf16.mxu0 0
        %3180 = vmatpush2.bf16.xpose.msra.mxu0 0
        %3181 = vmatprep.subr.bf16.mxu0 0
        %3182 = vmatpush2.bf16.xpose.msra.mxu0 0
        %3183 = vmatprep.subr.bf16.mxu0 0
        %3184 = vmatpush2.bf16.xpose.msra.mxu0 0
        %3185 = vmatprep.subr.bf16.mxu0 0
        %3186 = vmatpush2.bf16.xpose.msra.mxu0 0
        %3187 = vmatprep.subr.bf16.mxu0 0
        %3188 = vmatpush2.bf16.xpose.msra.mxu0 0
        %3189 = vmatprep.mubr.bf16.mxu0 0
        %3190 = vmatmul.mubr.bf16.gmra.mxu0 %v3152
        %v3191 = vpop.f32.mrf.mxu0
        %v3192 = vadd.f32 %v1595, %v3191
        %v3193 = vpop.f32.mrf.mxu0
        %v3194 = vpop.f32.mrf.mxu0
        %v3195 = vadd.f32 %v1596, %v3194
        %v3196 = vpop.f32.mrf.mxu0
        %3197 = vdwg.mxu0
        %vm3198 = vcmask 130048
        %v3199 = vsel %vm3198, %v1642, -inf
        %3200 = vmax.xlane.f32.xlu0 %v3199
        %v3201 = vpop.xlane.xlu0 %3200
        %v3202 = vsel %vm3198, %v1645, -inf
        %3203 = vmax.xlane.f32.xlu0 %v3202
        %v3204 = vpop.xlane.xlu0 %3203
        %v3205 = vsel %vm3198, %v1692, -inf
        %3206 = vmax.xlane.f32.xlu0 %v3205
        %v3207 = vpop.xlane.xlu0 %3206
        %v3208 = vsel %vm3198, %v1695, -inf
        %3209 = vmax.xlane.f32.xlu0 %v3208
        %v3210 = vpop.xlane.xlu0 %3209
        %v3211 = vsel %vm3198, %v1742, -inf
        %3212 = vmax.xlane.f32.xlu0 %v3211
        %v3213 = vpop.xlane.xlu0 %3212
        %v3214 = vsel %vm3198, %v1745, -inf
        %3215 = vmax.xlane.f32.xlu0 %v3214
        %v3216 = vpop.xlane.xlu0 %3215
        %v3217 = vsel %vm3198, %v1792, -inf
        %3218 = vmax.xlane.f32.xlu0 %v3217
        %v3219 = vpop.xlane.xlu0 %3218
        %v3220 = vsel %vm3198, %v1795, -inf
        %3221 = vmax.xlane.f32.xlu0 %v3220
        %v3222 = vpop.xlane.xlu0 %3221
        %v3223 = vsel %vm3198, %v1842, -inf
        %3224 = vmax.xlane.f32.xlu0 %v3223
        %v3225 = vpop.xlane.xlu0 %3224
        %v3226 = vsel %vm3198, %v1845, -inf
        %3227 = vmax.xlane.f32.xlu0 %v3226
        %v3228 = vpop.xlane.xlu0 %3227
        %v3229 = vsel %vm3198, %v1892, -inf
        %3230 = vmax.xlane.f32.xlu0 %v3229
        %v3231 = vpop.xlane.xlu0 %3230
        %v3232 = vsel %vm3198, %v1895, -inf
        %3233 = vmax.xlane.f32.xlu0 %v3232
        %v3234 = vpop.xlane.xlu0 %3233
        %v3235 = vsel %vm3198, %v1942, -inf
        %3236 = vmax.xlane.f32.xlu0 %v3235
        %v3237 = vpop.xlane.xlu0 %3236
        %v3238 = vsel %vm3198, %v1945, -inf
        %3239 = vmax.xlane.f32.xlu0 %v3238
        %v3240 = vpop.xlane.xlu0 %3239
        %v3241 = vsel %vm3198, %v1992, -inf
        %3242 = vmax.xlane.f32.xlu0 %v3241
        %v3243 = vpop.xlane.xlu0 %3242
        %v3244 = vsel %vm3198, %v1995, -inf
        %3245 = vmax.xlane.f32.xlu0 %v3244
        %v3246 = vpop.xlane.xlu0 %3245
        %v3247 = vsel %vm3198, %v2042, -inf
        %3248 = vmax.xlane.f32.xlu0 %v3247
        %v3249 = vpop.xlane.xlu0 %3248
        %v3250 = vsel %vm3198, %v2045, -inf
        %3251 = vmax.xlane.f32.xlu0 %v3250
        %v3252 = vpop.xlane.xlu0 %3251
        %v3253 = vsel %vm3198, %v2092, -inf
        %3254 = vmax.xlane.f32.xlu0 %v3253
        %v3255 = vpop.xlane.xlu0 %3254
        %v3256 = vsel %vm3198, %v2095, -inf
        %3257 = vmax.xlane.f32.xlu0 %v3256
        %v3258 = vpop.xlane.xlu0 %3257
        %v3259 = vsel %vm3198, %v2142, -inf
        %3260 = vmax.xlane.f32.xlu0 %v3259
        %v3261 = vpop.xlane.xlu0 %3260
        %v3262 = vsel %vm3198, %v2145, -inf
        %3263 = vmax.xlane.f32.xlu0 %v3262
        %v3264 = vpop.xlane.xlu0 %3263
        %v3265 = vsel %vm3198, %v2192, -inf
        %3266 = vmax.xlane.f32.xlu0 %v3265
        %v3267 = vpop.xlane.xlu0 %3266
        %v3268 = vsel %vm3198, %v2195, -inf
        %3269 = vmax.xlane.f32.xlu0 %v3268
        %v3270 = vpop.xlane.xlu0 %3269
        %v3271 = vsel %vm3198, %v2242, -inf
        %3272 = vmax.xlane.f32.xlu0 %v3271
        %v3273 = vpop.xlane.xlu0 %3272
        %v3274 = vsel %vm3198, %v2245, -inf
        %3275 = vmax.xlane.f32.xlu0 %v3274
        %v3276 = vpop.xlane.xlu0 %3275
        %v3277 = vsel %vm3198, %v2292, -inf
        %3278 = vmax.xlane.f32.xlu0 %v3277
        %v3279 = vpop.xlane.xlu0 %3278
        %v3280 = vsel %vm3198, %v2295, -inf
        %3281 = vmax.xlane.f32.xlu0 %v3280
        %v3282 = vpop.xlane.xlu0 %3281
        %v3283 = vsel %vm3198, %v2342, -inf
        %3284 = vmax.xlane.f32.xlu0 %v3283
        %v3285 = vpop.xlane.xlu0 %3284
        %v3286 = vsel %vm3198, %v2345, -inf
        %3287 = vmax.xlane.f32.xlu0 %v3286
        %v3288 = vpop.xlane.xlu0 %3287
        %v3289 = vsel %vm3198, %v2392, -inf
        %3290 = vmax.xlane.f32.xlu0 %v3289
        %v3291 = vpop.xlane.xlu0 %3290
        %v3292 = vsel %vm3198, %v2395, -inf
        %3293 = vmax.xlane.f32.xlu0 %v3292
        %v3294 = vpop.xlane.xlu0 %3293
        %v3295 = vsel %vm3198, %v2442, -inf
        %3296 = vmax.xlane.f32.xlu0 %v3295
        %v3297 = vpop.xlane.xlu0 %3296
        %v3298 = vsel %vm3198, %v2445, -inf
        %3299 = vmax.xlane.f32.xlu0 %v3298
        %v3300 = vpop.xlane.xlu0 %3299
        %v3301 = vsel %vm3198, %v2492, -inf
        %3302 = vmax.xlane.f32.xlu0 %v3301
        %v3303 = vpop.xlane.xlu0 %3302
        %v3304 = vsel %vm3198, %v2495, -inf
        %3305 = vmax.xlane.f32.xlu0 %v3304
        %v3306 = vpop.xlane.xlu0 %3305
        %v3307 = vsel %vm3198, %v2542, -inf
        %3308 = vmax.xlane.f32.xlu0 %v3307
        %v3309 = vpop.xlane.xlu0 %3308
        %v3310 = vsel %vm3198, %v2545, -inf
        %3311 = vmax.xlane.f32.xlu0 %v3310
        %v3312 = vpop.xlane.xlu0 %3311
        %v3313 = vsel %vm3198, %v2592, -inf
        %3314 = vmax.xlane.f32.xlu0 %v3313
        %v3315 = vpop.xlane.xlu0 %3314
        %v3316 = vsel %vm3198, %v2595, -inf
        %3317 = vmax.xlane.f32.xlu0 %v3316
        %v3318 = vpop.xlane.xlu0 %3317
        %v3319 = vsel %vm3198, %v2642, -inf
        %3320 = vmax.xlane.f32.xlu0 %v3319
        %v3321 = vpop.xlane.xlu0 %3320
        %v3322 = vsel %vm3198, %v2645, -inf
        %3323 = vmax.xlane.f32.xlu0 %v3322
        %v3324 = vpop.xlane.xlu0 %3323
        %v3325 = vsel %vm3198, %v2692, -inf
        %3326 = vmax.xlane.f32.xlu0 %v3325
        %v3327 = vpop.xlane.xlu0 %3326
        %v3328 = vsel %vm3198, %v2695, -inf
        %3329 = vmax.xlane.f32.xlu0 %v3328
        %v3330 = vpop.xlane.xlu0 %3329
        %v3331 = vsel %vm3198, %v2742, -inf
        %3332 = vmax.xlane.f32.xlu0 %v3331
        %v3333 = vpop.xlane.xlu0 %3332
        %v3334 = vsel %vm3198, %v2745, -inf
        %3335 = vmax.xlane.f32.xlu0 %v3334
        %v3336 = vpop.xlane.xlu0 %3335
        %v3337 = vsel %vm3198, %v2792, -inf
        %3338 = vmax.xlane.f32.xlu0 %v3337
        %v3339 = vpop.xlane.xlu0 %3338
        %v3340 = vsel %vm3198, %v2795, -inf
        %3341 = vmax.xlane.f32.xlu0 %v3340
        %v3342 = vpop.xlane.xlu0 %3341
        %v3343 = vsel %vm3198, %v2842, -inf
        %3344 = vmax.xlane.f32.xlu0 %v3343
        %v3345 = vpop.xlane.xlu0 %3344
        %v3346 = vsel %vm3198, %v2845, -inf
        %3347 = vmax.xlane.f32.xlu0 %v3346
        %v3348 = vpop.xlane.xlu0 %3347
        %v3349 = vsel %vm3198, %v2892, -inf
        %3350 = vmax.xlane.f32.xlu0 %v3349
        %v3351 = vpop.xlane.xlu0 %3350
        %v3352 = vsel %vm3198, %v2895, -inf
        %3353 = vmax.xlane.f32.xlu0 %v3352
        %v3354 = vpop.xlane.xlu0 %3353
        %v3355 = vsel %vm3198, %v2942, -inf
        %3356 = vmax.xlane.f32.xlu0 %v3355
        %v3357 = vpop.xlane.xlu0 %3356
        %v3358 = vsel %vm3198, %v2945, -inf
        %3359 = vmax.xlane.f32.xlu0 %v3358
        %v3360 = vpop.xlane.xlu0 %3359
        %v3361 = vsel %vm3198, %v2992, -inf
        %3362 = vmax.xlane.f32.xlu0 %v3361
        %v3363 = vpop.xlane.xlu0 %3362
        %v3364 = vsel %vm3198, %v2995, -inf
        %3365 = vmax.xlane.f32.xlu0 %v3364
        %v3366 = vpop.xlane.xlu0 %3365
        %v3367 = vsel %vm3198, %v3042, -inf
        %3368 = vmax.xlane.f32.xlu0 %v3367
        %v3369 = vpop.xlane.xlu0 %3368
        %v3370 = vsel %vm3198, %v3045, -inf
        %3371 = vmax.xlane.f32.xlu0 %v3370
        %v3372 = vpop.xlane.xlu0 %3371
        %v3373 = vsel %vm3198, %v3092, -inf
        %3374 = vmax.xlane.f32.xlu0 %v3373
        %v3375 = vpop.xlane.xlu0 %3374
        %v3376 = vsel %vm3198, %v3095, -inf
        %3377 = vmax.xlane.f32.xlu0 %v3376
        %v3378 = vpop.xlane.xlu0 %3377
        %v3379 = vsel %vm3198, %v3142, -inf
        %3380 = vmax.xlane.f32.xlu0 %v3379
        %v3381 = vpop.xlane.xlu0 %3380
        %v3382 = vsel %vm3198, %v3145, -inf
        %3383 = vmax.xlane.f32.xlu0 %v3382
        %v3384 = vpop.xlane.xlu0 %3383
        %v3385 = vsel %vm3198, %v3192, -inf
        %3386 = vmax.xlane.f32.xlu0 %v3385
        %v3387 = vpop.xlane.xlu0 %3386
        %v3388 = vsel %vm3198, %v3195, -inf
        %3389 = vmax.xlane.f32.xlu0 %v3388
        %v3390 = vpop.xlane.xlu0 %3389
        %v3391 = vsub.f32 %v1642, %v3201
        %v3392 = vsub.f32 %v1645, %v3204
        %v3393 = vsub.f32 %v1692, %v3207
        %v3394 = vsub.f32 %v1695, %v3210
        %v3395 = vsub.f32 %v1742, %v3213
        %v3396 = vsub.f32 %v1745, %v3216
        %v3397 = vsub.f32 %v1792, %v3219
        %v3398 = vsub.f32 %v1795, %v3222
        %v3399 = vsub.f32 %v1842, %v3225
        %v3400 = vsub.f32 %v1845, %v3228
        %v3401 = vsub.f32 %v1892, %v3231
        %v3402 = vsub.f32 %v1895, %v3234
        %v3403 = vsub.f32 %v1942, %v3237
        %v3404 = vsub.f32 %v1945, %v3240
        %v3405 = vsub.f32 %v1992, %v3243
        %v3406 = vsub.f32 %v1995, %v3246
        %v3407 = vsub.f32 %v2042, %v3249
        %v3408 = vsub.f32 %v2045, %v3252
        %v3409 = vsub.f32 %v2092, %v3255
        %v3410 = vsub.f32 %v2095, %v3258
        %v3411 = vsub.f32 %v2142, %v3261
        %v3412 = vsub.f32 %v2145, %v3264
        %v3413 = vsub.f32 %v2192, %v3267
        %v3414 = vsub.f32 %v2195, %v3270
        %v3415 = vsub.f32 %v2242, %v3273
        %v3416 = vsub.f32 %v2245, %v3276
        %v3417 = vsub.f32 %v2292, %v3279
        %v3418 = vsub.f32 %v2295, %v3282
        %v3419 = vsub.f32 %v2342, %v3285
        %v3420 = vsub.f32 %v2345, %v3288
        %v3421 = vsub.f32 %v2392, %v3291
        %v3422 = vsub.f32 %v2395, %v3294
        %v3423 = vsub.f32 %v2442, %v3297
        %v3424 = vsub.f32 %v2445, %v3300
        %v3425 = vsub.f32 %v2492, %v3303
        %v3426 = vsub.f32 %v2495, %v3306
        %v3427 = vsub.f32 %v2542, %v3309
        %v3428 = vsub.f32 %v2545, %v3312
        %v3429 = vsub.f32 %v2592, %v3315
        %v3430 = vsub.f32 %v2595, %v3318
        %v3431 = vsub.f32 %v2642, %v3321
        %v3432 = vsub.f32 %v2645, %v3324
        %v3433 = vsub.f32 %v2692, %v3327
        %v3434 = vsub.f32 %v2695, %v3330
        %v3435 = vsub.f32 %v2742, %v3333
        %v3436 = vsub.f32 %v2745, %v3336
        %v3437 = vsub.f32 %v2792, %v3339
        %v3438 = vsub.f32 %v2795, %v3342
        %v3439 = vsub.f32 %v2842, %v3345
        %v3440 = vsub.f32 %v2845, %v3348
        %v3441 = vsub.f32 %v2892, %v3351
        %v3442 = vsub.f32 %v2895, %v3354
        %v3443 = vsub.f32 %v2942, %v3357
        %v3444 = vsub.f32 %v2945, %v3360
        %v3445 = vsub.f32 %v2992, %v3363
        %v3446 = vsub.f32 %v2995, %v3366
        %v3447 = vsub.f32 %v3042, %v3369
        %v3448 = vsub.f32 %v3045, %v3372
        %v3449 = vsub.f32 %v3092, %v3375
        %v3450 = vsub.f32 %v3095, %v3378
        %v3451 = vsub.f32 %v3142, %v3381
        %v3452 = vsub.f32 %v3145, %v3384
        %v3453 = vsub.f32 %v3192, %v3387
        %v3454 = vsub.f32 %v3195, %v3390
        %v3455 = vmul.f32 %v3391, 1.442695
        %v3456 = vpow.pop %v3455
        %v3457 = vmul.f32 %v3392, 1.442695
        %v3458 = vpow.pop %v3457
        %v3459 = vmul.f32 %v3393, 1.442695
        %v3460 = vpow.pop %v3459
        %v3461 = vmul.f32 %v3394, 1.442695
        %v3462 = vpow.pop %v3461
        %v3463 = vmul.f32 %v3395, 1.442695
        %v3464 = vpow.pop %v3463
        %v3465 = vmul.f32 %v3396, 1.442695
        %v3466 = vpow.pop %v3465
        %v3467 = vmul.f32 %v3397, 1.442695
        %v3468 = vpow.pop %v3467
        %v3469 = vmul.f32 %v3398, 1.442695
        %v3470 = vpow.pop %v3469
        %v3471 = vmul.f32 %v3399, 1.442695
        %v3472 = vpow.pop %v3471
        %v3473 = vmul.f32 %v3400, 1.442695
        %v3474 = vpow.pop %v3473
        %v3475 = vmul.f32 %v3401, 1.442695
        %v3476 = vpow.pop %v3475
        %v3477 = vmul.f32 %v3402, 1.442695
        %v3478 = vpow.pop %v3477
        %v3479 = vmul.f32 %v3403, 1.442695
        %v3480 = vpow.pop %v3479
        %v3481 = vmul.f32 %v3404, 1.442695
        %v3482 = vpow.pop %v3481
        %v3483 = vmul.f32 %v3405, 1.442695
        %v3484 = vpow.pop %v3483
        %v3485 = vmul.f32 %v3406, 1.442695
        %v3486 = vpow.pop %v3485
        %v3487 = vmul.f32 %v3407, 1.442695
        %v3488 = vpow.pop %v3487
        %v3489 = vmul.f32 %v3408, 1.442695
        %v3490 = vpow.pop %v3489
        %v3491 = vmul.f32 %v3409, 1.442695
        %v3492 = vpow.pop %v3491
        %v3493 = vmul.f32 %v3410, 1.442695
        %v3494 = vpow.pop %v3493
        %v3495 = vmul.f32 %v3411, 1.442695
        %v3496 = vpow.pop %v3495
        %v3497 = vmul.f32 %v3412, 1.442695
        %v3498 = vpow.pop %v3497
        %v3499 = vmul.f32 %v3413, 1.442695
        %v3500 = vpow.pop %v3499
        %v3501 = vmul.f32 %v3414, 1.442695
        %v3502 = vpow.pop %v3501
        %v3503 = vmul.f32 %v3415, 1.442695
        %v3504 = vpow.pop %v3503
        %v3505 = vmul.f32 %v3416, 1.442695
        %v3506 = vpow.pop %v3505
        %v3507 = vmul.f32 %v3417, 1.442695
        %v3508 = vpow.pop %v3507
        %v3509 = vmul.f32 %v3418, 1.442695
        %v3510 = vpow.pop %v3509
        %v3511 = vmul.f32 %v3419, 1.442695
        %v3512 = vpow.pop %v3511
        %v3513 = vmul.f32 %v3420, 1.442695
        %v3514 = vpow.pop %v3513
        %v3515 = vmul.f32 %v3421, 1.442695
        %v3516 = vpow.pop %v3515
        %v3517 = vmul.f32 %v3422, 1.442695
        %v3518 = vpow.pop %v3517
        %v3519 = vmul.f32 %v3423, 1.442695
        %v3520 = vpow.pop %v3519
        %v3521 = vmul.f32 %v3424, 1.442695
        %v3522 = vpow.pop %v3521
        %v3523 = vmul.f32 %v3425, 1.442695
        %v3524 = vpow.pop %v3523
        %v3525 = vmul.f32 %v3426, 1.442695
        %v3526 = vpow.pop %v3525
        %v3527 = vmul.f32 %v3427, 1.442695
        %v3528 = vpow.pop %v3527
        %v3529 = vmul.f32 %v3428, 1.442695
        %v3530 = vpow.pop %v3529
        %v3531 = vmul.f32 %v3429, 1.442695
        %v3532 = vpow.pop %v3531
        %v3533 = vmul.f32 %v3430, 1.442695
        %v3534 = vpow.pop %v3533
        %v3535 = vmul.f32 %v3431, 1.442695
        %v3536 = vpow.pop %v3535
        %v3537 = vmul.f32 %v3432, 1.442695
        %v3538 = vpow.pop %v3537
        %v3539 = vmul.f32 %v3433, 1.442695
        %v3540 = vpow.pop %v3539
        %v3541 = vmul.f32 %v3434, 1.442695
        %v3542 = vpow.pop %v3541
        %v3543 = vmul.f32 %v3435, 1.442695
        %v3544 = vpow.pop %v3543
        %v3545 = vmul.f32 %v3436, 1.442695
        %v3546 = vpow.pop %v3545
        %v3547 = vmul.f32 %v3437, 1.442695
        %v3548 = vpow.pop %v3547
        %v3549 = vmul.f32 %v3438, 1.442695
        %v3550 = vpow.pop %v3549
        %v3551 = vmul.f32 %v3439, 1.442695
        %v3552 = vpow.pop %v3551
        %v3553 = vmul.f32 %v3440, 1.442695
        %v3554 = vpow.pop %v3553
        %v3555 = vmul.f32 %v3441, 1.442695
        %v3556 = vpow.pop %v3555
        %v3557 = vmul.f32 %v3442, 1.442695
        %v3558 = vpow.pop %v3557
        %v3559 = vmul.f32 %v3443, 1.442695
        %v3560 = vpow.pop %v3559
        %v3561 = vmul.f32 %v3444, 1.442695
        %v3562 = vpow.pop %v3561
        %v3563 = vmul.f32 %v3445, 1.442695
        %v3564 = vpow.pop %v3563
        %v3565 = vmul.f32 %v3446, 1.442695
        %v3566 = vpow.pop %v3565
        %v3567 = vmul.f32 %v3447, 1.442695
        %v3568 = vpow.pop %v3567
        %v3569 = vmul.f32 %v3448, 1.442695
        %v3570 = vpow.pop %v3569
        %v3571 = vmul.f32 %v3449, 1.442695
        %v3572 = vpow.pop %v3571
        %v3573 = vmul.f32 %v3450, 1.442695
        %v3574 = vpow.pop %v3573
        %v3575 = vmul.f32 %v3451, 1.442695
        %v3576 = vpow.pop %v3575
        %v3577 = vmul.f32 %v3452, 1.442695
        %v3578 = vpow.pop %v3577
        %v3579 = vmul.f32 %v3453, 1.442695
        %v3580 = vpow.pop %v3579
        %v3581 = vmul.f32 %v3454, 1.442695
        %v3582 = vpow.pop %v3581
        %v3583 = vsel %vm3198, %v3456, 0.0
        %3584 = vadd.xlane.f32.xlu0 %v3583
        %v3585 = vpop.xlane.xlu0 %3584
        %v3586 = vsel %vm3198, %v3458, 0.0
        %3587 = vadd.xlane.f32.xlu0 %v3586
        %v3588 = vpop.xlane.xlu0 %3587
        %v3589 = vsel %vm3198, %v3460, 0.0
        %3590 = vadd.xlane.f32.xlu0 %v3589
        %v3591 = vpop.xlane.xlu0 %3590
        %v3592 = vsel %vm3198, %v3462, 0.0
        %3593 = vadd.xlane.f32.xlu0 %v3592
        %v3594 = vpop.xlane.xlu0 %3593
        %v3595 = vsel %vm3198, %v3464, 0.0
        %3596 = vadd.xlane.f32.xlu0 %v3595
        %v3597 = vpop.xlane.xlu0 %3596
        %v3598 = vsel %vm3198, %v3466, 0.0
        %3599 = vadd.xlane.f32.xlu0 %v3598
        %v3600 = vpop.xlane.xlu0 %3599
        %v3601 = vsel %vm3198, %v3468, 0.0
        %3602 = vadd.xlane.f32.xlu0 %v3601
        %v3603 = vpop.xlane.xlu0 %3602
        %v3604 = vsel %vm3198, %v3470, 0.0
        %3605 = vadd.xlane.f32.xlu0 %v3604
        %v3606 = vpop.xlane.xlu0 %3605
        %v3607 = vsel %vm3198, %v3472, 0.0
        %3608 = vadd.xlane.f32.xlu0 %v3607
        %v3609 = vpop.xlane.xlu0 %3608
        %v3610 = vsel %vm3198, %v3474, 0.0
        %3611 = vadd.xlane.f32.xlu0 %v3610
        %v3612 = vpop.xlane.xlu0 %3611
        %v3613 = vsel %vm3198, %v3476, 0.0
        %3614 = vadd.xlane.f32.xlu0 %v3613
        %v3615 = vpop.xlane.xlu0 %3614
        %v3616 = vsel %vm3198, %v3478, 0.0
        %3617 = vadd.xlane.f32.xlu0 %v3616
        %v3618 = vpop.xlane.xlu0 %3617
        %v3619 = vsel %vm3198, %v3480, 0.0
        %3620 = vadd.xlane.f32.xlu0 %v3619
        %v3621 = vpop.xlane.xlu0 %3620
        %v3622 = vsel %vm3198, %v3482, 0.0
        %3623 = vadd.xlane.f32.xlu0 %v3622
        %v3624 = vpop.xlane.xlu0 %3623
        %v3625 = vsel %vm3198, %v3484, 0.0
        %3626 = vadd.xlane.f32.xlu0 %v3625
        %v3627 = vpop.xlane.xlu0 %3626
        %v3628 = vsel %vm3198, %v3486, 0.0
        %3629 = vadd.xlane.f32.xlu0 %v3628
        %v3630 = vpop.xlane.xlu0 %3629
        %v3631 = vsel %vm3198, %v3488, 0.0
        %3632 = vadd.xlane.f32.xlu0 %v3631
        %v3633 = vpop.xlane.xlu0 %3632
        %v3634 = vsel %vm3198, %v3490, 0.0
        %3635 = vadd.xlane.f32.xlu0 %v3634
        %v3636 = vpop.xlane.xlu0 %3635
        %v3637 = vsel %vm3198, %v3492, 0.0
        %3638 = vadd.xlane.f32.xlu0 %v3637
        %v3639 = vpop.xlane.xlu0 %3638
        %v3640 = vsel %vm3198, %v3494, 0.0
        %3641 = vadd.xlane.f32.xlu0 %v3640
        %v3642 = vpop.xlane.xlu0 %3641
        %v3643 = vsel %vm3198, %v3496, 0.0
        %3644 = vadd.xlane.f32.xlu0 %v3643
        %v3645 = vpop.xlane.xlu0 %3644
        %v3646 = vsel %vm3198, %v3498, 0.0
        %3647 = vadd.xlane.f32.xlu0 %v3646
        %v3648 = vpop.xlane.xlu0 %3647
        %v3649 = vsel %vm3198, %v3500, 0.0
        %3650 = vadd.xlane.f32.xlu0 %v3649
        %v3651 = vpop.xlane.xlu0 %3650
        %v3652 = vsel %vm3198, %v3502, 0.0
        %3653 = vadd.xlane.f32.xlu0 %v3652
        %v3654 = vpop.xlane.xlu0 %3653
        %v3655 = vsel %vm3198, %v3504, 0.0
        %3656 = vadd.xlane.f32.xlu0 %v3655
        %v3657 = vpop.xlane.xlu0 %3656
        %v3658 = vsel %vm3198, %v3506, 0.0
        %3659 = vadd.xlane.f32.xlu0 %v3658
        %v3660 = vpop.xlane.xlu0 %3659
        %v3661 = vsel %vm3198, %v3508, 0.0
        %3662 = vadd.xlane.f32.xlu0 %v3661
        %v3663 = vpop.xlane.xlu0 %3662
        %v3664 = vsel %vm3198, %v3510, 0.0
        %3665 = vadd.xlane.f32.xlu0 %v3664
        %v3666 = vpop.xlane.xlu0 %3665
        %v3667 = vsel %vm3198, %v3512, 0.0
        %3668 = vadd.xlane.f32.xlu0 %v3667
        %v3669 = vpop.xlane.xlu0 %3668
        %v3670 = vsel %vm3198, %v3514, 0.0
        %3671 = vadd.xlane.f32.xlu0 %v3670
        %v3672 = vpop.xlane.xlu0 %3671
        %v3673 = vsel %vm3198, %v3516, 0.0
        %3674 = vadd.xlane.f32.xlu0 %v3673
        %v3675 = vpop.xlane.xlu0 %3674
        %v3676 = vsel %vm3198, %v3518, 0.0
        %3677 = vadd.xlane.f32.xlu0 %v3676
        %v3678 = vpop.xlane.xlu0 %3677
        %v3679 = vsel %vm3198, %v3520, 0.0
        %3680 = vadd.xlane.f32.xlu0 %v3679
        %v3681 = vpop.xlane.xlu0 %3680
        %v3682 = vsel %vm3198, %v3522, 0.0
        %3683 = vadd.xlane.f32.xlu0 %v3682
        %v3684 = vpop.xlane.xlu0 %3683
        %v3685 = vsel %vm3198, %v3524, 0.0
        %3686 = vadd.xlane.f32.xlu0 %v3685
        %v3687 = vpop.xlane.xlu0 %3686
        %v3688 = vsel %vm3198, %v3526, 0.0
        %3689 = vadd.xlane.f32.xlu0 %v3688
        %v3690 = vpop.xlane.xlu0 %3689
        %v3691 = vsel %vm3198, %v3528, 0.0
        %3692 = vadd.xlane.f32.xlu0 %v3691
        %v3693 = vpop.xlane.xlu0 %3692
        %v3694 = vsel %vm3198, %v3530, 0.0
        %3695 = vadd.xlane.f32.xlu0 %v3694
        %v3696 = vpop.xlane.xlu0 %3695
        %v3697 = vsel %vm3198, %v3532, 0.0
        %3698 = vadd.xlane.f32.xlu0 %v3697
        %v3699 = vpop.xlane.xlu0 %3698
        %v3700 = vsel %vm3198, %v3534, 0.0
        %3701 = vadd.xlane.f32.xlu0 %v3700
        %v3702 = vpop.xlane.xlu0 %3701
        %v3703 = vsel %vm3198, %v3536, 0.0
        %3704 = vadd.xlane.f32.xlu0 %v3703
        %v3705 = vpop.xlane.xlu0 %3704
        %v3706 = vsel %vm3198, %v3538, 0.0
        %3707 = vadd.xlane.f32.xlu0 %v3706
        %v3708 = vpop.xlane.xlu0 %3707
        %v3709 = vsel %vm3198, %v3540, 0.0
        %3710 = vadd.xlane.f32.xlu0 %v3709
        %v3711 = vpop.xlane.xlu0 %3710
        %v3712 = vsel %vm3198, %v3542, 0.0
        %3713 = vadd.xlane.f32.xlu0 %v3712
        %v3714 = vpop.xlane.xlu0 %3713
        %v3715 = vsel %vm3198, %v3544, 0.0
        %3716 = vadd.xlane.f32.xlu0 %v3715
        %v3717 = vpop.xlane.xlu0 %3716
        %v3718 = vsel %vm3198, %v3546, 0.0
        %3719 = vadd.xlane.f32.xlu0 %v3718
        %v3720 = vpop.xlane.xlu0 %3719
        %v3721 = vsel %vm3198, %v3548, 0.0
        %3722 = vadd.xlane.f32.xlu0 %v3721
        %v3723 = vpop.xlane.xlu0 %3722
        %v3724 = vsel %vm3198, %v3550, 0.0
        %3725 = vadd.xlane.f32.xlu0 %v3724
        %v3726 = vpop.xlane.xlu0 %3725
        %v3727 = vsel %vm3198, %v3552, 0.0
        %3728 = vadd.xlane.f32.xlu0 %v3727
        %v3729 = vpop.xlane.xlu0 %3728
        %v3730 = vsel %vm3198, %v3554, 0.0
        %3731 = vadd.xlane.f32.xlu0 %v3730
        %v3732 = vpop.xlane.xlu0 %3731
        %v3733 = vsel %vm3198, %v3556, 0.0
        %3734 = vadd.xlane.f32.xlu0 %v3733
        %v3735 = vpop.xlane.xlu0 %3734
        %v3736 = vsel %vm3198, %v3558, 0.0
        %3737 = vadd.xlane.f32.xlu0 %v3736
        %v3738 = vpop.xlane.xlu0 %3737
        %v3739 = vsel %vm3198, %v3560, 0.0
        %3740 = vadd.xlane.f32.xlu0 %v3739
        %v3741 = vpop.xlane.xlu0 %3740
        %v3742 = vsel %vm3198, %v3562, 0.0
        %3743 = vadd.xlane.f32.xlu0 %v3742
        %v3744 = vpop.xlane.xlu0 %3743
        %v3745 = vsel %vm3198, %v3564, 0.0
        %3746 = vadd.xlane.f32.xlu0 %v3745
        %v3747 = vpop.xlane.xlu0 %3746
        %v3748 = vsel %vm3198, %v3566, 0.0
        %3749 = vadd.xlane.f32.xlu0 %v3748
        %v3750 = vpop.xlane.xlu0 %3749
        %v3751 = vsel %vm3198, %v3568, 0.0
        %3752 = vadd.xlane.f32.xlu0 %v3751
        %v3753 = vpop.xlane.xlu0 %3752
        %v3754 = vsel %vm3198, %v3570, 0.0
        %3755 = vadd.xlane.f32.xlu0 %v3754
        %v3756 = vpop.xlane.xlu0 %3755
        %v3757 = vsel %vm3198, %v3572, 0.0
        %3758 = vadd.xlane.f32.xlu0 %v3757
        %v3759 = vpop.xlane.xlu0 %3758
        %v3760 = vsel %vm3198, %v3574, 0.0
        %3761 = vadd.xlane.f32.xlu0 %v3760
        %v3762 = vpop.xlane.xlu0 %3761
        %v3763 = vsel %vm3198, %v3576, 0.0
        %3764 = vadd.xlane.f32.xlu0 %v3763
        %v3765 = vpop.xlane.xlu0 %3764
        %v3766 = vsel %vm3198, %v3578, 0.0
        %3767 = vadd.xlane.f32.xlu0 %v3766
        %v3768 = vpop.xlane.xlu0 %3767
        %v3769 = vsel %vm3198, %v3580, 0.0
        %3770 = vadd.xlane.f32.xlu0 %v3769
        %v3771 = vpop.xlane.xlu0 %3770
        %v3772 = vsel %vm3198, %v3582, 0.0
        %3773 = vadd.xlane.f32.xlu0 %v3772
        %v3774 = vpop.xlane.xlu0 %3773
        %v3775 = vrcp.pop %v3585
        %v3776 = vrcp.pop %v3588
        %v3777 = vrcp.pop %v3591
        %v3778 = vrcp.pop %v3594
        %v3779 = vrcp.pop %v3597
        %v3780 = vrcp.pop %v3600
        %v3781 = vrcp.pop %v3603
        %v3782 = vrcp.pop %v3606
        %v3783 = vrcp.pop %v3609
        %v3784 = vrcp.pop %v3612
        %v3785 = vrcp.pop %v3615
        %v3786 = vrcp.pop %v3618
        %v3787 = vrcp.pop %v3621
        %v3788 = vrcp.pop %v3624
        %v3789 = vrcp.pop %v3627
        %v3790 = vrcp.pop %v3630
        %v3791 = vrcp.pop %v3633
        %v3792 = vrcp.pop %v3636
        %v3793 = vrcp.pop %v3639
        %v3794 = vrcp.pop %v3642
        %v3795 = vrcp.pop %v3645
        %v3796 = vrcp.pop %v3648
        %v3797 = vrcp.pop %v3651
        %v3798 = vrcp.pop %v3654
        %v3799 = vrcp.pop %v3657
        %v3800 = vrcp.pop %v3660
        %v3801 = vrcp.pop %v3663
        %v3802 = vrcp.pop %v3666
        %v3803 = vrcp.pop %v3669
        %v3804 = vrcp.pop %v3672
        %v3805 = vrcp.pop %v3675
        %v3806 = vrcp.pop %v3678
        %v3807 = vrcp.pop %v3681
        %v3808 = vrcp.pop %v3684
        %v3809 = vrcp.pop %v3687
        %v3810 = vrcp.pop %v3690
        %v3811 = vrcp.pop %v3693
        %v3812 = vrcp.pop %v3696
        %v3813 = vrcp.pop %v3699
        %v3814 = vrcp.pop %v3702
        %v3815 = vrcp.pop %v3705
        %v3816 = vrcp.pop %v3708
        %v3817 = vrcp.pop %v3711
        %v3818 = vrcp.pop %v3714
        %v3819 = vrcp.pop %v3717
        %v3820 = vrcp.pop %v3720
        %v3821 = vrcp.pop %v3723
        %v3822 = vrcp.pop %v3726
        %v3823 = vrcp.pop %v3729
        %v3824 = vrcp.pop %v3732
        %v3825 = vrcp.pop %v3735
        %v3826 = vrcp.pop %v3738
        %v3827 = vrcp.pop %v3741
        %v3828 = vrcp.pop %v3744
        %v3829 = vrcp.pop %v3747
        %v3830 = vrcp.pop %v3750
        %v3831 = vrcp.pop %v3753
        %v3832 = vrcp.pop %v3756
        %v3833 = vrcp.pop %v3759
        %v3834 = vrcp.pop %v3762
        %v3835 = vrcp.pop %v3765
        %v3836 = vrcp.pop %v3768
        %v3837 = vrcp.pop %v3771
        %v3838 = vrcp.pop %v3774
        %v3839 = vmul.f32 %v3456, %v3775
        %v3840 = vmul.f32 %v3458, %v3776
        %v3841 = vmul.f32 %v3460, %v3777
        %v3842 = vmul.f32 %v3462, %v3778
        %v3843 = vmul.f32 %v3464, %v3779
        %v3844 = vmul.f32 %v3466, %v3780
        %v3845 = vmul.f32 %v3468, %v3781
        %v3846 = vmul.f32 %v3470, %v3782
        %v3847 = vmul.f32 %v3472, %v3783
        %v3848 = vmul.f32 %v3474, %v3784
        %v3849 = vmul.f32 %v3476, %v3785
        %v3850 = vmul.f32 %v3478, %v3786
        %v3851 = vmul.f32 %v3480, %v3787
        %v3852 = vmul.f32 %v3482, %v3788
        %v3853 = vmul.f32 %v3484, %v3789
        %v3854 = vmul.f32 %v3486, %v3790
        %v3855 = vmul.f32 %v3488, %v3791
        %v3856 = vmul.f32 %v3490, %v3792
        %v3857 = vmul.f32 %v3492, %v3793
        %v3858 = vmul.f32 %v3494, %v3794
        %v3859 = vmul.f32 %v3496, %v3795
        %v3860 = vmul.f32 %v3498, %v3796
        %v3861 = vmul.f32 %v3500, %v3797
        %v3862 = vmul.f32 %v3502, %v3798
        %v3863 = vmul.f32 %v3504, %v3799
        %v3864 = vmul.f32 %v3506, %v3800
        %v3865 = vmul.f32 %v3508, %v3801
        %v3866 = vmul.f32 %v3510, %v3802
        %v3867 = vmul.f32 %v3512, %v3803
        %v3868 = vmul.f32 %v3514, %v3804
        %v3869 = vmul.f32 %v3516, %v3805
        %v3870 = vmul.f32 %v3518, %v3806
        %v3871 = vmul.f32 %v3520, %v3807
        %v3872 = vmul.f32 %v3522, %v3808
        %v3873 = vmul.f32 %v3524, %v3809
        %v3874 = vmul.f32 %v3526, %v3810
        %v3875 = vmul.f32 %v3528, %v3811
        %v3876 = vmul.f32 %v3530, %v3812
        %v3877 = vmul.f32 %v3532, %v3813
        %v3878 = vmul.f32 %v3534, %v3814
        %v3879 = vmul.f32 %v3536, %v3815
        %v3880 = vmul.f32 %v3538, %v3816
        %v3881 = vmul.f32 %v3540, %v3817
        %v3882 = vmul.f32 %v3542, %v3818
        %v3883 = vmul.f32 %v3544, %v3819
        %v3884 = vmul.f32 %v3546, %v3820
        %v3885 = vmul.f32 %v3548, %v3821
        %v3886 = vmul.f32 %v3550, %v3822
        %v3887 = vmul.f32 %v3552, %v3823
        %v3888 = vmul.f32 %v3554, %v3824
        %v3889 = vmul.f32 %v3556, %v3825
        %v3890 = vmul.f32 %v3558, %v3826
        %v3891 = vmul.f32 %v3560, %v3827
        %v3892 = vmul.f32 %v3562, %v3828
        %v3893 = vmul.f32 %v3564, %v3829
        %v3894 = vmul.f32 %v3566, %v3830
        %v3895 = vmul.f32 %v3568, %v3831
        %v3896 = vmul.f32 %v3570, %v3832
        %v3897 = vmul.f32 %v3572, %v3833
        %v3898 = vmul.f32 %v3574, %v3834
        %v3899 = vmul.f32 %v3576, %v3835
        %v3900 = vmul.f32 %v3578, %v3836
        %v3901 = vmul.f32 %v3580, %v3837
        %v3902 = vmul.f32 %v3582, %v3838
        %v3903 = vpack.c.bf16 %v3840, %v3839
        %v3904 = vpack.c.bf16 %v3842, %v3841
        %v3905 = vpack.c.bf16 %v3844, %v3843
        %v3906 = vpack.c.bf16 %v3846, %v3845
        %v3907 = vpack.c.bf16 %v3848, %v3847
        %v3908 = vpack.c.bf16 %v3850, %v3849
        %v3909 = vpack.c.bf16 %v3852, %v3851
        %v3910 = vpack.c.bf16 %v3854, %v3853
        %v3911 = vpack.c.bf16 %v3856, %v3855
        %v3912 = vpack.c.bf16 %v3858, %v3857
        %v3913 = vpack.c.bf16 %v3860, %v3859
        %v3914 = vpack.c.bf16 %v3862, %v3861
        %v3915 = vpack.c.bf16 %v3864, %v3863
        %v3916 = vpack.c.bf16 %v3866, %v3865
        %v3917 = vpack.c.bf16 %v3868, %v3867
        %v3918 = vpack.c.bf16 %v3870, %v3869
        %v3919 = vpack.c.bf16 %v3872, %v3871
        %v3920 = vpack.c.bf16 %v3874, %v3873
        %v3921 = vpack.c.bf16 %v3876, %v3875
        %v3922 = vpack.c.bf16 %v3878, %v3877
        %v3923 = vpack.c.bf16 %v3880, %v3879
        %v3924 = vpack.c.bf16 %v3882, %v3881
        %v3925 = vpack.c.bf16 %v3884, %v3883
        %v3926 = vpack.c.bf16 %v3886, %v3885
        %v3927 = vpack.c.bf16 %v3888, %v3887
        %v3928 = vpack.c.bf16 %v3890, %v3889
        %v3929 = vpack.c.bf16 %v3892, %v3891
        %v3930 = vpack.c.bf16 %v3894, %v3893
        %v3931 = vpack.c.bf16 %v3896, %v3895
        %v3932 = vpack.c.bf16 %v3898, %v3897
        %v3933 = vpack.c.bf16 %v3900, %v3899
        %v3934 = vpack.c.bf16 %v3902, %v3901
        %3935 = vrot.lane.b32.xlu0 %v1556, 64
        %v3936 = vpop.permute.xlu0 %3935
        %v3939 = vsel %vm3198, %v3903, 0
        %3941 = vmatprep.subr.bf16.mxu0 0
        %3942 = vmatpush1.bf16.msra.mxu0 0
        %3943 = vmatprep.subr.bf16.mxu0 0
        %3944 = vmatpush1.bf16.msra.mxu0 0
        %3945 = vmatprep.subr.bf16.mxu0 0
        %3946 = vmatpush1.bf16.msra.mxu0 0
        %3947 = vmatprep.subr.bf16.mxu0 0
        %3948 = vmatpush1.bf16.msra.mxu0 0
        %3949 = vmatprep.subr.bf16.mxu0 0
        %3950 = vmatpush1.bf16.msra.mxu0 0
        %3951 = vmatprep.subr.bf16.mxu0 0
        %3952 = vmatpush1.bf16.msra.mxu0 0
        %3953 = vmatprep.subr.bf16.mxu0 0
        %3954 = vmatpush1.bf16.msra.mxu0 0
        %3955 = vmatprep.subr.bf16.mxu0 0
        %3956 = vmatpush1.bf16.msra.mxu0 %v3936
        %3957 = vmatprep.subr.bf16.mxu0 0
        %3958 = vmatpush2.bf16.msra.mxu0 0
        %3959 = vmatprep.subr.bf16.mxu0 0
        %3960 = vmatpush2.bf16.msra.mxu0 0
        %3961 = vmatprep.subr.bf16.mxu0 0
        %3962 = vmatpush2.bf16.msra.mxu0 0
        %3963 = vmatprep.subr.bf16.mxu0 0
        %3964 = vmatpush2.bf16.msra.mxu0 0
        %3965 = vmatprep.subr.bf16.mxu0 0
        %3966 = vmatpush2.bf16.msra.mxu0 0
        %3967 = vmatprep.subr.bf16.mxu0 0
        %3968 = vmatpush2.bf16.msra.mxu0 0
        %3969 = vmatprep.subr.bf16.mxu0 0
        %3970 = vmatpush2.bf16.msra.mxu0 0
        %3971 = vmatprep.subr.bf16.mxu0 0
        %3972 = vmatpush2.bf16.msra.mxu0 0
        %3973 = vmatprep.mubr.bf16.mxu0 0
        %3974 = vmatmul.mubr.bf16.gmra.mxu0 %v3939
        %v3975 = vpop.f32.mrf.mxu0
        %v3976 = vadd.f32 0.0, %v3975
        %v3977 = vpop.f32.mrf.mxu0
        %v3978 = vpop.f32.mrf.mxu0
        %v3979 = vadd.f32 0.0, %v3978
        %v3980 = vpop.f32.mrf.mxu0
        %3981 = vdwg.mxu0
        %3982 = vrot.lane.b32.xlu0 %v1557, 64
        %v3983 = vpop.permute.xlu0 %3982
        %v3986 = vsel %vm3198, %v3904, 0
        %3988 = vmatprep.subr.bf16.mxu0 0
        %3989 = vmatpush1.bf16.msra.mxu0 0
        %3990 = vmatprep.subr.bf16.mxu0 0
        %3991 = vmatpush1.bf16.msra.mxu0 0
        %3992 = vmatprep.subr.bf16.mxu0 0
        %3993 = vmatpush1.bf16.msra.mxu0 0
        %3994 = vmatprep.subr.bf16.mxu0 0
        %3995 = vmatpush1.bf16.msra.mxu0 0
        %3996 = vmatprep.subr.bf16.mxu0 0
        %3997 = vmatpush1.bf16.msra.mxu0 0
        %3998 = vmatprep.subr.bf16.mxu0 0
        %3999 = vmatpush1.bf16.msra.mxu0 0
        %4000 = vmatprep.subr.bf16.mxu0 0
        %4001 = vmatpush1.bf16.msra.mxu0 0
        %4002 = vmatprep.subr.bf16.mxu0 0
        %4003 = vmatpush1.bf16.msra.mxu0 %v3983
        %4004 = vmatprep.subr.bf16.mxu0 0
        %4005 = vmatpush2.bf16.msra.mxu0 0
        %4006 = vmatprep.subr.bf16.mxu0 0
        %4007 = vmatpush2.bf16.msra.mxu0 0
        %4008 = vmatprep.subr.bf16.mxu0 0
        %4009 = vmatpush2.bf16.msra.mxu0 0
        %4010 = vmatprep.subr.bf16.mxu0 0
        %4011 = vmatpush2.bf16.msra.mxu0 0
        %4012 = vmatprep.subr.bf16.mxu0 0
        %4013 = vmatpush2.bf16.msra.mxu0 0
        %4014 = vmatprep.subr.bf16.mxu0 0
        %4015 = vmatpush2.bf16.msra.mxu0 0
        %4016 = vmatprep.subr.bf16.mxu0 0
        %4017 = vmatpush2.bf16.msra.mxu0 0
        %4018 = vmatprep.subr.bf16.mxu0 0
        %4019 = vmatpush2.bf16.msra.mxu0 0
        %4020 = vmatprep.mubr.bf16.mxu0 0
        %4021 = vmatmul.mubr.bf16.gmra.mxu0 %v3986
        %v4022 = vpop.f32.mrf.mxu0
        %v4023 = vadd.f32 0.0, %v4022
        %v4024 = vpop.f32.mrf.mxu0
        %v4025 = vpop.f32.mrf.mxu0
        %v4026 = vadd.f32 0.0, %v4025
        %v4027 = vpop.f32.mrf.mxu0
        %4028 = vdwg.mxu0
        %4029 = vrot.lane.b32.xlu0 %v1558, 64
        %v4030 = vpop.permute.xlu0 %4029
        %v4033 = vsel %vm3198, %v3905, 0
        %4035 = vmatprep.subr.bf16.mxu0 0
        %4036 = vmatpush1.bf16.msra.mxu0 0
        %4037 = vmatprep.subr.bf16.mxu0 0
        %4038 = vmatpush1.bf16.msra.mxu0 0
        %4039 = vmatprep.subr.bf16.mxu0 0
        %4040 = vmatpush1.bf16.msra.mxu0 0
        %4041 = vmatprep.subr.bf16.mxu0 0
        %4042 = vmatpush1.bf16.msra.mxu0 0
        %4043 = vmatprep.subr.bf16.mxu0 0
        %4044 = vmatpush1.bf16.msra.mxu0 0
        %4045 = vmatprep.subr.bf16.mxu0 0
        %4046 = vmatpush1.bf16.msra.mxu0 0
        %4047 = vmatprep.subr.bf16.mxu0 0
        %4048 = vmatpush1.bf16.msra.mxu0 0
        %4049 = vmatprep.subr.bf16.mxu0 0
        %4050 = vmatpush1.bf16.msra.mxu0 %v4030
        %4051 = vmatprep.subr.bf16.mxu0 0
        %4052 = vmatpush2.bf16.msra.mxu0 0
        %4053 = vmatprep.subr.bf16.mxu0 0
        %4054 = vmatpush2.bf16.msra.mxu0 0
        %4055 = vmatprep.subr.bf16.mxu0 0
        %4056 = vmatpush2.bf16.msra.mxu0 0
        %4057 = vmatprep.subr.bf16.mxu0 0
        %4058 = vmatpush2.bf16.msra.mxu0 0
        %4059 = vmatprep.subr.bf16.mxu0 0
        %4060 = vmatpush2.bf16.msra.mxu0 0
        %4061 = vmatprep.subr.bf16.mxu0 0
        %4062 = vmatpush2.bf16.msra.mxu0 0
        %4063 = vmatprep.subr.bf16.mxu0 0
        %4064 = vmatpush2.bf16.msra.mxu0 0
        %4065 = vmatprep.subr.bf16.mxu0 0
        %4066 = vmatpush2.bf16.msra.mxu0 0
        %4067 = vmatprep.mubr.bf16.mxu0 0
        %4068 = vmatmul.mubr.bf16.gmra.mxu0 %v4033
        %v4069 = vpop.f32.mrf.mxu0
        %v4070 = vadd.f32 0.0, %v4069
        %v4071 = vpop.f32.mrf.mxu0
        %v4072 = vpop.f32.mrf.mxu0
        %v4073 = vadd.f32 0.0, %v4072
        %v4074 = vpop.f32.mrf.mxu0
        %4075 = vdwg.mxu0
        %4076 = vrot.lane.b32.xlu0 %v1559, 64
        %v4077 = vpop.permute.xlu0 %4076
        %v4080 = vsel %vm3198, %v3906, 0
        %4082 = vmatprep.subr.bf16.mxu0 0
        %4083 = vmatpush1.bf16.msra.mxu0 0
        %4084 = vmatprep.subr.bf16.mxu0 0
        %4085 = vmatpush1.bf16.msra.mxu0 0
        %4086 = vmatprep.subr.bf16.mxu0 0
        %4087 = vmatpush1.bf16.msra.mxu0 0
        %4088 = vmatprep.subr.bf16.mxu0 0
        %4089 = vmatpush1.bf16.msra.mxu0 0
        %4090 = vmatprep.subr.bf16.mxu0 0
        %4091 = vmatpush1.bf16.msra.mxu0 0
        %4092 = vmatprep.subr.bf16.mxu0 0
        %4093 = vmatpush1.bf16.msra.mxu0 0
        %4094 = vmatprep.subr.bf16.mxu0 0
        %4095 = vmatpush1.bf16.msra.mxu0 0
        %4096 = vmatprep.subr.bf16.mxu0 0
        %4097 = vmatpush1.bf16.msra.mxu0 %v4077
        %4098 = vmatprep.subr.bf16.mxu0 0
        %4099 = vmatpush2.bf16.msra.mxu0 0
        %4100 = vmatprep.subr.bf16.mxu0 0
        %4101 = vmatpush2.bf16.msra.mxu0 0
        %4102 = vmatprep.subr.bf16.mxu0 0
        %4103 = vmatpush2.bf16.msra.mxu0 0
        %4104 = vmatprep.subr.bf16.mxu0 0
        %4105 = vmatpush2.bf16.msra.mxu0 0
        %4106 = vmatprep.subr.bf16.mxu0 0
        %4107 = vmatpush2.bf16.msra.mxu0 0
        %4108 = vmatprep.subr.bf16.mxu0 0
        %4109 = vmatpush2.bf16.msra.mxu0 0
        %4110 = vmatprep.subr.bf16.mxu0 0
        %4111 = vmatpush2.bf16.msra.mxu0 0
        %4112 = vmatprep.subr.bf16.mxu0 0
        %4113 = vmatpush2.bf16.msra.mxu0 0
        %4114 = vmatprep.mubr.bf16.mxu0 0
        %4115 = vmatmul.mubr.bf16.gmra.mxu0 %v4080
        %v4116 = vpop.f32.mrf.mxu0
        %v4117 = vadd.f32 0.0, %v4116
        %v4118 = vpop.f32.mrf.mxu0
        %v4119 = vpop.f32.mrf.mxu0
        %v4120 = vadd.f32 0.0, %v4119
        %v4121 = vpop.f32.mrf.mxu0
        %4122 = vdwg.mxu0
        %4123 = vrot.lane.b32.xlu0 %v1560, 64
        %v4124 = vpop.permute.xlu0 %4123
        %v4127 = vsel %vm3198, %v3907, 0
        %4129 = vmatprep.subr.bf16.mxu0 0
        %4130 = vmatpush1.bf16.msra.mxu0 0
        %4131 = vmatprep.subr.bf16.mxu0 0
        %4132 = vmatpush1.bf16.msra.mxu0 0
        %4133 = vmatprep.subr.bf16.mxu0 0
        %4134 = vmatpush1.bf16.msra.mxu0 0
        %4135 = vmatprep.subr.bf16.mxu0 0
        %4136 = vmatpush1.bf16.msra.mxu0 0
        %4137 = vmatprep.subr.bf16.mxu0 0
        %4138 = vmatpush1.bf16.msra.mxu0 0
        %4139 = vmatprep.subr.bf16.mxu0 0
        %4140 = vmatpush1.bf16.msra.mxu0 0
        %4141 = vmatprep.subr.bf16.mxu0 0
        %4142 = vmatpush1.bf16.msra.mxu0 0
        %4143 = vmatprep.subr.bf16.mxu0 0
        %4144 = vmatpush1.bf16.msra.mxu0 %v4124
        %4145 = vmatprep.subr.bf16.mxu0 0
        %4146 = vmatpush2.bf16.msra.mxu0 0
        %4147 = vmatprep.subr.bf16.mxu0 0
        %4148 = vmatpush2.bf16.msra.mxu0 0
        %4149 = vmatprep.subr.bf16.mxu0 0
        %4150 = vmatpush2.bf16.msra.mxu0 0
        %4151 = vmatprep.subr.bf16.mxu0 0
        %4152 = vmatpush2.bf16.msra.mxu0 0
        %4153 = vmatprep.subr.bf16.mxu0 0
        %4154 = vmatpush2.bf16.msra.mxu0 0
        %4155 = vmatprep.subr.bf16.mxu0 0
        %4156 = vmatpush2.bf16.msra.mxu0 0
        %4157 = vmatprep.subr.bf16.mxu0 0
        %4158 = vmatpush2.bf16.msra.mxu0 0
        %4159 = vmatprep.subr.bf16.mxu0 0
        %4160 = vmatpush2.bf16.msra.mxu0 0
        %4161 = vmatprep.mubr.bf16.mxu0 0
        %4162 = vmatmul.mubr.bf16.gmra.mxu0 %v4127
        %v4163 = vpop.f32.mrf.mxu0
        %v4164 = vadd.f32 0.0, %v4163
        %v4165 = vpop.f32.mrf.mxu0
        %v4166 = vpop.f32.mrf.mxu0
        %v4167 = vadd.f32 0.0, %v4166
        %v4168 = vpop.f32.mrf.mxu0
        %4169 = vdwg.mxu0
        %4170 = vrot.lane.b32.xlu0 %v1561, 64
        %v4171 = vpop.permute.xlu0 %4170
        %v4174 = vsel %vm3198, %v3908, 0
        %4176 = vmatprep.subr.bf16.mxu0 0
        %4177 = vmatpush1.bf16.msra.mxu0 0
        %4178 = vmatprep.subr.bf16.mxu0 0
        %4179 = vmatpush1.bf16.msra.mxu0 0
        %4180 = vmatprep.subr.bf16.mxu0 0
        %4181 = vmatpush1.bf16.msra.mxu0 0
        %4182 = vmatprep.subr.bf16.mxu0 0
        %4183 = vmatpush1.bf16.msra.mxu0 0
        %4184 = vmatprep.subr.bf16.mxu0 0
        %4185 = vmatpush1.bf16.msra.mxu0 0
        %4186 = vmatprep.subr.bf16.mxu0 0
        %4187 = vmatpush1.bf16.msra.mxu0 0
        %4188 = vmatprep.subr.bf16.mxu0 0
        %4189 = vmatpush1.bf16.msra.mxu0 0
        %4190 = vmatprep.subr.bf16.mxu0 0
        %4191 = vmatpush1.bf16.msra.mxu0 %v4171
        %4192 = vmatprep.subr.bf16.mxu0 0
        %4193 = vmatpush2.bf16.msra.mxu0 0
        %4194 = vmatprep.subr.bf16.mxu0 0
        %4195 = vmatpush2.bf16.msra.mxu0 0
        %4196 = vmatprep.subr.bf16.mxu0 0
        %4197 = vmatpush2.bf16.msra.mxu0 0
        %4198 = vmatprep.subr.bf16.mxu0 0
        %4199 = vmatpush2.bf16.msra.mxu0 0
        %4200 = vmatprep.subr.bf16.mxu0 0
        %4201 = vmatpush2.bf16.msra.mxu0 0
        %4202 = vmatprep.subr.bf16.mxu0 0
        %4203 = vmatpush2.bf16.msra.mxu0 0
        %4204 = vmatprep.subr.bf16.mxu0 0
        %4205 = vmatpush2.bf16.msra.mxu0 0
        %4206 = vmatprep.subr.bf16.mxu0 0
        %4207 = vmatpush2.bf16.msra.mxu0 0
        %4208 = vmatprep.mubr.bf16.mxu0 0
        %4209 = vmatmul.mubr.bf16.gmra.mxu0 %v4174
        %v4210 = vpop.f32.mrf.mxu0
        %v4211 = vadd.f32 0.0, %v4210
        %v4212 = vpop.f32.mrf.mxu0
        %v4213 = vpop.f32.mrf.mxu0
        %v4214 = vadd.f32 0.0, %v4213
        %v4215 = vpop.f32.mrf.mxu0
        %4216 = vdwg.mxu0
        %4217 = vrot.lane.b32.xlu0 %v1562, 64
        %v4218 = vpop.permute.xlu0 %4217
        %v4221 = vsel %vm3198, %v3909, 0
        %4223 = vmatprep.subr.bf16.mxu0 0
        %4224 = vmatpush1.bf16.msra.mxu0 0
        %4225 = vmatprep.subr.bf16.mxu0 0
        %4226 = vmatpush1.bf16.msra.mxu0 0
        %4227 = vmatprep.subr.bf16.mxu0 0
        %4228 = vmatpush1.bf16.msra.mxu0 0
        %4229 = vmatprep.subr.bf16.mxu0 0
        %4230 = vmatpush1.bf16.msra.mxu0 0
        %4231 = vmatprep.subr.bf16.mxu0 0
        %4232 = vmatpush1.bf16.msra.mxu0 0
        %4233 = vmatprep.subr.bf16.mxu0 0
        %4234 = vmatpush1.bf16.msra.mxu0 0
        %4235 = vmatprep.subr.bf16.mxu0 0
        %4236 = vmatpush1.bf16.msra.mxu0 0
        %4237 = vmatprep.subr.bf16.mxu0 0
        %4238 = vmatpush1.bf16.msra.mxu0 %v4218
        %4239 = vmatprep.subr.bf16.mxu0 0
        %4240 = vmatpush2.bf16.msra.mxu0 0
        %4241 = vmatprep.subr.bf16.mxu0 0
        %4242 = vmatpush2.bf16.msra.mxu0 0
        %4243 = vmatprep.subr.bf16.mxu0 0
        %4244 = vmatpush2.bf16.msra.mxu0 0
        %4245 = vmatprep.subr.bf16.mxu0 0
        %4246 = vmatpush2.bf16.msra.mxu0 0
        %4247 = vmatprep.subr.bf16.mxu0 0
        %4248 = vmatpush2.bf16.msra.mxu0 0
        %4249 = vmatprep.subr.bf16.mxu0 0
        %4250 = vmatpush2.bf16.msra.mxu0 0
        %4251 = vmatprep.subr.bf16.mxu0 0
        %4252 = vmatpush2.bf16.msra.mxu0 0
        %4253 = vmatprep.subr.bf16.mxu0 0
        %4254 = vmatpush2.bf16.msra.mxu0 0
        %4255 = vmatprep.mubr.bf16.mxu0 0
        %4256 = vmatmul.mubr.bf16.gmra.mxu0 %v4221
        %v4257 = vpop.f32.mrf.mxu0
        %v4258 = vadd.f32 0.0, %v4257
        %v4259 = vpop.f32.mrf.mxu0
        %v4260 = vpop.f32.mrf.mxu0
        %v4261 = vadd.f32 0.0, %v4260
        %v4262 = vpop.f32.mrf.mxu0
        %4263 = vdwg.mxu0
        %4264 = vrot.lane.b32.xlu0 %v1563, 64
        %v4265 = vpop.permute.xlu0 %4264
        %v4268 = vsel %vm3198, %v3910, 0
        %4270 = vmatprep.subr.bf16.mxu0 0
        %4271 = vmatpush1.bf16.msra.mxu0 0
        %4272 = vmatprep.subr.bf16.mxu0 0
        %4273 = vmatpush1.bf16.msra.mxu0 0
        %4274 = vmatprep.subr.bf16.mxu0 0
        %4275 = vmatpush1.bf16.msra.mxu0 0
        %4276 = vmatprep.subr.bf16.mxu0 0
        %4277 = vmatpush1.bf16.msra.mxu0 0
        %4278 = vmatprep.subr.bf16.mxu0 0
        %4279 = vmatpush1.bf16.msra.mxu0 0
        %4280 = vmatprep.subr.bf16.mxu0 0
        %4281 = vmatpush1.bf16.msra.mxu0 0
        %4282 = vmatprep.subr.bf16.mxu0 0
        %4283 = vmatpush1.bf16.msra.mxu0 0
        %4284 = vmatprep.subr.bf16.mxu0 0
        %4285 = vmatpush1.bf16.msra.mxu0 %v4265
        %4286 = vmatprep.subr.bf16.mxu0 0
        %4287 = vmatpush2.bf16.msra.mxu0 0
        %4288 = vmatprep.subr.bf16.mxu0 0
        %4289 = vmatpush2.bf16.msra.mxu0 0
        %4290 = vmatprep.subr.bf16.mxu0 0
        %4291 = vmatpush2.bf16.msra.mxu0 0
        %4292 = vmatprep.subr.bf16.mxu0 0
        %4293 = vmatpush2.bf16.msra.mxu0 0
        %4294 = vmatprep.subr.bf16.mxu0 0
        %4295 = vmatpush2.bf16.msra.mxu0 0
        %4296 = vmatprep.subr.bf16.mxu0 0
        %4297 = vmatpush2.bf16.msra.mxu0 0
        %4298 = vmatprep.subr.bf16.mxu0 0
        %4299 = vmatpush2.bf16.msra.mxu0 0
        %4300 = vmatprep.subr.bf16.mxu0 0
        %4301 = vmatpush2.bf16.msra.mxu0 0
        %4302 = vmatprep.mubr.bf16.mxu0 0
        %4303 = vmatmul.mubr.bf16.gmra.mxu0 %v4268
        %v4304 = vpop.f32.mrf.mxu0
        %v4305 = vadd.f32 0.0, %v4304
        %v4306 = vpop.f32.mrf.mxu0
        %v4307 = vpop.f32.mrf.mxu0
        %v4308 = vadd.f32 0.0, %v4307
        %v4309 = vpop.f32.mrf.mxu0
        %4310 = vdwg.mxu0
        %4311 = vrot.lane.b32.xlu0 %v1564, 64
        %v4312 = vpop.permute.xlu0 %4311
        %v4315 = vsel %vm3198, %v3911, 0
        %4317 = vmatprep.subr.bf16.mxu0 0
        %4318 = vmatpush1.bf16.msra.mxu0 0
        %4319 = vmatprep.subr.bf16.mxu0 0
        %4320 = vmatpush1.bf16.msra.mxu0 0
        %4321 = vmatprep.subr.bf16.mxu0 0
        %4322 = vmatpush1.bf16.msra.mxu0 0
        %4323 = vmatprep.subr.bf16.mxu0 0
        %4324 = vmatpush1.bf16.msra.mxu0 0
        %4325 = vmatprep.subr.bf16.mxu0 0
        %4326 = vmatpush1.bf16.msra.mxu0 0
        %4327 = vmatprep.subr.bf16.mxu0 0
        %4328 = vmatpush1.bf16.msra.mxu0 0
        %4329 = vmatprep.subr.bf16.mxu0 0
        %4330 = vmatpush1.bf16.msra.mxu0 0
        %4331 = vmatprep.subr.bf16.mxu0 0
        %4332 = vmatpush1.bf16.msra.mxu0 %v4312
        %4333 = vmatprep.subr.bf16.mxu0 0
        %4334 = vmatpush2.bf16.msra.mxu0 0
        %4335 = vmatprep.subr.bf16.mxu0 0
        %4336 = vmatpush2.bf16.msra.mxu0 0
        %4337 = vmatprep.subr.bf16.mxu0 0
        %4338 = vmatpush2.bf16.msra.mxu0 0
        %4339 = vmatprep.subr.bf16.mxu0 0
        %4340 = vmatpush2.bf16.msra.mxu0 0
        %4341 = vmatprep.subr.bf16.mxu0 0
        %4342 = vmatpush2.bf16.msra.mxu0 0
        %4343 = vmatprep.subr.bf16.mxu0 0
        %4344 = vmatpush2.bf16.msra.mxu0 0
        %4345 = vmatprep.subr.bf16.mxu0 0
        %4346 = vmatpush2.bf16.msra.mxu0 0
        %4347 = vmatprep.subr.bf16.mxu0 0
        %4348 = vmatpush2.bf16.msra.mxu0 0
        %4349 = vmatprep.mubr.bf16.mxu0 0
        %4350 = vmatmul.mubr.bf16.gmra.mxu0 %v4315
        %v4351 = vpop.f32.mrf.mxu0
        %v4352 = vadd.f32 0.0, %v4351
        %v4353 = vpop.f32.mrf.mxu0
        %v4354 = vpop.f32.mrf.mxu0
        %v4355 = vadd.f32 0.0, %v4354
        %v4356 = vpop.f32.mrf.mxu0
        %4357 = vdwg.mxu0
        %4358 = vrot.lane.b32.xlu0 %v1565, 64
        %v4359 = vpop.permute.xlu0 %4358
        %v4362 = vsel %vm3198, %v3912, 0
        %4364 = vmatprep.subr.bf16.mxu0 0
        %4365 = vmatpush1.bf16.msra.mxu0 0
        %4366 = vmatprep.subr.bf16.mxu0 0
        %4367 = vmatpush1.bf16.msra.mxu0 0
        %4368 = vmatprep.subr.bf16.mxu0 0
        %4369 = vmatpush1.bf16.msra.mxu0 0
        %4370 = vmatprep.subr.bf16.mxu0 0
        %4371 = vmatpush1.bf16.msra.mxu0 0
        %4372 = vmatprep.subr.bf16.mxu0 0
        %4373 = vmatpush1.bf16.msra.mxu0 0
        %4374 = vmatprep.subr.bf16.mxu0 0
        %4375 = vmatpush1.bf16.msra.mxu0 0
        %4376 = vmatprep.subr.bf16.mxu0 0
        %4377 = vmatpush1.bf16.msra.mxu0 0
        %4378 = vmatprep.subr.bf16.mxu0 0
        %4379 = vmatpush1.bf16.msra.mxu0 %v4359
        %4380 = vmatprep.subr.bf16.mxu0 0
        %4381 = vmatpush2.bf16.msra.mxu0 0
        %4382 = vmatprep.subr.bf16.mxu0 0
        %4383 = vmatpush2.bf16.msra.mxu0 0
        %4384 = vmatprep.subr.bf16.mxu0 0
        %4385 = vmatpush2.bf16.msra.mxu0 0
        %4386 = vmatprep.subr.bf16.mxu0 0
        %4387 = vmatpush2.bf16.msra.mxu0 0
        %4388 = vmatprep.subr.bf16.mxu0 0
        %4389 = vmatpush2.bf16.msra.mxu0 0
        %4390 = vmatprep.subr.bf16.mxu0 0
        %4391 = vmatpush2.bf16.msra.mxu0 0
        %4392 = vmatprep.subr.bf16.mxu0 0
        %4393 = vmatpush2.bf16.msra.mxu0 0
        %4394 = vmatprep.subr.bf16.mxu0 0
        %4395 = vmatpush2.bf16.msra.mxu0 0
        %4396 = vmatprep.mubr.bf16.mxu0 0
        %4397 = vmatmul.mubr.bf16.gmra.mxu0 %v4362
        %v4398 = vpop.f32.mrf.mxu0
        %v4399 = vadd.f32 0.0, %v4398
        %v4400 = vpop.f32.mrf.mxu0
        %v4401 = vpop.f32.mrf.mxu0
        %v4402 = vadd.f32 0.0, %v4401
        %v4403 = vpop.f32.mrf.mxu0
        %4404 = vdwg.mxu0
        %4405 = vrot.lane.b32.xlu0 %v1566, 64
        %v4406 = vpop.permute.xlu0 %4405
        %v4409 = vsel %vm3198, %v3913, 0
        %4411 = vmatprep.subr.bf16.mxu0 0
        %4412 = vmatpush1.bf16.msra.mxu0 0
        %4413 = vmatprep.subr.bf16.mxu0 0
        %4414 = vmatpush1.bf16.msra.mxu0 0
        %4415 = vmatprep.subr.bf16.mxu0 0
        %4416 = vmatpush1.bf16.msra.mxu0 0
        %4417 = vmatprep.subr.bf16.mxu0 0
        %4418 = vmatpush1.bf16.msra.mxu0 0
        %4419 = vmatprep.subr.bf16.mxu0 0
        %4420 = vmatpush1.bf16.msra.mxu0 0
        %4421 = vmatprep.subr.bf16.mxu0 0
        %4422 = vmatpush1.bf16.msra.mxu0 0
        %4423 = vmatprep.subr.bf16.mxu0 0
        %4424 = vmatpush1.bf16.msra.mxu0 0
        %4425 = vmatprep.subr.bf16.mxu0 0
        %4426 = vmatpush1.bf16.msra.mxu0 %v4406
        %4427 = vmatprep.subr.bf16.mxu0 0
        %4428 = vmatpush2.bf16.msra.mxu0 0
        %4429 = vmatprep.subr.bf16.mxu0 0
        %4430 = vmatpush2.bf16.msra.mxu0 0
        %4431 = vmatprep.subr.bf16.mxu0 0
        %4432 = vmatpush2.bf16.msra.mxu0 0
        %4433 = vmatprep.subr.bf16.mxu0 0
        %4434 = vmatpush2.bf16.msra.mxu0 0
        %4435 = vmatprep.subr.bf16.mxu0 0
        %4436 = vmatpush2.bf16.msra.mxu0 0
        %4437 = vmatprep.subr.bf16.mxu0 0
        %4438 = vmatpush2.bf16.msra.mxu0 0
        %4439 = vmatprep.subr.bf16.mxu0 0
        %4440 = vmatpush2.bf16.msra.mxu0 0
        %4441 = vmatprep.subr.bf16.mxu0 0
        %4442 = vmatpush2.bf16.msra.mxu0 0
        %4443 = vmatprep.mubr.bf16.mxu0 0
        %4444 = vmatmul.mubr.bf16.gmra.mxu0 %v4409
        %v4445 = vpop.f32.mrf.mxu0
        %v4446 = vadd.f32 0.0, %v4445
        %v4447 = vpop.f32.mrf.mxu0
        %v4448 = vpop.f32.mrf.mxu0
        %v4449 = vadd.f32 0.0, %v4448
        %v4450 = vpop.f32.mrf.mxu0
        %4451 = vdwg.mxu0
        %4452 = vrot.lane.b32.xlu0 %v1567, 64
        %v4453 = vpop.permute.xlu0 %4452
        %v4456 = vsel %vm3198, %v3914, 0
        %4458 = vmatprep.subr.bf16.mxu0 0
        %4459 = vmatpush1.bf16.msra.mxu0 0
        %4460 = vmatprep.subr.bf16.mxu0 0
        %4461 = vmatpush1.bf16.msra.mxu0 0
        %4462 = vmatprep.subr.bf16.mxu0 0
        %4463 = vmatpush1.bf16.msra.mxu0 0
        %4464 = vmatprep.subr.bf16.mxu0 0
        %4465 = vmatpush1.bf16.msra.mxu0 0
        %4466 = vmatprep.subr.bf16.mxu0 0
        %4467 = vmatpush1.bf16.msra.mxu0 0
        %4468 = vmatprep.subr.bf16.mxu0 0
        %4469 = vmatpush1.bf16.msra.mxu0 0
        %4470 = vmatprep.subr.bf16.mxu0 0
        %4471 = vmatpush1.bf16.msra.mxu0 0
        %4472 = vmatprep.subr.bf16.mxu0 0
        %4473 = vmatpush1.bf16.msra.mxu0 %v4453
        %4474 = vmatprep.subr.bf16.mxu0 0
        %4475 = vmatpush2.bf16.msra.mxu0 0
        %4476 = vmatprep.subr.bf16.mxu0 0
        %4477 = vmatpush2.bf16.msra.mxu0 0
        %4478 = vmatprep.subr.bf16.mxu0 0
        %4479 = vmatpush2.bf16.msra.mxu0 0
        %4480 = vmatprep.subr.bf16.mxu0 0
        %4481 = vmatpush2.bf16.msra.mxu0 0
        %4482 = vmatprep.subr.bf16.mxu0 0
        %4483 = vmatpush2.bf16.msra.mxu0 0
        %4484 = vmatprep.subr.bf16.mxu0 0
        %4485 = vmatpush2.bf16.msra.mxu0 0
        %4486 = vmatprep.subr.bf16.mxu0 0
        %4487 = vmatpush2.bf16.msra.mxu0 0
        %4488 = vmatprep.subr.bf16.mxu0 0
        %4489 = vmatpush2.bf16.msra.mxu0 0
        %4490 = vmatprep.mubr.bf16.mxu0 0
        %4491 = vmatmul.mubr.bf16.gmra.mxu0 %v4456
        %v4492 = vpop.f32.mrf.mxu0
        %v4493 = vadd.f32 0.0, %v4492
        %v4494 = vpop.f32.mrf.mxu0
        %v4495 = vpop.f32.mrf.mxu0
        %v4496 = vadd.f32 0.0, %v4495
        %v4497 = vpop.f32.mrf.mxu0
        %4498 = vdwg.mxu0
        %4499 = vrot.lane.b32.xlu0 %v1568, 64
        %v4500 = vpop.permute.xlu0 %4499
        %v4503 = vsel %vm3198, %v3915, 0
        %4505 = vmatprep.subr.bf16.mxu0 0
        %4506 = vmatpush1.bf16.msra.mxu0 0
        %4507 = vmatprep.subr.bf16.mxu0 0
        %4508 = vmatpush1.bf16.msra.mxu0 0
        %4509 = vmatprep.subr.bf16.mxu0 0
        %4510 = vmatpush1.bf16.msra.mxu0 0
        %4511 = vmatprep.subr.bf16.mxu0 0
        %4512 = vmatpush1.bf16.msra.mxu0 0
        %4513 = vmatprep.subr.bf16.mxu0 0
        %4514 = vmatpush1.bf16.msra.mxu0 0
        %4515 = vmatprep.subr.bf16.mxu0 0
        %4516 = vmatpush1.bf16.msra.mxu0 0
        %4517 = vmatprep.subr.bf16.mxu0 0
        %4518 = vmatpush1.bf16.msra.mxu0 0
        %4519 = vmatprep.subr.bf16.mxu0 0
        %4520 = vmatpush1.bf16.msra.mxu0 %v4500
        %4521 = vmatprep.subr.bf16.mxu0 0
        %4522 = vmatpush2.bf16.msra.mxu0 0
        %4523 = vmatprep.subr.bf16.mxu0 0
        %4524 = vmatpush2.bf16.msra.mxu0 0
        %4525 = vmatprep.subr.bf16.mxu0 0
        %4526 = vmatpush2.bf16.msra.mxu0 0
        %4527 = vmatprep.subr.bf16.mxu0 0
        %4528 = vmatpush2.bf16.msra.mxu0 0
        %4529 = vmatprep.subr.bf16.mxu0 0
        %4530 = vmatpush2.bf16.msra.mxu0 0
        %4531 = vmatprep.subr.bf16.mxu0 0
        %4532 = vmatpush2.bf16.msra.mxu0 0
        %4533 = vmatprep.subr.bf16.mxu0 0
        %4534 = vmatpush2.bf16.msra.mxu0 0
        %4535 = vmatprep.subr.bf16.mxu0 0
        %4536 = vmatpush2.bf16.msra.mxu0 0
        %4537 = vmatprep.mubr.bf16.mxu0 0
        %4538 = vmatmul.mubr.bf16.gmra.mxu0 %v4503
        %v4539 = vpop.f32.mrf.mxu0
        %v4540 = vadd.f32 0.0, %v4539
        %v4541 = vpop.f32.mrf.mxu0
        %v4542 = vpop.f32.mrf.mxu0
        %v4543 = vadd.f32 0.0, %v4542
        %v4544 = vpop.f32.mrf.mxu0
        %4545 = vdwg.mxu0
        %4546 = vrot.lane.b32.xlu0 %v1569, 64
        %v4547 = vpop.permute.xlu0 %4546
        %v4550 = vsel %vm3198, %v3916, 0
        %4552 = vmatprep.subr.bf16.mxu0 0
        %4553 = vmatpush1.bf16.msra.mxu0 0
        %4554 = vmatprep.subr.bf16.mxu0 0
        %4555 = vmatpush1.bf16.msra.mxu0 0
        %4556 = vmatprep.subr.bf16.mxu0 0
        %4557 = vmatpush1.bf16.msra.mxu0 0
        %4558 = vmatprep.subr.bf16.mxu0 0
        %4559 = vmatpush1.bf16.msra.mxu0 0
        %4560 = vmatprep.subr.bf16.mxu0 0
        %4561 = vmatpush1.bf16.msra.mxu0 0
        %4562 = vmatprep.subr.bf16.mxu0 0
        %4563 = vmatpush1.bf16.msra.mxu0 0
        %4564 = vmatprep.subr.bf16.mxu0 0
        %4565 = vmatpush1.bf16.msra.mxu0 0
        %4566 = vmatprep.subr.bf16.mxu0 0
        %4567 = vmatpush1.bf16.msra.mxu0 %v4547
        %4568 = vmatprep.subr.bf16.mxu0 0
        %4569 = vmatpush2.bf16.msra.mxu0 0
        %4570 = vmatprep.subr.bf16.mxu0 0
        %4571 = vmatpush2.bf16.msra.mxu0 0
        %4572 = vmatprep.subr.bf16.mxu0 0
        %4573 = vmatpush2.bf16.msra.mxu0 0
        %4574 = vmatprep.subr.bf16.mxu0 0
        %4575 = vmatpush2.bf16.msra.mxu0 0
        %4576 = vmatprep.subr.bf16.mxu0 0
        %4577 = vmatpush2.bf16.msra.mxu0 0
        %4578 = vmatprep.subr.bf16.mxu0 0
        %4579 = vmatpush2.bf16.msra.mxu0 0
        %4580 = vmatprep.subr.bf16.mxu0 0
        %4581 = vmatpush2.bf16.msra.mxu0 0
        %4582 = vmatprep.subr.bf16.mxu0 0
        %4583 = vmatpush2.bf16.msra.mxu0 0
        %4584 = vmatprep.mubr.bf16.mxu0 0
        %4585 = vmatmul.mubr.bf16.gmra.mxu0 %v4550
        %v4586 = vpop.f32.mrf.mxu0
        %v4587 = vadd.f32 0.0, %v4586
        %v4588 = vpop.f32.mrf.mxu0
        %v4589 = vpop.f32.mrf.mxu0
        %v4590 = vadd.f32 0.0, %v4589
        %v4591 = vpop.f32.mrf.mxu0
        %4592 = vdwg.mxu0
        %4593 = vrot.lane.b32.xlu0 %v1570, 64
        %v4594 = vpop.permute.xlu0 %4593
        %v4597 = vsel %vm3198, %v3917, 0
        %4599 = vmatprep.subr.bf16.mxu0 0
        %4600 = vmatpush1.bf16.msra.mxu0 0
        %4601 = vmatprep.subr.bf16.mxu0 0
        %4602 = vmatpush1.bf16.msra.mxu0 0
        %4603 = vmatprep.subr.bf16.mxu0 0
        %4604 = vmatpush1.bf16.msra.mxu0 0
        %4605 = vmatprep.subr.bf16.mxu0 0
        %4606 = vmatpush1.bf16.msra.mxu0 0
        %4607 = vmatprep.subr.bf16.mxu0 0
        %4608 = vmatpush1.bf16.msra.mxu0 0
        %4609 = vmatprep.subr.bf16.mxu0 0
        %4610 = vmatpush1.bf16.msra.mxu0 0
        %4611 = vmatprep.subr.bf16.mxu0 0
        %4612 = vmatpush1.bf16.msra.mxu0 0
        %4613 = vmatprep.subr.bf16.mxu0 0
        %4614 = vmatpush1.bf16.msra.mxu0 %v4594
        %4615 = vmatprep.subr.bf16.mxu0 0
        %4616 = vmatpush2.bf16.msra.mxu0 0
        %4617 = vmatprep.subr.bf16.mxu0 0
        %4618 = vmatpush2.bf16.msra.mxu0 0
        %4619 = vmatprep.subr.bf16.mxu0 0
        %4620 = vmatpush2.bf16.msra.mxu0 0
        %4621 = vmatprep.subr.bf16.mxu0 0
        %4622 = vmatpush2.bf16.msra.mxu0 0
        %4623 = vmatprep.subr.bf16.mxu0 0
        %4624 = vmatpush2.bf16.msra.mxu0 0
        %4625 = vmatprep.subr.bf16.mxu0 0
        %4626 = vmatpush2.bf16.msra.mxu0 0
        %4627 = vmatprep.subr.bf16.mxu0 0
        %4628 = vmatpush2.bf16.msra.mxu0 0
        %4629 = vmatprep.subr.bf16.mxu0 0
        %4630 = vmatpush2.bf16.msra.mxu0 0
        %4631 = vmatprep.mubr.bf16.mxu0 0
        %4632 = vmatmul.mubr.bf16.gmra.mxu0 %v4597
        %v4633 = vpop.f32.mrf.mxu0
        %v4634 = vadd.f32 0.0, %v4633
        %v4635 = vpop.f32.mrf.mxu0
        %v4636 = vpop.f32.mrf.mxu0
        %v4637 = vadd.f32 0.0, %v4636
        %v4638 = vpop.f32.mrf.mxu0
        %4639 = vdwg.mxu0
        %4640 = vrot.lane.b32.xlu0 %v1571, 64
        %v4641 = vpop.permute.xlu0 %4640
        %v4644 = vsel %vm3198, %v3918, 0
        %4646 = vmatprep.subr.bf16.mxu0 0
        %4647 = vmatpush1.bf16.msra.mxu0 0
        %4648 = vmatprep.subr.bf16.mxu0 0
        %4649 = vmatpush1.bf16.msra.mxu0 0
        %4650 = vmatprep.subr.bf16.mxu0 0
        %4651 = vmatpush1.bf16.msra.mxu0 0
        %4652 = vmatprep.subr.bf16.mxu0 0
        %4653 = vmatpush1.bf16.msra.mxu0 0
        %4654 = vmatprep.subr.bf16.mxu0 0
        %4655 = vmatpush1.bf16.msra.mxu0 0
        %4656 = vmatprep.subr.bf16.mxu0 0
        %4657 = vmatpush1.bf16.msra.mxu0 0
        %4658 = vmatprep.subr.bf16.mxu0 0
        %4659 = vmatpush1.bf16.msra.mxu0 0
        %4660 = vmatprep.subr.bf16.mxu0 0
        %4661 = vmatpush1.bf16.msra.mxu0 %v4641
        %4662 = vmatprep.subr.bf16.mxu0 0
        %4663 = vmatpush2.bf16.msra.mxu0 0
        %4664 = vmatprep.subr.bf16.mxu0 0
        %4665 = vmatpush2.bf16.msra.mxu0 0
        %4666 = vmatprep.subr.bf16.mxu0 0
        %4667 = vmatpush2.bf16.msra.mxu0 0
        %4668 = vmatprep.subr.bf16.mxu0 0
        %4669 = vmatpush2.bf16.msra.mxu0 0
        %4670 = vmatprep.subr.bf16.mxu0 0
        %4671 = vmatpush2.bf16.msra.mxu0 0
        %4672 = vmatprep.subr.bf16.mxu0 0
        %4673 = vmatpush2.bf16.msra.mxu0 0
        %4674 = vmatprep.subr.bf16.mxu0 0
        %4675 = vmatpush2.bf16.msra.mxu0 0
        %4676 = vmatprep.subr.bf16.mxu0 0
        %4677 = vmatpush2.bf16.msra.mxu0 0
        %4678 = vmatprep.mubr.bf16.mxu0 0
        %4679 = vmatmul.mubr.bf16.gmra.mxu0 %v4644
        %v4680 = vpop.f32.mrf.mxu0
        %v4681 = vadd.f32 0.0, %v4680
        %v4682 = vpop.f32.mrf.mxu0
        %v4683 = vpop.f32.mrf.mxu0
        %v4684 = vadd.f32 0.0, %v4683
        %v4685 = vpop.f32.mrf.mxu0
        %4686 = vdwg.mxu0
        %4687 = vrot.lane.b32.xlu0 %v1572, 64
        %v4688 = vpop.permute.xlu0 %4687
        %v4691 = vsel %vm3198, %v3919, 0
        %4693 = vmatprep.subr.bf16.mxu0 0
        %4694 = vmatpush1.bf16.msra.mxu0 0
        %4695 = vmatprep.subr.bf16.mxu0 0
        %4696 = vmatpush1.bf16.msra.mxu0 0
        %4697 = vmatprep.subr.bf16.mxu0 0
        %4698 = vmatpush1.bf16.msra.mxu0 0
        %4699 = vmatprep.subr.bf16.mxu0 0
        %4700 = vmatpush1.bf16.msra.mxu0 0
        %4701 = vmatprep.subr.bf16.mxu0 0
        %4702 = vmatpush1.bf16.msra.mxu0 0
        %4703 = vmatprep.subr.bf16.mxu0 0
        %4704 = vmatpush1.bf16.msra.mxu0 0
        %4705 = vmatprep.subr.bf16.mxu0 0
        %4706 = vmatpush1.bf16.msra.mxu0 0
        %4707 = vmatprep.subr.bf16.mxu0 0
        %4708 = vmatpush1.bf16.msra.mxu0 %v4688
        %4709 = vmatprep.subr.bf16.mxu0 0
        %4710 = vmatpush2.bf16.msra.mxu0 0
        %4711 = vmatprep.subr.bf16.mxu0 0
        %4712 = vmatpush2.bf16.msra.mxu0 0
        %4713 = vmatprep.subr.bf16.mxu0 0
        %4714 = vmatpush2.bf16.msra.mxu0 0
        %4715 = vmatprep.subr.bf16.mxu0 0
        %4716 = vmatpush2.bf16.msra.mxu0 0
        %4717 = vmatprep.subr.bf16.mxu0 0
        %4718 = vmatpush2.bf16.msra.mxu0 0
        %4719 = vmatprep.subr.bf16.mxu0 0
        %4720 = vmatpush2.bf16.msra.mxu0 0
        %4721 = vmatprep.subr.bf16.mxu0 0
        %4722 = vmatpush2.bf16.msra.mxu0 0
        %4723 = vmatprep.subr.bf16.mxu0 0
        %4724 = vmatpush2.bf16.msra.mxu0 0
        %4725 = vmatprep.mubr.bf16.mxu0 0
        %4726 = vmatmul.mubr.bf16.gmra.mxu0 %v4691
        %v4727 = vpop.f32.mrf.mxu0
        %v4728 = vadd.f32 0.0, %v4727
        %v4729 = vpop.f32.mrf.mxu0
        %v4730 = vpop.f32.mrf.mxu0
        %v4731 = vadd.f32 0.0, %v4730
        %v4732 = vpop.f32.mrf.mxu0
        %4733 = vdwg.mxu0
        %4734 = vrot.lane.b32.xlu0 %v1573, 64
        %v4735 = vpop.permute.xlu0 %4734
        %v4738 = vsel %vm3198, %v3920, 0
        %4740 = vmatprep.subr.bf16.mxu0 0
        %4741 = vmatpush1.bf16.msra.mxu0 0
        %4742 = vmatprep.subr.bf16.mxu0 0
        %4743 = vmatpush1.bf16.msra.mxu0 0
        %4744 = vmatprep.subr.bf16.mxu0 0
        %4745 = vmatpush1.bf16.msra.mxu0 0
        %4746 = vmatprep.subr.bf16.mxu0 0
        %4747 = vmatpush1.bf16.msra.mxu0 0
        %4748 = vmatprep.subr.bf16.mxu0 0
        %4749 = vmatpush1.bf16.msra.mxu0 0
        %4750 = vmatprep.subr.bf16.mxu0 0
        %4751 = vmatpush1.bf16.msra.mxu0 0
        %4752 = vmatprep.subr.bf16.mxu0 0
        %4753 = vmatpush1.bf16.msra.mxu0 0
        %4754 = vmatprep.subr.bf16.mxu0 0
        %4755 = vmatpush1.bf16.msra.mxu0 %v4735
        %4756 = vmatprep.subr.bf16.mxu0 0
        %4757 = vmatpush2.bf16.msra.mxu0 0
        %4758 = vmatprep.subr.bf16.mxu0 0
        %4759 = vmatpush2.bf16.msra.mxu0 0
        %4760 = vmatprep.subr.bf16.mxu0 0
        %4761 = vmatpush2.bf16.msra.mxu0 0
        %4762 = vmatprep.subr.bf16.mxu0 0
        %4763 = vmatpush2.bf16.msra.mxu0 0
        %4764 = vmatprep.subr.bf16.mxu0 0
        %4765 = vmatpush2.bf16.msra.mxu0 0
        %4766 = vmatprep.subr.bf16.mxu0 0
        %4767 = vmatpush2.bf16.msra.mxu0 0
        %4768 = vmatprep.subr.bf16.mxu0 0
        %4769 = vmatpush2.bf16.msra.mxu0 0
        %4770 = vmatprep.subr.bf16.mxu0 0
        %4771 = vmatpush2.bf16.msra.mxu0 0
        %4772 = vmatprep.mubr.bf16.mxu0 0
        %4773 = vmatmul.mubr.bf16.gmra.mxu0 %v4738
        %v4774 = vpop.f32.mrf.mxu0
        %v4775 = vadd.f32 0.0, %v4774
        %v4776 = vpop.f32.mrf.mxu0
        %v4777 = vpop.f32.mrf.mxu0
        %v4778 = vadd.f32 0.0, %v4777
        %v4779 = vpop.f32.mrf.mxu0
        %4780 = vdwg.mxu0
        %4781 = vrot.lane.b32.xlu0 %v1574, 64
        %v4782 = vpop.permute.xlu0 %4781
        %v4785 = vsel %vm3198, %v3921, 0
        %4787 = vmatprep.subr.bf16.mxu0 0
        %4788 = vmatpush1.bf16.msra.mxu0 0
        %4789 = vmatprep.subr.bf16.mxu0 0
        %4790 = vmatpush1.bf16.msra.mxu0 0
        %4791 = vmatprep.subr.bf16.mxu0 0
        %4792 = vmatpush1.bf16.msra.mxu0 0
        %4793 = vmatprep.subr.bf16.mxu0 0
        %4794 = vmatpush1.bf16.msra.mxu0 0
        %4795 = vmatprep.subr.bf16.mxu0 0
        %4796 = vmatpush1.bf16.msra.mxu0 0
        %4797 = vmatprep.subr.bf16.mxu0 0
        %4798 = vmatpush1.bf16.msra.mxu0 0
        %4799 = vmatprep.subr.bf16.mxu0 0
        %4800 = vmatpush1.bf16.msra.mxu0 0
        %4801 = vmatprep.subr.bf16.mxu0 0
        %4802 = vmatpush1.bf16.msra.mxu0 %v4782
        %4803 = vmatprep.subr.bf16.mxu0 0
        %4804 = vmatpush2.bf16.msra.mxu0 0
        %4805 = vmatprep.subr.bf16.mxu0 0
        %4806 = vmatpush2.bf16.msra.mxu0 0
        %4807 = vmatprep.subr.bf16.mxu0 0
        %4808 = vmatpush2.bf16.msra.mxu0 0
        %4809 = vmatprep.subr.bf16.mxu0 0
        %4810 = vmatpush2.bf16.msra.mxu0 0
        %4811 = vmatprep.subr.bf16.mxu0 0
        %4812 = vmatpush2.bf16.msra.mxu0 0
        %4813 = vmatprep.subr.bf16.mxu0 0
        %4814 = vmatpush2.bf16.msra.mxu0 0
        %4815 = vmatprep.subr.bf16.mxu0 0
        %4816 = vmatpush2.bf16.msra.mxu0 0
        %4817 = vmatprep.subr.bf16.mxu0 0
        %4818 = vmatpush2.bf16.msra.mxu0 0
        %4819 = vmatprep.mubr.bf16.mxu0 0
        %4820 = vmatmul.mubr.bf16.gmra.mxu0 %v4785
        %v4821 = vpop.f32.mrf.mxu0
        %v4822 = vadd.f32 0.0, %v4821
        %v4823 = vpop.f32.mrf.mxu0
        %v4824 = vpop.f32.mrf.mxu0
        %v4825 = vadd.f32 0.0, %v4824
        %v4826 = vpop.f32.mrf.mxu0
        %4827 = vdwg.mxu0
        %4828 = vrot.lane.b32.xlu0 %v1575, 64
        %v4829 = vpop.permute.xlu0 %4828
        %v4832 = vsel %vm3198, %v3922, 0
        %4834 = vmatprep.subr.bf16.mxu0 0
        %4835 = vmatpush1.bf16.msra.mxu0 0
        %4836 = vmatprep.subr.bf16.mxu0 0
        %4837 = vmatpush1.bf16.msra.mxu0 0
        %4838 = vmatprep.subr.bf16.mxu0 0
        %4839 = vmatpush1.bf16.msra.mxu0 0
        %4840 = vmatprep.subr.bf16.mxu0 0
        %4841 = vmatpush1.bf16.msra.mxu0 0
        %4842 = vmatprep.subr.bf16.mxu0 0
        %4843 = vmatpush1.bf16.msra.mxu0 0
        %4844 = vmatprep.subr.bf16.mxu0 0
        %4845 = vmatpush1.bf16.msra.mxu0 0
        %4846 = vmatprep.subr.bf16.mxu0 0
        %4847 = vmatpush1.bf16.msra.mxu0 0
        %4848 = vmatprep.subr.bf16.mxu0 0
        %4849 = vmatpush1.bf16.msra.mxu0 %v4829
        %4850 = vmatprep.subr.bf16.mxu0 0
        %4851 = vmatpush2.bf16.msra.mxu0 0
        %4852 = vmatprep.subr.bf16.mxu0 0
        %4853 = vmatpush2.bf16.msra.mxu0 0
        %4854 = vmatprep.subr.bf16.mxu0 0
        %4855 = vmatpush2.bf16.msra.mxu0 0
        %4856 = vmatprep.subr.bf16.mxu0 0
        %4857 = vmatpush2.bf16.msra.mxu0 0
        %4858 = vmatprep.subr.bf16.mxu0 0
        %4859 = vmatpush2.bf16.msra.mxu0 0
        %4860 = vmatprep.subr.bf16.mxu0 0
        %4861 = vmatpush2.bf16.msra.mxu0 0
        %4862 = vmatprep.subr.bf16.mxu0 0
        %4863 = vmatpush2.bf16.msra.mxu0 0
        %4864 = vmatprep.subr.bf16.mxu0 0
        %4865 = vmatpush2.bf16.msra.mxu0 0
        %4866 = vmatprep.mubr.bf16.mxu0 0
        %4867 = vmatmul.mubr.bf16.gmra.mxu0 %v4832
        %v4868 = vpop.f32.mrf.mxu0
        %v4869 = vadd.f32 0.0, %v4868
        %v4870 = vpop.f32.mrf.mxu0
        %v4871 = vpop.f32.mrf.mxu0
        %v4872 = vadd.f32 0.0, %v4871
        %v4873 = vpop.f32.mrf.mxu0
        %4874 = vdwg.mxu0
        %4875 = vrot.lane.b32.xlu0 %v1576, 64
        %v4876 = vpop.permute.xlu0 %4875
        %v4879 = vsel %vm3198, %v3923, 0
        %4881 = vmatprep.subr.bf16.mxu0 0
        %4882 = vmatpush1.bf16.msra.mxu0 0
        %4883 = vmatprep.subr.bf16.mxu0 0
        %4884 = vmatpush1.bf16.msra.mxu0 0
        %4885 = vmatprep.subr.bf16.mxu0 0
        %4886 = vmatpush1.bf16.msra.mxu0 0
        %4887 = vmatprep.subr.bf16.mxu0 0
        %4888 = vmatpush1.bf16.msra.mxu0 0
        %4889 = vmatprep.subr.bf16.mxu0 0
        %4890 = vmatpush1.bf16.msra.mxu0 0
        %4891 = vmatprep.subr.bf16.mxu0 0
        %4892 = vmatpush1.bf16.msra.mxu0 0
        %4893 = vmatprep.subr.bf16.mxu0 0
        %4894 = vmatpush1.bf16.msra.mxu0 0
        %4895 = vmatprep.subr.bf16.mxu0 0
        %4896 = vmatpush1.bf16.msra.mxu0 %v4876
        %4897 = vmatprep.subr.bf16.mxu0 0
        %4898 = vmatpush2.bf16.msra.mxu0 0
        %4899 = vmatprep.subr.bf16.mxu0 0
        %4900 = vmatpush2.bf16.msra.mxu0 0
        %4901 = vmatprep.subr.bf16.mxu0 0
        %4902 = vmatpush2.bf16.msra.mxu0 0
        %4903 = vmatprep.subr.bf16.mxu0 0
        %4904 = vmatpush2.bf16.msra.mxu0 0
        %4905 = vmatprep.subr.bf16.mxu0 0
        %4906 = vmatpush2.bf16.msra.mxu0 0
        %4907 = vmatprep.subr.bf16.mxu0 0
        %4908 = vmatpush2.bf16.msra.mxu0 0
        %4909 = vmatprep.subr.bf16.mxu0 0
        %4910 = vmatpush2.bf16.msra.mxu0 0
        %4911 = vmatprep.subr.bf16.mxu0 0
        %4912 = vmatpush2.bf16.msra.mxu0 0
        %4913 = vmatprep.mubr.bf16.mxu0 0
        %4914 = vmatmul.mubr.bf16.gmra.mxu0 %v4879
        %v4915 = vpop.f32.mrf.mxu0
        %v4916 = vadd.f32 0.0, %v4915
        %v4917 = vpop.f32.mrf.mxu0
        %v4918 = vpop.f32.mrf.mxu0
        %v4919 = vadd.f32 0.0, %v4918
        %v4920 = vpop.f32.mrf.mxu0
        %4921 = vdwg.mxu0
        %4922 = vrot.lane.b32.xlu0 %v1577, 64
        %v4923 = vpop.permute.xlu0 %4922
        %v4926 = vsel %vm3198, %v3924, 0
        %4928 = vmatprep.subr.bf16.mxu0 0
        %4929 = vmatpush1.bf16.msra.mxu0 0
        %4930 = vmatprep.subr.bf16.mxu0 0
        %4931 = vmatpush1.bf16.msra.mxu0 0
        %4932 = vmatprep.subr.bf16.mxu0 0
        %4933 = vmatpush1.bf16.msra.mxu0 0
        %4934 = vmatprep.subr.bf16.mxu0 0
        %4935 = vmatpush1.bf16.msra.mxu0 0
        %4936 = vmatprep.subr.bf16.mxu0 0
        %4937 = vmatpush1.bf16.msra.mxu0 0
        %4938 = vmatprep.subr.bf16.mxu0 0
        %4939 = vmatpush1.bf16.msra.mxu0 0
        %4940 = vmatprep.subr.bf16.mxu0 0
        %4941 = vmatpush1.bf16.msra.mxu0 0
        %4942 = vmatprep.subr.bf16.mxu0 0
        %4943 = vmatpush1.bf16.msra.mxu0 %v4923
        %4944 = vmatprep.subr.bf16.mxu0 0
        %4945 = vmatpush2.bf16.msra.mxu0 0
        %4946 = vmatprep.subr.bf16.mxu0 0
        %4947 = vmatpush2.bf16.msra.mxu0 0
        %4948 = vmatprep.subr.bf16.mxu0 0
        %4949 = vmatpush2.bf16.msra.mxu0 0
        %4950 = vmatprep.subr.bf16.mxu0 0
        %4951 = vmatpush2.bf16.msra.mxu0 0
        %4952 = vmatprep.subr.bf16.mxu0 0
        %4953 = vmatpush2.bf16.msra.mxu0 0
        %4954 = vmatprep.subr.bf16.mxu0 0
        %4955 = vmatpush2.bf16.msra.mxu0 0
        %4956 = vmatprep.subr.bf16.mxu0 0
        %4957 = vmatpush2.bf16.msra.mxu0 0
        %4958 = vmatprep.subr.bf16.mxu0 0
        %4959 = vmatpush2.bf16.msra.mxu0 0
        %4960 = vmatprep.mubr.bf16.mxu0 0
        %4961 = vmatmul.mubr.bf16.gmra.mxu0 %v4926
        %v4962 = vpop.f32.mrf.mxu0
        %v4963 = vadd.f32 0.0, %v4962
        %v4964 = vpop.f32.mrf.mxu0
        %v4965 = vpop.f32.mrf.mxu0
        %v4966 = vadd.f32 0.0, %v4965
        %v4967 = vpop.f32.mrf.mxu0
        %4968 = vdwg.mxu0
        %4969 = vrot.lane.b32.xlu0 %v1578, 64
        %v4970 = vpop.permute.xlu0 %4969
        %v4973 = vsel %vm3198, %v3925, 0
        %4975 = vmatprep.subr.bf16.mxu0 0
        %4976 = vmatpush1.bf16.msra.mxu0 0
        %4977 = vmatprep.subr.bf16.mxu0 0
        %4978 = vmatpush1.bf16.msra.mxu0 0
        %4979 = vmatprep.subr.bf16.mxu0 0
        %4980 = vmatpush1.bf16.msra.mxu0 0
        %4981 = vmatprep.subr.bf16.mxu0 0
        %4982 = vmatpush1.bf16.msra.mxu0 0
        %4983 = vmatprep.subr.bf16.mxu0 0
        %4984 = vmatpush1.bf16.msra.mxu0 0
        %4985 = vmatprep.subr.bf16.mxu0 0
        %4986 = vmatpush1.bf16.msra.mxu0 0
        %4987 = vmatprep.subr.bf16.mxu0 0
        %4988 = vmatpush1.bf16.msra.mxu0 0
        %4989 = vmatprep.subr.bf16.mxu0 0
        %4990 = vmatpush1.bf16.msra.mxu0 %v4970
        %4991 = vmatprep.subr.bf16.mxu0 0
        %4992 = vmatpush2.bf16.msra.mxu0 0
        %4993 = vmatprep.subr.bf16.mxu0 0
        %4994 = vmatpush2.bf16.msra.mxu0 0
        %4995 = vmatprep.subr.bf16.mxu0 0
        %4996 = vmatpush2.bf16.msra.mxu0 0
        %4997 = vmatprep.subr.bf16.mxu0 0
        %4998 = vmatpush2.bf16.msra.mxu0 0
        %4999 = vmatprep.subr.bf16.mxu0 0
        %5000 = vmatpush2.bf16.msra.mxu0 0
        %5001 = vmatprep.subr.bf16.mxu0 0
        %5002 = vmatpush2.bf16.msra.mxu0 0
        %5003 = vmatprep.subr.bf16.mxu0 0
        %5004 = vmatpush2.bf16.msra.mxu0 0
        %5005 = vmatprep.subr.bf16.mxu0 0
        %5006 = vmatpush2.bf16.msra.mxu0 0
        %5007 = vmatprep.mubr.bf16.mxu0 0
        %5008 = vmatmul.mubr.bf16.gmra.mxu0 %v4973
        %v5009 = vpop.f32.mrf.mxu0
        %v5010 = vadd.f32 0.0, %v5009
        %v5011 = vpop.f32.mrf.mxu0
        %v5012 = vpop.f32.mrf.mxu0
        %v5013 = vadd.f32 0.0, %v5012
        %v5014 = vpop.f32.mrf.mxu0
        %5015 = vdwg.mxu0
        %5016 = vrot.lane.b32.xlu0 %v1579, 64
        %v5017 = vpop.permute.xlu0 %5016
        %v5020 = vsel %vm3198, %v3926, 0
        %5022 = vmatprep.subr.bf16.mxu0 0
        %5023 = vmatpush1.bf16.msra.mxu0 0
        %5024 = vmatprep.subr.bf16.mxu0 0
        %5025 = vmatpush1.bf16.msra.mxu0 0
        %5026 = vmatprep.subr.bf16.mxu0 0
        %5027 = vmatpush1.bf16.msra.mxu0 0
        %5028 = vmatprep.subr.bf16.mxu0 0
        %5029 = vmatpush1.bf16.msra.mxu0 0
        %5030 = vmatprep.subr.bf16.mxu0 0
        %5031 = vmatpush1.bf16.msra.mxu0 0
        %5032 = vmatprep.subr.bf16.mxu0 0
        %5033 = vmatpush1.bf16.msra.mxu0 0
        %5034 = vmatprep.subr.bf16.mxu0 0
        %5035 = vmatpush1.bf16.msra.mxu0 0
        %5036 = vmatprep.subr.bf16.mxu0 0
        %5037 = vmatpush1.bf16.msra.mxu0 %v5017
        %5038 = vmatprep.subr.bf16.mxu0 0
        %5039 = vmatpush2.bf16.msra.mxu0 0
        %5040 = vmatprep.subr.bf16.mxu0 0
        %5041 = vmatpush2.bf16.msra.mxu0 0
        %5042 = vmatprep.subr.bf16.mxu0 0
        %5043 = vmatpush2.bf16.msra.mxu0 0
        %5044 = vmatprep.subr.bf16.mxu0 0
        %5045 = vmatpush2.bf16.msra.mxu0 0
        %5046 = vmatprep.subr.bf16.mxu0 0
        %5047 = vmatpush2.bf16.msra.mxu0 0
        %5048 = vmatprep.subr.bf16.mxu0 0
        %5049 = vmatpush2.bf16.msra.mxu0 0
        %5050 = vmatprep.subr.bf16.mxu0 0
        %5051 = vmatpush2.bf16.msra.mxu0 0
        %5052 = vmatprep.subr.bf16.mxu0 0
        %5053 = vmatpush2.bf16.msra.mxu0 0
        %5054 = vmatprep.mubr.bf16.mxu0 0
        %5055 = vmatmul.mubr.bf16.gmra.mxu0 %v5020
        %v5056 = vpop.f32.mrf.mxu0
        %v5057 = vadd.f32 0.0, %v5056
        %v5058 = vpop.f32.mrf.mxu0
        %v5059 = vpop.f32.mrf.mxu0
        %v5060 = vadd.f32 0.0, %v5059
        %v5061 = vpop.f32.mrf.mxu0
        %5062 = vdwg.mxu0
        %5063 = vrot.lane.b32.xlu0 %v1580, 64
        %v5064 = vpop.permute.xlu0 %5063
        %v5067 = vsel %vm3198, %v3927, 0
        %5069 = vmatprep.subr.bf16.mxu0 0
        %5070 = vmatpush1.bf16.msra.mxu0 0
        %5071 = vmatprep.subr.bf16.mxu0 0
        %5072 = vmatpush1.bf16.msra.mxu0 0
        %5073 = vmatprep.subr.bf16.mxu0 0
        %5074 = vmatpush1.bf16.msra.mxu0 0
        %5075 = vmatprep.subr.bf16.mxu0 0
        %5076 = vmatpush1.bf16.msra.mxu0 0
        %5077 = vmatprep.subr.bf16.mxu0 0
        %5078 = vmatpush1.bf16.msra.mxu0 0
        %5079 = vmatprep.subr.bf16.mxu0 0
        %5080 = vmatpush1.bf16.msra.mxu0 0
        %5081 = vmatprep.subr.bf16.mxu0 0
        %5082 = vmatpush1.bf16.msra.mxu0 0
        %5083 = vmatprep.subr.bf16.mxu0 0
        %5084 = vmatpush1.bf16.msra.mxu0 %v5064
        %5085 = vmatprep.subr.bf16.mxu0 0
        %5086 = vmatpush2.bf16.msra.mxu0 0
        %5087 = vmatprep.subr.bf16.mxu0 0
        %5088 = vmatpush2.bf16.msra.mxu0 0
        %5089 = vmatprep.subr.bf16.mxu0 0
        %5090 = vmatpush2.bf16.msra.mxu0 0
        %5091 = vmatprep.subr.bf16.mxu0 0
        %5092 = vmatpush2.bf16.msra.mxu0 0
        %5093 = vmatprep.subr.bf16.mxu0 0
        %5094 = vmatpush2.bf16.msra.mxu0 0
        %5095 = vmatprep.subr.bf16.mxu0 0
        %5096 = vmatpush2.bf16.msra.mxu0 0
        %5097 = vmatprep.subr.bf16.mxu0 0
        %5098 = vmatpush2.bf16.msra.mxu0 0
        %5099 = vmatprep.subr.bf16.mxu0 0
        %5100 = vmatpush2.bf16.msra.mxu0 0
        %5101 = vmatprep.mubr.bf16.mxu0 0
        %5102 = vmatmul.mubr.bf16.gmra.mxu0 %v5067
        %v5103 = vpop.f32.mrf.mxu0
        %v5104 = vadd.f32 0.0, %v5103
        %v5105 = vpop.f32.mrf.mxu0
        %v5106 = vpop.f32.mrf.mxu0
        %v5107 = vadd.f32 0.0, %v5106
        %v5108 = vpop.f32.mrf.mxu0
        %5109 = vdwg.mxu0
        %5110 = vrot.lane.b32.xlu0 %v1581, 64
        %v5111 = vpop.permute.xlu0 %5110
        %v5114 = vsel %vm3198, %v3928, 0
        %5116 = vmatprep.subr.bf16.mxu0 0
        %5117 = vmatpush1.bf16.msra.mxu0 0
        %5118 = vmatprep.subr.bf16.mxu0 0
        %5119 = vmatpush1.bf16.msra.mxu0 0
        %5120 = vmatprep.subr.bf16.mxu0 0
        %5121 = vmatpush1.bf16.msra.mxu0 0
        %5122 = vmatprep.subr.bf16.mxu0 0
        %5123 = vmatpush1.bf16.msra.mxu0 0
        %5124 = vmatprep.subr.bf16.mxu0 0
        %5125 = vmatpush1.bf16.msra.mxu0 0
        %5126 = vmatprep.subr.bf16.mxu0 0
        %5127 = vmatpush1.bf16.msra.mxu0 0
        %5128 = vmatprep.subr.bf16.mxu0 0
        %5129 = vmatpush1.bf16.msra.mxu0 0
        %5130 = vmatprep.subr.bf16.mxu0 0
        %5131 = vmatpush1.bf16.msra.mxu0 %v5111
        %5132 = vmatprep.subr.bf16.mxu0 0
        %5133 = vmatpush2.bf16.msra.mxu0 0
        %5134 = vmatprep.subr.bf16.mxu0 0
        %5135 = vmatpush2.bf16.msra.mxu0 0
        %5136 = vmatprep.subr.bf16.mxu0 0
        %5137 = vmatpush2.bf16.msra.mxu0 0
        %5138 = vmatprep.subr.bf16.mxu0 0
        %5139 = vmatpush2.bf16.msra.mxu0 0
        %5140 = vmatprep.subr.bf16.mxu0 0
        %5141 = vmatpush2.bf16.msra.mxu0 0
        %5142 = vmatprep.subr.bf16.mxu0 0
        %5143 = vmatpush2.bf16.msra.mxu0 0
        %5144 = vmatprep.subr.bf16.mxu0 0
        %5145 = vmatpush2.bf16.msra.mxu0 0
        %5146 = vmatprep.subr.bf16.mxu0 0
        %5147 = vmatpush2.bf16.msra.mxu0 0
        %5148 = vmatprep.mubr.bf16.mxu0 0
        %5149 = vmatmul.mubr.bf16.gmra.mxu0 %v5114
        %v5150 = vpop.f32.mrf.mxu0
        %v5151 = vadd.f32 0.0, %v5150
        %v5152 = vpop.f32.mrf.mxu0
        %v5153 = vpop.f32.mrf.mxu0
        %v5154 = vadd.f32 0.0, %v5153
        %v5155 = vpop.f32.mrf.mxu0
        %5156 = vdwg.mxu0
        %5157 = vrot.lane.b32.xlu0 %v1582, 64
        %v5158 = vpop.permute.xlu0 %5157
        %v5161 = vsel %vm3198, %v3929, 0
        %5163 = vmatprep.subr.bf16.mxu0 0
        %5164 = vmatpush1.bf16.msra.mxu0 0
        %5165 = vmatprep.subr.bf16.mxu0 0
        %5166 = vmatpush1.bf16.msra.mxu0 0
        %5167 = vmatprep.subr.bf16.mxu0 0
        %5168 = vmatpush1.bf16.msra.mxu0 0
        %5169 = vmatprep.subr.bf16.mxu0 0
        %5170 = vmatpush1.bf16.msra.mxu0 0
        %5171 = vmatprep.subr.bf16.mxu0 0
        %5172 = vmatpush1.bf16.msra.mxu0 0
        %5173 = vmatprep.subr.bf16.mxu0 0
        %5174 = vmatpush1.bf16.msra.mxu0 0
        %5175 = vmatprep.subr.bf16.mxu0 0
        %5176 = vmatpush1.bf16.msra.mxu0 0
        %5177 = vmatprep.subr.bf16.mxu0 0
        %5178 = vmatpush1.bf16.msra.mxu0 %v5158
        %5179 = vmatprep.subr.bf16.mxu0 0
        %5180 = vmatpush2.bf16.msra.mxu0 0
        %5181 = vmatprep.subr.bf16.mxu0 0
        %5182 = vmatpush2.bf16.msra.mxu0 0
        %5183 = vmatprep.subr.bf16.mxu0 0
        %5184 = vmatpush2.bf16.msra.mxu0 0
        %5185 = vmatprep.subr.bf16.mxu0 0
        %5186 = vmatpush2.bf16.msra.mxu0 0
        %5187 = vmatprep.subr.bf16.mxu0 0
        %5188 = vmatpush2.bf16.msra.mxu0 0
        %5189 = vmatprep.subr.bf16.mxu0 0
        %5190 = vmatpush2.bf16.msra.mxu0 0
        %5191 = vmatprep.subr.bf16.mxu0 0
        %5192 = vmatpush2.bf16.msra.mxu0 0
        %5193 = vmatprep.subr.bf16.mxu0 0
        %5194 = vmatpush2.bf16.msra.mxu0 0
        %5195 = vmatprep.mubr.bf16.mxu0 0
        %5196 = vmatmul.mubr.bf16.gmra.mxu0 %v5161
        %v5197 = vpop.f32.mrf.mxu0
        %v5198 = vadd.f32 0.0, %v5197
        %v5199 = vpop.f32.mrf.mxu0
        %v5200 = vpop.f32.mrf.mxu0
        %v5201 = vadd.f32 0.0, %v5200
        %v5202 = vpop.f32.mrf.mxu0
        %5203 = vdwg.mxu0
        %5204 = vrot.lane.b32.xlu0 %v1583, 64
        %v5205 = vpop.permute.xlu0 %5204
        %v5208 = vsel %vm3198, %v3930, 0
        %5210 = vmatprep.subr.bf16.mxu0 0
        %5211 = vmatpush1.bf16.msra.mxu0 0
        %5212 = vmatprep.subr.bf16.mxu0 0
        %5213 = vmatpush1.bf16.msra.mxu0 0
        %5214 = vmatprep.subr.bf16.mxu0 0
        %5215 = vmatpush1.bf16.msra.mxu0 0
        %5216 = vmatprep.subr.bf16.mxu0 0
        %5217 = vmatpush1.bf16.msra.mxu0 0
        %5218 = vmatprep.subr.bf16.mxu0 0
        %5219 = vmatpush1.bf16.msra.mxu0 0
        %5220 = vmatprep.subr.bf16.mxu0 0
        %5221 = vmatpush1.bf16.msra.mxu0 0
        %5222 = vmatprep.subr.bf16.mxu0 0
        %5223 = vmatpush1.bf16.msra.mxu0 0
        %5224 = vmatprep.subr.bf16.mxu0 0
        %5225 = vmatpush1.bf16.msra.mxu0 %v5205
        %5226 = vmatprep.subr.bf16.mxu0 0
        %5227 = vmatpush2.bf16.msra.mxu0 0
        %5228 = vmatprep.subr.bf16.mxu0 0
        %5229 = vmatpush2.bf16.msra.mxu0 0
        %5230 = vmatprep.subr.bf16.mxu0 0
        %5231 = vmatpush2.bf16.msra.mxu0 0
        %5232 = vmatprep.subr.bf16.mxu0 0
        %5233 = vmatpush2.bf16.msra.mxu0 0
        %5234 = vmatprep.subr.bf16.mxu0 0
        %5235 = vmatpush2.bf16.msra.mxu0 0
        %5236 = vmatprep.subr.bf16.mxu0 0
        %5237 = vmatpush2.bf16.msra.mxu0 0
        %5238 = vmatprep.subr.bf16.mxu0 0
        %5239 = vmatpush2.bf16.msra.mxu0 0
        %5240 = vmatprep.subr.bf16.mxu0 0
        %5241 = vmatpush2.bf16.msra.mxu0 0
        %5242 = vmatprep.mubr.bf16.mxu0 0
        %5243 = vmatmul.mubr.bf16.gmra.mxu0 %v5208
        %v5244 = vpop.f32.mrf.mxu0
        %v5245 = vadd.f32 0.0, %v5244
        %v5246 = vpop.f32.mrf.mxu0
        %v5247 = vpop.f32.mrf.mxu0
        %v5248 = vadd.f32 0.0, %v5247
        %v5249 = vpop.f32.mrf.mxu0
        %5250 = vdwg.mxu0
        %5251 = vrot.lane.b32.xlu0 %v1584, 64
        %v5252 = vpop.permute.xlu0 %5251
        %v5255 = vsel %vm3198, %v3931, 0
        %5257 = vmatprep.subr.bf16.mxu0 0
        %5258 = vmatpush1.bf16.msra.mxu0 0
        %5259 = vmatprep.subr.bf16.mxu0 0
        %5260 = vmatpush1.bf16.msra.mxu0 0
        %5261 = vmatprep.subr.bf16.mxu0 0
        %5262 = vmatpush1.bf16.msra.mxu0 0
        %5263 = vmatprep.subr.bf16.mxu0 0
        %5264 = vmatpush1.bf16.msra.mxu0 0
        %5265 = vmatprep.subr.bf16.mxu0 0
        %5266 = vmatpush1.bf16.msra.mxu0 0
        %5267 = vmatprep.subr.bf16.mxu0 0
        %5268 = vmatpush1.bf16.msra.mxu0 0
        %5269 = vmatprep.subr.bf16.mxu0 0
        %5270 = vmatpush1.bf16.msra.mxu0 0
        %5271 = vmatprep.subr.bf16.mxu0 0
        %5272 = vmatpush1.bf16.msra.mxu0 %v5252
        %5273 = vmatprep.subr.bf16.mxu0 0
        %5274 = vmatpush2.bf16.msra.mxu0 0
        %5275 = vmatprep.subr.bf16.mxu0 0
        %5276 = vmatpush2.bf16.msra.mxu0 0
        %5277 = vmatprep.subr.bf16.mxu0 0
        %5278 = vmatpush2.bf16.msra.mxu0 0
        %5279 = vmatprep.subr.bf16.mxu0 0
        %5280 = vmatpush2.bf16.msra.mxu0 0
        %5281 = vmatprep.subr.bf16.mxu0 0
        %5282 = vmatpush2.bf16.msra.mxu0 0
        %5283 = vmatprep.subr.bf16.mxu0 0
        %5284 = vmatpush2.bf16.msra.mxu0 0
        %5285 = vmatprep.subr.bf16.mxu0 0
        %5286 = vmatpush2.bf16.msra.mxu0 0
        %5287 = vmatprep.subr.bf16.mxu0 0
        %5288 = vmatpush2.bf16.msra.mxu0 0
        %5289 = vmatprep.mubr.bf16.mxu0 0
        %5290 = vmatmul.mubr.bf16.gmra.mxu0 %v5255
        %v5291 = vpop.f32.mrf.mxu0
        %v5292 = vadd.f32 0.0, %v5291
        %v5293 = vpop.f32.mrf.mxu0
        %v5294 = vpop.f32.mrf.mxu0
        %v5295 = vadd.f32 0.0, %v5294
        %v5296 = vpop.f32.mrf.mxu0
        %5297 = vdwg.mxu0
        %5298 = vrot.lane.b32.xlu0 %v1585, 64
        %v5299 = vpop.permute.xlu0 %5298
        %v5302 = vsel %vm3198, %v3932, 0
        %5304 = vmatprep.subr.bf16.mxu0 0
        %5305 = vmatpush1.bf16.msra.mxu0 0
        %5306 = vmatprep.subr.bf16.mxu0 0
        %5307 = vmatpush1.bf16.msra.mxu0 0
        %5308 = vmatprep.subr.bf16.mxu0 0
        %5309 = vmatpush1.bf16.msra.mxu0 0
        %5310 = vmatprep.subr.bf16.mxu0 0
        %5311 = vmatpush1.bf16.msra.mxu0 0
        %5312 = vmatprep.subr.bf16.mxu0 0
        %5313 = vmatpush1.bf16.msra.mxu0 0
        %5314 = vmatprep.subr.bf16.mxu0 0
        %5315 = vmatpush1.bf16.msra.mxu0 0
        %5316 = vmatprep.subr.bf16.mxu0 0
        %5317 = vmatpush1.bf16.msra.mxu0 0
        %5318 = vmatprep.subr.bf16.mxu0 0
        %5319 = vmatpush1.bf16.msra.mxu0 %v5299
        %5320 = vmatprep.subr.bf16.mxu0 0
        %5321 = vmatpush2.bf16.msra.mxu0 0
        %5322 = vmatprep.subr.bf16.mxu0 0
        %5323 = vmatpush2.bf16.msra.mxu0 0
        %5324 = vmatprep.subr.bf16.mxu0 0
        %5325 = vmatpush2.bf16.msra.mxu0 0
        %5326 = vmatprep.subr.bf16.mxu0 0
        %5327 = vmatpush2.bf16.msra.mxu0 0
        %5328 = vmatprep.subr.bf16.mxu0 0
        %5329 = vmatpush2.bf16.msra.mxu0 0
        %5330 = vmatprep.subr.bf16.mxu0 0
        %5331 = vmatpush2.bf16.msra.mxu0 0
        %5332 = vmatprep.subr.bf16.mxu0 0
        %5333 = vmatpush2.bf16.msra.mxu0 0
        %5334 = vmatprep.subr.bf16.mxu0 0
        %5335 = vmatpush2.bf16.msra.mxu0 0
        %5336 = vmatprep.mubr.bf16.mxu0 0
        %5337 = vmatmul.mubr.bf16.gmra.mxu0 %v5302
        %v5338 = vpop.f32.mrf.mxu0
        %v5339 = vadd.f32 0.0, %v5338
        %v5340 = vpop.f32.mrf.mxu0
        %v5341 = vpop.f32.mrf.mxu0
        %v5342 = vadd.f32 0.0, %v5341
        %v5343 = vpop.f32.mrf.mxu0
        %5344 = vdwg.mxu0
        %5345 = vrot.lane.b32.xlu0 %v1586, 64
        %v5346 = vpop.permute.xlu0 %5345
        %v5349 = vsel %vm3198, %v3933, 0
        %5351 = vmatprep.subr.bf16.mxu0 0
        %5352 = vmatpush1.bf16.msra.mxu0 0
        %5353 = vmatprep.subr.bf16.mxu0 0
        %5354 = vmatpush1.bf16.msra.mxu0 0
        %5355 = vmatprep.subr.bf16.mxu0 0
        %5356 = vmatpush1.bf16.msra.mxu0 0
        %5357 = vmatprep.subr.bf16.mxu0 0
        %5358 = vmatpush1.bf16.msra.mxu0 0
        %5359 = vmatprep.subr.bf16.mxu0 0
        %5360 = vmatpush1.bf16.msra.mxu0 0
        %5361 = vmatprep.subr.bf16.mxu0 0
        %5362 = vmatpush1.bf16.msra.mxu0 0
        %5363 = vmatprep.subr.bf16.mxu0 0
        %5364 = vmatpush1.bf16.msra.mxu0 0
        %5365 = vmatprep.subr.bf16.mxu0 0
        %5366 = vmatpush1.bf16.msra.mxu0 %v5346
        %5367 = vmatprep.subr.bf16.mxu0 0
        %5368 = vmatpush2.bf16.msra.mxu0 0
        %5369 = vmatprep.subr.bf16.mxu0 0
        %5370 = vmatpush2.bf16.msra.mxu0 0
        %5371 = vmatprep.subr.bf16.mxu0 0
        %5372 = vmatpush2.bf16.msra.mxu0 0
        %5373 = vmatprep.subr.bf16.mxu0 0
        %5374 = vmatpush2.bf16.msra.mxu0 0
        %5375 = vmatprep.subr.bf16.mxu0 0
        %5376 = vmatpush2.bf16.msra.mxu0 0
        %5377 = vmatprep.subr.bf16.mxu0 0
        %5378 = vmatpush2.bf16.msra.mxu0 0
        %5379 = vmatprep.subr.bf16.mxu0 0
        %5380 = vmatpush2.bf16.msra.mxu0 0
        %5381 = vmatprep.subr.bf16.mxu0 0
        %5382 = vmatpush2.bf16.msra.mxu0 0
        %5383 = vmatprep.mubr.bf16.mxu0 0
        %5384 = vmatmul.mubr.bf16.gmra.mxu0 %v5349
        %v5385 = vpop.f32.mrf.mxu0
        %v5386 = vadd.f32 0.0, %v5385
        %v5387 = vpop.f32.mrf.mxu0
        %v5388 = vpop.f32.mrf.mxu0
        %v5389 = vadd.f32 0.0, %v5388
        %v5390 = vpop.f32.mrf.mxu0
        %5391 = vdwg.mxu0
        %5392 = vrot.lane.b32.xlu0 %v1587, 64
        %v5393 = vpop.permute.xlu0 %5392
        %v5396 = vsel %vm3198, %v3934, 0
        %5398 = vmatprep.subr.bf16.mxu0 0
        %5399 = vmatpush1.bf16.msra.mxu0 0
        %5400 = vmatprep.subr.bf16.mxu0 0
        %5401 = vmatpush1.bf16.msra.mxu0 0
        %5402 = vmatprep.subr.bf16.mxu0 0
        %5403 = vmatpush1.bf16.msra.mxu0 0
        %5404 = vmatprep.subr.bf16.mxu0 0
        %5405 = vmatpush1.bf16.msra.mxu0 0
        %5406 = vmatprep.subr.bf16.mxu0 0
        %5407 = vmatpush1.bf16.msra.mxu0 0
        %5408 = vmatprep.subr.bf16.mxu0 0
        %5409 = vmatpush1.bf16.msra.mxu0 0
        %5410 = vmatprep.subr.bf16.mxu0 0
        %5411 = vmatpush1.bf16.msra.mxu0 0
        %5412 = vmatprep.subr.bf16.mxu0 0
        %5413 = vmatpush1.bf16.msra.mxu0 %v5393
        %5414 = vmatprep.subr.bf16.mxu0 0
        %5415 = vmatpush2.bf16.msra.mxu0 0
        %5416 = vmatprep.subr.bf16.mxu0 0
        %5417 = vmatpush2.bf16.msra.mxu0 0
        %5418 = vmatprep.subr.bf16.mxu0 0
        %5419 = vmatpush2.bf16.msra.mxu0 0
        %5420 = vmatprep.subr.bf16.mxu0 0
        %5421 = vmatpush2.bf16.msra.mxu0 0
        %5422 = vmatprep.subr.bf16.mxu0 0
        %5423 = vmatpush2.bf16.msra.mxu0 0
        %5424 = vmatprep.subr.bf16.mxu0 0
        %5425 = vmatpush2.bf16.msra.mxu0 0
        %5426 = vmatprep.subr.bf16.mxu0 0
        %5427 = vmatpush2.bf16.msra.mxu0 0
        %5428 = vmatprep.subr.bf16.mxu0 0
        %5429 = vmatpush2.bf16.msra.mxu0 0
        %5430 = vmatprep.mubr.bf16.mxu0 0
        %5431 = vmatmul.mubr.bf16.gmra.mxu0 %v5396
        %v5432 = vpop.f32.mrf.mxu0
        %v5433 = vadd.f32 0.0, %v5432
        %v5434 = vpop.f32.mrf.mxu0
        %v5435 = vpop.f32.mrf.mxu0
        %v5436 = vadd.f32 0.0, %v5435
        %v5437 = vpop.f32.mrf.mxu0
        %5438 = vdwg.mxu0
        %5439 = vst.msk [vmem:[#allocation3] sm:$0xff] %vm1600, %v3976
        %5440 = vst.msk [vmem:[#allocation3 + $0x8] sm:$0xff] %vm1600, %v3979
        %5441 = vst.msk [vmem:[#allocation3 + $0x10] sm:$0xff] %vm1600, %v4023
        %5442 = vst.msk [vmem:[#allocation3 + $0x18] sm:$0xff] %vm1600, %v4026
        %5443 = vst.msk [vmem:[#allocation3 + $0x20] sm:$0xff] %vm1600, %v4070
        %5444 = vst.msk [vmem:[#allocation3 + $0x28] sm:$0xff] %vm1600, %v4073
        %5445 = vst.msk [vmem:[#allocation3 + $0x30] sm:$0xff] %vm1600, %v4117
        %5446 = vst.msk [vmem:[#allocation3 + $0x38] sm:$0xff] %vm1600, %v4120
        %5447 = vst.msk [vmem:[#allocation3 + $0x40] sm:$0xff] %vm1600, %v4164
        %5448 = vst.msk [vmem:[#allocation3 + $0x48] sm:$0xff] %vm1600, %v4167
        %5449 = vst.msk [vmem:[#allocation3 + $0x50] sm:$0xff] %vm1600, %v4211
        %5450 = vst.msk [vmem:[#allocation3 + $0x58] sm:$0xff] %vm1600, %v4214
        %5451 = vst.msk [vmem:[#allocation3 + $0x60] sm:$0xff] %vm1600, %v4258
        %5452 = vst.msk [vmem:[#allocation3 + $0x68] sm:$0xff] %vm1600, %v4261
        %5453 = vst.msk [vmem:[#allocation3 + $0x70] sm:$0xff] %vm1600, %v4305
        %5454 = vst.msk [vmem:[#allocation3 + $0x78] sm:$0xff] %vm1600, %v4308
        %5471 = vrot.lane.b32.xlu0 %v4352, 8
        %v5472 = vpop.permute.xlu0 %5471
        %5473 = vrot.lane.b32.xlu0 %v4355, 8
        %v5474 = vpop.permute.xlu0 %5473
        %5475 = vrot.lane.b32.xlu0 %v4399, 8
        %v5476 = vpop.permute.xlu0 %5475
        %5477 = vrot.lane.b32.xlu0 %v4402, 8
        %v5478 = vpop.permute.xlu0 %5477
        %5479 = vrot.lane.b32.xlu0 %v4446, 8
        %v5480 = vpop.permute.xlu0 %5479
        %5481 = vrot.lane.b32.xlu0 %v4449, 8
        %v5482 = vpop.permute.xlu0 %5481
        %5483 = vrot.lane.b32.xlu0 %v4493, 8
        %v5484 = vpop.permute.xlu0 %5483
        %5485 = vrot.lane.b32.xlu0 %v4496, 8
        %v5486 = vpop.permute.xlu0 %5485
        %5487 = vrot.lane.b32.xlu0 %v4540, 8
        %v5488 = vpop.permute.xlu0 %5487
        %5489 = vrot.lane.b32.xlu0 %v4543, 8
        %v5490 = vpop.permute.xlu0 %5489
        %5491 = vrot.lane.b32.xlu0 %v4587, 8
        %v5492 = vpop.permute.xlu0 %5491
        %5493 = vrot.lane.b32.xlu0 %v4590, 8
        %v5494 = vpop.permute.xlu0 %5493
        %5495 = vrot.lane.b32.xlu0 %v4634, 8
        %v5496 = vpop.permute.xlu0 %5495
        %5497 = vrot.lane.b32.xlu0 %v4637, 8
        %v5498 = vpop.permute.xlu0 %5497
        %5499 = vrot.lane.b32.xlu0 %v4681, 8
        %v5500 = vpop.permute.xlu0 %5499
        %5501 = vrot.lane.b32.xlu0 %v4684, 8
        %v5502 = vpop.permute.xlu0 %5501
        %vm5519 = vcmask 130112
        %5520 = vst.msk [vmem:[#allocation3] sm:$0xff] %vm5519, %v5472
        %5521 = vst.msk [vmem:[#allocation3 + $0x8] sm:$0xff] %vm5519, %v5474
        %5522 = vst.msk [vmem:[#allocation3 + $0x10] sm:$0xff] %vm5519, %v5476
        %5523 = vst.msk [vmem:[#allocation3 + $0x18] sm:$0xff] %vm5519, %v5478
        %5524 = vst.msk [vmem:[#allocation3 + $0x20] sm:$0xff] %vm5519, %v5480
        %5525 = vst.msk [vmem:[#allocation3 + $0x28] sm:$0xff] %vm5519, %v5482
        %5526 = vst.msk [vmem:[#allocation3 + $0x30] sm:$0xff] %vm5519, %v5484
        %5527 = vst.msk [vmem:[#allocation3 + $0x38] sm:$0xff] %vm5519, %v5486
        %5528 = vst.msk [vmem:[#allocation3 + $0x40] sm:$0xff] %vm5519, %v5488
        %5529 = vst.msk [vmem:[#allocation3 + $0x48] sm:$0xff] %vm5519, %v5490
        %5530 = vst.msk [vmem:[#allocation3 + $0x50] sm:$0xff] %vm5519, %v5492
        %5531 = vst.msk [vmem:[#allocation3 + $0x58] sm:$0xff] %vm5519, %v5494
        %5532 = vst.msk [vmem:[#allocation3 + $0x60] sm:$0xff] %vm5519, %v5496
        %5533 = vst.msk [vmem:[#allocation3 + $0x68] sm:$0xff] %vm5519, %v5498
        %5534 = vst.msk [vmem:[#allocation3 + $0x70] sm:$0xff] %vm5519, %v5500
        %5535 = vst.msk [vmem:[#allocation3 + $0x78] sm:$0xff] %vm5519, %v5502
        %5552 = vrot.lane.b32.xlu0 %v4728, 16
        %v5553 = vpop.permute.xlu0 %5552
        %5554 = vrot.lane.b32.xlu0 %v4731, 16
        %v5555 = vpop.permute.xlu0 %5554
        %5556 = vrot.lane.b32.xlu0 %v4775, 16
        %v5557 = vpop.permute.xlu0 %5556
        %5558 = vrot.lane.b32.xlu0 %v4778, 16
        %v5559 = vpop.permute.xlu0 %5558
        %5560 = vrot.lane.b32.xlu0 %v4822, 16
        %v5561 = vpop.permute.xlu0 %5560
        %5562 = vrot.lane.b32.xlu0 %v4825, 16
        %v5563 = vpop.permute.xlu0 %5562
        %5564 = vrot.lane.b32.xlu0 %v4869, 16
        %v5565 = vpop.permute.xlu0 %5564
        %5566 = vrot.lane.b32.xlu0 %v4872, 16
        %v5567 = vpop.permute.xlu0 %5566
        %5568 = vrot.lane.b32.xlu0 %v4916, 16
        %v5569 = vpop.permute.xlu0 %5568
        %5570 = vrot.lane.b32.xlu0 %v4919, 16
        %v5571 = vpop.permute.xlu0 %5570
        %5572 = vrot.lane.b32.xlu0 %v4963, 16
        %v5573 = vpop.permute.xlu0 %5572
        %5574 = vrot.lane.b32.xlu0 %v4966, 16
        %v5575 = vpop.permute.xlu0 %5574
        %5576 = vrot.lane.b32.xlu0 %v5010, 16
        %v5577 = vpop.permute.xlu0 %5576
        %5578 = vrot.lane.b32.xlu0 %v5013, 16
        %v5579 = vpop.permute.xlu0 %5578
        %5580 = vrot.lane.b32.xlu0 %v5057, 16
        %v5581 = vpop.permute.xlu0 %5580
        %5582 = vrot.lane.b32.xlu0 %v5060, 16
        %v5583 = vpop.permute.xlu0 %5582
        %vm5600 = vcmask 195712
        %5601 = vst.msk [vmem:[#allocation3] sm:$0xff] %vm5600, %v5553
        %5602 = vst.msk [vmem:[#allocation3 + $0x8] sm:$0xff] %vm5600, %v5555
        %5603 = vst.msk [vmem:[#allocation3 + $0x10] sm:$0xff] %vm5600, %v5557
        %5604 = vst.msk [vmem:[#allocation3 + $0x18] sm:$0xff] %vm5600, %v5559
        %5605 = vst.msk [vmem:[#allocation3 + $0x20] sm:$0xff] %vm5600, %v5561
        %5606 = vst.msk [vmem:[#allocation3 + $0x28] sm:$0xff] %vm5600, %v5563
        %5607 = vst.msk [vmem:[#allocation3 + $0x30] sm:$0xff] %vm5600, %v5565
        %5608 = vst.msk [vmem:[#allocation3 + $0x38] sm:$0xff] %vm5600, %v5567
        %5609 = vst.msk [vmem:[#allocation3 + $0x40] sm:$0xff] %vm5600, %v5569
        %5610 = vst.msk [vmem:[#allocation3 + $0x48] sm:$0xff] %vm5600, %v5571
        %5611 = vst.msk [vmem:[#allocation3 + $0x50] sm:$0xff] %vm5600, %v5573
        %5612 = vst.msk [vmem:[#allocation3 + $0x58] sm:$0xff] %vm5600, %v5575
        %5613 = vst.msk [vmem:[#allocation3 + $0x60] sm:$0xff] %vm5600, %v5577
        %5614 = vst.msk [vmem:[#allocation3 + $0x68] sm:$0xff] %vm5600, %v5579
        %5615 = vst.msk [vmem:[#allocation3 + $0x70] sm:$0xff] %vm5600, %v5581
        %5616 = vst.msk [vmem:[#allocation3 + $0x78] sm:$0xff] %vm5600, %v5583
        %5633 = vrot.lane.b32.xlu0 %v5104, 24
        %v5634 = vpop.permute.xlu0 %5633
        %5635 = vrot.lane.b32.xlu0 %v5107, 24
        %v5636 = vpop.permute.xlu0 %5635
        %5637 = vrot.lane.b32.xlu0 %v5151, 24
        %v5638 = vpop.permute.xlu0 %5637
        %5639 = vrot.lane.b32.xlu0 %v5154, 24
        %v5640 = vpop.permute.xlu0 %5639
        %5641 = vrot.lane.b32.xlu0 %v5198, 24
        %v5642 = vpop.permute.xlu0 %5641
        %5643 = vrot.lane.b32.xlu0 %v5201, 24
        %v5644 = vpop.permute.xlu0 %5643
        %5645 = vrot.lane.b32.xlu0 %v5245, 24
        %v5646 = vpop.permute.xlu0 %5645
        %5647 = vrot.lane.b32.xlu0 %v5248, 24
        %v5648 = vpop.permute.xlu0 %5647
        %5649 = vrot.lane.b32.xlu0 %v5292, 24
        %v5650 = vpop.permute.xlu0 %5649
        %5651 = vrot.lane.b32.xlu0 %v5295, 24
        %v5652 = vpop.permute.xlu0 %5651
        %5653 = vrot.lane.b32.xlu0 %v5339, 24
        %v5654 = vpop.permute.xlu0 %5653
        %5655 = vrot.lane.b32.xlu0 %v5342, 24
        %v5656 = vpop.permute.xlu0 %5655
        %5657 = vrot.lane.b32.xlu0 %v5386, 24
        %v5658 = vpop.permute.xlu0 %5657
        %5659 = vrot.lane.b32.xlu0 %v5389, 24
        %v5660 = vpop.permute.xlu0 %5659
        %5661 = vrot.lane.b32.xlu0 %v5433, 24
        %v5662 = vpop.permute.xlu0 %5661
        %5663 = vrot.lane.b32.xlu0 %v5436, 24
        %v5664 = vpop.permute.xlu0 %5663
        %vm5681 = vcmask 261312
        %5682 = vst.msk [vmem:[#allocation3] sm:$0xff] %vm5681, %v5634
        %5683 = vst.msk [vmem:[#allocation3 + $0x8] sm:$0xff] %vm5681, %v5636
        %5684 = vst.msk [vmem:[#allocation3 + $0x10] sm:$0xff] %vm5681, %v5638
        %5685 = vst.msk [vmem:[#allocation3 + $0x18] sm:$0xff] %vm5681, %v5640
        %5686 = vst.msk [vmem:[#allocation3 + $0x20] sm:$0xff] %vm5681, %v5642
        %5687 = vst.msk [vmem:[#allocation3 + $0x28] sm:$0xff] %vm5681, %v5644
        %5688 = vst.msk [vmem:[#allocation3 + $0x30] sm:$0xff] %vm5681, %v5646
        %5689 = vst.msk [vmem:[#allocation3 + $0x38] sm:$0xff] %vm5681, %v5648
        %5690 = vst.msk [vmem:[#allocation3 + $0x40] sm:$0xff] %vm5681, %v5650
        %5691 = vst.msk [vmem:[#allocation3 + $0x48] sm:$0xff] %vm5681, %v5652
        %5692 = vst.msk [vmem:[#allocation3 + $0x50] sm:$0xff] %vm5681, %v5654
        %5693 = vst.msk [vmem:[#allocation3 + $0x58] sm:$0xff] %vm5681, %v5656
        %5694 = vst.msk [vmem:[#allocation3 + $0x60] sm:$0xff] %vm5681, %v5658
        %5695 = vst.msk [vmem:[#allocation3 + $0x68] sm:$0xff] %vm5681, %v5660
        %5696 = vst.msk [vmem:[#allocation3 + $0x70] sm:$0xff] %vm5681, %v5662
        %5697 = vst.msk [vmem:[#allocation3 + $0x78] sm:$0xff] %vm5681, %v5664
        %v5698 = vld [vmem:[#allocation3] sm:$0xff]
        %v5699 = vld [vmem:[#allocation3 + $0x8] sm:$0xff]
        %v5700 = vld [vmem:[#allocation3 + $0x10] sm:$0xff]
        %v5701 = vld [vmem:[#allocation3 + $0x18] sm:$0xff]
        %v5702 = vld [vmem:[#allocation3 + $0x20] sm:$0xff]
        %v5703 = vld [vmem:[#allocation3 + $0x28] sm:$0xff]
        %v5704 = vld [vmem:[#allocation3 + $0x30] sm:$0xff]
        %v5705 = vld [vmem:[#allocation3 + $0x38] sm:$0xff]
        %v5706 = vld [vmem:[#allocation3 + $0x40] sm:$0xff]
        %v5707 = vld [vmem:[#allocation3 + $0x48] sm:$0xff]
        %v5708 = vld [vmem:[#allocation3 + $0x50] sm:$0xff]
        %v5709 = vld [vmem:[#allocation3 + $0x58] sm:$0xff]
        %v5710 = vld [vmem:[#allocation3 + $0x60] sm:$0xff]
        %v5711 = vld [vmem:[#allocation3 + $0x68] sm:$0xff]
        %v5712 = vld [vmem:[#allocation3 + $0x70] sm:$0xff]
        %v5713 = vld [vmem:[#allocation3 + $0x78] sm:$0xff]
        %v5714 = vpack.c.bf16 %v5699, %v5698
        %v5715 = vpack.c.bf16 %v5701, %v5700
        %v5716 = vpack.c.bf16 %v5703, %v5702
        %v5717 = vpack.c.bf16 %v5705, %v5704
        %v5718 = vpack.c.bf16 %v5707, %v5706
        %v5719 = vpack.c.bf16 %v5709, %v5708
        %v5720 = vpack.c.bf16 %v5711, %v5710
        %v5721 = vpack.c.bf16 %v5713, %v5712
        %v5722 = vld [vmem:[%s700] sm:$0xf]
        %v5723 = vld [vmem:[%s700 + $0x4] sm:$0xf]
        %v5724 = vld [vmem:[%s700 + $0x8] sm:$0xf]
        %v5725 = vld [vmem:[%s700 + $0xc] sm:$0xf]
        %v5726 = vld [vmem:[%s703] sm:$0x1]
        %v5728 = vlaneseq
        %v5729 = vshrl.u32 %v5728, 7
        %v5730 = vsub.s32 0, %v5729
        %v5731 = vrot.slane %v5726, %v5730
        %v5737 = vunpack.c.l.b16 %v5722
        %v5738 = vunpack.c.l.b16 %v5723
        %v5739 = vunpack.c.l.b16 %v5724
        %v5740 = vunpack.c.l.b16 %v5725
        %v5741 = vpack.c.b16 %v5738, %v5737
        %v5742 = vpack.c.b16 %v5740, %v5739
        %v5746 = vsel %vm782, %v5714, 0
        %v5749 = vsel %vm782, %v5715, 0
        %v5752 = vsel %vm782, %v5716, 0
        %v5755 = vsel %vm782, %v5717, 0
        %v5758 = vsel %vm782, %v5718, 0
        %v5761 = vsel %vm782, %v5719, 0
        %v5764 = vsel %vm782, %v5720, 0
        %v5767 = vsel %vm782, %v5721, 0
        %5769 = vmatprep.subr.bf16.mxu0 0
        %5770 = vmatpush1.bf16.msra.mxu0 0
        %5771 = vmatprep.subr.bf16.mxu0 0
        %5772 = vmatpush1.bf16.msra.mxu0 0
        %5773 = vmatprep.subr.bf16.mxu0 0
        %5774 = vmatpush1.bf16.msra.mxu0 0
        %5775 = vmatprep.subr.bf16.mxu0 0
        %5776 = vmatpush1.bf16.msra.mxu0 0
        %5777 = vmatprep.subr.bf16.mxu0 0
        %5778 = vmatpush1.bf16.msra.mxu0 0
        %5779 = vmatprep.subr.bf16.mxu0 0
        %5780 = vmatpush1.bf16.msra.mxu0 0
        %5781 = vmatprep.subr.bf16.mxu0 0
        %5782 = vmatpush1.bf16.msra.mxu0 %v5742
        %5783 = vmatprep.subr.bf16.mxu0 0
        %5784 = vmatpush1.bf16.msra.mxu0 %v5741
        %5785 = vmatprep.subr.bf16.mxu0 0
        %5786 = vmatpush2.bf16.msra.mxu0 0
        %5787 = vmatprep.subr.bf16.mxu0 0
        %5788 = vmatpush2.bf16.msra.mxu0 0
        %5789 = vmatprep.subr.bf16.mxu0 0
        %5790 = vmatpush2.bf16.msra.mxu0 0
        %5791 = vmatprep.subr.bf16.mxu0 0
        %5792 = vmatpush2.bf16.msra.mxu0 0
        %5793 = vmatprep.subr.bf16.mxu0 0
        %5794 = vmatpush2.bf16.msra.mxu0 0
        %5795 = vmatprep.subr.bf16.mxu0 0
        %5796 = vmatpush2.bf16.msra.mxu0 0
        %5797 = vmatprep.subr.bf16.mxu0 0
        %5798 = vmatpush2.bf16.msra.mxu0 0
        %5799 = vmatprep.subr.bf16.mxu0 0
        %5800 = vmatpush2.bf16.msra.mxu0 0
        %5801 = vmatprep.mubr.bf16.mxu0 0
        %5802 = vmatmul.mubr.bf16.gmra.mxu0 %v5746
        %v5803 = vpop.f32.mrf.mxu0
        %v5804 = vadd.f32 %v5731, %v5803
        %v5805 = vpop.f32.mrf.mxu0
        %v5806 = vpop.f32.mrf.mxu0
        %v5807 = vadd.f32 %v5731, %v5806
        %v5808 = vpop.f32.mrf.mxu0
        %5809 = vmatprep.mubr.bf16.mxu0 0
        %5810 = vmatmul.mubr.bf16.gmra.mxu0 %v5749
        %v5811 = vpop.f32.mrf.mxu0
        %v5812 = vadd.f32 %v5731, %v5811
        %v5813 = vpop.f32.mrf.mxu0
        %v5814 = vpop.f32.mrf.mxu0
        %v5815 = vadd.f32 %v5731, %v5814
        %v5816 = vpop.f32.mrf.mxu0
        %5817 = vmatprep.mubr.bf16.mxu0 0
        %5818 = vmatmul.mubr.bf16.gmra.mxu0 %v5752
        %v5819 = vpop.f32.mrf.mxu0
        %v5820 = vadd.f32 %v5731, %v5819
        %v5821 = vpop.f32.mrf.mxu0
        %v5822 = vpop.f32.mrf.mxu0
        %v5823 = vadd.f32 %v5731, %v5822
        %v5824 = vpop.f32.mrf.mxu0
        %5825 = vmatprep.mubr.bf16.mxu0 0
        %5826 = vmatmul.mubr.bf16.gmra.mxu0 %v5755
        %v5827 = vpop.f32.mrf.mxu0
        %v5828 = vadd.f32 %v5731, %v5827
        %v5829 = vpop.f32.mrf.mxu0
        %v5830 = vpop.f32.mrf.mxu0
        %v5831 = vadd.f32 %v5731, %v5830
        %v5832 = vpop.f32.mrf.mxu0
        %5833 = vmatprep.mubr.bf16.mxu0 0
        %5834 = vmatmul.mubr.bf16.gmra.mxu0 %v5758
        %v5835 = vpop.f32.mrf.mxu0
        %v5836 = vadd.f32 %v5731, %v5835
        %v5837 = vpop.f32.mrf.mxu0
        %v5838 = vpop.f32.mrf.mxu0
        %v5839 = vadd.f32 %v5731, %v5838
        %v5840 = vpop.f32.mrf.mxu0
        %5841 = vmatprep.mubr.bf16.mxu0 0
        %5842 = vmatmul.mubr.bf16.gmra.mxu0 %v5761
        %v5843 = vpop.f32.mrf.mxu0
        %v5844 = vadd.f32 %v5731, %v5843
        %v5845 = vpop.f32.mrf.mxu0
        %v5846 = vpop.f32.mrf.mxu0
        %v5847 = vadd.f32 %v5731, %v5846
        %v5848 = vpop.f32.mrf.mxu0
        %5849 = vmatprep.mubr.bf16.mxu0 0
        %5850 = vmatmul.mubr.bf16.gmra.mxu0 %v5764
        %v5851 = vpop.f32.mrf.mxu0
        %v5852 = vadd.f32 %v5731, %v5851
        %v5853 = vpop.f32.mrf.mxu0
        %v5854 = vpop.f32.mrf.mxu0
        %v5855 = vadd.f32 %v5731, %v5854
        %v5856 = vpop.f32.mrf.mxu0
        %5857 = vmatprep.mubr.bf16.mxu0 0
        %5858 = vmatmul.mubr.bf16.gmra.mxu0 %v5767
        %v5859 = vpop.f32.mrf.mxu0
        %v5860 = vadd.f32 %v5731, %v5859
        %v5861 = vpop.f32.mrf.mxu0
        %v5862 = vpop.f32.mrf.mxu0
        %v5863 = vadd.f32 %v5731, %v5862
        %v5864 = vpop.f32.mrf.mxu0
        %5865 = vdwg.mxu0
        %v5866 = vadd.f32 %v764, %v5804
        %v5867 = vadd.f32 %v765, %v5807
        %v5868 = vadd.f32 %v766, %v5812
        %v5869 = vadd.f32 %v767, %v5815
        %v5870 = vadd.f32 %v768, %v5820
        %v5871 = vadd.f32 %v769, %v5823
        %v5872 = vadd.f32 %v770, %v5828
        %v5873 = vadd.f32 %v771, %v5831
        %v5874 = vadd.f32 %v772, %v5836
        %v5875 = vadd.f32 %v773, %v5839
        %v5876 = vadd.f32 %v774, %v5844
        %v5877 = vadd.f32 %v775, %v5847
        %v5878 = vadd.f32 %v776, %v5852
        %v5879 = vadd.f32 %v777, %v5855
        %v5880 = vadd.f32 %v778, %v5860
        %v5881 = vadd.f32 %v779, %v5863
        %v5882 = vld [vmem:[%s706] sm:$0x1]
        %v5883 = vld [vmem:[%s709] sm:$0x1]
        %v5884 = vsel %vm782, %v5866, 0.0
        %5885 = vadd.xlane.f32.xlu0 %v5884
        %v5886 = vpop.xlane.xlu0 %5885
        %v5887 = vsel %vm782, %v5867, 0.0
        %5888 = vadd.xlane.f32.xlu0 %v5887
        %v5889 = vpop.xlane.xlu0 %5888
        %v5890 = vsel %vm782, %v5868, 0.0
        %5891 = vadd.xlane.f32.xlu0 %v5890
        %v5892 = vpop.xlane.xlu0 %5891
        %v5893 = vsel %vm782, %v5869, 0.0
        %5894 = vadd.xlane.f32.xlu0 %v5893
        %v5895 = vpop.xlane.xlu0 %5894
        %v5896 = vsel %vm782, %v5870, 0.0
        %5897 = vadd.xlane.f32.xlu0 %v5896
        %v5898 = vpop.xlane.xlu0 %5897
        %v5899 = vsel %vm782, %v5871, 0.0
        %5900 = vadd.xlane.f32.xlu0 %v5899
        %v5901 = vpop.xlane.xlu0 %5900
        %v5902 = vsel %vm782, %v5872, 0.0
        %5903 = vadd.xlane.f32.xlu0 %v5902
        %v5904 = vpop.xlane.xlu0 %5903
        %v5905 = vsel %vm782, %v5873, 0.0
        %5906 = vadd.xlane.f32.xlu0 %v5905
        %v5907 = vpop.xlane.xlu0 %5906
        %v5908 = vsel %vm782, %v5874, 0.0
        %5909 = vadd.xlane.f32.xlu0 %v5908
        %v5910 = vpop.xlane.xlu0 %5909
        %v5911 = vsel %vm782, %v5875, 0.0
        %5912 = vadd.xlane.f32.xlu0 %v5911
        %v5913 = vpop.xlane.xlu0 %5912
        %v5914 = vsel %vm782, %v5876, 0.0
        %5915 = vadd.xlane.f32.xlu0 %v5914
        %v5916 = vpop.xlane.xlu0 %5915
        %v5917 = vsel %vm782, %v5877, 0.0
        %5918 = vadd.xlane.f32.xlu0 %v5917
        %v5919 = vpop.xlane.xlu0 %5918
        %v5920 = vsel %vm782, %v5878, 0.0
        %5921 = vadd.xlane.f32.xlu0 %v5920
        %v5922 = vpop.xlane.xlu0 %5921
        %v5923 = vsel %vm782, %v5879, 0.0
        %5924 = vadd.xlane.f32.xlu0 %v5923
        %v5925 = vpop.xlane.xlu0 %5924
        %v5926 = vsel %vm782, %v5880, 0.0
        %5927 = vadd.xlane.f32.xlu0 %v5926
        %v5928 = vpop.xlane.xlu0 %5927
        %v5929 = vsel %vm782, %v5881, 0.0
        %5930 = vadd.xlane.f32.xlu0 %v5929
        %v5931 = vpop.xlane.xlu0 %5930
        %v5932 = vmul.f32 %v5886, %v831
        %v5933 = vmul.f32 %v5889, %v831
        %v5934 = vmul.f32 %v5892, %v831
        %v5935 = vmul.f32 %v5895, %v831
        %v5936 = vmul.f32 %v5898, %v831
        %v5937 = vmul.f32 %v5901, %v831
        %v5938 = vmul.f32 %v5904, %v831
        %v5939 = vmul.f32 %v5907, %v831
        %v5940 = vmul.f32 %v5910, %v831
        %v5941 = vmul.f32 %v5913, %v831
        %v5942 = vmul.f32 %v5916, %v831
        %v5943 = vmul.f32 %v5919, %v831
        %v5944 = vmul.f32 %v5922, %v831
        %v5945 = vmul.f32 %v5925, %v831
        %v5946 = vmul.f32 %v5928, %v831
        %v5947 = vmul.f32 %v5931, %v831
        %v5948 = vsub.f32 %v5866, %v5932
        %v5949 = vsub.f32 %v5867, %v5933
        %v5950 = vsub.f32 %v5868, %v5934
        %v5951 = vsub.f32 %v5869, %v5935
        %v5952 = vsub.f32 %v5870, %v5936
        %v5953 = vsub.f32 %v5871, %v5937
        %v5954 = vsub.f32 %v5872, %v5938
        %v5955 = vsub.f32 %v5873, %v5939
        %v5956 = vsub.f32 %v5874, %v5940
        %v5957 = vsub.f32 %v5875, %v5941
        %v5958 = vsub.f32 %v5876, %v5942
        %v5959 = vsub.f32 %v5877, %v5943
        %v5960 = vsub.f32 %v5878, %v5944
        %v5961 = vsub.f32 %v5879, %v5945
        %v5962 = vsub.f32 %v5880, %v5946
        %v5963 = vsub.f32 %v5881, %v5947
        %v5964 = vmul.f32 %v5948, %v5948
        %v5965 = vmul.f32 %v5949, %v5949
        %v5966 = vmul.f32 %v5950, %v5950
        %v5967 = vmul.f32 %v5951, %v5951
        %v5968 = vmul.f32 %v5952, %v5952
        %v5969 = vmul.f32 %v5953, %v5953
        %v5970 = vmul.f32 %v5954, %v5954
        %v5971 = vmul.f32 %v5955, %v5955
        %v5972 = vmul.f32 %v5956, %v5956
        %v5973 = vmul.f32 %v5957, %v5957
        %v5974 = vmul.f32 %v5958, %v5958
        %v5975 = vmul.f32 %v5959, %v5959
        %v5976 = vmul.f32 %v5960, %v5960
        %v5977 = vmul.f32 %v5961, %v5961
        %v5978 = vmul.f32 %v5962, %v5962
        %v5979 = vmul.f32 %v5963, %v5963
        %v5980 = vsel %vm782, %v5964, 0.0
        %5981 = vadd.xlane.f32.xlu0 %v5980
        %v5982 = vpop.xlane.xlu0 %5981
        %v5983 = vsel %vm782, %v5965, 0.0
        %5984 = vadd.xlane.f32.xlu0 %v5983
        %v5985 = vpop.xlane.xlu0 %5984
        %v5986 = vsel %vm782, %v5966, 0.0
        %5987 = vadd.xlane.f32.xlu0 %v5986
        %v5988 = vpop.xlane.xlu0 %5987
        %v5989 = vsel %vm782, %v5967, 0.0
        %5990 = vadd.xlane.f32.xlu0 %v5989
        %v5991 = vpop.xlane.xlu0 %5990
        %v5992 = vsel %vm782, %v5968, 0.0
        %5993 = vadd.xlane.f32.xlu0 %v5992
        %v5994 = vpop.xlane.xlu0 %5993
        %v5995 = vsel %vm782, %v5969, 0.0
        %5996 = vadd.xlane.f32.xlu0 %v5995
        %v5997 = vpop.xlane.xlu0 %5996
        %v5998 = vsel %vm782, %v5970, 0.0
        %5999 = vadd.xlane.f32.xlu0 %v5998
        %v6000 = vpop.xlane.xlu0 %5999
        %v6001 = vsel %vm782, %v5971, 0.0
        %6002 = vadd.xlane.f32.xlu0 %v6001
        %v6003 = vpop.xlane.xlu0 %6002
        %v6004 = vsel %vm782, %v5972, 0.0
        %6005 = vadd.xlane.f32.xlu0 %v6004
        %v6006 = vpop.xlane.xlu0 %6005
        %v6007 = vsel %vm782, %v5973, 0.0
        %6008 = vadd.xlane.f32.xlu0 %v6007
        %v6009 = vpop.xlane.xlu0 %6008
        %v6010 = vsel %vm782, %v5974, 0.0
        %6011 = vadd.xlane.f32.xlu0 %v6010
        %v6012 = vpop.xlane.xlu0 %6011
        %v6013 = vsel %vm782, %v5975, 0.0
        %6014 = vadd.xlane.f32.xlu0 %v6013
        %v6015 = vpop.xlane.xlu0 %6014
        %v6016 = vsel %vm782, %v5976, 0.0
        %6017 = vadd.xlane.f32.xlu0 %v6016
        %v6018 = vpop.xlane.xlu0 %6017
        %v6019 = vsel %vm782, %v5977, 0.0
        %6020 = vadd.xlane.f32.xlu0 %v6019
        %v6021 = vpop.xlane.xlu0 %6020
        %v6022 = vsel %vm782, %v5978, 0.0
        %6023 = vadd.xlane.f32.xlu0 %v6022
        %v6024 = vpop.xlane.xlu0 %6023
        %v6025 = vsel %vm782, %v5979, 0.0
        %6026 = vadd.xlane.f32.xlu0 %v6025
        %v6027 = vpop.xlane.xlu0 %6026
        %v6028 = vmul.f32 %v5982, %v831
        %v6029 = vmul.f32 %v5985, %v831
        %v6030 = vmul.f32 %v5988, %v831
        %v6031 = vmul.f32 %v5991, %v831
        %v6032 = vmul.f32 %v5994, %v831
        %v6033 = vmul.f32 %v5997, %v831
        %v6034 = vmul.f32 %v6000, %v831
        %v6035 = vmul.f32 %v6003, %v831
        %v6036 = vmul.f32 %v6006, %v831
        %v6037 = vmul.f32 %v6009, %v831
        %v6038 = vmul.f32 %v6012, %v831
        %v6039 = vmul.f32 %v6015, %v831
        %v6040 = vmul.f32 %v6018, %v831
        %v6041 = vmul.f32 %v6021, %v831
        %v6042 = vmul.f32 %v6024, %v831
        %v6043 = vmul.f32 %v6027, %v831
        %v6044 = vadd.f32 %v6028, 1e-05
        %v6045 = vadd.f32 %v6029, 1e-05
        %v6046 = vadd.f32 %v6030, 1e-05
        %v6047 = vadd.f32 %v6031, 1e-05
        %v6048 = vadd.f32 %v6032, 1e-05
        %v6049 = vadd.f32 %v6033, 1e-05
        %v6050 = vadd.f32 %v6034, 1e-05
        %v6051 = vadd.f32 %v6035, 1e-05
        %v6052 = vadd.f32 %v6036, 1e-05
        %v6053 = vadd.f32 %v6037, 1e-05
        %v6054 = vadd.f32 %v6038, 1e-05
        %v6055 = vadd.f32 %v6039, 1e-05
        %v6056 = vadd.f32 %v6040, 1e-05
        %v6057 = vadd.f32 %v6041, 1e-05
        %v6058 = vadd.f32 %v6042, 1e-05
        %v6059 = vadd.f32 %v6043, 1e-05
        %v6060 = vrsqrt.pop %v6044
        %v6061 = vrsqrt.pop %v6045
        %v6062 = vrsqrt.pop %v6046
        %v6063 = vrsqrt.pop %v6047
        %v6064 = vrsqrt.pop %v6048
        %v6065 = vrsqrt.pop %v6049
        %v6066 = vrsqrt.pop %v6050
        %v6067 = vrsqrt.pop %v6051
        %v6068 = vrsqrt.pop %v6052
        %v6069 = vrsqrt.pop %v6053
        %v6070 = vrsqrt.pop %v6054
        %v6071 = vrsqrt.pop %v6055
        %v6072 = vrsqrt.pop %v6056
        %v6073 = vrsqrt.pop %v6057
        %v6074 = vrsqrt.pop %v6058
        %v6075 = vrsqrt.pop %v6059
        %v6076 = vmul.f32 %v5948, %v6060
        %v6077 = vmul.f32 %v5949, %v6061
        %v6078 = vmul.f32 %v5950, %v6062
        %v6079 = vmul.f32 %v5951, %v6063
        %v6080 = vmul.f32 %v5952, %v6064
        %v6081 = vmul.f32 %v5953, %v6065
        %v6082 = vmul.f32 %v5954, %v6066
        %v6083 = vmul.f32 %v5955, %v6067
        %v6084 = vmul.f32 %v5956, %v6068
        %v6085 = vmul.f32 %v5957, %v6069
        %v6086 = vmul.f32 %v5958, %v6070
        %v6087 = vmul.f32 %v5959, %v6071
        %v6088 = vmul.f32 %v5960, %v6072
        %v6089 = vmul.f32 %v5961, %v6073
        %v6090 = vmul.f32 %v5962, %v6074
        %v6091 = vmul.f32 %v5963, %v6075
        %v6093 = vlaneseq
        %v6094 = vshrl.u32 %v6093, 7
        %v6095 = vsub.s32 0, %v6094
        %v6096 = vrot.slane %v5882, %v6095
        %v6098 = vmul.f32 %v6076, %v6096
        %v6099 = vmul.f32 %v6077, %v6096
        %v6100 = vmul.f32 %v6078, %v6096
        %v6101 = vmul.f32 %v6079, %v6096
        %v6102 = vmul.f32 %v6080, %v6096
        %v6103 = vmul.f32 %v6081, %v6096
        %v6104 = vmul.f32 %v6082, %v6096
        %v6105 = vmul.f32 %v6083, %v6096
        %v6106 = vmul.f32 %v6084, %v6096
        %v6107 = vmul.f32 %v6085, %v6096
        %v6108 = vmul.f32 %v6086, %v6096
        %v6109 = vmul.f32 %v6087, %v6096
        %v6110 = vmul.f32 %v6088, %v6096
        %v6111 = vmul.f32 %v6089, %v6096
        %v6112 = vmul.f32 %v6090, %v6096
        %v6113 = vmul.f32 %v6091, %v6096
        %v6115 = vlaneseq
        %v6116 = vshrl.u32 %v6115, 7
        %v6117 = vsub.s32 0, %v6116
        %v6118 = vrot.slane %v5883, %v6117
        %v6120 = vadd.f32 %v6098, %v6118
        %v6121 = vadd.f32 %v6099, %v6118
        %v6122 = vadd.f32 %v6100, %v6118
        %v6123 = vadd.f32 %v6101, %v6118
        %v6124 = vadd.f32 %v6102, %v6118
        %v6125 = vadd.f32 %v6103, %v6118
        %v6126 = vadd.f32 %v6104, %v6118
        %v6127 = vadd.f32 %v6105, %v6118
        %v6128 = vadd.f32 %v6106, %v6118
        %v6129 = vadd.f32 %v6107, %v6118
        %v6130 = vadd.f32 %v6108, %v6118
        %v6131 = vadd.f32 %v6109, %v6118
        %v6132 = vadd.f32 %v6110, %v6118
        %v6133 = vadd.f32 %v6111, %v6118
        %v6134 = vadd.f32 %v6112, %v6118
        %v6135 = vadd.f32 %v6113, %v6118
        %v6136 = vpack.c.bf16 %v6121, %v6120
        %v6137 = vpack.c.bf16 %v6123, %v6122
        %v6138 = vpack.c.bf16 %v6125, %v6124
        %v6139 = vpack.c.bf16 %v6127, %v6126
        %v6140 = vpack.c.bf16 %v6129, %v6128
        %v6141 = vpack.c.bf16 %v6131, %v6130
        %v6142 = vpack.c.bf16 %v6133, %v6132
        %v6143 = vpack.c.bf16 %v6135, %v6134
        %v6144 = vld [vmem:[%s714] sm:$0xf]
        %v6145 = vld [vmem:[%s714 + $0x4] sm:$0xf]
        %v6146 = vld [vmem:[%s714 + $0x8] sm:$0xf]
        %v6147 = vld [vmem:[%s714 + $0xc] sm:$0xf]
        %v6148 = vld [vmem:[%s717] sm:$0x1]
        %v6150 = vlaneseq
        %v6151 = vshrl.u32 %v6150, 7
        %v6152 = vsub.s32 0, %v6151
        %v6153 = vrot.slane %v6148, %v6152
        %v6159 = vunpack.c.l.b16 %v6144
        %v6160 = vunpack.c.l.b16 %v6145
        %v6161 = vunpack.c.l.b16 %v6146
        %v6162 = vunpack.c.l.b16 %v6147
        %v6163 = vpack.c.b16 %v6160, %v6159
        %v6164 = vpack.c.b16 %v6162, %v6161
        %v6168 = vsel %vm782, %v6136, 0
        %v6171 = vsel %vm782, %v6137, 0
        %v6174 = vsel %vm782, %v6138, 0
        %v6177 = vsel %vm782, %v6139, 0
        %v6180 = vsel %vm782, %v6140, 0
        %v6183 = vsel %vm782, %v6141, 0
        %v6186 = vsel %vm782, %v6142, 0
        %v6189 = vsel %vm782, %v6143, 0
        %6191 = vmatprep.subr.bf16.mxu0 0
        %6192 = vmatpush1.bf16.msra.mxu0 0
        %6193 = vmatprep.subr.bf16.mxu0 0
        %6194 = vmatpush1.bf16.msra.mxu0 0
        %6195 = vmatprep.subr.bf16.mxu0 0
        %6196 = vmatpush1.bf16.msra.mxu0 0
        %6197 = vmatprep.subr.bf16.mxu0 0
        %6198 = vmatpush1.bf16.msra.mxu0 0
        %6199 = vmatprep.subr.bf16.mxu0 0
        %6200 = vmatpush1.bf16.msra.mxu0 0
        %6201 = vmatprep.subr.bf16.mxu0 0
        %6202 = vmatpush1.bf16.msra.mxu0 0
        %6203 = vmatprep.subr.bf16.mxu0 0
        %6204 = vmatpush1.bf16.msra.mxu0 %v6164
        %6205 = vmatprep.subr.bf16.mxu0 0
        %6206 = vmatpush1.bf16.msra.mxu0 %v6163
        %6207 = vmatprep.subr.bf16.mxu0 0
        %6208 = vmatpush2.bf16.msra.mxu0 0
        %6209 = vmatprep.subr.bf16.mxu0 0
        %6210 = vmatpush2.bf16.msra.mxu0 0
        %6211 = vmatprep.subr.bf16.mxu0 0
        %6212 = vmatpush2.bf16.msra.mxu0 0
        %6213 = vmatprep.subr.bf16.mxu0 0
        %6214 = vmatpush2.bf16.msra.mxu0 0
        %6215 = vmatprep.subr.bf16.mxu0 0
        %6216 = vmatpush2.bf16.msra.mxu0 0
        %6217 = vmatprep.subr.bf16.mxu0 0
        %6218 = vmatpush2.bf16.msra.mxu0 0
        %6219 = vmatprep.subr.bf16.mxu0 0
        %6220 = vmatpush2.bf16.msra.mxu0 0
        %6221 = vmatprep.subr.bf16.mxu0 0
        %6222 = vmatpush2.bf16.msra.mxu0 0
        %6223 = vmatprep.mubr.bf16.mxu0 0
        %6224 = vmatmul.mubr.bf16.gmra.mxu0 %v6168
        %v6225 = vpop.f32.mrf.mxu0
        %v6226 = vadd.f32 %v6153, %v6225
        %v6227 = vpop.f32.mrf.mxu0
        %v6228 = vpop.f32.mrf.mxu0
        %v6229 = vadd.f32 %v6153, %v6228
        %v6230 = vpop.f32.mrf.mxu0
        %6231 = vmatprep.mubr.bf16.mxu0 0
        %6232 = vmatmul.mubr.bf16.gmra.mxu0 %v6171
        %v6233 = vpop.f32.mrf.mxu0
        %v6234 = vadd.f32 %v6153, %v6233
        %v6235 = vpop.f32.mrf.mxu0
        %v6236 = vpop.f32.mrf.mxu0
        %v6237 = vadd.f32 %v6153, %v6236
        %v6238 = vpop.f32.mrf.mxu0
        %6239 = vmatprep.mubr.bf16.mxu0 0
        %6240 = vmatmul.mubr.bf16.gmra.mxu0 %v6174
        %v6241 = vpop.f32.mrf.mxu0
        %v6242 = vadd.f32 %v6153, %v6241
        %v6243 = vpop.f32.mrf.mxu0
        %v6244 = vpop.f32.mrf.mxu0
        %v6245 = vadd.f32 %v6153, %v6244
        %v6246 = vpop.f32.mrf.mxu0
        %6247 = vmatprep.mubr.bf16.mxu0 0
        %6248 = vmatmul.mubr.bf16.gmra.mxu0 %v6177
        %v6249 = vpop.f32.mrf.mxu0
        %v6250 = vadd.f32 %v6153, %v6249
        %v6251 = vpop.f32.mrf.mxu0
        %v6252 = vpop.f32.mrf.mxu0
        %v6253 = vadd.f32 %v6153, %v6252
        %v6254 = vpop.f32.mrf.mxu0
        %6255 = vmatprep.mubr.bf16.mxu0 0
        %6256 = vmatmul.mubr.bf16.gmra.mxu0 %v6180
        %v6257 = vpop.f32.mrf.mxu0
        %v6258 = vadd.f32 %v6153, %v6257
        %v6259 = vpop.f32.mrf.mxu0
        %v6260 = vpop.f32.mrf.mxu0
        %v6261 = vadd.f32 %v6153, %v6260
        %v6262 = vpop.f32.mrf.mxu0
        %6263 = vmatprep.mubr.bf16.mxu0 0
        %6264 = vmatmul.mubr.bf16.gmra.mxu0 %v6183
        %v6265 = vpop.f32.mrf.mxu0
        %v6266 = vadd.f32 %v6153, %v6265
        %v6267 = vpop.f32.mrf.mxu0
        %v6268 = vpop.f32.mrf.mxu0
        %v6269 = vadd.f32 %v6153, %v6268
        %v6270 = vpop.f32.mrf.mxu0
        %6271 = vmatprep.mubr.bf16.mxu0 0
        %6272 = vmatmul.mubr.bf16.gmra.mxu0 %v6186
        %v6273 = vpop.f32.mrf.mxu0
        %v6274 = vadd.f32 %v6153, %v6273
        %v6275 = vpop.f32.mrf.mxu0
        %v6276 = vpop.f32.mrf.mxu0
        %v6277 = vadd.f32 %v6153, %v6276
        %v6278 = vpop.f32.mrf.mxu0
        %6279 = vmatprep.mubr.bf16.mxu0 0
        %6280 = vmatmul.mubr.bf16.gmra.mxu0 %v6189
        %v6281 = vpop.f32.mrf.mxu0
        %v6282 = vadd.f32 %v6153, %v6281
        %v6283 = vpop.f32.mrf.mxu0
        %v6284 = vpop.f32.mrf.mxu0
        %v6285 = vadd.f32 %v6153, %v6284
        %v6286 = vpop.f32.mrf.mxu0
        %6287 = vdwg.mxu0
        %v6288 = vmul.f32 %v6226, 1.702
        %v6289 = vmul.f32 %v6229, 1.702
        %v6290 = vmul.f32 %v6234, 1.702
        %v6291 = vmul.f32 %v6237, 1.702
        %v6292 = vmul.f32 %v6242, 1.702
        %v6293 = vmul.f32 %v6245, 1.702
        %v6294 = vmul.f32 %v6250, 1.702
        %v6295 = vmul.f32 %v6253, 1.702
        %v6296 = vmul.f32 %v6258, 1.702
        %v6297 = vmul.f32 %v6261, 1.702
        %v6298 = vmul.f32 %v6266, 1.702
        %v6299 = vmul.f32 %v6269, 1.702
        %v6300 = vmul.f32 %v6274, 1.702
        %v6301 = vmul.f32 %v6277, 1.702
        %v6302 = vmul.f32 %v6282, 1.702
        %v6303 = vmul.f32 %v6285, 1.702
        %v6304 = vxor.u32 %v6288, 2147483648
        %v6305 = vxor.u32 %v6289, 2147483648
        %v6306 = vxor.u32 %v6290, 2147483648
        %v6307 = vxor.u32 %v6291, 2147483648
        %v6308 = vxor.u32 %v6292, 2147483648
        %v6309 = vxor.u32 %v6293, 2147483648
        %v6310 = vxor.u32 %v6294, 2147483648
        %v6311 = vxor.u32 %v6295, 2147483648
        %v6312 = vxor.u32 %v6296, 2147483648
        %v6313 = vxor.u32 %v6297, 2147483648
        %v6314 = vxor.u32 %v6298, 2147483648
        %v6315 = vxor.u32 %v6299, 2147483648
        %v6316 = vxor.u32 %v6300, 2147483648
        %v6317 = vxor.u32 %v6301, 2147483648
        %v6318 = vxor.u32 %v6302, 2147483648
        %v6319 = vxor.u32 %v6303, 2147483648
        %v6320 = vmul.f32 %v6304, 1.442695
        %v6321 = vpow.pop %v6320
        %v6322 = vmul.f32 %v6305, 1.442695
        %v6323 = vpow.pop %v6322
        %v6324 = vmul.f32 %v6306, 1.442695
        %v6325 = vpow.pop %v6324
        %v6326 = vmul.f32 %v6307, 1.442695
        %v6327 = vpow.pop %v6326
        %v6328 = vmul.f32 %v6308, 1.442695
        %v6329 = vpow.pop %v6328
        %v6330 = vmul.f32 %v6309, 1.442695
        %v6331 = vpow.pop %v6330
        %v6332 = vmul.f32 %v6310, 1.442695
        %v6333 = vpow.pop %v6332
        %v6334 = vmul.f32 %v6311, 1.442695
        %v6335 = vpow.pop %v6334
        %v6336 = vmul.f32 %v6312, 1.442695
        %v6337 = vpow.pop %v6336
        %v6338 = vmul.f32 %v6313, 1.442695
        %v6339 = vpow.pop %v6338
        %v6340 = vmul.f32 %v6314, 1.442695
        %v6341 = vpow.pop %v6340
        %v6342 = vmul.f32 %v6315, 1.442695
        %v6343 = vpow.pop %v6342
        %v6344 = vmul.f32 %v6316, 1.442695
        %v6345 = vpow.pop %v6344
        %v6346 = vmul.f32 %v6317, 1.442695
        %v6347 = vpow.pop %v6346
        %v6348 = vmul.f32 %v6318, 1.442695
        %v6349 = vpow.pop %v6348
        %v6350 = vmul.f32 %v6319, 1.442695
        %v6351 = vpow.pop %v6350
        %v6352 = vadd.f32 %v6321, 1.0
        %v6353 = vadd.f32 %v6323, 1.0
        %v6354 = vadd.f32 %v6325, 1.0
        %v6355 = vadd.f32 %v6327, 1.0
        %v6356 = vadd.f32 %v6329, 1.0
        %v6357 = vadd.f32 %v6331, 1.0
        %v6358 = vadd.f32 %v6333, 1.0
        %v6359 = vadd.f32 %v6335, 1.0
        %v6360 = vadd.f32 %v6337, 1.0
        %v6361 = vadd.f32 %v6339, 1.0
        %v6362 = vadd.f32 %v6341, 1.0
        %v6363 = vadd.f32 %v6343, 1.0
        %v6364 = vadd.f32 %v6345, 1.0
        %v6365 = vadd.f32 %v6347, 1.0
        %v6366 = vadd.f32 %v6349, 1.0
        %v6367 = vadd.f32 %v6351, 1.0
        %v6368 = vrcp.pop %v6352
        %v6369 = vmul.f32 1.0, %v6368
        %v6370 = vrcp.pop %v6353
        %v6371 = vmul.f32 1.0, %v6370
        %v6372 = vrcp.pop %v6354
        %v6373 = vmul.f32 1.0, %v6372
        %v6374 = vrcp.pop %v6355
        %v6375 = vmul.f32 1.0, %v6374
        %v6376 = vrcp.pop %v6356
        %v6377 = vmul.f32 1.0, %v6376
        %v6378 = vrcp.pop %v6357
        %v6379 = vmul.f32 1.0, %v6378
        %v6380 = vrcp.pop %v6358
        %v6381 = vmul.f32 1.0, %v6380
        %v6382 = vrcp.pop %v6359
        %v6383 = vmul.f32 1.0, %v6382
        %v6384 = vrcp.pop %v6360
        %v6385 = vmul.f32 1.0, %v6384
        %v6386 = vrcp.pop %v6361
        %v6387 = vmul.f32 1.0, %v6386
        %v6388 = vrcp.pop %v6362
        %v6389 = vmul.f32 1.0, %v6388
        %v6390 = vrcp.pop %v6363
        %v6391 = vmul.f32 1.0, %v6390
        %v6392 = vrcp.pop %v6364
        %v6393 = vmul.f32 1.0, %v6392
        %v6394 = vrcp.pop %v6365
        %v6395 = vmul.f32 1.0, %v6394
        %v6396 = vrcp.pop %v6366
        %v6397 = vmul.f32 1.0, %v6396
        %v6398 = vrcp.pop %v6367
        %v6399 = vmul.f32 1.0, %v6398
        %v6400 = vmul.f32 %v6226, %v6369
        %v6401 = vmul.f32 %v6229, %v6371
        %v6402 = vmul.f32 %v6234, %v6373
        %v6403 = vmul.f32 %v6237, %v6375
        %v6404 = vmul.f32 %v6242, %v6377
        %v6405 = vmul.f32 %v6245, %v6379
        %v6406 = vmul.f32 %v6250, %v6381
        %v6407 = vmul.f32 %v6253, %v6383
        %v6408 = vmul.f32 %v6258, %v6385
        %v6409 = vmul.f32 %v6261, %v6387
        %v6410 = vmul.f32 %v6266, %v6389
        %v6411 = vmul.f32 %v6269, %v6391
        %v6412 = vmul.f32 %v6274, %v6393
        %v6413 = vmul.f32 %v6277, %v6395
        %v6414 = vmul.f32 %v6282, %v6397
        %v6415 = vmul.f32 %v6285, %v6399
        %v6416 = vpack.c.bf16 %v6401, %v6400
        %v6417 = vpack.c.bf16 %v6403, %v6402
        %v6418 = vpack.c.bf16 %v6405, %v6404
        %v6419 = vpack.c.bf16 %v6407, %v6406
        %v6420 = vpack.c.bf16 %v6409, %v6408
        %v6421 = vpack.c.bf16 %v6411, %v6410
        %v6422 = vpack.c.bf16 %v6413, %v6412
        %v6423 = vpack.c.bf16 %v6415, %v6414
        %v6424 = vld [vmem:[%s722] sm:$0xf]
        %v6425 = vld [vmem:[%s722 + $0x4] sm:$0xf]
        %v6426 = vld [vmem:[%s722 + $0x8] sm:$0xf]
        %v6427 = vld [vmem:[%s722 + $0xc] sm:$0xf]
        %v6428 = vld [vmem:[%s722 + $0x10] sm:$0xf]
        %v6429 = vld [vmem:[%s722 + $0x14] sm:$0xf]
        %v6430 = vld [vmem:[%s722 + $0x18] sm:$0xf]
        %v6431 = vld [vmem:[%s722 + $0x1c] sm:$0xf]
        %v6432 = vld [vmem:[%s722 + $0x20] sm:$0xf]
        %v6433 = vld [vmem:[%s722 + $0x24] sm:$0xf]
        %v6434 = vld [vmem:[%s722 + $0x28] sm:$0xf]
        %v6435 = vld [vmem:[%s722 + $0x2c] sm:$0xf]
        %v6436 = vld [vmem:[%s722 + $0x30] sm:$0xf]
        %v6437 = vld [vmem:[%s722 + $0x34] sm:$0xf]
        %v6438 = vld [vmem:[%s722 + $0x38] sm:$0xf]
        %v6439 = vld [vmem:[%s722 + $0x3c] sm:$0xf]
        %v6440 = vld [vmem:[%s725] sm:$0x1]
        %v6442 = vlaneseq
        %v6443 = vshrl.u32 %v6442, 7
        %v6444 = vsub.s32 0, %v6443
        %v6445 = vrot.slane %v6440, %v6444
        %v6463 = vunpack.c.l.b16 %v6424
        %v6464 = vunpack.c.l.b16 %v6425
        %v6465 = vunpack.c.l.b16 %v6426
        %v6466 = vunpack.c.l.b16 %v6427
        %v6467 = vunpack.c.l.b16 %v6428
        %v6468 = vunpack.c.l.b16 %v6429
        %v6469 = vunpack.c.l.b16 %v6430
        %v6470 = vunpack.c.l.b16 %v6431
        %v6471 = vunpack.c.l.b16 %v6432
        %v6472 = vunpack.c.l.b16 %v6433
        %v6473 = vunpack.c.l.b16 %v6434
        %v6474 = vunpack.c.l.b16 %v6435
        %v6475 = vunpack.c.l.b16 %v6436
        %v6476 = vunpack.c.l.b16 %v6437
        %v6477 = vunpack.c.l.b16 %v6438
        %v6478 = vunpack.c.l.b16 %v6439
        %v6479 = vpack.c.b16 %v6464, %v6463
        %v6480 = vpack.c.b16 %v6466, %v6465
        %v6481 = vpack.c.b16 %v6468, %v6467
        %v6482 = vpack.c.b16 %v6470, %v6469
        %v6483 = vpack.c.b16 %v6472, %v6471
        %v6484 = vpack.c.b16 %v6474, %v6473
        %v6485 = vpack.c.b16 %v6476, %v6475
        %v6486 = vpack.c.b16 %v6478, %v6477
        %6495 = vmatprep.subr.bf16.mxu0 0
        %6496 = vmatpush1.bf16.msra.mxu0 %v6486
        %6497 = vmatprep.subr.bf16.mxu0 0
        %6498 = vmatpush1.bf16.msra.mxu0 %v6485
        %6499 = vmatprep.subr.bf16.mxu0 0
        %6500 = vmatpush1.bf16.msra.mxu0 %v6484
        %6501 = vmatprep.subr.bf16.mxu0 0
        %6502 = vmatpush1.bf16.msra.mxu0 %v6483
        %6503 = vmatprep.subr.bf16.mxu0 0
        %6504 = vmatpush1.bf16.msra.mxu0 %v6482
        %6505 = vmatprep.subr.bf16.mxu0 0
        %6506 = vmatpush1.bf16.msra.mxu0 %v6481
        %6507 = vmatprep.subr.bf16.mxu0 0
        %6508 = vmatpush1.bf16.msra.mxu0 %v6480
        %6509 = vmatprep.subr.bf16.mxu0 0
        %6510 = vmatpush1.bf16.msra.mxu0 %v6479
        %6511 = vmatprep.subr.bf16.mxu0 0
        %6512 = vmatpush2.bf16.msra.mxu0 0
        %6513 = vmatprep.subr.bf16.mxu0 0
        %6514 = vmatpush2.bf16.msra.mxu0 0
        %6515 = vmatprep.subr.bf16.mxu0 0
        %6516 = vmatpush2.bf16.msra.mxu0 0
        %6517 = vmatprep.subr.bf16.mxu0 0
        %6518 = vmatpush2.bf16.msra.mxu0 0
        %6519 = vmatprep.subr.bf16.mxu0 0
        %6520 = vmatpush2.bf16.msra.mxu0 0
        %6521 = vmatprep.subr.bf16.mxu0 0
        %6522 = vmatpush2.bf16.msra.mxu0 0
        %6523 = vmatprep.subr.bf16.mxu0 0
        %6524 = vmatpush2.bf16.msra.mxu0 0
        %6525 = vmatprep.subr.bf16.mxu0 0
        %6526 = vmatpush2.bf16.msra.mxu0 0
        %6527 = vmatprep.mubr.bf16.mxu0 0
        %6528 = vmatmul.mubr.bf16.gmra.mxu0 %v6416
        %v6529 = vpop.f32.mrf.mxu0
        %v6530 = vadd.f32 %v6445, %v6529
        %v6531 = vpop.f32.mrf.mxu0
        %v6532 = vpop.f32.mrf.mxu0
        %v6533 = vadd.f32 %v6445, %v6532
        %v6534 = vpop.f32.mrf.mxu0
        %6535 = vmatprep.mubr.bf16.mxu0 0
        %6536 = vmatmul.mubr.bf16.gmra.mxu0 %v6417
        %v6537 = vpop.f32.mrf.mxu0
        %v6538 = vadd.f32 %v6445, %v6537
        %v6539 = vpop.f32.mrf.mxu0
        %v6540 = vpop.f32.mrf.mxu0
        %v6541 = vadd.f32 %v6445, %v6540
        %v6542 = vpop.f32.mrf.mxu0
        %6543 = vmatprep.mubr.bf16.mxu0 0
        %6544 = vmatmul.mubr.bf16.gmra.mxu0 %v6418
        %v6545 = vpop.f32.mrf.mxu0
        %v6546 = vadd.f32 %v6445, %v6545
        %v6547 = vpop.f32.mrf.mxu0
        %v6548 = vpop.f32.mrf.mxu0
        %v6549 = vadd.f32 %v6445, %v6548
        %v6550 = vpop.f32.mrf.mxu0
        %6551 = vmatprep.mubr.bf16.mxu0 0
        %6552 = vmatmul.mubr.bf16.gmra.mxu0 %v6419
        %v6553 = vpop.f32.mrf.mxu0
        %v6554 = vadd.f32 %v6445, %v6553
        %v6555 = vpop.f32.mrf.mxu0
        %v6556 = vpop.f32.mrf.mxu0
        %v6557 = vadd.f32 %v6445, %v6556
        %v6558 = vpop.f32.mrf.mxu0
        %6559 = vmatprep.mubr.bf16.mxu0 0
        %6560 = vmatmul.mubr.bf16.gmra.mxu0 %v6420
        %v6561 = vpop.f32.mrf.mxu0
        %v6562 = vadd.f32 %v6445, %v6561
        %v6563 = vpop.f32.mrf.mxu0
        %v6564 = vpop.f32.mrf.mxu0
        %v6565 = vadd.f32 %v6445, %v6564
        %v6566 = vpop.f32.mrf.mxu0
        %6567 = vmatprep.mubr.bf16.mxu0 0
        %6568 = vmatmul.mubr.bf16.gmra.mxu0 %v6421
        %v6569 = vpop.f32.mrf.mxu0
        %v6570 = vadd.f32 %v6445, %v6569
        %v6571 = vpop.f32.mrf.mxu0
        %v6572 = vpop.f32.mrf.mxu0
        %v6573 = vadd.f32 %v6445, %v6572
        %v6574 = vpop.f32.mrf.mxu0
        %6575 = vmatprep.mubr.bf16.mxu0 0
        %6576 = vmatmul.mubr.bf16.gmra.mxu0 %v6422
        %v6577 = vpop.f32.mrf.mxu0
        %v6578 = vadd.f32 %v6445, %v6577
        %v6579 = vpop.f32.mrf.mxu0
        %v6580 = vpop.f32.mrf.mxu0
        %v6581 = vadd.f32 %v6445, %v6580
        %v6582 = vpop.f32.mrf.mxu0
        %6583 = vmatprep.mubr.bf16.mxu0 0
        %6584 = vmatmul.mubr.bf16.gmra.mxu0 %v6423
        %v6585 = vpop.f32.mrf.mxu0
        %v6586 = vadd.f32 %v6445, %v6585
        %v6587 = vpop.f32.mrf.mxu0
        %v6588 = vpop.f32.mrf.mxu0
        %v6589 = vadd.f32 %v6445, %v6588
        %v6590 = vpop.f32.mrf.mxu0
        %6591 = vdwg.mxu0
        %v6592 = vadd.f32 %v5866, %v6530
        %v6593 = vadd.f32 %v5867, %v6533
        %v6594 = vadd.f32 %v5868, %v6538
        %v6595 = vadd.f32 %v5869, %v6541
        %v6596 = vadd.f32 %v5870, %v6546
        %v6597 = vadd.f32 %v5871, %v6549
        %v6598 = vadd.f32 %v5872, %v6554
        %v6599 = vadd.f32 %v5873, %v6557
        %v6600 = vadd.f32 %v5874, %v6562
        %v6601 = vadd.f32 %v5875, %v6565
        %v6602 = vadd.f32 %v5876, %v6570
        %v6603 = vadd.f32 %v5877, %v6573
        %v6604 = vadd.f32 %v5878, %v6578
        %v6605 = vadd.f32 %v5879, %v6581
        %v6606 = vadd.f32 %v5880, %v6586
        %v6607 = vadd.f32 %v5881, %v6589
        %6608 = vst.msk [vmem:[#allocation2] sm:$0xff] %vm782, %v6592
        %6609 = vst.msk [vmem:[#allocation2 + $0x8] sm:$0xff] %vm782, %v6593
        %6610 = vst.msk [vmem:[#allocation2 + $0x10] sm:$0xff] %vm782, %v6594
        %6611 = vst.msk [vmem:[#allocation2 + $0x18] sm:$0xff] %vm782, %v6595
        %6612 = vst.msk [vmem:[#allocation2 + $0x20] sm:$0xff] %vm782, %v6596
        %6613 = vst.msk [vmem:[#allocation2 + $0x28] sm:$0xff] %vm782, %v6597
        %6614 = vst.msk [vmem:[#allocation2 + $0x30] sm:$0xff] %vm782, %v6598
        %6615 = vst.msk [vmem:[#allocation2 + $0x38] sm:$0xff] %vm782, %v6599
        %6616 = vst.msk [vmem:[#allocation2 + $0x40] sm:$0xff] %vm782, %v6600
        %6617 = vst.msk [vmem:[#allocation2 + $0x48] sm:$0xff] %vm782, %v6601
        %6618 = vst.msk [vmem:[#allocation2 + $0x50] sm:$0xff] %vm782, %v6602
        %6619 = vst.msk [vmem:[#allocation2 + $0x58] sm:$0xff] %vm782, %v6603
        %6620 = vst.msk [vmem:[#allocation2 + $0x60] sm:$0xff] %vm782, %v6604
        %6621 = vst.msk [vmem:[#allocation2 + $0x68] sm:$0xff] %vm782, %v6605
        %6622 = vst.msk [vmem:[#allocation2 + $0x70] sm:$0xff] %vm782, %v6606
        %6623 = vst.msk [vmem:[#allocation2 + $0x78] sm:$0xff] %vm782, %v6607
        %p6624 = scmp.eq.s32.totalorder %s40, 1
        // Predicated region
        $region89: #{tpu_custom_call.1} parent=83 // pred_check
          %p6625 = pneg %p6624
        $region90: #{tpu_custom_call.1} parent=83 // pred_check_branch
          %6627 = sbr.rel (%p6625) target = $region92
        $region91: #{tpu_custom_call.1} parent=83 // pred_region
          %s6628 = smul.u32 %s39, 8
          %s6629 = sld [smem:[#allocation5 + %s6628]]
          %s6630 = scalar_lea.vmem [#allocation2], %s6629
          %v6631 = vld [vmem:[%s6630] sm:$0x1]
          %s6632 = sadd.s32 %s6628, 1
          %s6633 = sld [smem:[#allocation5 + %s6632]]
          %s6634 = sadd.s32 %s6633, 16
          %s6635 = scalar_lea.vmem [#allocation2], %s6634
          %v6636 = vld [vmem:[%s6635] sm:$0x1]
          %s6637 = sadd.s32 %s6628, 2
          %s6638 = sld [smem:[#allocation5 + %s6637]]
          %s6639 = sadd.s32 %s6638, 32
          %s6640 = scalar_lea.vmem [#allocation2], %s6639
          %v6641 = vld [vmem:[%s6640] sm:$0x1]
          %s6642 = sadd.s32 %s6628, 3
          %s6643 = sld [smem:[#allocation5 + %s6642]]
          %s6644 = sadd.s32 %s6643, 48
          %s6645 = scalar_lea.vmem [#allocation2], %s6644
          %v6646 = vld [vmem:[%s6645] sm:$0x1]
          %s6647 = sadd.s32 %s6628, 4
          %s6648 = sld [smem:[#allocation5 + %s6647]]
          %s6649 = sadd.s32 %s6648, 64
          %s6650 = scalar_lea.vmem [#allocation2], %s6649
          %v6651 = vld [vmem:[%s6650] sm:$0x1]
          %s6652 = sadd.s32 %s6628, 5
          %s6653 = sld [smem:[#allocation5 + %s6652]]
          %s6654 = sadd.s32 %s6653, 80
          %s6655 = scalar_lea.vmem [#allocation2], %s6654
          %v6656 = vld [vmem:[%s6655] sm:$0x1]
          %s6657 = sadd.s32 %s6628, 6
          %s6658 = sld [smem:[#allocation5 + %s6657]]
          %s6659 = sadd.s32 %s6658, 96
          %s6660 = scalar_lea.vmem [#allocation2], %s6659
          %v6661 = vld [vmem:[%s6660] sm:$0x1]
          %s6662 = sadd.s32 %s6628, 7
          %s6663 = sld [smem:[#allocation5 + %s6662]]
          %s6664 = sadd.s32 %s6663, 112
          %s6665 = scalar_lea.vmem [#allocation2], %s6664
          %v6666 = vld [vmem:[%s6665] sm:$0x1]
          %v6668 = vrot.slane %v6636, 7
          %v6671 = vrot.slane %v6641, 6
          %v6674 = vrot.slane %v6646, 5
          %v6677 = vrot.slane %v6651, 4
          %v6680 = vrot.slane %v6656, 3
          %v6683 = vrot.slane %v6661, 2
          %v6686 = vrot.slane %v6666, 1
          %vm6688 = vcmask 1040384
          %v6689 = vsel %vm6688, %v6631, %v6668
          %vm6690 = vcmask 1041408
          %v6691 = vsel %vm6690, %v6689, %v6671
          %vm6692 = vcmask 1042432
          %v6693 = vsel %vm6692, %v6691, %v6674
          %vm6694 = vcmask 1043456
          %v6695 = vsel %vm6694, %v6693, %v6677
          %vm6696 = vcmask 1044480
          %v6697 = vsel %vm6696, %v6695, %v6680
          %vm6698 = vcmask 1045504
          %v6699 = vsel %vm6698, %v6697, %v6683
          %vm6700 = vcmask 1046528
          %v6701 = vsel %vm6700, %v6699, %v6686
          %v6702 = vld [vmem:[%s14] sm:$0x1]
          %v6703 = vld [vmem:[%s15] sm:$0x1]
          %v6704 = vsel %vm782, %v6701, 0.0
          %6705 = vadd.xlane.f32.xlu0 %v6704
          %v6706 = vpop.xlane.xlu0 %6705
          %v6707 = vmul.f32 %v6706, %v831
          %v6708 = vsub.f32 %v6701, %v6707
          %v6709 = vmul.f32 %v6708, %v6708
          %v6710 = vsel %vm782, %v6709, 0.0
          %6711 = vadd.xlane.f32.xlu0 %v6710
          %v6712 = vpop.xlane.xlu0 %6711
          %v6713 = vmul.f32 %v6712, %v831
          %v6714 = vadd.f32 %v6713, 1e-05
          %v6715 = vrsqrt.pop %v6714
          %v6716 = vmul.f32 %v6708, %v6715
          %v6718 = vlaneseq
          %v6719 = vshrl.u32 %v6718, 7
          %v6720 = vsub.s32 0, %v6719
          %v6721 = vrot.slane %v6702, %v6720
          %v6723 = vmul.f32 %v6716, %v6721
          %v6725 = vlaneseq
          %v6726 = vshrl.u32 %v6725, 7
          %v6727 = vsub.s32 0, %v6726
          %v6728 = vrot.slane %v6703, %v6727
          %v6730 = vadd.f32 %v6723, %v6728
          %v6731 = vpack.c.bf16 %v6730, %v6730
          %v6732 = vld [vmem:[%s16] sm:$0xf]
          %v6733 = vld [vmem:[%s16 + $0x4] sm:$0xf]
          %v6734 = vld [vmem:[%s16 + $0x8] sm:$0xf]
          %v6735 = vld [vmem:[%s16 + $0xc] sm:$0xf]
          %v6740 = vunpack.c.l.b16 %v6732
          %v6741 = vunpack.c.l.b16 %v6733
          %v6742 = vunpack.c.l.b16 %v6734
          %v6743 = vunpack.c.l.b16 %v6735
          %v6744 = vpack.c.b16 %v6741, %v6740
          %v6745 = vpack.c.b16 %v6743, %v6742
          %v6749 = vsel %vm782, %v6731, 0
          %6751 = vmatprep.subr.bf16.mxu0 0
          %6752 = vmatpush1.bf16.msra.mxu0 0
          %6753 = vmatprep.subr.bf16.mxu0 0
          %6754 = vmatpush1.bf16.msra.mxu0 0
          %6755 = vmatprep.subr.bf16.mxu0 0
          %6756 = vmatpush1.bf16.msra.mxu0 0
          %6757 = vmatprep.subr.bf16.mxu0 0
          %6758 = vmatpush1.bf16.msra.mxu0 0
          %6759 = vmatprep.subr.bf16.mxu0 0
          %6760 = vmatpush1.bf16.msra.mxu0 0
          %6761 = vmatprep.subr.bf16.mxu0 0
          %6762 = vmatpush1.bf16.msra.mxu0 0
          %6763 = vmatprep.subr.bf16.mxu0 0
          %6764 = vmatpush1.bf16.msra.mxu0 %v6745
          %6765 = vmatprep.subr.bf16.mxu0 0
          %6766 = vmatpush1.bf16.msra.mxu0 %v6744
          %6767 = vmatprep.subr.bf16.mxu0 0
          %6768 = vmatpush2.bf16.msra.mxu0 0
          %6769 = vmatprep.subr.bf16.mxu0 0
          %6770 = vmatpush2.bf16.msra.mxu0 0
          %6771 = vmatprep.subr.bf16.mxu0 0
          %6772 = vmatpush2.bf16.msra.mxu0 0
          %6773 = vmatprep.subr.bf16.mxu0 0
          %6774 = vmatpush2.bf16.msra.mxu0 0
          %6775 = vmatprep.subr.bf16.mxu0 0
          %6776 = vmatpush2.bf16.msra.mxu0 0
          %6777 = vmatprep.subr.bf16.mxu0 0
          %6778 = vmatpush2.bf16.msra.mxu0 0
          %6779 = vmatprep.subr.bf16.mxu0 0
          %6780 = vmatpush2.bf16.msra.mxu0 0
          %6781 = vmatprep.subr.bf16.mxu0 0
          %6782 = vmatpush2.bf16.msra.mxu0 0
          %6783 = vmatprep.mubr.bf16.mxu0 0
          %6784 = vmatmul.mubr.bf16.gmra.mxu0 %v6749
          %v6785 = vpop.f32.mrf.mxu0
          %v6786 = vadd.f32 0.0, %v6785
          %v6787 = vpop.f32.mrf.mxu0
          %v6788 = vpop.f32.mrf.mxu0
          %v6789 = vpop.f32.mrf.mxu0
          %6790 = vdwg.mxu0
          %6791 = vst.msk [vmem:[#allocation6] sm:$0xff] %vm782, %v6786
        $region92: #{tpu_custom_call.1} parent=83 // pred_fallthru
          _
        // Predicated region
        $region93: #{tpu_custom_call.1} parent=83 // pred_check
          %p6792 = pneg %p466
        $region94: #{tpu_custom_call.1} parent=83 // pred_check_branch
          %6794 = sbr.rel (%p6792) target = $region96
        $region95: #{tpu_custom_call.1} parent=83 // pred_region
          %s6796 = ssub.s32 128, 128
          %6797 = vsyncadd [#allocation7], %s6796
          %s6798 = smul.addr %s39, 128
          %s6799 = scalar_lea.hbm %s17, %s6798
          %s6801 = sshll.u32 [#allocation6], 4
          %s6802 = int_to_ptr.vmem [resolvable:$true] %s6801
          %6804 = dma.vmem_to_hbm [thread:$0]  %s6802, 128, %s6799, [#allocation7]
        $region96: #{tpu_custom_call.1} parent=83 // pred_fallthru
          _
        // Predicated region
        $region97: #{tpu_custom_call.1} parent=83 // pred_check
          %p6805 = pneg %p466
        $region98: #{tpu_custom_call.1} parent=83 // pred_check_branch
          %6807 = sbr.rel (%p6805) target = $region100
        $region99: #{tpu_custom_call.1} parent=83 // pred_region
          %6808 = dma.done [#allocation7], 128
        $region100: #{tpu_custom_call.1} parent=83 // pred_fallthru
          _
      $region84: #{tpu_custom_call.1} parent=5 // pred_fallthru
        _
      %p6809 = scmp.le.s32.totalorder 2, %s30
      // Predicated region
      $region101: #{tpu_custom_call.1} parent=5 // pred_check
        %p6810 = pneg %p6809
      $region102: #{tpu_custom_call.1} parent=5 // pred_check_branch
        %6812 = sbr.rel (%p6810) target = $region104
      $region103: #{tpu_custom_call.1} parent=5 // pred_region
        %s6813 = ssub.s32 %s30, 2
      $region104: #{tpu_custom_call.1} parent=5 // pred_fallthru
        _
    $region6: #{tpu_custom_call.1} parent=1 // loop_footer
      %s34 = sadd.s32 1, %s30
    $region7: #{tpu_custom_call.1} parent=1 // loop_footer_branch
      %29 = sbr.rel target = $region3
    $region8: #{tpu_custom_call.1} parent=1 // loop_exit
      _
    %6814 = vsyncpa [#allocation7], 1
    %s6815 = scalar_lea.sflag [#allocation7], 1
    %6816 = vsyncpa %s6815, 1

</llo_original>
